<compile_context>
chip_gen: v5e
topology: v5e:2x2
jax: 0.10.0
libtpu: 0.0.40
codegen_flags: <defaults>
</compile_context>

<pallas_src>
import functools

import numpy as np
import jax
import jax.numpy as jnp
from jax.experimental import pallas as pl
from jax.experimental.pallas import tpu as pltpu

C_IN = 512     # fixed by the module (Conv2d(512,...), Linear(512,...))
C_MID = 256
C_HID = 32
BN_EPS = 1e-5


# ----------------------------- Pallas kernels --------------------------------
def _spatial_gap_kernel(x_ref, mask_ref, sel_ref, w1_ref, b1_ref,
                        weff_ref, beff_ref, gap_ref, im2col_ref, *, img_w):
    # x_ref:      (C, M)       bf16  channel-major block of block_b images, M = block_b*H*W
    # mask_ref:   (9, 1, M)    f32   zero-padding masks for the 9 conv taps
    # sel_ref:    (M, Bb)      f32   per-image averaging selector (1/HW on own columns)
    # w1_ref:     (Cm, C)      bf16  conv1x1 (+BN2d) weight
    # weff_ref:   (C, 9*Cm)    bf16  merged 3x3/1x3/3x1 (+BN2d) conv weight
    # gap_ref:    (1, C, Bb)   f32   per-image GAP of the spatial-attention output
    # im2col_ref: (9*Cm, M)    bf16  scratch
    Cm = w1_ref.shape[0]
    M = x_ref.shape[1]

    x2 = x_ref[...]                                              # (C, M) bf16

    # conv1x1 (+ folded BN2d): pointwise conv == one channel matmul on the MXU
    y1 = jnp.dot(w1_ref[...], x2,
                 preferred_element_type=jnp.float32) + b1_ref[...]   # (Cm, M) f32

    # Merged 3x3 conv via im2col + one big-K matmul.  Tap (dy, dx) needs y1 shifted by
    # s = (dy-1)*W + (dx-1) along the flattened (b,h,w) lane axis: a cyclic lane roll
    # (XLU) plus a precomputed mask that zeroes out-of-image sources (== zero padding).
    for k in range(9):
        dy, dx = k // 3, k % 3
        s = (dy - 1) * img_w + (dx - 1)
        if s == 0:
            tap = y1
        else:
            tap = pltpu.roll(y1, shift=(-s) % M, axis=1) * mask_ref[k]
        im2col_ref[k * Cm:(k + 1) * Cm, :] = tap.astype(jnp.bfloat16)

    # (C, 9*Cm) x (9*Cm, M) -> (C, M): K-accumulation stays inside the MXU
    z = jnp.dot(weff_ref[...], im2col_ref[...], preferred_element_type=jnp.float32)
    z = jnp.maximum(z + beff_ref[...], 0.0)                      # ReLU
    s_sum = jnp.sum(z, axis=0, keepdims=True)                    # channel sum -> (1, M)

    sa = x2.astype(jnp.float32) * s_sum                          # spatial attention (C, M)
    # per-image global average pool as a tiny matmul with the (M, Bb) selector
    gap_ref[0] = jnp.dot(sa, sel_ref[...], preferred_element_type=jnp.float32)


def _channel_attention_kernel(gap_ref, wl1_ref, bl1_ref, wl2_ref, bl2_ref, out_ref):
    gap = gap_ref[...]                                           # (B, C) f32
    v = jnp.dot(gap, wl1_ref[...],
                preferred_element_type=jnp.float32) + bl1_ref[...]
    v = jnp.maximum(v, 0.0)                                      # Linear(512,32)+BN1d+ReLU
    u = jnp.dot(v, wl2_ref[...],
                preferred_element_type=jnp.float32) + bl2_ref[...]
    out_ref[...] = gap * jax.nn.sigmoid(u)                       # Linear(32,512)+Sigmoid


# ------------------------------ host helpers ----------------------------------
def _border_masks(block_b, H, W):
    p = np.arange(H * W)
    h, w = p // W, p % W
    masks = np.zeros((9, 1, block_b * H * W), np.float32)
    for k in range(9):
        dy, dx = k // 3, k % 3
        valid = ((h + dy - 1 >= 0) & (h + dy - 1 < H) &
                 (w + dx - 1 >= 0) & (w + dx - 1 < W)).astype(np.float32)
        masks[k, 0, :] = np.tile(valid, block_b)
    return jnp.asarray(masks)


def _gap_selector(block_b, HW):
    sel = np.zeros((block_b * HW, block_b), np.float32)
    for b in range(block_b):
        sel[b * HW:(b + 1) * HW, b] = 1.0 / HW
    return jnp.asarray(sel)


# ------------------------------ host wrapper ----------------------------------
def cross_attention_head(x_nchw, params, block_b=None):
    B, C, H, W = x_nchw.shape
    assert C == C_IN
    w1, b1, weff, beff, wl1, bl1, wl2, bl2 = params

    if block_b is None:
        block_b = min(B, 4)                      # images per grid step -> bigger matmul M/N
    Bp = ((B + block_b - 1) // block_b) * block_b
    nb = Bp // block_b
    HW = H * W
    M = block_b * HW

    # NCHW is already channel-major: flatten to (C, B*H*W), pad batch, cast bf16
    xt = jnp.transpose(x_nchw, (1, 0, 2, 3)).reshape(C, B * HW)
    if Bp != B:
        xt = jnp.pad(xt, ((0, 0), (0, (Bp - B) * HW)))
    xt = xt.astype(jnp.bfloat16)

    masks = _border_masks(block_b, H, W)
    sel = _gap_selector(block_b, HW)
    w1_t = jnp.transpose(w1).astype(jnp.bfloat16)                          # (Cm, C)
    b1_c = jnp.reshape(b1, (C_MID, 1)).astype(jnp.float32)
    weff_t = jnp.transpose(weff.reshape(9 * C_MID, C_IN)).astype(jnp.bfloat16)  # (C, 9*Cm)
    beff_c = jnp.reshape(beff, (C_IN, 1)).astype(jnp.float32)

    gap = pl.pallas_call(
        functools.partial(_spatial_gap_kernel, img_w=W),
        out_shape=jax.ShapeDtypeStruct((nb, C, block_b), jnp.float32),
        grid_spec=pltpu.PrefetchScalarGridSpec(
            num_scalar_prefetch=0,
            grid=(nb,),
            in_specs=[
                pl.BlockSpec((C, M), lambda b: (0, b)),
                pl.BlockSpec((9, 1, M), lambda b: (0, 0, 0)),
                pl.BlockSpec((M, block_b), lambda b: (0, 0)),
                pl.BlockSpec((C_MID, C), lambda b: (0, 0)),
                pl.BlockSpec((C_MID, 1), lambda b: (0, 0)),
                pl.BlockSpec((C, 9 * C_MID), lambda b: (0, 0)),
                pl.BlockSpec((C, 1), lambda b: (0, 0)),
            ],
            out_specs=pl.BlockSpec((1, C, block_b), lambda b: (b, 0, 0)),
            scratch_shapes=[pltpu.VMEM((9 * C_MID, M), jnp.bfloat16)],
        ),
        compiler_params=pltpu.CompilerParams(
            dimension_semantics=("parallel",),
            vmem_limit_bytes=32 * 1024 * 1024),
    )(xt, masks, sel, w1_t, b1_c, weff_t, beff_c)

    gap = jnp.transpose(gap, (0, 2, 1)).reshape(Bp, C)           # (Bp, C)

    # ChannelAttention MLP hoisted out of the per-image grid: one whole-batch call.
    out = pl.pallas_call(
        _channel_attention_kernel,
        out_shape=jax.ShapeDtypeStruct((Bp, C), jnp.float32),
    )(gap, wl1, bl1, wl2, bl2)
    return out[:B]                                               # (B, 512)


# -------- deterministic parameter init (mirrors module.init_weights) ---------
def init_params(key):
    ks = jax.random.split(key, 6)
    bn_scale = 1.0 / np.sqrt(1.0 + BN_EPS)       # eval BN: gamma=1, beta=0, mu=0, var=1

    # PyTorch weight shapes, kaiming_normal_(mode='fan_out'); all biases = 0
    w_c1 = jax.random.normal(ks[0], (C_MID, C_IN, 1, 1), jnp.float32) * np.sqrt(2.0 / (C_MID * 1 * 1))
    w_c3 = jax.random.normal(ks[1], (C_IN, C_MID, 3, 3), jnp.float32) * np.sqrt(2.0 / (C_IN * 3 * 3))
    w_c13 = jax.random.normal(ks[2], (C_IN, C_MID, 1, 3), jnp.float32) * np.sqrt(2.0 / (C_IN * 1 * 3))
    w_c31 = jax.random.normal(ks[3], (C_IN, C_MID, 3, 1), jnp.float32) * np.sqrt(2.0 / (C_IN * 3 * 1))
    w_l1 = jax.random.normal(ks[4], (C_HID, C_IN), jnp.float32) * 0.001   # Linear(512,32)
    w_l2 = jax.random.normal(ks[5], (C_IN, C_HID), jnp.float32) * 0.001   # Linear(32,512)

    # conv1x1 + BN2d folded -> (C_IN, C_MID) matmul weight
    w1 = (w_c1[:, :, 0, 0] * bn_scale).T
    b1 = jnp.zeros((1, C_MID), jnp.float32)

    # conv_3x3 + conv_1x3 + conv_3x1 (each + BN2d) folded into one 3x3 kernel
    weff = jnp.transpose(w_c3, (2, 3, 1, 0)) * bn_scale                               # (3,3,Cm,C)
    weff = weff.at[1].add(jnp.transpose(w_c13[:, :, 0, :], (2, 1, 0)) * bn_scale)     # 1x3 -> center row
    weff = weff.at[:, 1].add(jnp.transpose(w_c31[:, :, :, 0], (2, 1, 0)) * bn_scale)  # 3x1 -> center col
    weff = weff.reshape(9, C_MID, C_IN)
    beff = jnp.zeros((1, C_IN), jnp.float32)

    # Linear(512,32) + BN1d folded, and Linear(32,512)
    wl1 = w_l1.T * bn_scale
    bl1 = jnp.zeros((1, C_HID), jnp.float32)
    wl2 = w_l2.T
    bl2 = jnp.zeros((1, C_IN), jnp.float32)
    return (w1, b1, weff, beff, wl1, bl1, wl2, bl2)


# ------------------------- plain-JAX reference check -------------------------
def reference(x_nchw, params):
    w1, b1, weff, beff, wl1, bl1, wl2, bl2 = params
    x = jnp.transpose(x_nchw, (0, 2, 3, 1)).astype(jnp.float32)
    B, H, W, C = x.shape
    y1 = jnp.einsum('bhwc,cm->bhwm', x, w1) + b1.reshape(1, 1, 1, -1)
    ypad = jnp.pad(y1, ((0, 0), (1, 1), (1, 1), (0, 0)))
    weff4 = weff.reshape(3, 3, C_MID, C)
    z = jnp.zeros((B, H, W, C), jnp.float32)
    for dy in range(3):
        for dx in range(3):
            z = z + jnp.einsum('bhwm,md->bhwd',
                               ypad[:, dy:dy + H, dx:dx + W, :], weff4[dy, dx])
    z = jnp.maximum(z + beff.reshape(1, 1, 1, -1), 0.0)
    s = jnp.sum(z, axis=-1, keepdims=True)
    sa = x * s
    gap = jnp.mean(sa, axis=(1, 2))
    v = jnp.maximum(gap @ wl1 + bl1, 0.0)
    u = v @ wl2 + bl2
    return gap * jax.nn.sigmoid(u)


if __name__ == "__main__":
    key = jax.random.PRNGKey(0)
    kx, kp = jax.random.split(key)
    # small, module-consistent shapes: batch=2, channels=512 (fixed), spatial=8x8 (NCHW)
    x = jax.random.normal(kx, (2, C_IN, 8, 8), jnp.float32)
    params = init_params(kp)

    out = jax.block_until_ready(cross_attention_head(x, params))
    ref = jax.block_until_ready(reference(x, params))

    assert out.shape == (2, C_IN)
    tol = 3e-2 * (float(jnp.max(jnp.abs(ref))) + 1.0)   # bf16 matmul operands, f32 accumulation
    assert bool(jnp.all(jnp.abs(out - ref) <= tol)), "kernel/reference mismatch"
    print("KERNEL_OK")
</pallas_src>

<mosaic_0001>
module attributes {stable_mosaic.version = 11 : i64} {
  func.func @_spatial_gap_kernel(%arg0: i32, %arg1: memref<512x128xbf16, #tpu.memory_space<vmem>>, %arg2: memref<9x1x128xf32, #tpu.memory_space<vmem>>, %arg3: memref<128x2xf32, #tpu.memory_space<vmem>>, %arg4: memref<256x512xbf16, #tpu.memory_space<vmem>>, %arg5: memref<256x1xf32, #tpu.memory_space<vmem>>, %arg6: memref<512x2304xbf16, #tpu.memory_space<vmem>>, %arg7: memref<512x1xf32, #tpu.memory_space<vmem>>, %arg8: memref<1x512x2xf32, #tpu.memory_space<vmem>>, %arg9: memref<2304x128xbf16, #tpu.memory_space<vmem>>) attributes {dimension_semantics = [#tpu.dimension_semantics<parallel>], iteration_bounds = array<i64: 1>, scalar_prefetch = 0 : i64, scratch_operands = 1 : i64, tpu.core_type = #tpu.core_type<tc>, window_params = [{transform_indices = @transform_0, window_bounds = array<i64: 512, 128>}, {pipeline_mode = #tpu.pipeline_mode<synchronous>, transform_indices = @transform_1, window_bounds = array<i64: 9, 1, 128>}, {pipeline_mode = #tpu.pipeline_mode<synchronous>, transform_indices = @transform_2, window_bounds = array<i64: 128, 2>}, {pipeline_mode = #tpu.pipeline_mode<synchronous>, transform_indices = @transform_3, window_bounds = array<i64: 256, 512>}, {pipeline_mode = #tpu.pipeline_mode<synchronous>, transform_indices = @transform_4, window_bounds = array<i64: 256, 1>}, {pipeline_mode = #tpu.pipeline_mode<synchronous>, transform_indices = @transform_5, window_bounds = array<i64: 512, 2304>}, {pipeline_mode = #tpu.pipeline_mode<synchronous>, transform_indices = @transform_6, window_bounds = array<i64: 512, 1>}, {transform_indices = @transform_7, window_bounds = array<i64: 1, 512, 2>}]} {
    %c0 = arith.constant 0 : index
    %c0_0 = arith.constant 0 : index
    %0 = vector.load %arg1[%c0, %c0_0] : memref<512x128xbf16, #tpu.memory_space<vmem>>, vector<512x128xbf16>
    %c0_1 = arith.constant 0 : index
    %c0_2 = arith.constant 0 : index
    %1 = vector.load %arg4[%c0_1, %c0_2] : memref<256x512xbf16, #tpu.memory_space<vmem>>, vector<256x512xbf16>
    %cst = arith.constant dense<0.000000e+00> : vector<256x128xf32>
    %2 = tpu.matmul %1, %0, %cst {dimension_numbers = #tpu.dot_dimension_numbers<[1], [0], [0], [1], [0, 0, 1, 1], [], []>} : vector<256x512xbf16>, vector<512x128xbf16>, vector<256x128xf32> -> vector<256x128xf32>
    %c0_3 = arith.constant 0 : index
    %c0_4 = arith.constant 0 : index
    %3 = vector.load %arg5[%c0_3, %c0_4] : memref<256x1xf32, #tpu.memory_space<vmem>>, vector<256x1xf32>
    %4 = vector.broadcast %3 : vector<256x1xf32> to vector<256x128xf32>
    %5 = arith.addf %2, %4 : vector<256x128xf32>
    %c9_i32 = arith.constant 9 : i32
    %6 = tpu.dynamic_rotate %5 by %c9_i32 dim 1 : vector<256x128xf32>, i32 -> vector<256x128xf32>
    %c0_5 = arith.constant 0 : index
    %c0_6 = arith.constant 0 : index
    %c0_7 = arith.constant 0 : index
    %7 = vector.load %arg2[%c0_5, %c0_6, %c0_7] : memref<9x1x128xf32, #tpu.memory_space<vmem>>, vector<1x1x128xf32>
    %8 = vector.shape_cast %7 : vector<1x1x128xf32> to vector<1x128xf32>
    %9 = vector.broadcast %8 : vector<1x128xf32> to vector<256x128xf32>
    %10 = arith.mulf %6, %9 : vector<256x128xf32>
    %11 = arith.truncf %10 : vector<256x128xf32> to vector<256x128xbf16>
    %c0_8 = arith.constant 0 : index
    %c0_9 = arith.constant 0 : index
    %12 = vector.load %arg9[%c0_8, %c0_9] : memref<2304x128xbf16, #tpu.memory_space<vmem>>, vector<256x128xbf16>
    tpu.vector_store %arg9[%c0_8, %c0_9], %11 {strides = array<i32>} : memref<2304x128xbf16, #tpu.memory_space<vmem>>, vector<256x128xbf16>,
    %c8_i32 = arith.constant 8 : i32
    %13 = tpu.dynamic_rotate %5 by %c8_i32 dim 1 : vector<256x128xf32>, i32 -> vector<256x128xf32>
    %c1 = arith.constant 1 : index
    %c0_10 = arith.constant 0 : index
    %c0_11 = arith.constant 0 : index
    %14 = vector.load %arg2[%c1, %c0_10, %c0_11] : memref<9x1x128xf32, #tpu.memory_space<vmem>>, vector<1x1x128xf32>
    %15 = vector.shape_cast %14 : vector<1x1x128xf32> to vector<1x128xf32>
    %16 = vector.broadcast %15 : vector<1x128xf32> to vector<256x128xf32>
    %17 = arith.mulf %13, %16 : vector<256x128xf32>
    %18 = arith.truncf %17 : vector<256x128xf32> to vector<256x128xbf16>
    %c256 = arith.constant 256 : index
    %c0_12 = arith.constant 0 : index
    %19 = vector.load %arg9[%c256, %c0_12] : memref<2304x128xbf16, #tpu.memory_space<vmem>>, vector<256x128xbf16>
    tpu.vector_store %arg9[%c256, %c0_12], %18 {strides = array<i32>} : memref<2304x128xbf16, #tpu.memory_space<vmem>>, vector<256x128xbf16>,
    %c7_i32 = arith.constant 7 : i32
    %20 = tpu.dynamic_rotate %5 by %c7_i32 dim 1 : vector<256x128xf32>, i32 -> vector<256x128xf32>
    %c2 = arith.constant 2 : index
    %c0_13 = arith.constant 0 : index
    %c0_14 = arith.constant 0 : index
    %21 = vector.load %arg2[%c2, %c0_13, %c0_14] : memref<9x1x128xf32, #tpu.memory_space<vmem>>, vector<1x1x128xf32>
    %22 = vector.shape_cast %21 : vector<1x1x128xf32> to vector<1x128xf32>
    %23 = vector.broadcast %22 : vector<1x128xf32> to vector<256x128xf32>
    %24 = arith.mulf %20, %23 : vector<256x128xf32>
    %25 = arith.truncf %24 : vector<256x128xf32> to vector<256x128xbf16>
    %c512 = arith.constant 512 : index
    %c0_15 = arith.constant 0 : index
    %26 = vector.load %arg9[%c512, %c0_15] : memref<2304x128xbf16, #tpu.memory_space<vmem>>, vector<256x128xbf16>
    tpu.vector_store %arg9[%c512, %c0_15], %25 {strides = array<i32>} : memref<2304x128xbf16, #tpu.memory_space<vmem>>, vector<256x128xbf16>,
    %c1_i32 = arith.constant 1 : i32
    %27 = tpu.dynamic_rotate %5 by %c1_i32 dim 1 : vector<256x128xf32>, i32 -> vector<256x128xf32>
    %c3 = arith.constant 3 : index
    %c0_16 = arith.constant 0 : index
    %c0_17 = arith.constant 0 : index
    %28 = vector.load %arg2[%c3, %c0_16, %c0_17] : memref<9x1x128xf32, #tpu.memory_space<vmem>>, vector<1x1x128xf32>
    %29 = vector.shape_cast %28 : vector<1x1x128xf32> to vector<1x128xf32>
    %30 = vector.broadcast %29 : vector<1x128xf32> to vector<256x128xf32>
    %31 = arith.mulf %27, %30 : vector<256x128xf32>
    %32 = arith.truncf %31 : vector<256x128xf32> to vector<256x128xbf16>
    %c768 = arith.constant 768 : index
    %c0_18 = arith.constant 0 : index
    %33 = vector.load %arg9[%c768, %c0_18] : memref<2304x128xbf16, #tpu.memory_space<vmem>>, vector<256x128xbf16>
    tpu.vector_store %arg9[%c768, %c0_18], %32 {strides = array<i32>} : memref<2304x128xbf16, #tpu.memory_space<vmem>>, vector<256x128xbf16>,
    %34 = arith.truncf %5 : vector<256x128xf32> to vector<256x128xbf16>
    %c1024 = arith.constant 1024 : index
    %c0_19 = arith.constant 0 : index
    %35 = vector.load %arg9[%c1024, %c0_19] : memref<2304x128xbf16, #tpu.memory_space<vmem>>, vector<256x128xbf16>
    tpu.vector_store %arg9[%c1024, %c0_19], %34 {strides = array<i32>} : memref<2304x128xbf16, #tpu.memory_space<vmem>>, vector<256x128xbf16>,
    %c127_i32 = arith.constant 127 : i32
    %36 = tpu.dynamic_rotate %5 by %c127_i32 dim 1 : vector<256x128xf32>, i32 -> vector<256x128xf32>
    %c5 = arith.constant 5 : index
    %c0_20 = arith.constant 0 : index
    %c0_21 = arith.constant 0 : index
    %37 = vector.load %arg2[%c5, %c0_20, %c0_21] : memref<9x1x128xf32, #tpu.memory_space<vmem>>, vector<1x1x128xf32>
    %38 = vector.shape_cast %37 : vector<1x1x128xf32> to vector<1x128xf32>
    %39 = vector.broadcast %38 : vector<1x128xf32> to vector<256x128xf32>
    %40 = arith.mulf %36, %39 : vector<256x128xf32>
    %41 = arith.truncf %40 : vector<256x128xf32> to vector<256x128xbf16>
    %c1280 = arith.constant 1280 : index
    %c0_22 = arith.constant 0 : index
    %42 = vector.load %arg9[%c1280, %c0_22] : memref<2304x128xbf16, #tpu.memory_space<vmem>>, vector<256x128xbf16>
    tpu.vector_store %arg9[%c1280, %c0_22], %41 {strides = array<i32>} : memref<2304x128xbf16, #tpu.memory_space<vmem>>, vector<256x128xbf16>,
    %c121_i32 = arith.constant 121 : i32
    %43 = tpu.dynamic_rotate %5 by %c121_i32 dim 1 : vector<256x128xf32>, i32 -> vector<256x128xf32>
    %c6 = arith.constant 6 : index
    %c0_23 = arith.constant 0 : index
    %c0_24 = arith.constant 0 : index
    %44 = vector.load %arg2[%c6, %c0_23, %c0_24] : memref<9x1x128xf32, #tpu.memory_space<vmem>>, vector<1x1x128xf32>
    %45 = vector.shape_cast %44 : vector<1x1x128xf32> to vector<1x128xf32>
    %46 = vector.broadcast %45 : vector<1x128xf32> to vector<256x128xf32>
    %47 = arith.mulf %43, %46 : vector<256x128xf32>
    %48 = arith.truncf %47 : vector<256x128xf32> to vector<256x128xbf16>
    %c1536 = arith.constant 1536 : index
    %c0_25 = arith.constant 0 : index
    %49 = vector.load %arg9[%c1536, %c0_25] : memref<2304x128xbf16, #tpu.memory_space<vmem>>, vector<256x128xbf16>
    tpu.vector_store %arg9[%c1536, %c0_25], %48 {strides = array<i32>} : memref<2304x128xbf16, #tpu.memory_space<vmem>>, vector<256x128xbf16>,
    %c120_i32 = arith.constant 120 : i32
    %50 = tpu.dynamic_rotate %5 by %c120_i32 dim 1 : vector<256x128xf32>, i32 -> vector<256x128xf32>
    %c7 = arith.constant 7 : index
    %c0_26 = arith.constant 0 : index
    %c0_27 = arith.constant 0 : index
    %51 = vector.load %arg2[%c7, %c0_26, %c0_27] : memref<9x1x128xf32, #tpu.memory_space<vmem>>, vector<1x1x128xf32>
    %52 = vector.shape_cast %51 : vector<1x1x128xf32> to vector<1x128xf32>
    %53 = vector.broadcast %52 : vector<1x128xf32> to vector<256x128xf32>
    %54 = arith.mulf %50, %53 : vector<256x128xf32>
    %55 = arith.truncf %54 : vector<256x128xf32> to vector<256x128xbf16>
    %c1792 = arith.constant 1792 : index
    %c0_28 = arith.constant 0 : index
    %56 = vector.load %arg9[%c1792, %c0_28] : memref<2304x128xbf16, #tpu.memory_space<vmem>>, vector<256x128xbf16>
    tpu.vector_store %arg9[%c1792, %c0_28], %55 {strides = array<i32>} : memref<2304x128xbf16, #tpu.memory_space<vmem>>, vector<256x128xbf16>,
    %c119_i32 = arith.constant 119 : i32
    %57 = tpu.dynamic_rotate %5 by %c119_i32 dim 1 : vector<256x128xf32>, i32 -> vector<256x128xf32>
    %c8 = arith.constant 8 : index
    %c0_29 = arith.constant 0 : index
    %c0_30 = arith.constant 0 : index
    %58 = vector.load %arg2[%c8, %c0_29, %c0_30] : memref<9x1x128xf32, #tpu.memory_space<vmem>>, vector<1x1x128xf32>
    %59 = vector.shape_cast %58 : vector<1x1x128xf32> to vector<1x128xf32>
    %60 = vector.broadcast %59 : vector<1x128xf32> to vector<256x128xf32>
    %61 = arith.mulf %57, %60 : vector<256x128xf32>
    %62 = arith.truncf %61 : vector<256x128xf32> to vector<256x128xbf16>
    %c2048 = arith.constant 2048 : index
    %c0_31 = arith.constant 0 : index
    %63 = vector.load %arg9[%c2048, %c0_31] : memref<2304x128xbf16, #tpu.memory_space<vmem>>, vector<256x128xbf16>
    tpu.vector_store %arg9[%c2048, %c0_31], %62 {strides = array<i32>} : memref<2304x128xbf16, #tpu.memory_space<vmem>>, vector<256x128xbf16>,
    %c0_32 = arith.constant 0 : index
    %c0_33 = arith.constant 0 : index
    %64 = vector.load %arg6[%c0_32, %c0_33] : memref<512x2304xbf16, #tpu.memory_space<vmem>>, vector<512x2304xbf16>
    %c0_34 = arith.constant 0 : index
    %c0_35 = arith.constant 0 : index
    %65 = vector.load %arg9[%c0_34, %c0_35] : memref<2304x128xbf16, #tpu.memory_space<vmem>>, vector<2304x128xbf16>
    %cst_36 = arith.constant dense<0.000000e+00> : vector<512x128xf32>
    %66 = tpu.matmul %64, %65, %cst_36 {dimension_numbers = #tpu.dot_dimension_numbers<[1], [0], [0], [1], [0, 0, 1, 1], [], []>} : vector<512x2304xbf16>, vector<2304x128xbf16>, vector<512x128xf32> -> vector<512x128xf32>
    %c0_37 = arith.constant 0 : index
    %c0_38 = arith.constant 0 : index
    %67 = vector.load %arg7[%c0_37, %c0_38] : memref<512x1xf32, #tpu.memory_space<vmem>>, vector<512x1xf32>
    %68 = vector.broadcast %67 : vector<512x1xf32> to vector<512x128xf32>
    %69 = arith.addf %66, %68 : vector<512x128xf32>
    %cst_39 = arith.constant 0.000000e+00 : f32
    %70 = vector.broadcast %cst_39 : f32 to vector<512x128xf32>
    %71 = arith.maximumf %69, %70 : vector<512x128xf32>
    %cst_40 = arith.constant dense<0.000000e+00> : vector<128xf32>
    %72 = vector.multi_reduction <add>, %71, %cst_40 [0] : vector<512x128xf32> to vector<128xf32>
    %73 = vector.shape_cast %72 : vector<128xf32> to vector<1x128xf32>
    %74 = arith.extf %0 : vector<512x128xbf16> to vector<512x128xf32>
    %75 = vector.broadcast %73 : vector<1x128xf32> to vector<512x128xf32>
    %76 = arith.mulf %74, %75 : vector<512x128xf32>
    %c0_41 = arith.constant 0 : index
    %c0_42 = arith.constant 0 : index
    %77 = vector.load %arg3[%c0_41, %c0_42] : memref<128x2xf32, #tpu.memory_space<vmem>>, vector<128x2xf32>
    %cst_43 = arith.constant dense<0.000000e+00> : vector<512x2xf32>
    %78 = tpu.matmul %76, %77, %cst_43 {dimension_numbers = #tpu.dot_dimension_numbers<[1], [0], [0], [1], [0, 0, 1, 1], [], []>} : vector<512x128xf32>, vector<128x2xf32>, vector<512x2xf32> -> vector<512x2xf32>
    %c0_44 = arith.constant 0 : index
    %c0_45 = arith.constant 0 : index
    %c0_46 = arith.constant 0 : index
    %79 = vector.load %arg8[%c0_44, %c0_45, %c0_46] : memref<1x512x2xf32, #tpu.memory_space<vmem>>, vector<1x512x2xf32>
    %80 = vector.shape_cast %79 : vector<1x512x2xf32> to vector<512x2xf32>
    %81 = vector.shape_cast %78 : vector<512x2xf32> to vector<1x512x2xf32>
    tpu.vector_store %arg8[%c0_44, %c0_45, %c0_46], %81 {strides = array<i32>} : memref<1x512x2xf32, #tpu.memory_space<vmem>>, vector<1x512x2xf32>,
    return
  }
  func.func @transform_0(%arg0: i32) -> (i32, i32) {
    %c0_i32 = arith.constant 0 : i32
    %c0_i32_0 = arith.constant 0 : i32
    return %c0_i32, %arg0 : i32, i32
  }
  func.func @transform_1(%arg0: i32) -> (i32, i32, i32) {
    %c0_i32 = arith.constant 0 : i32
    %c0_i32_0 = arith.constant 0 : i32
    %c0_i32_1 = arith.constant 0 : i32
    %c0_i32_2 = arith.constant 0 : i32
    return %c0_i32, %c0_i32_0, %c0_i32_1 : i32, i32, i32
  }
  func.func @transform_2(%arg0: i32) -> (i32, i32) {
    %c0_i32 = arith.constant 0 : i32
    %c0_i32_0 = arith.constant 0 : i32
    %c0_i32_1 = arith.constant 0 : i32
    return %c0_i32, %c0_i32_0 : i32, i32
  }
  func.func @transform_3(%arg0: i32) -> (i32, i32) {
    %c0_i32 = arith.constant 0 : i32
    %c0_i32_0 = arith.constant 0 : i32
    %c0_i32_1 = arith.constant 0 : i32
    return %c0_i32, %c0_i32_0 : i32, i32
  }
  func.func @transform_4(%arg0: i32) -> (i32, i32) {
    %c0_i32 = arith.constant 0 : i32
    %c0_i32_0 = arith.constant 0 : i32
    %c0_i32_1 = arith.constant 0 : i32
    return %c0_i32, %c0_i32_0 : i32, i32
  }
  func.func @transform_5(%arg0: i32) -> (i32, i32) {
    %c0_i32 = arith.constant 0 : i32
    %c0_i32_0 = arith.constant 0 : i32
    %c0_i32_1 = arith.constant 0 : i32
    return %c0_i32, %c0_i32_0 : i32, i32
  }
  func.func @transform_6(%arg0: i32) -> (i32, i32) {
    %c0_i32 = arith.constant 0 : i32
    %c0_i32_0 = arith.constant 0 : i32
    %c0_i32_1 = arith.constant 0 : i32
    return %c0_i32, %c0_i32_0 : i32, i32
  }
  func.func @transform_7(%arg0: i32) -> (i32, i32, i32) {
    %c0_i32 = arith.constant 0 : i32
    %c0_i32_0 = arith.constant 0 : i32
    %c0_i32_1 = arith.constant 0 : i32
    return %arg0, %c0_i32, %c0_i32_0 : i32, i32, i32
  }
}

</mosaic_0001>

<llo_original>
// kernel: tpu_custom_call.1
$region0: #{tpu_custom_call.1}
  #allocation0 [shape = 'u32[]', space=smem, size = 0x4, offset = 0x4, fixed_abs, tag = 'smem constant byte address 0x4 - core index']
  #allocation1 [shape = 'u32[72,128]{1,0:T(1,128)}', space=vmem, size = 0x9000, scoped, tag = 'internal scratch']
  #allocation2 [shape = 'bf16[2304,128]{1,0:T(8,128)(2,1)}', space=vmem, size = 0x90000, scoped, tag = 'scratch operand']
  %s0 = inlined_call_operand.hbm [shape: bf16[512,128], index: 0, kind: input, shape index: {}]
  %s1 = inlined_call_operand.hbm [shape: f32[9,1,128], index: 1, kind: input, shape index: {}]
  %s2 = inlined_call_operand.vmem [shape: f32[128,2], index: 2, kind: input, shape index: {}]
  %s3 = inlined_call_operand.hbm [shape: bf16[256,512], index: 3, kind: input, shape index: {}]
  %s4 = inlined_call_operand.vmem [shape: f32[256,1], index: 4, kind: input, shape index: {}]
  %s5 = inlined_call_operand.hbm [shape: bf16[512,2304], index: 5, kind: input, shape index: {}]
  %s6 = inlined_call_operand.vmem [shape: f32[512,1], index: 6, kind: input, shape index: {}]
  %s7 = inlined_call_operand.vmem [shape: f32[1,512,2], index: 7, kind: output, shape index: {}]
  %s8 = sld [smem:[#allocation0]]
  $region54: #{tpu_custom_call.1} parent=0
    _
  %s10 = ssub.s32 1, %s8
  %s11 = scalar_select 0, %s10, %s8
  $region1: #{tpu_custom_call.1} parent=0
    #allocation3 [shape = 'u8[131072]{0}', space=vmem, size = 0x20000, scoped, tag = 'input window, operand 0, single buffered']
    #allocation4 [shape = 's32[1]{0}', space=sflag, size = 0x4, scoped, tag = 'scoped memory for tpu_custom_call.1']
    #allocation5 [shape = 'u8[4608]{0}', space=vmem, size = 0x1400, scoped, tag = 'input window, operand 1, single buffered']
    #allocation6 [shape = 's32[1]{0}', space=sflag, size = 0x4, scoped, tag = 'scoped memory for tpu_custom_call.1']
    #allocation7 [shape = 'u8[262144]{0}', space=vmem, size = 0x40000, scoped, tag = 'input window, operand 3, single buffered']
    #allocation8 [shape = 'u8[2359296]{0}', space=vmem, size = 0x240000, scoped, tag = 'input window, operand 5, single buffered']
    #allocation9 [shape = 's32[1]{0}', space=sflag, size = 0x4, scoped, tag = 'scoped memory for tpu_custom_call.1']
    %12 = vsyncpa [#allocation4], 0
    %13 = vsyncpa [#allocation6], 0
    %14 = vsyncpa [#allocation9], 0
    // Predicated region
    $region2: #{tpu_custom_call.1} parent=1 // pred_check
      _
    $region3: #{tpu_custom_call.1} parent=1 // pred_check_branch
      %16 = sbr.rel (0) target = $region5
    $region4: #{tpu_custom_call.1} parent=1 // pred_region
      %18 = vsyncadd [#allocation4], 0
      %s19 = sshll.u32 %s0, 4
      %s20 = int_to_ptr.hbm [resolvable:$true] %s19
      %s21 = sshll.u32 [#allocation3], 4
      %s22 = int_to_ptr.vmem [resolvable:$true] %s21
      %27 = dma.hbm_to_vmem [thread:$0]  %s20, 4096, %s22, [#allocation4], 64, 64, 4
    $region5: #{tpu_custom_call.1} parent=1 // pred_fallthru
      _
    // Predicated region
    $region6: #{tpu_custom_call.1} parent=1 // pred_check
      _
    $region7: #{tpu_custom_call.1} parent=1 // pred_check_branch
      %29 = sbr.rel (0) target = $region9
    $region8: #{tpu_custom_call.1} parent=1 // pred_region
      %31 = vsyncadd [#allocation6], 0
      %s32 = sshll.u32 %s1, 4
      %s33 = int_to_ptr.hbm [resolvable:$true] %s32
      %s34 = sshll.u32 [#allocation5], 4
      %s35 = int_to_ptr.vmem [resolvable:$true] %s34
      %40 = dma.hbm_to_vmem [thread:$0]  %s33, 144, %s35, [#allocation6], 16, 16, 1
    $region9: #{tpu_custom_call.1} parent=1 // pred_fallthru
      _
    // Predicated region
    $region10: #{tpu_custom_call.1} parent=1 // pred_check
      _
    $region11: #{tpu_custom_call.1} parent=1 // pred_check_branch
      %42 = sbr.rel (0) target = $region13
    $region12: #{tpu_custom_call.1} parent=1 // pred_region
      _
    $region13: #{tpu_custom_call.1} parent=1 // pred_fallthru
      _
    // Predicated region
    $region14: #{tpu_custom_call.1} parent=1 // pred_check
      _
    $region15: #{tpu_custom_call.1} parent=1 // pred_check_branch
      %44 = sbr.rel (0) target = $region17
    $region16: #{tpu_custom_call.1} parent=1 // pred_region
      %46 = vsyncadd [#allocation6], 0
      %s47 = sshll.u32 %s3, 4
      %s48 = int_to_ptr.hbm [resolvable:$true] %s47
      %s49 = sshll.u32 [#allocation7], 4
      %s50 = int_to_ptr.vmem [resolvable:$true] %s49
      %55 = dma.hbm_to_vmem [thread:$0]  %s48, 8192, %s50, [#allocation6], 256, 256, 16
    $region17: #{tpu_custom_call.1} parent=1 // pred_fallthru
      _
    // Predicated region
    $region18: #{tpu_custom_call.1} parent=1 // pred_check
      _
    $region19: #{tpu_custom_call.1} parent=1 // pred_check_branch
      %57 = sbr.rel (0) target = $region21
    $region20: #{tpu_custom_call.1} parent=1 // pred_region
      _
    $region21: #{tpu_custom_call.1} parent=1 // pred_fallthru
      _
    // Predicated region
    $region22: #{tpu_custom_call.1} parent=1 // pred_check
      _
    $region23: #{tpu_custom_call.1} parent=1 // pred_check_branch
      %59 = sbr.rel (0) target = $region25
    $region24: #{tpu_custom_call.1} parent=1 // pred_region
      %61 = vsyncadd [#allocation9], 0
      %s62 = sshll.u32 %s5, 4
      %s63 = int_to_ptr.hbm [resolvable:$true] %s62
      %s64 = sshll.u32 [#allocation8], 4
      %s65 = int_to_ptr.vmem [resolvable:$true] %s64
      %70 = dma.hbm_to_vmem [thread:$0]  %s63, 73728, %s65, [#allocation9], 1152, 1152, 72
    $region25: #{tpu_custom_call.1} parent=1 // pred_fallthru
      _
    // Predicated region
    $region26: #{tpu_custom_call.1} parent=1 // pred_check
      _
    $region27: #{tpu_custom_call.1} parent=1 // pred_check_branch
      %72 = sbr.rel (0) target = $region29
    $region28: #{tpu_custom_call.1} parent=1 // pred_region
      _
    $region29: #{tpu_custom_call.1} parent=1 // pred_fallthru
      _
    // Predicated region
    $region30: #{tpu_custom_call.1} parent=1 // pred_check
      _
    $region31: #{tpu_custom_call.1} parent=1 // pred_check_branch
      %74 = sbr.rel (0) target = $region33
    $region32: #{tpu_custom_call.1} parent=1 // pred_region
      %76 = dma.done [#allocation4], 4096
    $region33: #{tpu_custom_call.1} parent=1 // pred_fallthru
      _
    // Predicated region
    $region34: #{tpu_custom_call.1} parent=1 // pred_check
      _
    $region35: #{tpu_custom_call.1} parent=1 // pred_check_branch
      %78 = sbr.rel (0) target = $region37
    $region36: #{tpu_custom_call.1} parent=1 // pred_region
      %80 = dma.done [#allocation6], 144
    $region37: #{tpu_custom_call.1} parent=1 // pred_fallthru
      _
    // Predicated region
    $region38: #{tpu_custom_call.1} parent=1 // pred_check
      _
    $region39: #{tpu_custom_call.1} parent=1 // pred_check_branch
      %82 = sbr.rel (0) target = $region41
    $region40: #{tpu_custom_call.1} parent=1 // pred_region
      %84 = dma.done [#allocation6], 8192
    $region41: #{tpu_custom_call.1} parent=1 // pred_fallthru
      _
    // Predicated region
    $region42: #{tpu_custom_call.1} parent=1 // pred_check
      _
    $region43: #{tpu_custom_call.1} parent=1 // pred_check_branch
      %86 = sbr.rel (0) target = $region45
    $region44: #{tpu_custom_call.1} parent=1 // pred_region
      %88 = dma.done [#allocation9], 73728
    $region45: #{tpu_custom_call.1} parent=1 // pred_fallthru
      _
    %v89 = vld [vmem:[#allocation3] sm:$0xf]
    %v90 = vld [vmem:[#allocation3 + $0x4] sm:$0xf]
    %v91 = vld [vmem:[#allocation3 + $0x8] sm:$0xf]
    %v92 = vld [vmem:[#allocation3 + $0xc] sm:$0xf]
    %v93 = vld [vmem:[#allocation3 + $0x10] sm:$0xf]
    %v94 = vld [vmem:[#allocation3 + $0x14] sm:$0xf]
    %v95 = vld [vmem:[#allocation3 + $0x18] sm:$0xf]
    %v96 = vld [vmem:[#allocation3 + $0x1c] sm:$0xf]
    %v97 = vld [vmem:[#allocation3 + $0x20] sm:$0xf]
    %v98 = vld [vmem:[#allocation3 + $0x24] sm:$0xf]
    %v99 = vld [vmem:[#allocation3 + $0x28] sm:$0xf]
    %v100 = vld [vmem:[#allocation3 + $0x2c] sm:$0xf]
    %v101 = vld [vmem:[#allocation3 + $0x30] sm:$0xf]
    %v102 = vld [vmem:[#allocation3 + $0x34] sm:$0xf]
    %v103 = vld [vmem:[#allocation3 + $0x38] sm:$0xf]
    %v104 = vld [vmem:[#allocation3 + $0x3c] sm:$0xf]
    %v105 = vld [vmem:[#allocation3 + $0x40] sm:$0xf]
    %v106 = vld [vmem:[#allocation3 + $0x44] sm:$0xf]
    %v107 = vld [vmem:[#allocation3 + $0x48] sm:$0xf]
    %v108 = vld [vmem:[#allocation3 + $0x4c] sm:$0xf]
    %v109 = vld [vmem:[#allocation3 + $0x50] sm:$0xf]
    %v110 = vld [vmem:[#allocation3 + $0x54] sm:$0xf]
    %v111 = vld [vmem:[#allocation3 + $0x58] sm:$0xf]
    %v112 = vld [vmem:[#allocation3 + $0x5c] sm:$0xf]
    %v113 = vld [vmem:[#allocation3 + $0x60] sm:$0xf]
    %v114 = vld [vmem:[#allocation3 + $0x64] sm:$0xf]
    %v115 = vld [vmem:[#allocation3 + $0x68] sm:$0xf]
    %v116 = vld [vmem:[#allocation3 + $0x6c] sm:$0xf]
    %v117 = vld [vmem:[#allocation3 + $0x70] sm:$0xf]
    %v118 = vld [vmem:[#allocation3 + $0x74] sm:$0xf]
    %v119 = vld [vmem:[#allocation3 + $0x78] sm:$0xf]
    %v120 = vld [vmem:[#allocation3 + $0x7c] sm:$0xf]
    %v121 = vld [vmem:[#allocation3 + $0x80] sm:$0xf]
    %v122 = vld [vmem:[#allocation3 + $0x84] sm:$0xf]
    %v123 = vld [vmem:[#allocation3 + $0x88] sm:$0xf]
    %v124 = vld [vmem:[#allocation3 + $0x8c] sm:$0xf]
    %v125 = vld [vmem:[#allocation3 + $0x90] sm:$0xf]
    %v126 = vld [vmem:[#allocation3 + $0x94] sm:$0xf]
    %v127 = vld [vmem:[#allocation3 + $0x98] sm:$0xf]
    %v128 = vld [vmem:[#allocation3 + $0x9c] sm:$0xf]
    %v129 = vld [vmem:[#allocation3 + $0xa0] sm:$0xf]
    %v130 = vld [vmem:[#allocation3 + $0xa4] sm:$0xf]
    %v131 = vld [vmem:[#allocation3 + $0xa8] sm:$0xf]
    %v132 = vld [vmem:[#allocation3 + $0xac] sm:$0xf]
    %v133 = vld [vmem:[#allocation3 + $0xb0] sm:$0xf]
    %v134 = vld [vmem:[#allocation3 + $0xb4] sm:$0xf]
    %v135 = vld [vmem:[#allocation3 + $0xb8] sm:$0xf]
    %v136 = vld [vmem:[#allocation3 + $0xbc] sm:$0xf]
    %v137 = vld [vmem:[#allocation3 + $0xc0] sm:$0xf]
    %v138 = vld [vmem:[#allocation3 + $0xc4] sm:$0xf]
    %v139 = vld [vmem:[#allocation3 + $0xc8] sm:$0xf]
    %v140 = vld [vmem:[#allocation3 + $0xcc] sm:$0xf]
    %v141 = vld [vmem:[#allocation3 + $0xd0] sm:$0xf]
    %v142 = vld [vmem:[#allocation3 + $0xd4] sm:$0xf]
    %v143 = vld [vmem:[#allocation3 + $0xd8] sm:$0xf]
    %v144 = vld [vmem:[#allocation3 + $0xdc] sm:$0xf]
    %v145 = vld [vmem:[#allocation3 + $0xe0] sm:$0xf]
    %v146 = vld [vmem:[#allocation3 + $0xe4] sm:$0xf]
    %v147 = vld [vmem:[#allocation3 + $0xe8] sm:$0xf]
    %v148 = vld [vmem:[#allocation3 + $0xec] sm:$0xf]
    %v149 = vld [vmem:[#allocation3 + $0xf0] sm:$0xf]
    %v150 = vld [vmem:[#allocation3 + $0xf4] sm:$0xf]
    %v151 = vld [vmem:[#allocation3 + $0xf8] sm:$0xf]
    %v152 = vld [vmem:[#allocation3 + $0xfc] sm:$0xf]
    %v153 = vld [vmem:[#allocation7] sm:$0xff]
    %v154 = vld [vmem:[#allocation7 + $0x8] sm:$0xff]
    %v155 = vld [vmem:[#allocation7 + $0x10] sm:$0xff]
    %v156 = vld [vmem:[#allocation7 + $0x18] sm:$0xff]
    %v157 = vld [vmem:[#allocation7 + $0x20] sm:$0xff]
    %v158 = vld [vmem:[#allocation7 + $0x28] sm:$0xff]
    %v159 = vld [vmem:[#allocation7 + $0x30] sm:$0xff]
    %v160 = vld [vmem:[#allocation7 + $0x38] sm:$0xff]
    %v161 = vld [vmem:[#allocation7 + $0x40] sm:$0xff]
    %v162 = vld [vmem:[#allocation7 + $0x48] sm:$0xff]
    %v163 = vld [vmem:[#allocation7 + $0x50] sm:$0xff]
    %v164 = vld [vmem:[#allocation7 + $0x58] sm:$0xff]
    %v165 = vld [vmem:[#allocation7 + $0x60] sm:$0xff]
    %v166 = vld [vmem:[#allocation7 + $0x68] sm:$0xff]
    %v167 = vld [vmem:[#allocation7 + $0x70] sm:$0xff]
    %v168 = vld [vmem:[#allocation7 + $0x78] sm:$0xff]
    %v169 = vld [vmem:[#allocation7 + $0x80] sm:$0xff]
    %v170 = vld [vmem:[#allocation7 + $0x88] sm:$0xff]
    %v171 = vld [vmem:[#allocation7 + $0x90] sm:$0xff]
    %v172 = vld [vmem:[#allocation7 + $0x98] sm:$0xff]
    %v173 = vld [vmem:[#allocation7 + $0xa0] sm:$0xff]
    %v174 = vld [vmem:[#allocation7 + $0xa8] sm:$0xff]
    %v175 = vld [vmem:[#allocation7 + $0xb0] sm:$0xff]
    %v176 = vld [vmem:[#allocation7 + $0xb8] sm:$0xff]
    %v177 = vld [vmem:[#allocation7 + $0xc0] sm:$0xff]
    %v178 = vld [vmem:[#allocation7 + $0xc8] sm:$0xff]
    %v179 = vld [vmem:[#allocation7 + $0xd0] sm:$0xff]
    %v180 = vld [vmem:[#allocation7 + $0xd8] sm:$0xff]
    %v181 = vld [vmem:[#allocation7 + $0xe0] sm:$0xff]
    %v182 = vld [vmem:[#allocation7 + $0xe8] sm:$0xff]
    %v183 = vld [vmem:[#allocation7 + $0xf0] sm:$0xff]
    %v184 = vld [vmem:[#allocation7 + $0xf8] sm:$0xff]
    %v185 = vld [vmem:[#allocation7 + $0x100] sm:$0xff]
    %v186 = vld [vmem:[#allocation7 + $0x108] sm:$0xff]
    %v187 = vld [vmem:[#allocation7 + $0x110] sm:$0xff]
    %v188 = vld [vmem:[#allocation7 + $0x118] sm:$0xff]
    %v189 = vld [vmem:[#allocation7 + $0x120] sm:$0xff]
    %v190 = vld [vmem:[#allocation7 + $0x128] sm:$0xff]
    %v191 = vld [vmem:[#allocation7 + $0x130] sm:$0xff]
    %v192 = vld [vmem:[#allocation7 + $0x138] sm:$0xff]
    %v193 = vld [vmem:[#allocation7 + $0x140] sm:$0xff]
    %v194 = vld [vmem:[#allocation7 + $0x148] sm:$0xff]
    %v195 = vld [vmem:[#allocation7 + $0x150] sm:$0xff]
    %v196 = vld [vmem:[#allocation7 + $0x158] sm:$0xff]
    %v197 = vld [vmem:[#allocation7 + $0x160] sm:$0xff]
    %v198 = vld [vmem:[#allocation7 + $0x168] sm:$0xff]
    %v199 = vld [vmem:[#allocation7 + $0x170] sm:$0xff]
    %v200 = vld [vmem:[#allocation7 + $0x178] sm:$0xff]
    %v201 = vld [vmem:[#allocation7 + $0x180] sm:$0xff]
    %v202 = vld [vmem:[#allocation7 + $0x188] sm:$0xff]
    %v203 = vld [vmem:[#allocation7 + $0x190] sm:$0xff]
    %v204 = vld [vmem:[#allocation7 + $0x198] sm:$0xff]
    %v205 = vld [vmem:[#allocation7 + $0x1a0] sm:$0xff]
    %v206 = vld [vmem:[#allocation7 + $0x1a8] sm:$0xff]
    %v207 = vld [vmem:[#allocation7 + $0x1b0] sm:$0xff]
    %v208 = vld [vmem:[#allocation7 + $0x1b8] sm:$0xff]
    %v209 = vld [vmem:[#allocation7 + $0x1c0] sm:$0xff]
    %v210 = vld [vmem:[#allocation7 + $0x1c8] sm:$0xff]
    %v211 = vld [vmem:[#allocation7 + $0x1d0] sm:$0xff]
    %v212 = vld [vmem:[#allocation7 + $0x1d8] sm:$0xff]
    %v213 = vld [vmem:[#allocation7 + $0x1e0] sm:$0xff]
    %v214 = vld [vmem:[#allocation7 + $0x1e8] sm:$0xff]
    %v215 = vld [vmem:[#allocation7 + $0x1f0] sm:$0xff]
    %v216 = vld [vmem:[#allocation7 + $0x1f8] sm:$0xff]
    %v217 = vld [vmem:[%s4] sm:$0xff]
    %v218 = vld [vmem:[%s4 + $0x8] sm:$0xff]
    %v219 = vld [vmem:[%s4 + $0x10] sm:$0xff]
    %v220 = vld [vmem:[%s4 + $0x18] sm:$0xff]
    %v221 = vld [vmem:[%s4 + $0x20] sm:$0xff]
    %v222 = vld [vmem:[%s4 + $0x28] sm:$0xff]
    %v223 = vld [vmem:[%s4 + $0x30] sm:$0xff]
    %v224 = vld [vmem:[%s4 + $0x38] sm:$0xff]
    %v225 = vld [vmem:[%s4 + $0x40] sm:$0xff]
    %v226 = vld [vmem:[%s4 + $0x48] sm:$0xff]
    %v227 = vld [vmem:[%s4 + $0x50] sm:$0xff]
    %v228 = vld [vmem:[%s4 + $0x58] sm:$0xff]
    %v229 = vld [vmem:[%s4 + $0x60] sm:$0xff]
    %v230 = vld [vmem:[%s4 + $0x68] sm:$0xff]
    %v231 = vld [vmem:[%s4 + $0x70] sm:$0xff]
    %v232 = vld [vmem:[%s4 + $0x78] sm:$0xff]
    %v233 = vld [vmem:[%s4 + $0x80] sm:$0xff]
    %v234 = vld [vmem:[%s4 + $0x88] sm:$0xff]
    %v235 = vld [vmem:[%s4 + $0x90] sm:$0xff]
    %v236 = vld [vmem:[%s4 + $0x98] sm:$0xff]
    %v237 = vld [vmem:[%s4 + $0xa0] sm:$0xff]
    %v238 = vld [vmem:[%s4 + $0xa8] sm:$0xff]
    %v239 = vld [vmem:[%s4 + $0xb0] sm:$0xff]
    %v240 = vld [vmem:[%s4 + $0xb8] sm:$0xff]
    %v241 = vld [vmem:[%s4 + $0xc0] sm:$0xff]
    %v242 = vld [vmem:[%s4 + $0xc8] sm:$0xff]
    %v243 = vld [vmem:[%s4 + $0xd0] sm:$0xff]
    %v244 = vld [vmem:[%s4 + $0xd8] sm:$0xff]
    %v245 = vld [vmem:[%s4 + $0xe0] sm:$0xff]
    %v246 = vld [vmem:[%s4 + $0xe8] sm:$0xff]
    %v247 = vld [vmem:[%s4 + $0xf0] sm:$0xff]
    %v248 = vld [vmem:[%s4 + $0xf8] sm:$0xff]
    %250 = vset.pattern.permute.xlu0 0
    %251 = vperm.xlu0 %250, %v217
    %v252 = vpop.permute.xlu0 %251
    %255 = vset.pattern.permute.xlu0 0
    %256 = vperm.xlu0 %255, %v218
    %v257 = vpop.permute.xlu0 %256
    %260 = vset.pattern.permute.xlu0 0
    %261 = vperm.xlu0 %260, %v219
    %v262 = vpop.permute.xlu0 %261
    %265 = vset.pattern.permute.xlu0 0
    %266 = vperm.xlu0 %265, %v220
    %v267 = vpop.permute.xlu0 %266
    %270 = vset.pattern.permute.xlu0 0
    %271 = vperm.xlu0 %270, %v221
    %v272 = vpop.permute.xlu0 %271
    %275 = vset.pattern.permute.xlu0 0
    %276 = vperm.xlu0 %275, %v222
    %v277 = vpop.permute.xlu0 %276
    %280 = vset.pattern.permute.xlu0 0
    %281 = vperm.xlu0 %280, %v223
    %v282 = vpop.permute.xlu0 %281
    %285 = vset.pattern.permute.xlu0 0
    %286 = vperm.xlu0 %285, %v224
    %v287 = vpop.permute.xlu0 %286
    %290 = vset.pattern.permute.xlu0 0
    %291 = vperm.xlu0 %290, %v225
    %v292 = vpop.permute.xlu0 %291
    %295 = vset.pattern.permute.xlu0 0
    %296 = vperm.xlu0 %295, %v226
    %v297 = vpop.permute.xlu0 %296
    %300 = vset.pattern.permute.xlu0 0
    %301 = vperm.xlu0 %300, %v227
    %v302 = vpop.permute.xlu0 %301
    %305 = vset.pattern.permute.xlu0 0
    %306 = vperm.xlu0 %305, %v228
    %v307 = vpop.permute.xlu0 %306
    %310 = vset.pattern.permute.xlu0 0
    %311 = vperm.xlu0 %310, %v229
    %v312 = vpop.permute.xlu0 %311
    %315 = vset.pattern.permute.xlu0 0
    %316 = vperm.xlu0 %315, %v230
    %v317 = vpop.permute.xlu0 %316
    %320 = vset.pattern.permute.xlu0 0
    %321 = vperm.xlu0 %320, %v231
    %v322 = vpop.permute.xlu0 %321
    %325 = vset.pattern.permute.xlu0 0
    %326 = vperm.xlu0 %325, %v232
    %v327 = vpop.permute.xlu0 %326
    %330 = vset.pattern.permute.xlu0 0
    %331 = vperm.xlu0 %330, %v233
    %v332 = vpop.permute.xlu0 %331
    %335 = vset.pattern.permute.xlu0 0
    %336 = vperm.xlu0 %335, %v234
    %v337 = vpop.permute.xlu0 %336
    %340 = vset.pattern.permute.xlu0 0
    %341 = vperm.xlu0 %340, %v235
    %v342 = vpop.permute.xlu0 %341
    %345 = vset.pattern.permute.xlu0 0
    %346 = vperm.xlu0 %345, %v236
    %v347 = vpop.permute.xlu0 %346
    %350 = vset.pattern.permute.xlu0 0
    %351 = vperm.xlu0 %350, %v237
    %v352 = vpop.permute.xlu0 %351
    %355 = vset.pattern.permute.xlu0 0
    %356 = vperm.xlu0 %355, %v238
    %v357 = vpop.permute.xlu0 %356
    %360 = vset.pattern.permute.xlu0 0
    %361 = vperm.xlu0 %360, %v239
    %v362 = vpop.permute.xlu0 %361
    %365 = vset.pattern.permute.xlu0 0
    %366 = vperm.xlu0 %365, %v240
    %v367 = vpop.permute.xlu0 %366
    %370 = vset.pattern.permute.xlu0 0
    %371 = vperm.xlu0 %370, %v241
    %v372 = vpop.permute.xlu0 %371
    %375 = vset.pattern.permute.xlu0 0
    %376 = vperm.xlu0 %375, %v242
    %v377 = vpop.permute.xlu0 %376
    %380 = vset.pattern.permute.xlu0 0
    %381 = vperm.xlu0 %380, %v243
    %v382 = vpop.permute.xlu0 %381
    %385 = vset.pattern.permute.xlu0 0
    %386 = vperm.xlu0 %385, %v244
    %v387 = vpop.permute.xlu0 %386
    %390 = vset.pattern.permute.xlu0 0
    %391 = vperm.xlu0 %390, %v245
    %v392 = vpop.permute.xlu0 %391
    %395 = vset.pattern.permute.xlu0 0
    %396 = vperm.xlu0 %395, %v246
    %v397 = vpop.permute.xlu0 %396
    %400 = vset.pattern.permute.xlu0 0
    %401 = vperm.xlu0 %400, %v247
    %v402 = vpop.permute.xlu0 %401
    %405 = vset.pattern.permute.xlu0 0
    %406 = vperm.xlu0 %405, %v248
    %v407 = vpop.permute.xlu0 %406
    %v473 = vunpack.c.l.b16 %v153
    %v474 = vunpack.c.h.b16 %v153
    %v475 = vunpack.c.l.b16 %v154
    %v476 = vunpack.c.h.b16 %v154
    %v477 = vunpack.c.l.b16 %v155
    %v478 = vunpack.c.h.b16 %v155
    %v479 = vunpack.c.l.b16 %v156
    %v480 = vunpack.c.h.b16 %v156
    %v481 = vunpack.c.l.b16 %v157
    %v482 = vunpack.c.h.b16 %v157
    %v483 = vunpack.c.l.b16 %v158
    %v484 = vunpack.c.h.b16 %v158
    %v485 = vunpack.c.l.b16 %v159
    %v486 = vunpack.c.h.b16 %v159
    %v487 = vunpack.c.l.b16 %v160
    %v488 = vunpack.c.h.b16 %v160
    %v489 = vunpack.c.l.b16 %v161
    %v490 = vunpack.c.h.b16 %v161
    %v491 = vunpack.c.l.b16 %v162
    %v492 = vunpack.c.h.b16 %v162
    %v493 = vunpack.c.l.b16 %v163
    %v494 = vunpack.c.h.b16 %v163
    %v495 = vunpack.c.l.b16 %v164
    %v496 = vunpack.c.h.b16 %v164
    %v497 = vunpack.c.l.b16 %v165
    %v498 = vunpack.c.h.b16 %v165
    %v499 = vunpack.c.l.b16 %v166
    %v500 = vunpack.c.h.b16 %v166
    %v501 = vunpack.c.l.b16 %v167
    %v502 = vunpack.c.h.b16 %v167
    %v503 = vunpack.c.l.b16 %v168
    %v504 = vunpack.c.h.b16 %v168
    %v505 = vunpack.c.l.b16 %v169
    %v506 = vunpack.c.h.b16 %v169
    %v507 = vunpack.c.l.b16 %v170
    %v508 = vunpack.c.h.b16 %v170
    %v509 = vunpack.c.l.b16 %v171
    %v510 = vunpack.c.h.b16 %v171
    %v511 = vunpack.c.l.b16 %v172
    %v512 = vunpack.c.h.b16 %v172
    %v513 = vunpack.c.l.b16 %v173
    %v514 = vunpack.c.h.b16 %v173
    %v515 = vunpack.c.l.b16 %v174
    %v516 = vunpack.c.h.b16 %v174
    %v517 = vunpack.c.l.b16 %v175
    %v518 = vunpack.c.h.b16 %v175
    %v519 = vunpack.c.l.b16 %v176
    %v520 = vunpack.c.h.b16 %v176
    %v521 = vunpack.c.l.b16 %v177
    %v522 = vunpack.c.h.b16 %v177
    %v523 = vunpack.c.l.b16 %v178
    %v524 = vunpack.c.h.b16 %v178
    %v525 = vunpack.c.l.b16 %v179
    %v526 = vunpack.c.h.b16 %v179
    %v527 = vunpack.c.l.b16 %v180
    %v528 = vunpack.c.h.b16 %v180
    %v529 = vunpack.c.l.b16 %v181
    %v530 = vunpack.c.h.b16 %v181
    %v531 = vunpack.c.l.b16 %v182
    %v532 = vunpack.c.h.b16 %v182
    %v533 = vunpack.c.l.b16 %v183
    %v534 = vunpack.c.h.b16 %v183
    %v535 = vunpack.c.l.b16 %v184
    %v536 = vunpack.c.h.b16 %v184
    %v537 = vunpack.c.l.b16 %v185
    %v538 = vunpack.c.h.b16 %v185
    %v539 = vunpack.c.l.b16 %v186
    %v540 = vunpack.c.h.b16 %v186
    %v541 = vunpack.c.l.b16 %v187
    %v542 = vunpack.c.h.b16 %v187
    %v543 = vunpack.c.l.b16 %v188
    %v544 = vunpack.c.h.b16 %v188
    %v545 = vunpack.c.l.b16 %v189
    %v546 = vunpack.c.h.b16 %v189
    %v547 = vunpack.c.l.b16 %v190
    %v548 = vunpack.c.h.b16 %v190
    %v549 = vunpack.c.l.b16 %v191
    %v550 = vunpack.c.h.b16 %v191
    %v551 = vunpack.c.l.b16 %v192
    %v552 = vunpack.c.h.b16 %v192
    %v553 = vunpack.c.l.b16 %v193
    %v554 = vunpack.c.h.b16 %v193
    %v555 = vunpack.c.l.b16 %v194
    %v556 = vunpack.c.h.b16 %v194
    %v557 = vunpack.c.l.b16 %v195
    %v558 = vunpack.c.h.b16 %v195
    %v559 = vunpack.c.l.b16 %v196
    %v560 = vunpack.c.h.b16 %v196
    %v561 = vunpack.c.l.b16 %v197
    %v562 = vunpack.c.h.b16 %v197
    %v563 = vunpack.c.l.b16 %v198
    %v564 = vunpack.c.h.b16 %v198
    %v565 = vunpack.c.l.b16 %v199
    %v566 = vunpack.c.h.b16 %v199
    %v567 = vunpack.c.l.b16 %v200
    %v568 = vunpack.c.h.b16 %v200
    %v569 = vunpack.c.l.b16 %v201
    %v570 = vunpack.c.h.b16 %v201
    %v571 = vunpack.c.l.b16 %v202
    %v572 = vunpack.c.h.b16 %v202
    %v573 = vunpack.c.l.b16 %v203
    %v574 = vunpack.c.h.b16 %v203
    %v575 = vunpack.c.l.b16 %v204
    %v576 = vunpack.c.h.b16 %v204
    %v577 = vunpack.c.l.b16 %v205
    %v578 = vunpack.c.h.b16 %v205
    %v579 = vunpack.c.l.b16 %v206
    %v580 = vunpack.c.h.b16 %v206
    %v581 = vunpack.c.l.b16 %v207
    %v582 = vunpack.c.h.b16 %v207
    %v583 = vunpack.c.l.b16 %v208
    %v584 = vunpack.c.h.b16 %v208
    %v585 = vunpack.c.l.b16 %v209
    %v586 = vunpack.c.h.b16 %v209
    %v587 = vunpack.c.l.b16 %v210
    %v588 = vunpack.c.h.b16 %v210
    %v589 = vunpack.c.l.b16 %v211
    %v590 = vunpack.c.h.b16 %v211
    %v591 = vunpack.c.l.b16 %v212
    %v592 = vunpack.c.h.b16 %v212
    %v593 = vunpack.c.l.b16 %v213
    %v594 = vunpack.c.h.b16 %v213
    %v595 = vunpack.c.l.b16 %v214
    %v596 = vunpack.c.h.b16 %v214
    %v597 = vunpack.c.l.b16 %v215
    %v598 = vunpack.c.h.b16 %v215
    %v599 = vunpack.c.l.b16 %v216
    %v600 = vunpack.c.h.b16 %v216
    %v601 = vpack.c.b16 %v477, %v473
    %v602 = vpack.c.b16 %v478, %v474
    %v603 = vpack.c.b16 %v479, %v475
    %v604 = vpack.c.b16 %v480, %v476
    %v605 = vpack.c.b16 %v485, %v481
    %v606 = vpack.c.b16 %v486, %v482
    %v607 = vpack.c.b16 %v487, %v483
    %v608 = vpack.c.b16 %v488, %v484
    %v609 = vpack.c.b16 %v493, %v489
    %v610 = vpack.c.b16 %v494, %v490
    %v611 = vpack.c.b16 %v495, %v491
    %v612 = vpack.c.b16 %v496, %v492
    %v613 = vpack.c.b16 %v501, %v497
    %v614 = vpack.c.b16 %v502, %v498
    %v615 = vpack.c.b16 %v503, %v499
    %v616 = vpack.c.b16 %v504, %v500
    %v617 = vpack.c.b16 %v509, %v505
    %v618 = vpack.c.b16 %v510, %v506
    %v619 = vpack.c.b16 %v511, %v507
    %v620 = vpack.c.b16 %v512, %v508
    %v621 = vpack.c.b16 %v517, %v513
    %v622 = vpack.c.b16 %v518, %v514
    %v623 = vpack.c.b16 %v519, %v515
    %v624 = vpack.c.b16 %v520, %v516
    %v625 = vpack.c.b16 %v525, %v521
    %v626 = vpack.c.b16 %v526, %v522
    %v627 = vpack.c.b16 %v527, %v523
    %v628 = vpack.c.b16 %v528, %v524
    %v629 = vpack.c.b16 %v533, %v529
    %v630 = vpack.c.b16 %v534, %v530
    %v631 = vpack.c.b16 %v535, %v531
    %v632 = vpack.c.b16 %v536, %v532
    %v633 = vpack.c.b16 %v541, %v537
    %v634 = vpack.c.b16 %v542, %v538
    %v635 = vpack.c.b16 %v543, %v539
    %v636 = vpack.c.b16 %v544, %v540
    %v637 = vpack.c.b16 %v549, %v545
    %v638 = vpack.c.b16 %v550, %v546
    %v639 = vpack.c.b16 %v551, %v547
    %v640 = vpack.c.b16 %v552, %v548
    %v641 = vpack.c.b16 %v557, %v553
    %v642 = vpack.c.b16 %v558, %v554
    %v643 = vpack.c.b16 %v559, %v555
    %v644 = vpack.c.b16 %v560, %v556
    %v645 = vpack.c.b16 %v565, %v561
    %v646 = vpack.c.b16 %v566, %v562
    %v647 = vpack.c.b16 %v567, %v563
    %v648 = vpack.c.b16 %v568, %v564
    %v649 = vpack.c.b16 %v573, %v569
    %v650 = vpack.c.b16 %v574, %v570
    %v651 = vpack.c.b16 %v575, %v571
    %v652 = vpack.c.b16 %v576, %v572
    %v653 = vpack.c.b16 %v581, %v577
    %v654 = vpack.c.b16 %v582, %v578
    %v655 = vpack.c.b16 %v583, %v579
    %v656 = vpack.c.b16 %v584, %v580
    %v657 = vpack.c.b16 %v589, %v585
    %v658 = vpack.c.b16 %v590, %v586
    %v659 = vpack.c.b16 %v591, %v587
    %v660 = vpack.c.b16 %v592, %v588
    %v661 = vpack.c.b16 %v597, %v593
    %v662 = vpack.c.b16 %v598, %v594
    %v663 = vpack.c.b16 %v599, %v595
    %v664 = vpack.c.b16 %v600, %v596
    %v793 = vunpack.c.l.b16 %v89
    %v794 = vunpack.c.l.b16 %v90
    %v795 = vunpack.c.l.b16 %v91
    %v796 = vunpack.c.l.b16 %v92
    %v797 = vunpack.c.l.b16 %v93
    %v798 = vunpack.c.l.b16 %v94
    %v799 = vunpack.c.l.b16 %v95
    %v800 = vunpack.c.l.b16 %v96
    %v801 = vunpack.c.l.b16 %v97
    %v802 = vunpack.c.l.b16 %v98
    %v803 = vunpack.c.l.b16 %v99
    %v804 = vunpack.c.l.b16 %v100
    %v805 = vunpack.c.l.b16 %v101
    %v806 = vunpack.c.l.b16 %v102
    %v807 = vunpack.c.l.b16 %v103
    %v808 = vunpack.c.l.b16 %v104
    %v809 = vunpack.c.l.b16 %v105
    %v810 = vunpack.c.l.b16 %v106
    %v811 = vunpack.c.l.b16 %v107
    %v812 = vunpack.c.l.b16 %v108
    %v813 = vunpack.c.l.b16 %v109
    %v814 = vunpack.c.l.b16 %v110
    %v815 = vunpack.c.l.b16 %v111
    %v816 = vunpack.c.l.b16 %v112
    %v817 = vunpack.c.l.b16 %v113
    %v818 = vunpack.c.l.b16 %v114
    %v819 = vunpack.c.l.b16 %v115
    %v820 = vunpack.c.l.b16 %v116
    %v821 = vunpack.c.l.b16 %v117
    %v822 = vunpack.c.l.b16 %v118
    %v823 = vunpack.c.l.b16 %v119
    %v824 = vunpack.c.l.b16 %v120
    %v825 = vunpack.c.l.b16 %v121
    %v826 = vunpack.c.l.b16 %v122
    %v827 = vunpack.c.l.b16 %v123
    %v828 = vunpack.c.l.b16 %v124
    %v829 = vunpack.c.l.b16 %v125
    %v830 = vunpack.c.l.b16 %v126
    %v831 = vunpack.c.l.b16 %v127
    %v832 = vunpack.c.l.b16 %v128
    %v833 = vunpack.c.l.b16 %v129
    %v834 = vunpack.c.l.b16 %v130
    %v835 = vunpack.c.l.b16 %v131
    %v836 = vunpack.c.l.b16 %v132
    %v837 = vunpack.c.l.b16 %v133
    %v838 = vunpack.c.l.b16 %v134
    %v839 = vunpack.c.l.b16 %v135
    %v840 = vunpack.c.l.b16 %v136
    %v841 = vunpack.c.l.b16 %v137
    %v842 = vunpack.c.l.b16 %v138
    %v843 = vunpack.c.l.b16 %v139
    %v844 = vunpack.c.l.b16 %v140
    %v845 = vunpack.c.l.b16 %v141
    %v846 = vunpack.c.l.b16 %v142
    %v847 = vunpack.c.l.b16 %v143
    %v848 = vunpack.c.l.b16 %v144
    %v849 = vunpack.c.l.b16 %v145
    %v850 = vunpack.c.l.b16 %v146
    %v851 = vunpack.c.l.b16 %v147
    %v852 = vunpack.c.l.b16 %v148
    %v853 = vunpack.c.l.b16 %v149
    %v854 = vunpack.c.l.b16 %v150
    %v855 = vunpack.c.l.b16 %v151
    %v856 = vunpack.c.l.b16 %v152
    %v857 = vpack.c.b16 %v794, %v793
    %v858 = vpack.c.b16 %v796, %v795
    %v859 = vpack.c.b16 %v798, %v797
    %v860 = vpack.c.b16 %v800, %v799
    %v861 = vpack.c.b16 %v802, %v801
    %v862 = vpack.c.b16 %v804, %v803
    %v863 = vpack.c.b16 %v806, %v805
    %v864 = vpack.c.b16 %v808, %v807
    %v865 = vpack.c.b16 %v810, %v809
    %v866 = vpack.c.b16 %v812, %v811
    %v867 = vpack.c.b16 %v814, %v813
    %v868 = vpack.c.b16 %v816, %v815
    %v869 = vpack.c.b16 %v818, %v817
    %v870 = vpack.c.b16 %v820, %v819
    %v871 = vpack.c.b16 %v822, %v821
    %v872 = vpack.c.b16 %v824, %v823
    %v873 = vpack.c.b16 %v826, %v825
    %v874 = vpack.c.b16 %v828, %v827
    %v875 = vpack.c.b16 %v830, %v829
    %v876 = vpack.c.b16 %v832, %v831
    %v877 = vpack.c.b16 %v834, %v833
    %v878 = vpack.c.b16 %v836, %v835
    %v879 = vpack.c.b16 %v838, %v837
    %v880 = vpack.c.b16 %v840, %v839
    %v881 = vpack.c.b16 %v842, %v841
    %v882 = vpack.c.b16 %v844, %v843
    %v883 = vpack.c.b16 %v846, %v845
    %v884 = vpack.c.b16 %v848, %v847
    %v885 = vpack.c.b16 %v850, %v849
    %v886 = vpack.c.b16 %v852, %v851
    %v887 = vpack.c.b16 %v854, %v853
    %v888 = vpack.c.b16 %v856, %v855
    %921 = vmatpush.bf16.msra.mxu0 %v864
    %922 = vmatpush.bf16.msra.mxu0 %v863
    %923 = vmatpush.bf16.msra.mxu0 %v862
    %924 = vmatpush.bf16.msra.mxu0 %v861
    %925 = vmatpush.bf16.msra.mxu0 %v860
    %926 = vmatpush.bf16.msra.mxu0 %v859
    %927 = vmatpush.bf16.msra.mxu0 %v858
    %928 = vmatpush.bf16.msra.mxu0 %v857
    %929 = vmatmul.bf16.gmra.mxu0 %v601
    %v930 = vpop.f32.mrf.mxu0
    %v931 = vadd.f32 %v252, %v930
    %v932 = vpop.f32.mrf.mxu0
    %v933 = vadd.f32 %v257, %v932
    %934 = vmatmul.bf16.gmra.mxu0 %v605
    %v935 = vpop.f32.mrf.mxu0
    %v936 = vadd.f32 %v262, %v935
    %v937 = vpop.f32.mrf.mxu0
    %v938 = vadd.f32 %v267, %v937
    %939 = vmatmul.bf16.gmra.mxu0 %v609
    %v940 = vpop.f32.mrf.mxu0
    %v941 = vadd.f32 %v272, %v940
    %v942 = vpop.f32.mrf.mxu0
    %v943 = vadd.f32 %v277, %v942
    %944 = vmatmul.bf16.gmra.mxu0 %v613
    %v945 = vpop.f32.mrf.mxu0
    %v946 = vadd.f32 %v282, %v945
    %v947 = vpop.f32.mrf.mxu0
    %v948 = vadd.f32 %v287, %v947
    %949 = vmatmul.bf16.gmra.mxu0 %v617
    %v950 = vpop.f32.mrf.mxu0
    %v951 = vadd.f32 %v292, %v950
    %v952 = vpop.f32.mrf.mxu0
    %v953 = vadd.f32 %v297, %v952
    %954 = vmatmul.bf16.gmra.mxu0 %v621
    %v955 = vpop.f32.mrf.mxu0
    %v956 = vadd.f32 %v302, %v955
    %v957 = vpop.f32.mrf.mxu0
    %v958 = vadd.f32 %v307, %v957
    %959 = vmatmul.bf16.gmra.mxu0 %v625
    %v960 = vpop.f32.mrf.mxu0
    %v961 = vadd.f32 %v312, %v960
    %v962 = vpop.f32.mrf.mxu0
    %v963 = vadd.f32 %v317, %v962
    %964 = vmatmul.bf16.gmra.mxu0 %v629
    %v965 = vpop.f32.mrf.mxu0
    %v966 = vadd.f32 %v322, %v965
    %v967 = vpop.f32.mrf.mxu0
    %v968 = vadd.f32 %v327, %v967
    %969 = vmatmul.bf16.gmra.mxu0 %v633
    %v970 = vpop.f32.mrf.mxu0
    %v971 = vadd.f32 %v332, %v970
    %v972 = vpop.f32.mrf.mxu0
    %v973 = vadd.f32 %v337, %v972
    %974 = vmatmul.bf16.gmra.mxu0 %v637
    %v975 = vpop.f32.mrf.mxu0
    %v976 = vadd.f32 %v342, %v975
    %v977 = vpop.f32.mrf.mxu0
    %v978 = vadd.f32 %v347, %v977
    %979 = vmatmul.bf16.gmra.mxu0 %v641
    %v980 = vpop.f32.mrf.mxu0
    %v981 = vadd.f32 %v352, %v980
    %v982 = vpop.f32.mrf.mxu0
    %v983 = vadd.f32 %v357, %v982
    %984 = vmatmul.bf16.gmra.mxu0 %v645
    %v985 = vpop.f32.mrf.mxu0
    %v986 = vadd.f32 %v362, %v985
    %v987 = vpop.f32.mrf.mxu0
    %v988 = vadd.f32 %v367, %v987
    %989 = vmatmul.bf16.gmra.mxu0 %v649
    %v990 = vpop.f32.mrf.mxu0
    %v991 = vadd.f32 %v372, %v990
    %v992 = vpop.f32.mrf.mxu0
    %v993 = vadd.f32 %v377, %v992
    %994 = vmatmul.bf16.gmra.mxu0 %v653
    %v995 = vpop.f32.mrf.mxu0
    %v996 = vadd.f32 %v382, %v995
    %v997 = vpop.f32.mrf.mxu0
    %v998 = vadd.f32 %v387, %v997
    %999 = vmatmul.bf16.gmra.mxu0 %v657
    %v1000 = vpop.f32.mrf.mxu0
    %v1001 = vadd.f32 %v392, %v1000
    %v1002 = vpop.f32.mrf.mxu0
    %v1003 = vadd.f32 %v397, %v1002
    %1004 = vmatmul.bf16.gmra.mxu0 %v661
    %v1005 = vpop.f32.mrf.mxu0
    %v1006 = vadd.f32 %v402, %v1005
    %v1007 = vpop.f32.mrf.mxu0
    %v1008 = vadd.f32 %v407, %v1007
    %1009 = vdwg.mxu0
    %1010 = vmatpush.bf16.msra.mxu0 %v872
    %1011 = vmatpush.bf16.msra.mxu0 %v871
    %1012 = vmatpush.bf16.msra.mxu0 %v870
    %1013 = vmatpush.bf16.msra.mxu0 %v869
    %1014 = vmatpush.bf16.msra.mxu0 %v868
    %1015 = vmatpush.bf16.msra.mxu0 %v867
    %1016 = vmatpush.bf16.msra.mxu0 %v866
    %1017 = vmatpush.bf16.msra.mxu0 %v865
    %1018 = vmatmul.bf16.gmra.mxu0 %v602
    %v1019 = vpop.f32.mrf.mxu0
    %v1020 = vadd.f32 %v931, %v1019
    %v1021 = vpop.f32.mrf.mxu0
    %v1022 = vadd.f32 %v933, %v1021
    %1023 = vmatmul.bf16.gmra.mxu0 %v606
    %v1024 = vpop.f32.mrf.mxu0
    %v1025 = vadd.f32 %v936, %v1024
    %v1026 = vpop.f32.mrf.mxu0
    %v1027 = vadd.f32 %v938, %v1026
    %1028 = vmatmul.bf16.gmra.mxu0 %v610
    %v1029 = vpop.f32.mrf.mxu0
    %v1030 = vadd.f32 %v941, %v1029
    %v1031 = vpop.f32.mrf.mxu0
    %v1032 = vadd.f32 %v943, %v1031
    %1033 = vmatmul.bf16.gmra.mxu0 %v614
    %v1034 = vpop.f32.mrf.mxu0
    %v1035 = vadd.f32 %v946, %v1034
    %v1036 = vpop.f32.mrf.mxu0
    %v1037 = vadd.f32 %v948, %v1036
    %1038 = vmatmul.bf16.gmra.mxu0 %v618
    %v1039 = vpop.f32.mrf.mxu0
    %v1040 = vadd.f32 %v951, %v1039
    %v1041 = vpop.f32.mrf.mxu0
    %v1042 = vadd.f32 %v953, %v1041
    %1043 = vmatmul.bf16.gmra.mxu0 %v622
    %v1044 = vpop.f32.mrf.mxu0
    %v1045 = vadd.f32 %v956, %v1044
    %v1046 = vpop.f32.mrf.mxu0
    %v1047 = vadd.f32 %v958, %v1046
    %1048 = vmatmul.bf16.gmra.mxu0 %v626
    %v1049 = vpop.f32.mrf.mxu0
    %v1050 = vadd.f32 %v961, %v1049
    %v1051 = vpop.f32.mrf.mxu0
    %v1052 = vadd.f32 %v963, %v1051
    %1053 = vmatmul.bf16.gmra.mxu0 %v630
    %v1054 = vpop.f32.mrf.mxu0
    %v1055 = vadd.f32 %v966, %v1054
    %v1056 = vpop.f32.mrf.mxu0
    %v1057 = vadd.f32 %v968, %v1056
    %1058 = vmatmul.bf16.gmra.mxu0 %v634
    %v1059 = vpop.f32.mrf.mxu0
    %v1060 = vadd.f32 %v971, %v1059
    %v1061 = vpop.f32.mrf.mxu0
    %v1062 = vadd.f32 %v973, %v1061
    %1063 = vmatmul.bf16.gmra.mxu0 %v638
    %v1064 = vpop.f32.mrf.mxu0
    %v1065 = vadd.f32 %v976, %v1064
    %v1066 = vpop.f32.mrf.mxu0
    %v1067 = vadd.f32 %v978, %v1066
    %1068 = vmatmul.bf16.gmra.mxu0 %v642
    %v1069 = vpop.f32.mrf.mxu0
    %v1070 = vadd.f32 %v981, %v1069
    %v1071 = vpop.f32.mrf.mxu0
    %v1072 = vadd.f32 %v983, %v1071
    %1073 = vmatmul.bf16.gmra.mxu0 %v646
    %v1074 = vpop.f32.mrf.mxu0
    %v1075 = vadd.f32 %v986, %v1074
    %v1076 = vpop.f32.mrf.mxu0
    %v1077 = vadd.f32 %v988, %v1076
    %1078 = vmatmul.bf16.gmra.mxu0 %v650
    %v1079 = vpop.f32.mrf.mxu0
    %v1080 = vadd.f32 %v991, %v1079
    %v1081 = vpop.f32.mrf.mxu0
    %v1082 = vadd.f32 %v993, %v1081
    %1083 = vmatmul.bf16.gmra.mxu0 %v654
    %v1084 = vpop.f32.mrf.mxu0
    %v1085 = vadd.f32 %v996, %v1084
    %v1086 = vpop.f32.mrf.mxu0
    %v1087 = vadd.f32 %v998, %v1086
    %1088 = vmatmul.bf16.gmra.mxu0 %v658
    %v1089 = vpop.f32.mrf.mxu0
    %v1090 = vadd.f32 %v1001, %v1089
    %v1091 = vpop.f32.mrf.mxu0
    %v1092 = vadd.f32 %v1003, %v1091
    %1093 = vmatmul.bf16.gmra.mxu0 %v662
    %v1094 = vpop.f32.mrf.mxu0
    %v1095 = vadd.f32 %v1006, %v1094
    %v1096 = vpop.f32.mrf.mxu0
    %v1097 = vadd.f32 %v1008, %v1096
    %1098 = vdwg.mxu0
    %1099 = vmatpush.bf16.msra.mxu0 %v880
    %1100 = vmatpush.bf16.msra.mxu0 %v879
    %1101 = vmatpush.bf16.msra.mxu0 %v878
    %1102 = vmatpush.bf16.msra.mxu0 %v877
    %1103 = vmatpush.bf16.msra.mxu0 %v876
    %1104 = vmatpush.bf16.msra.mxu0 %v875
    %1105 = vmatpush.bf16.msra.mxu0 %v874
    %1106 = vmatpush.bf16.msra.mxu0 %v873
    %1107 = vmatmul.bf16.gmra.mxu0 %v603
    %v1108 = vpop.f32.mrf.mxu0
    %v1109 = vadd.f32 %v1020, %v1108
    %v1110 = vpop.f32.mrf.mxu0
    %v1111 = vadd.f32 %v1022, %v1110
    %1112 = vmatmul.bf16.gmra.mxu0 %v607
    %v1113 = vpop.f32.mrf.mxu0
    %v1114 = vadd.f32 %v1025, %v1113
    %v1115 = vpop.f32.mrf.mxu0
    %v1116 = vadd.f32 %v1027, %v1115
    %1117 = vmatmul.bf16.gmra.mxu0 %v611
    %v1118 = vpop.f32.mrf.mxu0
    %v1119 = vadd.f32 %v1030, %v1118
    %v1120 = vpop.f32.mrf.mxu0
    %v1121 = vadd.f32 %v1032, %v1120
    %1122 = vmatmul.bf16.gmra.mxu0 %v615
    %v1123 = vpop.f32.mrf.mxu0
    %v1124 = vadd.f32 %v1035, %v1123
    %v1125 = vpop.f32.mrf.mxu0
    %v1126 = vadd.f32 %v1037, %v1125
    %1127 = vmatmul.bf16.gmra.mxu0 %v619
    %v1128 = vpop.f32.mrf.mxu0
    %v1129 = vadd.f32 %v1040, %v1128
    %v1130 = vpop.f32.mrf.mxu0
    %v1131 = vadd.f32 %v1042, %v1130
    %1132 = vmatmul.bf16.gmra.mxu0 %v623
    %v1133 = vpop.f32.mrf.mxu0
    %v1134 = vadd.f32 %v1045, %v1133
    %v1135 = vpop.f32.mrf.mxu0
    %v1136 = vadd.f32 %v1047, %v1135
    %1137 = vmatmul.bf16.gmra.mxu0 %v627
    %v1138 = vpop.f32.mrf.mxu0
    %v1139 = vadd.f32 %v1050, %v1138
    %v1140 = vpop.f32.mrf.mxu0
    %v1141 = vadd.f32 %v1052, %v1140
    %1142 = vmatmul.bf16.gmra.mxu0 %v631
    %v1143 = vpop.f32.mrf.mxu0
    %v1144 = vadd.f32 %v1055, %v1143
    %v1145 = vpop.f32.mrf.mxu0
    %v1146 = vadd.f32 %v1057, %v1145
    %1147 = vmatmul.bf16.gmra.mxu0 %v635
    %v1148 = vpop.f32.mrf.mxu0
    %v1149 = vadd.f32 %v1060, %v1148
    %v1150 = vpop.f32.mrf.mxu0
    %v1151 = vadd.f32 %v1062, %v1150
    %1152 = vmatmul.bf16.gmra.mxu0 %v639
    %v1153 = vpop.f32.mrf.mxu0
    %v1154 = vadd.f32 %v1065, %v1153
    %v1155 = vpop.f32.mrf.mxu0
    %v1156 = vadd.f32 %v1067, %v1155
    %1157 = vmatmul.bf16.gmra.mxu0 %v643
    %v1158 = vpop.f32.mrf.mxu0
    %v1159 = vadd.f32 %v1070, %v1158
    %v1160 = vpop.f32.mrf.mxu0
    %v1161 = vadd.f32 %v1072, %v1160
    %1162 = vmatmul.bf16.gmra.mxu0 %v647
    %v1163 = vpop.f32.mrf.mxu0
    %v1164 = vadd.f32 %v1075, %v1163
    %v1165 = vpop.f32.mrf.mxu0
    %v1166 = vadd.f32 %v1077, %v1165
    %1167 = vmatmul.bf16.gmra.mxu0 %v651
    %v1168 = vpop.f32.mrf.mxu0
    %v1169 = vadd.f32 %v1080, %v1168
    %v1170 = vpop.f32.mrf.mxu0
    %v1171 = vadd.f32 %v1082, %v1170
    %1172 = vmatmul.bf16.gmra.mxu0 %v655
    %v1173 = vpop.f32.mrf.mxu0
    %v1174 = vadd.f32 %v1085, %v1173
    %v1175 = vpop.f32.mrf.mxu0
    %v1176 = vadd.f32 %v1087, %v1175
    %1177 = vmatmul.bf16.gmra.mxu0 %v659
    %v1178 = vpop.f32.mrf.mxu0
    %v1179 = vadd.f32 %v1090, %v1178
    %v1180 = vpop.f32.mrf.mxu0
    %v1181 = vadd.f32 %v1092, %v1180
    %1182 = vmatmul.bf16.gmra.mxu0 %v663
    %v1183 = vpop.f32.mrf.mxu0
    %v1184 = vadd.f32 %v1095, %v1183
    %v1185 = vpop.f32.mrf.mxu0
    %v1186 = vadd.f32 %v1097, %v1185
    %1187 = vdwg.mxu0
    %1188 = vmatpush.bf16.msra.mxu0 %v888
    %1189 = vmatpush.bf16.msra.mxu0 %v887
    %1190 = vmatpush.bf16.msra.mxu0 %v886
    %1191 = vmatpush.bf16.msra.mxu0 %v885
    %1192 = vmatpush.bf16.msra.mxu0 %v884
    %1193 = vmatpush.bf16.msra.mxu0 %v883
    %1194 = vmatpush.bf16.msra.mxu0 %v882
    %1195 = vmatpush.bf16.msra.mxu0 %v881
    %1196 = vmatmul.bf16.gmra.mxu0 %v604
    %v1197 = vpop.f32.mrf.mxu0
    %v1198 = vadd.f32 %v1109, %v1197
    %v1199 = vpop.f32.mrf.mxu0
    %v1200 = vadd.f32 %v1111, %v1199
    %1201 = vmatmul.bf16.gmra.mxu0 %v608
    %v1202 = vpop.f32.mrf.mxu0
    %v1203 = vadd.f32 %v1114, %v1202
    %v1204 = vpop.f32.mrf.mxu0
    %v1205 = vadd.f32 %v1116, %v1204
    %1206 = vmatmul.bf16.gmra.mxu0 %v612
    %v1207 = vpop.f32.mrf.mxu0
    %v1208 = vadd.f32 %v1119, %v1207
    %v1209 = vpop.f32.mrf.mxu0
    %v1210 = vadd.f32 %v1121, %v1209
    %1211 = vmatmul.bf16.gmra.mxu0 %v616
    %v1212 = vpop.f32.mrf.mxu0
    %v1213 = vadd.f32 %v1124, %v1212
    %v1214 = vpop.f32.mrf.mxu0
    %v1215 = vadd.f32 %v1126, %v1214
    %1216 = vmatmul.bf16.gmra.mxu0 %v620
    %v1217 = vpop.f32.mrf.mxu0
    %v1218 = vadd.f32 %v1129, %v1217
    %v1219 = vpop.f32.mrf.mxu0
    %v1220 = vadd.f32 %v1131, %v1219
    %1221 = vmatmul.bf16.gmra.mxu0 %v624
    %v1222 = vpop.f32.mrf.mxu0
    %v1223 = vadd.f32 %v1134, %v1222
    %v1224 = vpop.f32.mrf.mxu0
    %v1225 = vadd.f32 %v1136, %v1224
    %1226 = vmatmul.bf16.gmra.mxu0 %v628
    %v1227 = vpop.f32.mrf.mxu0
    %v1228 = vadd.f32 %v1139, %v1227
    %v1229 = vpop.f32.mrf.mxu0
    %v1230 = vadd.f32 %v1141, %v1229
    %1231 = vmatmul.bf16.gmra.mxu0 %v632
    %v1232 = vpop.f32.mrf.mxu0
    %v1233 = vadd.f32 %v1144, %v1232
    %v1234 = vpop.f32.mrf.mxu0
    %v1235 = vadd.f32 %v1146, %v1234
    %1236 = vmatmul.bf16.gmra.mxu0 %v636
    %v1237 = vpop.f32.mrf.mxu0
    %v1238 = vadd.f32 %v1149, %v1237
    %v1239 = vpop.f32.mrf.mxu0
    %v1240 = vadd.f32 %v1151, %v1239
    %1241 = vmatmul.bf16.gmra.mxu0 %v640
    %v1242 = vpop.f32.mrf.mxu0
    %v1243 = vadd.f32 %v1154, %v1242
    %v1244 = vpop.f32.mrf.mxu0
    %v1245 = vadd.f32 %v1156, %v1244
    %1246 = vmatmul.bf16.gmra.mxu0 %v644
    %v1247 = vpop.f32.mrf.mxu0
    %v1248 = vadd.f32 %v1159, %v1247
    %v1249 = vpop.f32.mrf.mxu0
    %v1250 = vadd.f32 %v1161, %v1249
    %1251 = vmatmul.bf16.gmra.mxu0 %v648
    %v1252 = vpop.f32.mrf.mxu0
    %v1253 = vadd.f32 %v1164, %v1252
    %v1254 = vpop.f32.mrf.mxu0
    %v1255 = vadd.f32 %v1166, %v1254
    %1256 = vmatmul.bf16.gmra.mxu0 %v652
    %v1257 = vpop.f32.mrf.mxu0
    %v1258 = vadd.f32 %v1169, %v1257
    %v1259 = vpop.f32.mrf.mxu0
    %v1260 = vadd.f32 %v1171, %v1259
    %1261 = vmatmul.bf16.gmra.mxu0 %v656
    %v1262 = vpop.f32.mrf.mxu0
    %v1263 = vadd.f32 %v1174, %v1262
    %v1264 = vpop.f32.mrf.mxu0
    %v1265 = vadd.f32 %v1176, %v1264
    %1266 = vmatmul.bf16.gmra.mxu0 %v660
    %v1267 = vpop.f32.mrf.mxu0
    %v1268 = vadd.f32 %v1179, %v1267
    %v1269 = vpop.f32.mrf.mxu0
    %v1270 = vadd.f32 %v1181, %v1269
    %1271 = vmatmul.bf16.gmra.mxu0 %v664
    %v1272 = vpop.f32.mrf.mxu0
    %v1273 = vadd.f32 %v1184, %v1272
    %v1274 = vpop.f32.mrf.mxu0
    %v1275 = vadd.f32 %v1186, %v1274
    %1276 = vdwg.mxu0
    %1277 = vrot.lane.b32.xlu0 %v1198, 9
    %v1278 = vpop.permute.xlu0 %1277
    %1279 = vrot.lane.b32.xlu0 %v1200, 9
    %v1280 = vpop.permute.xlu0 %1279
    %1281 = vrot.lane.b32.xlu0 %v1203, 9
    %v1282 = vpop.permute.xlu0 %1281
    %1283 = vrot.lane.b32.xlu0 %v1205, 9
    %v1284 = vpop.permute.xlu0 %1283
    %1285 = vrot.lane.b32.xlu0 %v1208, 9
    %v1286 = vpop.permute.xlu0 %1285
    %1287 = vrot.lane.b32.xlu0 %v1210, 9
    %v1288 = vpop.permute.xlu0 %1287
    %1289 = vrot.lane.b32.xlu0 %v1213, 9
    %v1290 = vpop.permute.xlu0 %1289
    %1291 = vrot.lane.b32.xlu0 %v1215, 9
    %v1292 = vpop.permute.xlu0 %1291
    %1293 = vrot.lane.b32.xlu0 %v1218, 9
    %v1294 = vpop.permute.xlu0 %1293
    %1295 = vrot.lane.b32.xlu0 %v1220, 9
    %v1296 = vpop.permute.xlu0 %1295
    %1297 = vrot.lane.b32.xlu0 %v1223, 9
    %v1298 = vpop.permute.xlu0 %1297
    %1299 = vrot.lane.b32.xlu0 %v1225, 9
    %v1300 = vpop.permute.xlu0 %1299
    %1301 = vrot.lane.b32.xlu0 %v1228, 9
    %v1302 = vpop.permute.xlu0 %1301
    %1303 = vrot.lane.b32.xlu0 %v1230, 9
    %v1304 = vpop.permute.xlu0 %1303
    %1305 = vrot.lane.b32.xlu0 %v1233, 9
    %v1306 = vpop.permute.xlu0 %1305
    %1307 = vrot.lane.b32.xlu0 %v1235, 9
    %v1308 = vpop.permute.xlu0 %1307
    %1309 = vrot.lane.b32.xlu0 %v1238, 9
    %v1310 = vpop.permute.xlu0 %1309
    %1311 = vrot.lane.b32.xlu0 %v1240, 9
    %v1312 = vpop.permute.xlu0 %1311
    %1313 = vrot.lane.b32.xlu0 %v1243, 9
    %v1314 = vpop.permute.xlu0 %1313
    %1315 = vrot.lane.b32.xlu0 %v1245, 9
    %v1316 = vpop.permute.xlu0 %1315
    %1317 = vrot.lane.b32.xlu0 %v1248, 9
    %v1318 = vpop.permute.xlu0 %1317
    %1319 = vrot.lane.b32.xlu0 %v1250, 9
    %v1320 = vpop.permute.xlu0 %1319
    %1321 = vrot.lane.b32.xlu0 %v1253, 9
    %v1322 = vpop.permute.xlu0 %1321
    %1323 = vrot.lane.b32.xlu0 %v1255, 9
    %v1324 = vpop.permute.xlu0 %1323
    %1325 = vrot.lane.b32.xlu0 %v1258, 9
    %v1326 = vpop.permute.xlu0 %1325
    %1327 = vrot.lane.b32.xlu0 %v1260, 9
    %v1328 = vpop.permute.xlu0 %1327
    %1329 = vrot.lane.b32.xlu0 %v1263, 9
    %v1330 = vpop.permute.xlu0 %1329
    %1331 = vrot.lane.b32.xlu0 %v1265, 9
    %v1332 = vpop.permute.xlu0 %1331
    %1333 = vrot.lane.b32.xlu0 %v1268, 9
    %v1334 = vpop.permute.xlu0 %1333
    %1335 = vrot.lane.b32.xlu0 %v1270, 9
    %v1336 = vpop.permute.xlu0 %1335
    %1337 = vrot.lane.b32.xlu0 %v1273, 9
    %v1338 = vpop.permute.xlu0 %1337
    %1339 = vrot.lane.b32.xlu0 %v1275, 9
    %v1340 = vpop.permute.xlu0 %1339
    %v1341 = vld [vmem:[#allocation5] sm:$0x1]
    %v1343 = vperm.slane %v1341, 0
    %v1345 = vmul.f32 %v1278, %v1343
    %v1346 = vmul.f32 %v1280, %v1343
    %v1347 = vmul.f32 %v1282, %v1343
    %v1348 = vmul.f32 %v1284, %v1343
    %v1349 = vmul.f32 %v1286, %v1343
    %v1350 = vmul.f32 %v1288, %v1343
    %v1351 = vmul.f32 %v1290, %v1343
    %v1352 = vmul.f32 %v1292, %v1343
    %v1353 = vmul.f32 %v1294, %v1343
    %v1354 = vmul.f32 %v1296, %v1343
    %v1355 = vmul.f32 %v1298, %v1343
    %v1356 = vmul.f32 %v1300, %v1343
    %v1357 = vmul.f32 %v1302, %v1343
    %v1358 = vmul.f32 %v1304, %v1343
    %v1359 = vmul.f32 %v1306, %v1343
    %v1360 = vmul.f32 %v1308, %v1343
    %v1361 = vmul.f32 %v1310, %v1343
    %v1362 = vmul.f32 %v1312, %v1343
    %v1363 = vmul.f32 %v1314, %v1343
    %v1364 = vmul.f32 %v1316, %v1343
    %v1365 = vmul.f32 %v1318, %v1343
    %v1366 = vmul.f32 %v1320, %v1343
    %v1367 = vmul.f32 %v1322, %v1343
    %v1368 = vmul.f32 %v1324, %v1343
    %v1369 = vmul.f32 %v1326, %v1343
    %v1370 = vmul.f32 %v1328, %v1343
    %v1371 = vmul.f32 %v1330, %v1343
    %v1372 = vmul.f32 %v1332, %v1343
    %v1373 = vmul.f32 %v1334, %v1343
    %v1374 = vmul.f32 %v1336, %v1343
    %v1375 = vmul.f32 %v1338, %v1343
    %v1376 = vmul.f32 %v1340, %v1343
    %v1377 = vpack.c.bf16 %v1345, %v1345
    %v1378 = vpack.c.bf16 %v1346, %v1346
    %v1379 = vpack.c.bf16 %v1347, %v1347
    %v1380 = vpack.c.bf16 %v1348, %v1348
    %v1381 = vpack.c.bf16 %v1349, %v1349
    %v1382 = vpack.c.bf16 %v1350, %v1350
    %v1383 = vpack.c.bf16 %v1351, %v1351
    %v1384 = vpack.c.bf16 %v1352, %v1352
    %v1385 = vpack.c.bf16 %v1353, %v1353
    %v1386 = vpack.c.bf16 %v1354, %v1354
    %v1387 = vpack.c.bf16 %v1355, %v1355
    %v1388 = vpack.c.bf16 %v1356, %v1356
    %v1389 = vpack.c.bf16 %v1357, %v1357
    %v1390 = vpack.c.bf16 %v1358, %v1358
    %v1391 = vpack.c.bf16 %v1359, %v1359
    %v1392 = vpack.c.bf16 %v1360, %v1360
    %v1393 = vpack.c.bf16 %v1361, %v1361
    %v1394 = vpack.c.bf16 %v1362, %v1362
    %v1395 = vpack.c.bf16 %v1363, %v1363
    %v1396 = vpack.c.bf16 %v1364, %v1364
    %v1397 = vpack.c.bf16 %v1365, %v1365
    %v1398 = vpack.c.bf16 %v1366, %v1366
    %v1399 = vpack.c.bf16 %v1367, %v1367
    %v1400 = vpack.c.bf16 %v1368, %v1368
    %v1401 = vpack.c.bf16 %v1369, %v1369
    %v1402 = vpack.c.bf16 %v1370, %v1370
    %v1403 = vpack.c.bf16 %v1371, %v1371
    %v1404 = vpack.c.bf16 %v1372, %v1372
    %v1405 = vpack.c.bf16 %v1373, %v1373
    %v1406 = vpack.c.bf16 %v1374, %v1374
    %v1407 = vpack.c.bf16 %v1375, %v1375
    %v1408 = vpack.c.bf16 %v1376, %v1376
    %1409 = vst [vmem:[#allocation2] sm:$0xf] %v1377
    %1410 = vst [vmem:[#allocation2 + $0x4] sm:$0xf] %v1378
    %1411 = vst [vmem:[#allocation2 + $0x8] sm:$0xf] %v1379
    %1412 = vst [vmem:[#allocation2 + $0xc] sm:$0xf] %v1380
    %1413 = vst [vmem:[#allocation2 + $0x10] sm:$0xf] %v1381
    %1414 = vst [vmem:[#allocation2 + $0x14] sm:$0xf] %v1382
    %1415 = vst [vmem:[#allocation2 + $0x18] sm:$0xf] %v1383
    %1416 = vst [vmem:[#allocation2 + $0x1c] sm:$0xf] %v1384
    %1417 = vst [vmem:[#allocation2 + $0x20] sm:$0xf] %v1385
    %1418 = vst [vmem:[#allocation2 + $0x24] sm:$0xf] %v1386
    %1419 = vst [vmem:[#allocation2 + $0x28] sm:$0xf] %v1387
    %1420 = vst [vmem:[#allocation2 + $0x2c] sm:$0xf] %v1388
    %1421 = vst [vmem:[#allocation2 + $0x30] sm:$0xf] %v1389
    %1422 = vst [vmem:[#allocation2 + $0x34] sm:$0xf] %v1390
    %1423 = vst [vmem:[#allocation2 + $0x38] sm:$0xf] %v1391
    %1424 = vst [vmem:[#allocation2 + $0x3c] sm:$0xf] %v1392
    %1425 = vst [vmem:[#allocation2 + $0x40] sm:$0xf] %v1393
    %1426 = vst [vmem:[#allocation2 + $0x44] sm:$0xf] %v1394
    %1427 = vst [vmem:[#allocation2 + $0x48] sm:$0xf] %v1395
    %1428 = vst [vmem:[#allocation2 + $0x4c] sm:$0xf] %v1396
    %1429 = vst [vmem:[#allocation2 + $0x50] sm:$0xf] %v1397
    %1430 = vst [vmem:[#allocation2 + $0x54] sm:$0xf] %v1398
    %1431 = vst [vmem:[#allocation2 + $0x58] sm:$0xf] %v1399
    %1432 = vst [vmem:[#allocation2 + $0x5c] sm:$0xf] %v1400
    %1433 = vst [vmem:[#allocation2 + $0x60] sm:$0xf] %v1401
    %1434 = vst [vmem:[#allocation2 + $0x64] sm:$0xf] %v1402
    %1435 = vst [vmem:[#allocation2 + $0x68] sm:$0xf] %v1403
    %1436 = vst [vmem:[#allocation2 + $0x6c] sm:$0xf] %v1404
    %1437 = vst [vmem:[#allocation2 + $0x70] sm:$0xf] %v1405
    %1438 = vst [vmem:[#allocation2 + $0x74] sm:$0xf] %v1406
    %1439 = vst [vmem:[#allocation2 + $0x78] sm:$0xf] %v1407
    %1440 = vst [vmem:[#allocation2 + $0x7c] sm:$0xf] %v1408
    %1441 = vrot.lane.b32.xlu0 %v1198, 8
    %v1442 = vpop.permute.xlu0 %1441
    %1443 = vrot.lane.b32.xlu0 %v1200, 8
    %v1444 = vpop.permute.xlu0 %1443
    %1445 = vrot.lane.b32.xlu0 %v1203, 8
    %v1446 = vpop.permute.xlu0 %1445
    %1447 = vrot.lane.b32.xlu0 %v1205, 8
    %v1448 = vpop.permute.xlu0 %1447
    %1449 = vrot.lane.b32.xlu0 %v1208, 8
    %v1450 = vpop.permute.xlu0 %1449
    %1451 = vrot.lane.b32.xlu0 %v1210, 8
    %v1452 = vpop.permute.xlu0 %1451
    %1453 = vrot.lane.b32.xlu0 %v1213, 8
    %v1454 = vpop.permute.xlu0 %1453
    %1455 = vrot.lane.b32.xlu0 %v1215, 8
    %v1456 = vpop.permute.xlu0 %1455
    %1457 = vrot.lane.b32.xlu0 %v1218, 8
    %v1458 = vpop.permute.xlu0 %1457
    %1459 = vrot.lane.b32.xlu0 %v1220, 8
    %v1460 = vpop.permute.xlu0 %1459
    %1461 = vrot.lane.b32.xlu0 %v1223, 8
    %v1462 = vpop.permute.xlu0 %1461
    %1463 = vrot.lane.b32.xlu0 %v1225, 8
    %v1464 = vpop.permute.xlu0 %1463
    %1465 = vrot.lane.b32.xlu0 %v1228, 8
    %v1466 = vpop.permute.xlu0 %1465
    %1467 = vrot.lane.b32.xlu0 %v1230, 8
    %v1468 = vpop.permute.xlu0 %1467
    %1469 = vrot.lane.b32.xlu0 %v1233, 8
    %v1470 = vpop.permute.xlu0 %1469
    %1471 = vrot.lane.b32.xlu0 %v1235, 8
    %v1472 = vpop.permute.xlu0 %1471
    %1473 = vrot.lane.b32.xlu0 %v1238, 8
    %v1474 = vpop.permute.xlu0 %1473
    %1475 = vrot.lane.b32.xlu0 %v1240, 8
    %v1476 = vpop.permute.xlu0 %1475
    %1477 = vrot.lane.b32.xlu0 %v1243, 8
    %v1478 = vpop.permute.xlu0 %1477
    %1479 = vrot.lane.b32.xlu0 %v1245, 8
    %v1480 = vpop.permute.xlu0 %1479
    %1481 = vrot.lane.b32.xlu0 %v1248, 8
    %v1482 = vpop.permute.xlu0 %1481
    %1483 = vrot.lane.b32.xlu0 %v1250, 8
    %v1484 = vpop.permute.xlu0 %1483
    %1485 = vrot.lane.b32.xlu0 %v1253, 8
    %v1486 = vpop.permute.xlu0 %1485
    %1487 = vrot.lane.b32.xlu0 %v1255, 8
    %v1488 = vpop.permute.xlu0 %1487
    %1489 = vrot.lane.b32.xlu0 %v1258, 8
    %v1490 = vpop.permute.xlu0 %1489
    %1491 = vrot.lane.b32.xlu0 %v1260, 8
    %v1492 = vpop.permute.xlu0 %1491
    %1493 = vrot.lane.b32.xlu0 %v1263, 8
    %v1494 = vpop.permute.xlu0 %1493
    %1495 = vrot.lane.b32.xlu0 %v1265, 8
    %v1496 = vpop.permute.xlu0 %1495
    %1497 = vrot.lane.b32.xlu0 %v1268, 8
    %v1498 = vpop.permute.xlu0 %1497
    %1499 = vrot.lane.b32.xlu0 %v1270, 8
    %v1500 = vpop.permute.xlu0 %1499
    %1501 = vrot.lane.b32.xlu0 %v1273, 8
    %v1502 = vpop.permute.xlu0 %1501
    %1503 = vrot.lane.b32.xlu0 %v1275, 8
    %v1504 = vpop.permute.xlu0 %1503
    %s1505 = scalar_lea.vmem [#allocation5], 1
    %v1506 = vld [vmem:[%s1505] sm:$0x1]
    %v1508 = vperm.slane %v1506, 0
    %v1510 = vmul.f32 %v1442, %v1508
    %v1511 = vmul.f32 %v1444, %v1508
    %v1512 = vmul.f32 %v1446, %v1508
    %v1513 = vmul.f32 %v1448, %v1508
    %v1514 = vmul.f32 %v1450, %v1508
    %v1515 = vmul.f32 %v1452, %v1508
    %v1516 = vmul.f32 %v1454, %v1508
    %v1517 = vmul.f32 %v1456, %v1508
    %v1518 = vmul.f32 %v1458, %v1508
    %v1519 = vmul.f32 %v1460, %v1508
    %v1520 = vmul.f32 %v1462, %v1508
    %v1521 = vmul.f32 %v1464, %v1508
    %v1522 = vmul.f32 %v1466, %v1508
    %v1523 = vmul.f32 %v1468, %v1508
    %v1524 = vmul.f32 %v1470, %v1508
    %v1525 = vmul.f32 %v1472, %v1508
    %v1526 = vmul.f32 %v1474, %v1508
    %v1527 = vmul.f32 %v1476, %v1508
    %v1528 = vmul.f32 %v1478, %v1508
    %v1529 = vmul.f32 %v1480, %v1508
    %v1530 = vmul.f32 %v1482, %v1508
    %v1531 = vmul.f32 %v1484, %v1508
    %v1532 = vmul.f32 %v1486, %v1508
    %v1533 = vmul.f32 %v1488, %v1508
    %v1534 = vmul.f32 %v1490, %v1508
    %v1535 = vmul.f32 %v1492, %v1508
    %v1536 = vmul.f32 %v1494, %v1508
    %v1537 = vmul.f32 %v1496, %v1508
    %v1538 = vmul.f32 %v1498, %v1508
    %v1539 = vmul.f32 %v1500, %v1508
    %v1540 = vmul.f32 %v1502, %v1508
    %v1541 = vmul.f32 %v1504, %v1508
    %v1542 = vpack.c.bf16 %v1510, %v1510
    %v1543 = vpack.c.bf16 %v1511, %v1511
    %v1544 = vpack.c.bf16 %v1512, %v1512
    %v1545 = vpack.c.bf16 %v1513, %v1513
    %v1546 = vpack.c.bf16 %v1514, %v1514
    %v1547 = vpack.c.bf16 %v1515, %v1515
    %v1548 = vpack.c.bf16 %v1516, %v1516
    %v1549 = vpack.c.bf16 %v1517, %v1517
    %v1550 = vpack.c.bf16 %v1518, %v1518
    %v1551 = vpack.c.bf16 %v1519, %v1519
    %v1552 = vpack.c.bf16 %v1520, %v1520
    %v1553 = vpack.c.bf16 %v1521, %v1521
    %v1554 = vpack.c.bf16 %v1522, %v1522
    %v1555 = vpack.c.bf16 %v1523, %v1523
    %v1556 = vpack.c.bf16 %v1524, %v1524
    %v1557 = vpack.c.bf16 %v1525, %v1525
    %v1558 = vpack.c.bf16 %v1526, %v1526
    %v1559 = vpack.c.bf16 %v1527, %v1527
    %v1560 = vpack.c.bf16 %v1528, %v1528
    %v1561 = vpack.c.bf16 %v1529, %v1529
    %v1562 = vpack.c.bf16 %v1530, %v1530
    %v1563 = vpack.c.bf16 %v1531, %v1531
    %v1564 = vpack.c.bf16 %v1532, %v1532
    %v1565 = vpack.c.bf16 %v1533, %v1533
    %v1566 = vpack.c.bf16 %v1534, %v1534
    %v1567 = vpack.c.bf16 %v1535, %v1535
    %v1568 = vpack.c.bf16 %v1536, %v1536
    %v1569 = vpack.c.bf16 %v1537, %v1537
    %v1570 = vpack.c.bf16 %v1538, %v1538
    %v1571 = vpack.c.bf16 %v1539, %v1539
    %v1572 = vpack.c.bf16 %v1540, %v1540
    %v1573 = vpack.c.bf16 %v1541, %v1541
    %1574 = vst [vmem:[#allocation2 + $0x80] sm:$0xf] %v1542
    %1575 = vst [vmem:[#allocation2 + $0x84] sm:$0xf] %v1543
    %1576 = vst [vmem:[#allocation2 + $0x88] sm:$0xf] %v1544
    %1577 = vst [vmem:[#allocation2 + $0x8c] sm:$0xf] %v1545
    %1578 = vst [vmem:[#allocation2 + $0x90] sm:$0xf] %v1546
    %1579 = vst [vmem:[#allocation2 + $0x94] sm:$0xf] %v1547
    %1580 = vst [vmem:[#allocation2 + $0x98] sm:$0xf] %v1548
    %1581 = vst [vmem:[#allocation2 + $0x9c] sm:$0xf] %v1549
    %1582 = vst [vmem:[#allocation2 + $0xa0] sm:$0xf] %v1550
    %1583 = vst [vmem:[#allocation2 + $0xa4] sm:$0xf] %v1551
    %1584 = vst [vmem:[#allocation2 + $0xa8] sm:$0xf] %v1552
    %1585 = vst [vmem:[#allocation2 + $0xac] sm:$0xf] %v1553
    %1586 = vst [vmem:[#allocation2 + $0xb0] sm:$0xf] %v1554
    %1587 = vst [vmem:[#allocation2 + $0xb4] sm:$0xf] %v1555
    %1588 = vst [vmem:[#allocation2 + $0xb8] sm:$0xf] %v1556
    %1589 = vst [vmem:[#allocation2 + $0xbc] sm:$0xf] %v1557
    %1590 = vst [vmem:[#allocation2 + $0xc0] sm:$0xf] %v1558
    %1591 = vst [vmem:[#allocation2 + $0xc4] sm:$0xf] %v1559
    %1592 = vst [vmem:[#allocation2 + $0xc8] sm:$0xf] %v1560
    %1593 = vst [vmem:[#allocation2 + $0xcc] sm:$0xf] %v1561
    %1594 = vst [vmem:[#allocation2 + $0xd0] sm:$0xf] %v1562
    %1595 = vst [vmem:[#allocation2 + $0xd4] sm:$0xf] %v1563
    %1596 = vst [vmem:[#allocation2 + $0xd8] sm:$0xf] %v1564
    %1597 = vst [vmem:[#allocation2 + $0xdc] sm:$0xf] %v1565
    %1598 = vst [vmem:[#allocation2 + $0xe0] sm:$0xf] %v1566
    %1599 = vst [vmem:[#allocation2 + $0xe4] sm:$0xf] %v1567
    %1600 = vst [vmem:[#allocation2 + $0xe8] sm:$0xf] %v1568
    %1601 = vst [vmem:[#allocation2 + $0xec] sm:$0xf] %v1569
    %1602 = vst [vmem:[#allocation2 + $0xf0] sm:$0xf] %v1570
    %1603 = vst [vmem:[#allocation2 + $0xf4] sm:$0xf] %v1571
    %1604 = vst [vmem:[#allocation2 + $0xf8] sm:$0xf] %v1572
    %1605 = vst [vmem:[#allocation2 + $0xfc] sm:$0xf] %v1573
    %1606 = vrot.lane.b32.xlu0 %v1198, 7
    %v1607 = vpop.permute.xlu0 %1606
    %1608 = vrot.lane.b32.xlu0 %v1200, 7
    %v1609 = vpop.permute.xlu0 %1608
    %1610 = vrot.lane.b32.xlu0 %v1203, 7
    %v1611 = vpop.permute.xlu0 %1610
    %1612 = vrot.lane.b32.xlu0 %v1205, 7
    %v1613 = vpop.permute.xlu0 %1612
    %1614 = vrot.lane.b32.xlu0 %v1208, 7
    %v1615 = vpop.permute.xlu0 %1614
    %1616 = vrot.lane.b32.xlu0 %v1210, 7
    %v1617 = vpop.permute.xlu0 %1616
    %1618 = vrot.lane.b32.xlu0 %v1213, 7
    %v1619 = vpop.permute.xlu0 %1618
    %1620 = vrot.lane.b32.xlu0 %v1215, 7
    %v1621 = vpop.permute.xlu0 %1620
    %1622 = vrot.lane.b32.xlu0 %v1218, 7
    %v1623 = vpop.permute.xlu0 %1622
    %1624 = vrot.lane.b32.xlu0 %v1220, 7
    %v1625 = vpop.permute.xlu0 %1624
    %1626 = vrot.lane.b32.xlu0 %v1223, 7
    %v1627 = vpop.permute.xlu0 %1626
    %1628 = vrot.lane.b32.xlu0 %v1225, 7
    %v1629 = vpop.permute.xlu0 %1628
    %1630 = vrot.lane.b32.xlu0 %v1228, 7
    %v1631 = vpop.permute.xlu0 %1630
    %1632 = vrot.lane.b32.xlu0 %v1230, 7
    %v1633 = vpop.permute.xlu0 %1632
    %1634 = vrot.lane.b32.xlu0 %v1233, 7
    %v1635 = vpop.permute.xlu0 %1634
    %1636 = vrot.lane.b32.xlu0 %v1235, 7
    %v1637 = vpop.permute.xlu0 %1636
    %1638 = vrot.lane.b32.xlu0 %v1238, 7
    %v1639 = vpop.permute.xlu0 %1638
    %1640 = vrot.lane.b32.xlu0 %v1240, 7
    %v1641 = vpop.permute.xlu0 %1640
    %1642 = vrot.lane.b32.xlu0 %v1243, 7
    %v1643 = vpop.permute.xlu0 %1642
    %1644 = vrot.lane.b32.xlu0 %v1245, 7
    %v1645 = vpop.permute.xlu0 %1644
    %1646 = vrot.lane.b32.xlu0 %v1248, 7
    %v1647 = vpop.permute.xlu0 %1646
    %1648 = vrot.lane.b32.xlu0 %v1250, 7
    %v1649 = vpop.permute.xlu0 %1648
    %1650 = vrot.lane.b32.xlu0 %v1253, 7
    %v1651 = vpop.permute.xlu0 %1650
    %1652 = vrot.lane.b32.xlu0 %v1255, 7
    %v1653 = vpop.permute.xlu0 %1652
    %1654 = vrot.lane.b32.xlu0 %v1258, 7
    %v1655 = vpop.permute.xlu0 %1654
    %1656 = vrot.lane.b32.xlu0 %v1260, 7
    %v1657 = vpop.permute.xlu0 %1656
    %1658 = vrot.lane.b32.xlu0 %v1263, 7
    %v1659 = vpop.permute.xlu0 %1658
    %1660 = vrot.lane.b32.xlu0 %v1265, 7
    %v1661 = vpop.permute.xlu0 %1660
    %1662 = vrot.lane.b32.xlu0 %v1268, 7
    %v1663 = vpop.permute.xlu0 %1662
    %1664 = vrot.lane.b32.xlu0 %v1270, 7
    %v1665 = vpop.permute.xlu0 %1664
    %1666 = vrot.lane.b32.xlu0 %v1273, 7
    %v1667 = vpop.permute.xlu0 %1666
    %1668 = vrot.lane.b32.xlu0 %v1275, 7
    %v1669 = vpop.permute.xlu0 %1668
    %s1670 = scalar_lea.vmem [#allocation5], 2
    %v1671 = vld [vmem:[%s1670] sm:$0x1]
    %v1673 = vperm.slane %v1671, 0
    %v1675 = vmul.f32 %v1607, %v1673
    %v1676 = vmul.f32 %v1609, %v1673
    %v1677 = vmul.f32 %v1611, %v1673
    %v1678 = vmul.f32 %v1613, %v1673
    %v1679 = vmul.f32 %v1615, %v1673
    %v1680 = vmul.f32 %v1617, %v1673
    %v1681 = vmul.f32 %v1619, %v1673
    %v1682 = vmul.f32 %v1621, %v1673
    %v1683 = vmul.f32 %v1623, %v1673
    %v1684 = vmul.f32 %v1625, %v1673
    %v1685 = vmul.f32 %v1627, %v1673
    %v1686 = vmul.f32 %v1629, %v1673
    %v1687 = vmul.f32 %v1631, %v1673
    %v1688 = vmul.f32 %v1633, %v1673
    %v1689 = vmul.f32 %v1635, %v1673
    %v1690 = vmul.f32 %v1637, %v1673
    %v1691 = vmul.f32 %v1639, %v1673
    %v1692 = vmul.f32 %v1641, %v1673
    %v1693 = vmul.f32 %v1643, %v1673
    %v1694 = vmul.f32 %v1645, %v1673
    %v1695 = vmul.f32 %v1647, %v1673
    %v1696 = vmul.f32 %v1649, %v1673
    %v1697 = vmul.f32 %v1651, %v1673
    %v1698 = vmul.f32 %v1653, %v1673
    %v1699 = vmul.f32 %v1655, %v1673
    %v1700 = vmul.f32 %v1657, %v1673
    %v1701 = vmul.f32 %v1659, %v1673
    %v1702 = vmul.f32 %v1661, %v1673
    %v1703 = vmul.f32 %v1663, %v1673
    %v1704 = vmul.f32 %v1665, %v1673
    %v1705 = vmul.f32 %v1667, %v1673
    %v1706 = vmul.f32 %v1669, %v1673
    %v1707 = vpack.c.bf16 %v1675, %v1675
    %v1708 = vpack.c.bf16 %v1676, %v1676
    %v1709 = vpack.c.bf16 %v1677, %v1677
    %v1710 = vpack.c.bf16 %v1678, %v1678
    %v1711 = vpack.c.bf16 %v1679, %v1679
    %v1712 = vpack.c.bf16 %v1680, %v1680
    %v1713 = vpack.c.bf16 %v1681, %v1681
    %v1714 = vpack.c.bf16 %v1682, %v1682
    %v1715 = vpack.c.bf16 %v1683, %v1683
    %v1716 = vpack.c.bf16 %v1684, %v1684
    %v1717 = vpack.c.bf16 %v1685, %v1685
    %v1718 = vpack.c.bf16 %v1686, %v1686
    %v1719 = vpack.c.bf16 %v1687, %v1687
    %v1720 = vpack.c.bf16 %v1688, %v1688
    %v1721 = vpack.c.bf16 %v1689, %v1689
    %v1722 = vpack.c.bf16 %v1690, %v1690
    %v1723 = vpack.c.bf16 %v1691, %v1691
    %v1724 = vpack.c.bf16 %v1692, %v1692
    %v1725 = vpack.c.bf16 %v1693, %v1693
    %v1726 = vpack.c.bf16 %v1694, %v1694
    %v1727 = vpack.c.bf16 %v1695, %v1695
    %v1728 = vpack.c.bf16 %v1696, %v1696
    %v1729 = vpack.c.bf16 %v1697, %v1697
    %v1730 = vpack.c.bf16 %v1698, %v1698
    %v1731 = vpack.c.bf16 %v1699, %v1699
    %v1732 = vpack.c.bf16 %v1700, %v1700
    %v1733 = vpack.c.bf16 %v1701, %v1701
    %v1734 = vpack.c.bf16 %v1702, %v1702
    %v1735 = vpack.c.bf16 %v1703, %v1703
    %v1736 = vpack.c.bf16 %v1704, %v1704
    %v1737 = vpack.c.bf16 %v1705, %v1705
    %v1738 = vpack.c.bf16 %v1706, %v1706
    %1739 = vst [vmem:[#allocation2 + $0x100] sm:$0xf] %v1707
    %1740 = vst [vmem:[#allocation2 + $0x104] sm:$0xf] %v1708
    %1741 = vst [vmem:[#allocation2 + $0x108] sm:$0xf] %v1709
    %1742 = vst [vmem:[#allocation2 + $0x10c] sm:$0xf] %v1710
    %1743 = vst [vmem:[#allocation2 + $0x110] sm:$0xf] %v1711
    %1744 = vst [vmem:[#allocation2 + $0x114] sm:$0xf] %v1712
    %1745 = vst [vmem:[#allocation2 + $0x118] sm:$0xf] %v1713
    %1746 = vst [vmem:[#allocation2 + $0x11c] sm:$0xf] %v1714
    %1747 = vst [vmem:[#allocation2 + $0x120] sm:$0xf] %v1715
    %1748 = vst [vmem:[#allocation2 + $0x124] sm:$0xf] %v1716
    %1749 = vst [vmem:[#allocation2 + $0x128] sm:$0xf] %v1717
    %1750 = vst [vmem:[#allocation2 + $0x12c] sm:$0xf] %v1718
    %1751 = vst [vmem:[#allocation2 + $0x130] sm:$0xf] %v1719
    %1752 = vst [vmem:[#allocation2 + $0x134] sm:$0xf] %v1720
    %1753 = vst [vmem:[#allocation2 + $0x138] sm:$0xf] %v1721
    %1754 = vst [vmem:[#allocation2 + $0x13c] sm:$0xf] %v1722
    %1755 = vst [vmem:[#allocation2 + $0x140] sm:$0xf] %v1723
    %1756 = vst [vmem:[#allocation2 + $0x144] sm:$0xf] %v1724
    %1757 = vst [vmem:[#allocation2 + $0x148] sm:$0xf] %v1725
    %1758 = vst [vmem:[#allocation2 + $0x14c] sm:$0xf] %v1726
    %1759 = vst [vmem:[#allocation2 + $0x150] sm:$0xf] %v1727
    %1760 = vst [vmem:[#allocation2 + $0x154] sm:$0xf] %v1728
    %1761 = vst [vmem:[#allocation2 + $0x158] sm:$0xf] %v1729
    %1762 = vst [vmem:[#allocation2 + $0x15c] sm:$0xf] %v1730
    %1763 = vst [vmem:[#allocation2 + $0x160] sm:$0xf] %v1731
    %1764 = vst [vmem:[#allocation2 + $0x164] sm:$0xf] %v1732
    %1765 = vst [vmem:[#allocation2 + $0x168] sm:$0xf] %v1733
    %1766 = vst [vmem:[#allocation2 + $0x16c] sm:$0xf] %v1734
    %1767 = vst [vmem:[#allocation2 + $0x170] sm:$0xf] %v1735
    %1768 = vst [vmem:[#allocation2 + $0x174] sm:$0xf] %v1736
    %1769 = vst [vmem:[#allocation2 + $0x178] sm:$0xf] %v1737
    %1770 = vst [vmem:[#allocation2 + $0x17c] sm:$0xf] %v1738
    %1771 = vrot.lane.b32.xlu0 %v1198, 1
    %v1772 = vpop.permute.xlu0 %1771
    %1773 = vrot.lane.b32.xlu0 %v1200, 1
    %v1774 = vpop.permute.xlu0 %1773
    %1775 = vrot.lane.b32.xlu0 %v1203, 1
    %v1776 = vpop.permute.xlu0 %1775
    %1777 = vrot.lane.b32.xlu0 %v1205, 1
    %v1778 = vpop.permute.xlu0 %1777
    %1779 = vrot.lane.b32.xlu0 %v1208, 1
    %v1780 = vpop.permute.xlu0 %1779
    %1781 = vrot.lane.b32.xlu0 %v1210, 1
    %v1782 = vpop.permute.xlu0 %1781
    %1783 = vrot.lane.b32.xlu0 %v1213, 1
    %v1784 = vpop.permute.xlu0 %1783
    %1785 = vrot.lane.b32.xlu0 %v1215, 1
    %v1786 = vpop.permute.xlu0 %1785
    %1787 = vrot.lane.b32.xlu0 %v1218, 1
    %v1788 = vpop.permute.xlu0 %1787
    %1789 = vrot.lane.b32.xlu0 %v1220, 1
    %v1790 = vpop.permute.xlu0 %1789
    %1791 = vrot.lane.b32.xlu0 %v1223, 1
    %v1792 = vpop.permute.xlu0 %1791
    %1793 = vrot.lane.b32.xlu0 %v1225, 1
    %v1794 = vpop.permute.xlu0 %1793
    %1795 = vrot.lane.b32.xlu0 %v1228, 1
    %v1796 = vpop.permute.xlu0 %1795
    %1797 = vrot.lane.b32.xlu0 %v1230, 1
    %v1798 = vpop.permute.xlu0 %1797
    %1799 = vrot.lane.b32.xlu0 %v1233, 1
    %v1800 = vpop.permute.xlu0 %1799
    %1801 = vrot.lane.b32.xlu0 %v1235, 1
    %v1802 = vpop.permute.xlu0 %1801
    %1803 = vrot.lane.b32.xlu0 %v1238, 1
    %v1804 = vpop.permute.xlu0 %1803
    %1805 = vrot.lane.b32.xlu0 %v1240, 1
    %v1806 = vpop.permute.xlu0 %1805
    %1807 = vrot.lane.b32.xlu0 %v1243, 1
    %v1808 = vpop.permute.xlu0 %1807
    %1809 = vrot.lane.b32.xlu0 %v1245, 1
    %v1810 = vpop.permute.xlu0 %1809
    %1811 = vrot.lane.b32.xlu0 %v1248, 1
    %v1812 = vpop.permute.xlu0 %1811
    %1813 = vrot.lane.b32.xlu0 %v1250, 1
    %v1814 = vpop.permute.xlu0 %1813
    %1815 = vrot.lane.b32.xlu0 %v1253, 1
    %v1816 = vpop.permute.xlu0 %1815
    %1817 = vrot.lane.b32.xlu0 %v1255, 1
    %v1818 = vpop.permute.xlu0 %1817
    %1819 = vrot.lane.b32.xlu0 %v1258, 1
    %v1820 = vpop.permute.xlu0 %1819
    %1821 = vrot.lane.b32.xlu0 %v1260, 1
    %v1822 = vpop.permute.xlu0 %1821
    %1823 = vrot.lane.b32.xlu0 %v1263, 1
    %v1824 = vpop.permute.xlu0 %1823
    %1825 = vrot.lane.b32.xlu0 %v1265, 1
    %v1826 = vpop.permute.xlu0 %1825
    %1827 = vrot.lane.b32.xlu0 %v1268, 1
    %v1828 = vpop.permute.xlu0 %1827
    %1829 = vrot.lane.b32.xlu0 %v1270, 1
    %v1830 = vpop.permute.xlu0 %1829
    %1831 = vrot.lane.b32.xlu0 %v1273, 1
    %v1832 = vpop.permute.xlu0 %1831
    %1833 = vrot.lane.b32.xlu0 %v1275, 1
    %v1834 = vpop.permute.xlu0 %1833
    %s1835 = scalar_lea.vmem [#allocation5], 3
    %v1836 = vld [vmem:[%s1835] sm:$0x1]
    %v1838 = vperm.slane %v1836, 0
    %v1840 = vmul.f32 %v1772, %v1838
    %v1841 = vmul.f32 %v1774, %v1838
    %v1842 = vmul.f32 %v1776, %v1838
    %v1843 = vmul.f32 %v1778, %v1838
    %v1844 = vmul.f32 %v1780, %v1838
    %v1845 = vmul.f32 %v1782, %v1838
    %v1846 = vmul.f32 %v1784, %v1838
    %v1847 = vmul.f32 %v1786, %v1838
    %v1848 = vmul.f32 %v1788, %v1838
    %v1849 = vmul.f32 %v1790, %v1838
    %v1850 = vmul.f32 %v1792, %v1838
    %v1851 = vmul.f32 %v1794, %v1838
    %v1852 = vmul.f32 %v1796, %v1838
    %v1853 = vmul.f32 %v1798, %v1838
    %v1854 = vmul.f32 %v1800, %v1838
    %v1855 = vmul.f32 %v1802, %v1838
    %v1856 = vmul.f32 %v1804, %v1838
    %v1857 = vmul.f32 %v1806, %v1838
    %v1858 = vmul.f32 %v1808, %v1838
    %v1859 = vmul.f32 %v1810, %v1838
    %v1860 = vmul.f32 %v1812, %v1838
    %v1861 = vmul.f32 %v1814, %v1838
    %v1862 = vmul.f32 %v1816, %v1838
    %v1863 = vmul.f32 %v1818, %v1838
    %v1864 = vmul.f32 %v1820, %v1838
    %v1865 = vmul.f32 %v1822, %v1838
    %v1866 = vmul.f32 %v1824, %v1838
    %v1867 = vmul.f32 %v1826, %v1838
    %v1868 = vmul.f32 %v1828, %v1838
    %v1869 = vmul.f32 %v1830, %v1838
    %v1870 = vmul.f32 %v1832, %v1838
    %v1871 = vmul.f32 %v1834, %v1838
    %v1872 = vpack.c.bf16 %v1840, %v1840
    %v1873 = vpack.c.bf16 %v1841, %v1841
    %v1874 = vpack.c.bf16 %v1842, %v1842
    %v1875 = vpack.c.bf16 %v1843, %v1843
    %v1876 = vpack.c.bf16 %v1844, %v1844
    %v1877 = vpack.c.bf16 %v1845, %v1845
    %v1878 = vpack.c.bf16 %v1846, %v1846
    %v1879 = vpack.c.bf16 %v1847, %v1847
    %v1880 = vpack.c.bf16 %v1848, %v1848
    %v1881 = vpack.c.bf16 %v1849, %v1849
    %v1882 = vpack.c.bf16 %v1850, %v1850
    %v1883 = vpack.c.bf16 %v1851, %v1851
    %v1884 = vpack.c.bf16 %v1852, %v1852
    %v1885 = vpack.c.bf16 %v1853, %v1853
    %v1886 = vpack.c.bf16 %v1854, %v1854
    %v1887 = vpack.c.bf16 %v1855, %v1855
    %v1888 = vpack.c.bf16 %v1856, %v1856
    %v1889 = vpack.c.bf16 %v1857, %v1857
    %v1890 = vpack.c.bf16 %v1858, %v1858
    %v1891 = vpack.c.bf16 %v1859, %v1859
    %v1892 = vpack.c.bf16 %v1860, %v1860
    %v1893 = vpack.c.bf16 %v1861, %v1861
    %v1894 = vpack.c.bf16 %v1862, %v1862
    %v1895 = vpack.c.bf16 %v1863, %v1863
    %v1896 = vpack.c.bf16 %v1864, %v1864
    %v1897 = vpack.c.bf16 %v1865, %v1865
    %v1898 = vpack.c.bf16 %v1866, %v1866
    %v1899 = vpack.c.bf16 %v1867, %v1867
    %v1900 = vpack.c.bf16 %v1868, %v1868
    %v1901 = vpack.c.bf16 %v1869, %v1869
    %v1902 = vpack.c.bf16 %v1870, %v1870
    %v1903 = vpack.c.bf16 %v1871, %v1871
    %1904 = vst [vmem:[#allocation2 + $0x180] sm:$0xf] %v1872
    %1905 = vst [vmem:[#allocation2 + $0x184] sm:$0xf] %v1873
    %1906 = vst [vmem:[#allocation2 + $0x188] sm:$0xf] %v1874
    %1907 = vst [vmem:[#allocation2 + $0x18c] sm:$0xf] %v1875
    %1908 = vst [vmem:[#allocation2 + $0x190] sm:$0xf] %v1876
    %1909 = vst [vmem:[#allocation2 + $0x194] sm:$0xf] %v1877
    %1910 = vst [vmem:[#allocation2 + $0x198] sm:$0xf] %v1878
    %1911 = vst [vmem:[#allocation2 + $0x19c] sm:$0xf] %v1879
    %1912 = vst [vmem:[#allocation2 + $0x1a0] sm:$0xf] %v1880
    %1913 = vst [vmem:[#allocation2 + $0x1a4] sm:$0xf] %v1881
    %1914 = vst [vmem:[#allocation2 + $0x1a8] sm:$0xf] %v1882
    %1915 = vst [vmem:[#allocation2 + $0x1ac] sm:$0xf] %v1883
    %1916 = vst [vmem:[#allocation2 + $0x1b0] sm:$0xf] %v1884
    %1917 = vst [vmem:[#allocation2 + $0x1b4] sm:$0xf] %v1885
    %1918 = vst [vmem:[#allocation2 + $0x1b8] sm:$0xf] %v1886
    %1919 = vst [vmem:[#allocation2 + $0x1bc] sm:$0xf] %v1887
    %1920 = vst [vmem:[#allocation2 + $0x1c0] sm:$0xf] %v1888
    %1921 = vst [vmem:[#allocation2 + $0x1c4] sm:$0xf] %v1889
    %1922 = vst [vmem:[#allocation2 + $0x1c8] sm:$0xf] %v1890
    %1923 = vst [vmem:[#allocation2 + $0x1cc] sm:$0xf] %v1891
    %1924 = vst [vmem:[#allocation2 + $0x1d0] sm:$0xf] %v1892
    %1925 = vst [vmem:[#allocation2 + $0x1d4] sm:$0xf] %v1893
    %1926 = vst [vmem:[#allocation2 + $0x1d8] sm:$0xf] %v1894
    %1927 = vst [vmem:[#allocation2 + $0x1dc] sm:$0xf] %v1895
    %1928 = vst [vmem:[#allocation2 + $0x1e0] sm:$0xf] %v1896
    %1929 = vst [vmem:[#allocation2 + $0x1e4] sm:$0xf] %v1897
    %1930 = vst [vmem:[#allocation2 + $0x1e8] sm:$0xf] %v1898
    %1931 = vst [vmem:[#allocation2 + $0x1ec] sm:$0xf] %v1899
    %1932 = vst [vmem:[#allocation2 + $0x1f0] sm:$0xf] %v1900
    %1933 = vst [vmem:[#allocation2 + $0x1f4] sm:$0xf] %v1901
    %1934 = vst [vmem:[#allocation2 + $0x1f8] sm:$0xf] %v1902
    %1935 = vst [vmem:[#allocation2 + $0x1fc] sm:$0xf] %v1903
    %v1936 = vpack.c.bf16 %v1198, %v1198
    %v1937 = vpack.c.bf16 %v1200, %v1200
    %v1938 = vpack.c.bf16 %v1203, %v1203
    %v1939 = vpack.c.bf16 %v1205, %v1205
    %v1940 = vpack.c.bf16 %v1208, %v1208
    %v1941 = vpack.c.bf16 %v1210, %v1210
    %v1942 = vpack.c.bf16 %v1213, %v1213
    %v1943 = vpack.c.bf16 %v1215, %v1215
    %v1944 = vpack.c.bf16 %v1218, %v1218
    %v1945 = vpack.c.bf16 %v1220, %v1220
    %v1946 = vpack.c.bf16 %v1223, %v1223
    %v1947 = vpack.c.bf16 %v1225, %v1225
    %v1948 = vpack.c.bf16 %v1228, %v1228
    %v1949 = vpack.c.bf16 %v1230, %v1230
    %v1950 = vpack.c.bf16 %v1233, %v1233
    %v1951 = vpack.c.bf16 %v1235, %v1235
    %v1952 = vpack.c.bf16 %v1238, %v1238
    %v1953 = vpack.c.bf16 %v1240, %v1240
    %v1954 = vpack.c.bf16 %v1243, %v1243
    %v1955 = vpack.c.bf16 %v1245, %v1245
    %v1956 = vpack.c.bf16 %v1248, %v1248
    %v1957 = vpack.c.bf16 %v1250, %v1250
    %v1958 = vpack.c.bf16 %v1253, %v1253
    %v1959 = vpack.c.bf16 %v1255, %v1255
    %v1960 = vpack.c.bf16 %v1258, %v1258
    %v1961 = vpack.c.bf16 %v1260, %v1260
    %v1962 = vpack.c.bf16 %v1263, %v1263
    %v1963 = vpack.c.bf16 %v1265, %v1265
    %v1964 = vpack.c.bf16 %v1268, %v1268
    %v1965 = vpack.c.bf16 %v1270, %v1270
    %v1966 = vpack.c.bf16 %v1273, %v1273
    %v1967 = vpack.c.bf16 %v1275, %v1275
    %1968 = vst [vmem:[#allocation2 + $0x200] sm:$0xf] %v1936
    %1969 = vst [vmem:[#allocation2 + $0x204] sm:$0xf] %v1937
    %1970 = vst [vmem:[#allocation2 + $0x208] sm:$0xf] %v1938
    %1971 = vst [vmem:[#allocation2 + $0x20c] sm:$0xf] %v1939
    %1972 = vst [vmem:[#allocation2 + $0x210] sm:$0xf] %v1940
    %1973 = vst [vmem:[#allocation2 + $0x214] sm:$0xf] %v1941
    %1974 = vst [vmem:[#allocation2 + $0x218] sm:$0xf] %v1942
    %1975 = vst [vmem:[#allocation2 + $0x21c] sm:$0xf] %v1943
    %1976 = vst [vmem:[#allocation2 + $0x220] sm:$0xf] %v1944
    %1977 = vst [vmem:[#allocation2 + $0x224] sm:$0xf] %v1945
    %1978 = vst [vmem:[#allocation2 + $0x228] sm:$0xf] %v1946
    %1979 = vst [vmem:[#allocation2 + $0x22c] sm:$0xf] %v1947
    %1980 = vst [vmem:[#allocation2 + $0x230] sm:$0xf] %v1948
    %1981 = vst [vmem:[#allocation2 + $0x234] sm:$0xf] %v1949
    %1982 = vst [vmem:[#allocation2 + $0x238] sm:$0xf] %v1950
    %1983 = vst [vmem:[#allocation2 + $0x23c] sm:$0xf] %v1951
    %1984 = vst [vmem:[#allocation2 + $0x240] sm:$0xf] %v1952
    %1985 = vst [vmem:[#allocation2 + $0x244] sm:$0xf] %v1953
    %1986 = vst [vmem:[#allocation2 + $0x248] sm:$0xf] %v1954
    %1987 = vst [vmem:[#allocation2 + $0x24c] sm:$0xf] %v1955
    %1988 = vst [vmem:[#allocation2 + $0x250] sm:$0xf] %v1956
    %1989 = vst [vmem:[#allocation2 + $0x254] sm:$0xf] %v1957
    %1990 = vst [vmem:[#allocation2 + $0x258] sm:$0xf] %v1958
    %1991 = vst [vmem:[#allocation2 + $0x25c] sm:$0xf] %v1959
    %1992 = vst [vmem:[#allocation2 + $0x260] sm:$0xf] %v1960
    %1993 = vst [vmem:[#allocation2 + $0x264] sm:$0xf] %v1961
    %1994 = vst [vmem:[#allocation2 + $0x268] sm:$0xf] %v1962
    %1995 = vst [vmem:[#allocation2 + $0x26c] sm:$0xf] %v1963
    %1996 = vst [vmem:[#allocation2 + $0x270] sm:$0xf] %v1964
    %1997 = vst [vmem:[#allocation2 + $0x274] sm:$0xf] %v1965
    %1998 = vst [vmem:[#allocation2 + $0x278] sm:$0xf] %v1966
    %1999 = vst [vmem:[#allocation2 + $0x27c] sm:$0xf] %v1967
    %2000 = vrot.lane.b32.xlu0 %v1198, 127
    %v2001 = vpop.permute.xlu0 %2000
    %2002 = vrot.lane.b32.xlu0 %v1200, 127
    %v2003 = vpop.permute.xlu0 %2002
    %2004 = vrot.lane.b32.xlu0 %v1203, 127
    %v2005 = vpop.permute.xlu0 %2004
    %2006 = vrot.lane.b32.xlu0 %v1205, 127
    %v2007 = vpop.permute.xlu0 %2006
    %2008 = vrot.lane.b32.xlu0 %v1208, 127
    %v2009 = vpop.permute.xlu0 %2008
    %2010 = vrot.lane.b32.xlu0 %v1210, 127
    %v2011 = vpop.permute.xlu0 %2010
    %2012 = vrot.lane.b32.xlu0 %v1213, 127
    %v2013 = vpop.permute.xlu0 %2012
    %2014 = vrot.lane.b32.xlu0 %v1215, 127
    %v2015 = vpop.permute.xlu0 %2014
    %2016 = vrot.lane.b32.xlu0 %v1218, 127
    %v2017 = vpop.permute.xlu0 %2016
    %2018 = vrot.lane.b32.xlu0 %v1220, 127
    %v2019 = vpop.permute.xlu0 %2018
    %2020 = vrot.lane.b32.xlu0 %v1223, 127
    %v2021 = vpop.permute.xlu0 %2020
    %2022 = vrot.lane.b32.xlu0 %v1225, 127
    %v2023 = vpop.permute.xlu0 %2022
    %2024 = vrot.lane.b32.xlu0 %v1228, 127
    %v2025 = vpop.permute.xlu0 %2024
    %2026 = vrot.lane.b32.xlu0 %v1230, 127
    %v2027 = vpop.permute.xlu0 %2026
    %2028 = vrot.lane.b32.xlu0 %v1233, 127
    %v2029 = vpop.permute.xlu0 %2028
    %2030 = vrot.lane.b32.xlu0 %v1235, 127
    %v2031 = vpop.permute.xlu0 %2030
    %2032 = vrot.lane.b32.xlu0 %v1238, 127
    %v2033 = vpop.permute.xlu0 %2032
    %2034 = vrot.lane.b32.xlu0 %v1240, 127
    %v2035 = vpop.permute.xlu0 %2034
    %2036 = vrot.lane.b32.xlu0 %v1243, 127
    %v2037 = vpop.permute.xlu0 %2036
    %2038 = vrot.lane.b32.xlu0 %v1245, 127
    %v2039 = vpop.permute.xlu0 %2038
    %2040 = vrot.lane.b32.xlu0 %v1248, 127
    %v2041 = vpop.permute.xlu0 %2040
    %2042 = vrot.lane.b32.xlu0 %v1250, 127
    %v2043 = vpop.permute.xlu0 %2042
    %2044 = vrot.lane.b32.xlu0 %v1253, 127
    %v2045 = vpop.permute.xlu0 %2044
    %2046 = vrot.lane.b32.xlu0 %v1255, 127
    %v2047 = vpop.permute.xlu0 %2046
    %2048 = vrot.lane.b32.xlu0 %v1258, 127
    %v2049 = vpop.permute.xlu0 %2048
    %2050 = vrot.lane.b32.xlu0 %v1260, 127
    %v2051 = vpop.permute.xlu0 %2050
    %2052 = vrot.lane.b32.xlu0 %v1263, 127
    %v2053 = vpop.permute.xlu0 %2052
    %2054 = vrot.lane.b32.xlu0 %v1265, 127
    %v2055 = vpop.permute.xlu0 %2054
    %2056 = vrot.lane.b32.xlu0 %v1268, 127
    %v2057 = vpop.permute.xlu0 %2056
    %2058 = vrot.lane.b32.xlu0 %v1270, 127
    %v2059 = vpop.permute.xlu0 %2058
    %2060 = vrot.lane.b32.xlu0 %v1273, 127
    %v2061 = vpop.permute.xlu0 %2060
    %2062 = vrot.lane.b32.xlu0 %v1275, 127
    %v2063 = vpop.permute.xlu0 %2062
    %s2064 = scalar_lea.vmem [#allocation5], 5
    %v2065 = vld [vmem:[%s2064] sm:$0x1]
    %v2067 = vperm.slane %v2065, 0
    %v2069 = vmul.f32 %v2001, %v2067
    %v2070 = vmul.f32 %v2003, %v2067
    %v2071 = vmul.f32 %v2005, %v2067
    %v2072 = vmul.f32 %v2007, %v2067
    %v2073 = vmul.f32 %v2009, %v2067
    %v2074 = vmul.f32 %v2011, %v2067
    %v2075 = vmul.f32 %v2013, %v2067
    %v2076 = vmul.f32 %v2015, %v2067
    %v2077 = vmul.f32 %v2017, %v2067
    %v2078 = vmul.f32 %v2019, %v2067
    %v2079 = vmul.f32 %v2021, %v2067
    %v2080 = vmul.f32 %v2023, %v2067
    %v2081 = vmul.f32 %v2025, %v2067
    %v2082 = vmul.f32 %v2027, %v2067
    %v2083 = vmul.f32 %v2029, %v2067
    %v2084 = vmul.f32 %v2031, %v2067
    %v2085 = vmul.f32 %v2033, %v2067
    %v2086 = vmul.f32 %v2035, %v2067
    %v2087 = vmul.f32 %v2037, %v2067
    %v2088 = vmul.f32 %v2039, %v2067
    %v2089 = vmul.f32 %v2041, %v2067
    %v2090 = vmul.f32 %v2043, %v2067
    %v2091 = vmul.f32 %v2045, %v2067
    %v2092 = vmul.f32 %v2047, %v2067
    %v2093 = vmul.f32 %v2049, %v2067
    %v2094 = vmul.f32 %v2051, %v2067
    %v2095 = vmul.f32 %v2053, %v2067
    %v2096 = vmul.f32 %v2055, %v2067
    %v2097 = vmul.f32 %v2057, %v2067
    %v2098 = vmul.f32 %v2059, %v2067
    %v2099 = vmul.f32 %v2061, %v2067
    %v2100 = vmul.f32 %v2063, %v2067
    %v2101 = vpack.c.bf16 %v2069, %v2069
    %v2102 = vpack.c.bf16 %v2070, %v2070
    %v2103 = vpack.c.bf16 %v2071, %v2071
    %v2104 = vpack.c.bf16 %v2072, %v2072
    %v2105 = vpack.c.bf16 %v2073, %v2073
    %v2106 = vpack.c.bf16 %v2074, %v2074
    %v2107 = vpack.c.bf16 %v2075, %v2075
    %v2108 = vpack.c.bf16 %v2076, %v2076
    %v2109 = vpack.c.bf16 %v2077, %v2077
    %v2110 = vpack.c.bf16 %v2078, %v2078
    %v2111 = vpack.c.bf16 %v2079, %v2079
    %v2112 = vpack.c.bf16 %v2080, %v2080
    %v2113 = vpack.c.bf16 %v2081, %v2081
    %v2114 = vpack.c.bf16 %v2082, %v2082
    %v2115 = vpack.c.bf16 %v2083, %v2083
    %v2116 = vpack.c.bf16 %v2084, %v2084
    %v2117 = vpack.c.bf16 %v2085, %v2085
    %v2118 = vpack.c.bf16 %v2086, %v2086
    %v2119 = vpack.c.bf16 %v2087, %v2087
    %v2120 = vpack.c.bf16 %v2088, %v2088
    %v2121 = vpack.c.bf16 %v2089, %v2089
    %v2122 = vpack.c.bf16 %v2090, %v2090
    %v2123 = vpack.c.bf16 %v2091, %v2091
    %v2124 = vpack.c.bf16 %v2092, %v2092
    %v2125 = vpack.c.bf16 %v2093, %v2093
    %v2126 = vpack.c.bf16 %v2094, %v2094
    %v2127 = vpack.c.bf16 %v2095, %v2095
    %v2128 = vpack.c.bf16 %v2096, %v2096
    %v2129 = vpack.c.bf16 %v2097, %v2097
    %v2130 = vpack.c.bf16 %v2098, %v2098
    %v2131 = vpack.c.bf16 %v2099, %v2099
    %v2132 = vpack.c.bf16 %v2100, %v2100
    %2133 = vst [vmem:[#allocation2 + $0x280] sm:$0xf] %v2101
    %2134 = vst [vmem:[#allocation2 + $0x284] sm:$0xf] %v2102
    %2135 = vst [vmem:[#allocation2 + $0x288] sm:$0xf] %v2103
    %2136 = vst [vmem:[#allocation2 + $0x28c] sm:$0xf] %v2104
    %2137 = vst [vmem:[#allocation2 + $0x290] sm:$0xf] %v2105
    %2138 = vst [vmem:[#allocation2 + $0x294] sm:$0xf] %v2106
    %2139 = vst [vmem:[#allocation2 + $0x298] sm:$0xf] %v2107
    %2140 = vst [vmem:[#allocation2 + $0x29c] sm:$0xf] %v2108
    %2141 = vst [vmem:[#allocation2 + $0x2a0] sm:$0xf] %v2109
    %2142 = vst [vmem:[#allocation2 + $0x2a4] sm:$0xf] %v2110
    %2143 = vst [vmem:[#allocation2 + $0x2a8] sm:$0xf] %v2111
    %2144 = vst [vmem:[#allocation2 + $0x2ac] sm:$0xf] %v2112
    %2145 = vst [vmem:[#allocation2 + $0x2b0] sm:$0xf] %v2113
    %2146 = vst [vmem:[#allocation2 + $0x2b4] sm:$0xf] %v2114
    %2147 = vst [vmem:[#allocation2 + $0x2b8] sm:$0xf] %v2115
    %2148 = vst [vmem:[#allocation2 + $0x2bc] sm:$0xf] %v2116
    %2149 = vst [vmem:[#allocation2 + $0x2c0] sm:$0xf] %v2117
    %2150 = vst [vmem:[#allocation2 + $0x2c4] sm:$0xf] %v2118
    %2151 = vst [vmem:[#allocation2 + $0x2c8] sm:$0xf] %v2119
    %2152 = vst [vmem:[#allocation2 + $0x2cc] sm:$0xf] %v2120
    %2153 = vst [vmem:[#allocation2 + $0x2d0] sm:$0xf] %v2121
    %2154 = vst [vmem:[#allocation2 + $0x2d4] sm:$0xf] %v2122
    %2155 = vst [vmem:[#allocation2 + $0x2d8] sm:$0xf] %v2123
    %2156 = vst [vmem:[#allocation2 + $0x2dc] sm:$0xf] %v2124
    %2157 = vst [vmem:[#allocation2 + $0x2e0] sm:$0xf] %v2125
    %2158 = vst [vmem:[#allocation2 + $0x2e4] sm:$0xf] %v2126
    %2159 = vst [vmem:[#allocation2 + $0x2e8] sm:$0xf] %v2127
    %2160 = vst [vmem:[#allocation2 + $0x2ec] sm:$0xf] %v2128
    %2161 = vst [vmem:[#allocation2 + $0x2f0] sm:$0xf] %v2129
    %2162 = vst [vmem:[#allocation2 + $0x2f4] sm:$0xf] %v2130
    %2163 = vst [vmem:[#allocation2 + $0x2f8] sm:$0xf] %v2131
    %2164 = vst [vmem:[#allocation2 + $0x2fc] sm:$0xf] %v2132
    %2165 = vrot.lane.b32.xlu0 %v1198, 121
    %v2166 = vpop.permute.xlu0 %2165
    %2167 = vrot.lane.b32.xlu0 %v1200, 121
    %v2168 = vpop.permute.xlu0 %2167
    %2169 = vrot.lane.b32.xlu0 %v1203, 121
    %v2170 = vpop.permute.xlu0 %2169
    %2171 = vrot.lane.b32.xlu0 %v1205, 121
    %v2172 = vpop.permute.xlu0 %2171
    %2173 = vrot.lane.b32.xlu0 %v1208, 121
    %v2174 = vpop.permute.xlu0 %2173
    %2175 = vrot.lane.b32.xlu0 %v1210, 121
    %v2176 = vpop.permute.xlu0 %2175
    %2177 = vrot.lane.b32.xlu0 %v1213, 121
    %v2178 = vpop.permute.xlu0 %2177
    %2179 = vrot.lane.b32.xlu0 %v1215, 121
    %v2180 = vpop.permute.xlu0 %2179
    %2181 = vrot.lane.b32.xlu0 %v1218, 121
    %v2182 = vpop.permute.xlu0 %2181
    %2183 = vrot.lane.b32.xlu0 %v1220, 121
    %v2184 = vpop.permute.xlu0 %2183
    %2185 = vrot.lane.b32.xlu0 %v1223, 121
    %v2186 = vpop.permute.xlu0 %2185
    %2187 = vrot.lane.b32.xlu0 %v1225, 121
    %v2188 = vpop.permute.xlu0 %2187
    %2189 = vrot.lane.b32.xlu0 %v1228, 121
    %v2190 = vpop.permute.xlu0 %2189
    %2191 = vrot.lane.b32.xlu0 %v1230, 121
    %v2192 = vpop.permute.xlu0 %2191
    %2193 = vrot.lane.b32.xlu0 %v1233, 121
    %v2194 = vpop.permute.xlu0 %2193
    %2195 = vrot.lane.b32.xlu0 %v1235, 121
    %v2196 = vpop.permute.xlu0 %2195
    %2197 = vrot.lane.b32.xlu0 %v1238, 121
    %v2198 = vpop.permute.xlu0 %2197
    %2199 = vrot.lane.b32.xlu0 %v1240, 121
    %v2200 = vpop.permute.xlu0 %2199
    %2201 = vrot.lane.b32.xlu0 %v1243, 121
    %v2202 = vpop.permute.xlu0 %2201
    %2203 = vrot.lane.b32.xlu0 %v1245, 121
    %v2204 = vpop.permute.xlu0 %2203
    %2205 = vrot.lane.b32.xlu0 %v1248, 121
    %v2206 = vpop.permute.xlu0 %2205
    %2207 = vrot.lane.b32.xlu0 %v1250, 121
    %v2208 = vpop.permute.xlu0 %2207
    %2209 = vrot.lane.b32.xlu0 %v1253, 121
    %v2210 = vpop.permute.xlu0 %2209
    %2211 = vrot.lane.b32.xlu0 %v1255, 121
    %v2212 = vpop.permute.xlu0 %2211
    %2213 = vrot.lane.b32.xlu0 %v1258, 121
    %v2214 = vpop.permute.xlu0 %2213
    %2215 = vrot.lane.b32.xlu0 %v1260, 121
    %v2216 = vpop.permute.xlu0 %2215
    %2217 = vrot.lane.b32.xlu0 %v1263, 121
    %v2218 = vpop.permute.xlu0 %2217
    %2219 = vrot.lane.b32.xlu0 %v1265, 121
    %v2220 = vpop.permute.xlu0 %2219
    %2221 = vrot.lane.b32.xlu0 %v1268, 121
    %v2222 = vpop.permute.xlu0 %2221
    %2223 = vrot.lane.b32.xlu0 %v1270, 121
    %v2224 = vpop.permute.xlu0 %2223
    %2225 = vrot.lane.b32.xlu0 %v1273, 121
    %v2226 = vpop.permute.xlu0 %2225
    %2227 = vrot.lane.b32.xlu0 %v1275, 121
    %v2228 = vpop.permute.xlu0 %2227
    %s2229 = scalar_lea.vmem [#allocation5], 6
    %v2230 = vld [vmem:[%s2229] sm:$0x1]
    %v2232 = vperm.slane %v2230, 0
    %v2234 = vmul.f32 %v2166, %v2232
    %v2235 = vmul.f32 %v2168, %v2232
    %v2236 = vmul.f32 %v2170, %v2232
    %v2237 = vmul.f32 %v2172, %v2232
    %v2238 = vmul.f32 %v2174, %v2232
    %v2239 = vmul.f32 %v2176, %v2232
    %v2240 = vmul.f32 %v2178, %v2232
    %v2241 = vmul.f32 %v2180, %v2232
    %v2242 = vmul.f32 %v2182, %v2232
    %v2243 = vmul.f32 %v2184, %v2232
    %v2244 = vmul.f32 %v2186, %v2232
    %v2245 = vmul.f32 %v2188, %v2232
    %v2246 = vmul.f32 %v2190, %v2232
    %v2247 = vmul.f32 %v2192, %v2232
    %v2248 = vmul.f32 %v2194, %v2232
    %v2249 = vmul.f32 %v2196, %v2232
    %v2250 = vmul.f32 %v2198, %v2232
    %v2251 = vmul.f32 %v2200, %v2232
    %v2252 = vmul.f32 %v2202, %v2232
    %v2253 = vmul.f32 %v2204, %v2232
    %v2254 = vmul.f32 %v2206, %v2232
    %v2255 = vmul.f32 %v2208, %v2232
    %v2256 = vmul.f32 %v2210, %v2232
    %v2257 = vmul.f32 %v2212, %v2232
    %v2258 = vmul.f32 %v2214, %v2232
    %v2259 = vmul.f32 %v2216, %v2232
    %v2260 = vmul.f32 %v2218, %v2232
    %v2261 = vmul.f32 %v2220, %v2232
    %v2262 = vmul.f32 %v2222, %v2232
    %v2263 = vmul.f32 %v2224, %v2232
    %v2264 = vmul.f32 %v2226, %v2232
    %v2265 = vmul.f32 %v2228, %v2232
    %v2266 = vpack.c.bf16 %v2234, %v2234
    %v2267 = vpack.c.bf16 %v2235, %v2235
    %v2268 = vpack.c.bf16 %v2236, %v2236
    %v2269 = vpack.c.bf16 %v2237, %v2237
    %v2270 = vpack.c.bf16 %v2238, %v2238
    %v2271 = vpack.c.bf16 %v2239, %v2239
    %v2272 = vpack.c.bf16 %v2240, %v2240
    %v2273 = vpack.c.bf16 %v2241, %v2241
    %v2274 = vpack.c.bf16 %v2242, %v2242
    %v2275 = vpack.c.bf16 %v2243, %v2243
    %v2276 = vpack.c.bf16 %v2244, %v2244
    %v2277 = vpack.c.bf16 %v2245, %v2245
    %v2278 = vpack.c.bf16 %v2246, %v2246
    %v2279 = vpack.c.bf16 %v2247, %v2247
    %v2280 = vpack.c.bf16 %v2248, %v2248
    %v2281 = vpack.c.bf16 %v2249, %v2249
    %v2282 = vpack.c.bf16 %v2250, %v2250
    %v2283 = vpack.c.bf16 %v2251, %v2251
    %v2284 = vpack.c.bf16 %v2252, %v2252
    %v2285 = vpack.c.bf16 %v2253, %v2253
    %v2286 = vpack.c.bf16 %v2254, %v2254
    %v2287 = vpack.c.bf16 %v2255, %v2255
    %v2288 = vpack.c.bf16 %v2256, %v2256
    %v2289 = vpack.c.bf16 %v2257, %v2257
    %v2290 = vpack.c.bf16 %v2258, %v2258
    %v2291 = vpack.c.bf16 %v2259, %v2259
    %v2292 = vpack.c.bf16 %v2260, %v2260
    %v2293 = vpack.c.bf16 %v2261, %v2261
    %v2294 = vpack.c.bf16 %v2262, %v2262
    %v2295 = vpack.c.bf16 %v2263, %v2263
    %v2296 = vpack.c.bf16 %v2264, %v2264
    %v2297 = vpack.c.bf16 %v2265, %v2265
    %2298 = vst [vmem:[#allocation2 + $0x300] sm:$0xf] %v2266
    %2299 = vst [vmem:[#allocation2 + $0x304] sm:$0xf] %v2267
    %2300 = vst [vmem:[#allocation2 + $0x308] sm:$0xf] %v2268
    %2301 = vst [vmem:[#allocation2 + $0x30c] sm:$0xf] %v2269
    %2302 = vst [vmem:[#allocation2 + $0x310] sm:$0xf] %v2270
    %2303 = vst [vmem:[#allocation2 + $0x314] sm:$0xf] %v2271
    %2304 = vst [vmem:[#allocation2 + $0x318] sm:$0xf] %v2272
    %2305 = vst [vmem:[#allocation2 + $0x31c] sm:$0xf] %v2273
    %2306 = vst [vmem:[#allocation2 + $0x320] sm:$0xf] %v2274
    %2307 = vst [vmem:[#allocation2 + $0x324] sm:$0xf] %v2275
    %2308 = vst [vmem:[#allocation2 + $0x328] sm:$0xf] %v2276
    %2309 = vst [vmem:[#allocation2 + $0x32c] sm:$0xf] %v2277
    %2310 = vst [vmem:[#allocation2 + $0x330] sm:$0xf] %v2278
    %2311 = vst [vmem:[#allocation2 + $0x334] sm:$0xf] %v2279
    %2312 = vst [vmem:[#allocation2 + $0x338] sm:$0xf] %v2280
    %2313 = vst [vmem:[#allocation2 + $0x33c] sm:$0xf] %v2281
    %2314 = vst [vmem:[#allocation2 + $0x340] sm:$0xf] %v2282
    %2315 = vst [vmem:[#allocation2 + $0x344] sm:$0xf] %v2283
    %2316 = vst [vmem:[#allocation2 + $0x348] sm:$0xf] %v2284
    %2317 = vst [vmem:[#allocation2 + $0x34c] sm:$0xf] %v2285
    %2318 = vst [vmem:[#allocation2 + $0x350] sm:$0xf] %v2286
    %2319 = vst [vmem:[#allocation2 + $0x354] sm:$0xf] %v2287
    %2320 = vst [vmem:[#allocation2 + $0x358] sm:$0xf] %v2288
    %2321 = vst [vmem:[#allocation2 + $0x35c] sm:$0xf] %v2289
    %2322 = vst [vmem:[#allocation2 + $0x360] sm:$0xf] %v2290
    %2323 = vst [vmem:[#allocation2 + $0x364] sm:$0xf] %v2291
    %2324 = vst [vmem:[#allocation2 + $0x368] sm:$0xf] %v2292
    %2325 = vst [vmem:[#allocation2 + $0x36c] sm:$0xf] %v2293
    %2326 = vst [vmem:[#allocation2 + $0x370] sm:$0xf] %v2294
    %2327 = vst [vmem:[#allocation2 + $0x374] sm:$0xf] %v2295
    %2328 = vst [vmem:[#allocation2 + $0x378] sm:$0xf] %v2296
    %2329 = vst [vmem:[#allocation2 + $0x37c] sm:$0xf] %v2297
    %2330 = vrot.lane.b32.xlu0 %v1198, 120
    %v2331 = vpop.permute.xlu0 %2330
    %2332 = vrot.lane.b32.xlu0 %v1200, 120
    %v2333 = vpop.permute.xlu0 %2332
    %2334 = vrot.lane.b32.xlu0 %v1203, 120
    %v2335 = vpop.permute.xlu0 %2334
    %2336 = vrot.lane.b32.xlu0 %v1205, 120
    %v2337 = vpop.permute.xlu0 %2336
    %2338 = vrot.lane.b32.xlu0 %v1208, 120
    %v2339 = vpop.permute.xlu0 %2338
    %2340 = vrot.lane.b32.xlu0 %v1210, 120
    %v2341 = vpop.permute.xlu0 %2340
    %2342 = vrot.lane.b32.xlu0 %v1213, 120
    %v2343 = vpop.permute.xlu0 %2342
    %2344 = vrot.lane.b32.xlu0 %v1215, 120
    %v2345 = vpop.permute.xlu0 %2344
    %2346 = vrot.lane.b32.xlu0 %v1218, 120
    %v2347 = vpop.permute.xlu0 %2346
    %2348 = vrot.lane.b32.xlu0 %v1220, 120
    %v2349 = vpop.permute.xlu0 %2348
    %2350 = vrot.lane.b32.xlu0 %v1223, 120
    %v2351 = vpop.permute.xlu0 %2350
    %2352 = vrot.lane.b32.xlu0 %v1225, 120
    %v2353 = vpop.permute.xlu0 %2352
    %2354 = vrot.lane.b32.xlu0 %v1228, 120
    %v2355 = vpop.permute.xlu0 %2354
    %2356 = vrot.lane.b32.xlu0 %v1230, 120
    %v2357 = vpop.permute.xlu0 %2356
    %2358 = vrot.lane.b32.xlu0 %v1233, 120
    %v2359 = vpop.permute.xlu0 %2358
    %2360 = vrot.lane.b32.xlu0 %v1235, 120
    %v2361 = vpop.permute.xlu0 %2360
    %2362 = vrot.lane.b32.xlu0 %v1238, 120
    %v2363 = vpop.permute.xlu0 %2362
    %2364 = vrot.lane.b32.xlu0 %v1240, 120
    %v2365 = vpop.permute.xlu0 %2364
    %2366 = vrot.lane.b32.xlu0 %v1243, 120
    %v2367 = vpop.permute.xlu0 %2366
    %2368 = vrot.lane.b32.xlu0 %v1245, 120
    %v2369 = vpop.permute.xlu0 %2368
    %2370 = vrot.lane.b32.xlu0 %v1248, 120
    %v2371 = vpop.permute.xlu0 %2370
    %2372 = vrot.lane.b32.xlu0 %v1250, 120
    %v2373 = vpop.permute.xlu0 %2372
    %2374 = vrot.lane.b32.xlu0 %v1253, 120
    %v2375 = vpop.permute.xlu0 %2374
    %2376 = vrot.lane.b32.xlu0 %v1255, 120
    %v2377 = vpop.permute.xlu0 %2376
    %2378 = vrot.lane.b32.xlu0 %v1258, 120
    %v2379 = vpop.permute.xlu0 %2378
    %2380 = vrot.lane.b32.xlu0 %v1260, 120
    %v2381 = vpop.permute.xlu0 %2380
    %2382 = vrot.lane.b32.xlu0 %v1263, 120
    %v2383 = vpop.permute.xlu0 %2382
    %2384 = vrot.lane.b32.xlu0 %v1265, 120
    %v2385 = vpop.permute.xlu0 %2384
    %2386 = vrot.lane.b32.xlu0 %v1268, 120
    %v2387 = vpop.permute.xlu0 %2386
    %2388 = vrot.lane.b32.xlu0 %v1270, 120
    %v2389 = vpop.permute.xlu0 %2388
    %2390 = vrot.lane.b32.xlu0 %v1273, 120
    %v2391 = vpop.permute.xlu0 %2390
    %2392 = vrot.lane.b32.xlu0 %v1275, 120
    %v2393 = vpop.permute.xlu0 %2392
    %s2394 = scalar_lea.vmem [#allocation5], 7
    %v2395 = vld [vmem:[%s2394] sm:$0x1]
    %v2397 = vperm.slane %v2395, 0
    %v2399 = vmul.f32 %v2331, %v2397
    %v2400 = vmul.f32 %v2333, %v2397
    %v2401 = vmul.f32 %v2335, %v2397
    %v2402 = vmul.f32 %v2337, %v2397
    %v2403 = vmul.f32 %v2339, %v2397
    %v2404 = vmul.f32 %v2341, %v2397
    %v2405 = vmul.f32 %v2343, %v2397
    %v2406 = vmul.f32 %v2345, %v2397
    %v2407 = vmul.f32 %v2347, %v2397
    %v2408 = vmul.f32 %v2349, %v2397
    %v2409 = vmul.f32 %v2351, %v2397
    %v2410 = vmul.f32 %v2353, %v2397
    %v2411 = vmul.f32 %v2355, %v2397
    %v2412 = vmul.f32 %v2357, %v2397
    %v2413 = vmul.f32 %v2359, %v2397
    %v2414 = vmul.f32 %v2361, %v2397
    %v2415 = vmul.f32 %v2363, %v2397
    %v2416 = vmul.f32 %v2365, %v2397
    %v2417 = vmul.f32 %v2367, %v2397
    %v2418 = vmul.f32 %v2369, %v2397
    %v2419 = vmul.f32 %v2371, %v2397
    %v2420 = vmul.f32 %v2373, %v2397
    %v2421 = vmul.f32 %v2375, %v2397
    %v2422 = vmul.f32 %v2377, %v2397
    %v2423 = vmul.f32 %v2379, %v2397
    %v2424 = vmul.f32 %v2381, %v2397
    %v2425 = vmul.f32 %v2383, %v2397
    %v2426 = vmul.f32 %v2385, %v2397
    %v2427 = vmul.f32 %v2387, %v2397
    %v2428 = vmul.f32 %v2389, %v2397
    %v2429 = vmul.f32 %v2391, %v2397
    %v2430 = vmul.f32 %v2393, %v2397
    %v2431 = vpack.c.bf16 %v2399, %v2399
    %v2432 = vpack.c.bf16 %v2400, %v2400
    %v2433 = vpack.c.bf16 %v2401, %v2401
    %v2434 = vpack.c.bf16 %v2402, %v2402
    %v2435 = vpack.c.bf16 %v2403, %v2403
    %v2436 = vpack.c.bf16 %v2404, %v2404
    %v2437 = vpack.c.bf16 %v2405, %v2405
    %v2438 = vpack.c.bf16 %v2406, %v2406
    %v2439 = vpack.c.bf16 %v2407, %v2407
    %v2440 = vpack.c.bf16 %v2408, %v2408
    %v2441 = vpack.c.bf16 %v2409, %v2409
    %v2442 = vpack.c.bf16 %v2410, %v2410
    %v2443 = vpack.c.bf16 %v2411, %v2411
    %v2444 = vpack.c.bf16 %v2412, %v2412
    %v2445 = vpack.c.bf16 %v2413, %v2413
    %v2446 = vpack.c.bf16 %v2414, %v2414
    %v2447 = vpack.c.bf16 %v2415, %v2415
    %v2448 = vpack.c.bf16 %v2416, %v2416
    %v2449 = vpack.c.bf16 %v2417, %v2417
    %v2450 = vpack.c.bf16 %v2418, %v2418
    %v2451 = vpack.c.bf16 %v2419, %v2419
    %v2452 = vpack.c.bf16 %v2420, %v2420
    %v2453 = vpack.c.bf16 %v2421, %v2421
    %v2454 = vpack.c.bf16 %v2422, %v2422
    %v2455 = vpack.c.bf16 %v2423, %v2423
    %v2456 = vpack.c.bf16 %v2424, %v2424
    %v2457 = vpack.c.bf16 %v2425, %v2425
    %v2458 = vpack.c.bf16 %v2426, %v2426
    %v2459 = vpack.c.bf16 %v2427, %v2427
    %v2460 = vpack.c.bf16 %v2428, %v2428
    %v2461 = vpack.c.bf16 %v2429, %v2429
    %v2462 = vpack.c.bf16 %v2430, %v2430
    %2463 = vst [vmem:[#allocation2 + $0x380] sm:$0xf] %v2431
    %2464 = vst [vmem:[#allocation2 + $0x384] sm:$0xf] %v2432
    %2465 = vst [vmem:[#allocation2 + $0x388] sm:$0xf] %v2433
    %2466 = vst [vmem:[#allocation2 + $0x38c] sm:$0xf] %v2434
    %2467 = vst [vmem:[#allocation2 + $0x390] sm:$0xf] %v2435
    %2468 = vst [vmem:[#allocation2 + $0x394] sm:$0xf] %v2436
    %2469 = vst [vmem:[#allocation2 + $0x398] sm:$0xf] %v2437
    %2470 = vst [vmem:[#allocation2 + $0x39c] sm:$0xf] %v2438
    %2471 = vst [vmem:[#allocation2 + $0x3a0] sm:$0xf] %v2439
    %2472 = vst [vmem:[#allocation2 + $0x3a4] sm:$0xf] %v2440
    %2473 = vst [vmem:[#allocation2 + $0x3a8] sm:$0xf] %v2441
    %2474 = vst [vmem:[#allocation2 + $0x3ac] sm:$0xf] %v2442
    %2475 = vst [vmem:[#allocation2 + $0x3b0] sm:$0xf] %v2443
    %2476 = vst [vmem:[#allocation2 + $0x3b4] sm:$0xf] %v2444
    %2477 = vst [vmem:[#allocation2 + $0x3b8] sm:$0xf] %v2445
    %2478 = vst [vmem:[#allocation2 + $0x3bc] sm:$0xf] %v2446
    %2479 = vst [vmem:[#allocation2 + $0x3c0] sm:$0xf] %v2447
    %2480 = vst [vmem:[#allocation2 + $0x3c4] sm:$0xf] %v2448
    %2481 = vst [vmem:[#allocation2 + $0x3c8] sm:$0xf] %v2449
    %2482 = vst [vmem:[#allocation2 + $0x3cc] sm:$0xf] %v2450
    %2483 = vst [vmem:[#allocation2 + $0x3d0] sm:$0xf] %v2451
    %2484 = vst [vmem:[#allocation2 + $0x3d4] sm:$0xf] %v2452
    %2485 = vst [vmem:[#allocation2 + $0x3d8] sm:$0xf] %v2453
    %2486 = vst [vmem:[#allocation2 + $0x3dc] sm:$0xf] %v2454
    %2487 = vst [vmem:[#allocation2 + $0x3e0] sm:$0xf] %v2455
    %2488 = vst [vmem:[#allocation2 + $0x3e4] sm:$0xf] %v2456
    %2489 = vst [vmem:[#allocation2 + $0x3e8] sm:$0xf] %v2457
    %2490 = vst [vmem:[#allocation2 + $0x3ec] sm:$0xf] %v2458
    %2491 = vst [vmem:[#allocation2 + $0x3f0] sm:$0xf] %v2459
    %2492 = vst [vmem:[#allocation2 + $0x3f4] sm:$0xf] %v2460
    %2493 = vst [vmem:[#allocation2 + $0x3f8] sm:$0xf] %v2461
    %2494 = vst [vmem:[#allocation2 + $0x3fc] sm:$0xf] %v2462
    %2495 = vrot.lane.b32.xlu0 %v1198, 119
    %v2496 = vpop.permute.xlu0 %2495
    %2497 = vrot.lane.b32.xlu0 %v1200, 119
    %v2498 = vpop.permute.xlu0 %2497
    %2499 = vrot.lane.b32.xlu0 %v1203, 119
    %v2500 = vpop.permute.xlu0 %2499
    %2501 = vrot.lane.b32.xlu0 %v1205, 119
    %v2502 = vpop.permute.xlu0 %2501
    %2503 = vrot.lane.b32.xlu0 %v1208, 119
    %v2504 = vpop.permute.xlu0 %2503
    %2505 = vrot.lane.b32.xlu0 %v1210, 119
    %v2506 = vpop.permute.xlu0 %2505
    %2507 = vrot.lane.b32.xlu0 %v1213, 119
    %v2508 = vpop.permute.xlu0 %2507
    %2509 = vrot.lane.b32.xlu0 %v1215, 119
    %v2510 = vpop.permute.xlu0 %2509
    %2511 = vrot.lane.b32.xlu0 %v1218, 119
    %v2512 = vpop.permute.xlu0 %2511
    %2513 = vrot.lane.b32.xlu0 %v1220, 119
    %v2514 = vpop.permute.xlu0 %2513
    %2515 = vrot.lane.b32.xlu0 %v1223, 119
    %v2516 = vpop.permute.xlu0 %2515
    %2517 = vrot.lane.b32.xlu0 %v1225, 119
    %v2518 = vpop.permute.xlu0 %2517
    %2519 = vrot.lane.b32.xlu0 %v1228, 119
    %v2520 = vpop.permute.xlu0 %2519
    %2521 = vrot.lane.b32.xlu0 %v1230, 119
    %v2522 = vpop.permute.xlu0 %2521
    %2523 = vrot.lane.b32.xlu0 %v1233, 119
    %v2524 = vpop.permute.xlu0 %2523
    %2525 = vrot.lane.b32.xlu0 %v1235, 119
    %v2526 = vpop.permute.xlu0 %2525
    %2527 = vrot.lane.b32.xlu0 %v1238, 119
    %v2528 = vpop.permute.xlu0 %2527
    %2529 = vrot.lane.b32.xlu0 %v1240, 119
    %v2530 = vpop.permute.xlu0 %2529
    %2531 = vrot.lane.b32.xlu0 %v1243, 119
    %v2532 = vpop.permute.xlu0 %2531
    %2533 = vrot.lane.b32.xlu0 %v1245, 119
    %v2534 = vpop.permute.xlu0 %2533
    %2535 = vrot.lane.b32.xlu0 %v1248, 119
    %v2536 = vpop.permute.xlu0 %2535
    %2537 = vrot.lane.b32.xlu0 %v1250, 119
    %v2538 = vpop.permute.xlu0 %2537
    %2539 = vrot.lane.b32.xlu0 %v1253, 119
    %v2540 = vpop.permute.xlu0 %2539
    %2541 = vrot.lane.b32.xlu0 %v1255, 119
    %v2542 = vpop.permute.xlu0 %2541
    %2543 = vrot.lane.b32.xlu0 %v1258, 119
    %v2544 = vpop.permute.xlu0 %2543
    %2545 = vrot.lane.b32.xlu0 %v1260, 119
    %v2546 = vpop.permute.xlu0 %2545
    %2547 = vrot.lane.b32.xlu0 %v1263, 119
    %v2548 = vpop.permute.xlu0 %2547
    %2549 = vrot.lane.b32.xlu0 %v1265, 119
    %v2550 = vpop.permute.xlu0 %2549
    %2551 = vrot.lane.b32.xlu0 %v1268, 119
    %v2552 = vpop.permute.xlu0 %2551
    %2553 = vrot.lane.b32.xlu0 %v1270, 119
    %v2554 = vpop.permute.xlu0 %2553
    %2555 = vrot.lane.b32.xlu0 %v1273, 119
    %v2556 = vpop.permute.xlu0 %2555
    %2557 = vrot.lane.b32.xlu0 %v1275, 119
    %v2558 = vpop.permute.xlu0 %2557
    %s2559 = scalar_lea.vmem [#allocation5], 8
    %v2560 = vld [vmem:[%s2559] sm:$0x1]
    %v2562 = vperm.slane %v2560, 0
    %v2564 = vmul.f32 %v2496, %v2562
    %v2565 = vmul.f32 %v2498, %v2562
    %v2566 = vmul.f32 %v2500, %v2562
    %v2567 = vmul.f32 %v2502, %v2562
    %v2568 = vmul.f32 %v2504, %v2562
    %v2569 = vmul.f32 %v2506, %v2562
    %v2570 = vmul.f32 %v2508, %v2562
    %v2571 = vmul.f32 %v2510, %v2562
    %v2572 = vmul.f32 %v2512, %v2562
    %v2573 = vmul.f32 %v2514, %v2562
    %v2574 = vmul.f32 %v2516, %v2562
    %v2575 = vmul.f32 %v2518, %v2562
    %v2576 = vmul.f32 %v2520, %v2562
    %v2577 = vmul.f32 %v2522, %v2562
    %v2578 = vmul.f32 %v2524, %v2562
    %v2579 = vmul.f32 %v2526, %v2562
    %v2580 = vmul.f32 %v2528, %v2562
    %v2581 = vmul.f32 %v2530, %v2562
    %v2582 = vmul.f32 %v2532, %v2562
    %v2583 = vmul.f32 %v2534, %v2562
    %v2584 = vmul.f32 %v2536, %v2562
    %v2585 = vmul.f32 %v2538, %v2562
    %v2586 = vmul.f32 %v2540, %v2562
    %v2587 = vmul.f32 %v2542, %v2562
    %v2588 = vmul.f32 %v2544, %v2562
    %v2589 = vmul.f32 %v2546, %v2562
    %v2590 = vmul.f32 %v2548, %v2562
    %v2591 = vmul.f32 %v2550, %v2562
    %v2592 = vmul.f32 %v2552, %v2562
    %v2593 = vmul.f32 %v2554, %v2562
    %v2594 = vmul.f32 %v2556, %v2562
    %v2595 = vmul.f32 %v2558, %v2562
    %v2596 = vpack.c.bf16 %v2564, %v2564
    %v2597 = vpack.c.bf16 %v2565, %v2565
    %v2598 = vpack.c.bf16 %v2566, %v2566
    %v2599 = vpack.c.bf16 %v2567, %v2567
    %v2600 = vpack.c.bf16 %v2568, %v2568
    %v2601 = vpack.c.bf16 %v2569, %v2569
    %v2602 = vpack.c.bf16 %v2570, %v2570
    %v2603 = vpack.c.bf16 %v2571, %v2571
    %v2604 = vpack.c.bf16 %v2572, %v2572
    %v2605 = vpack.c.bf16 %v2573, %v2573
    %v2606 = vpack.c.bf16 %v2574, %v2574
    %v2607 = vpack.c.bf16 %v2575, %v2575
    %v2608 = vpack.c.bf16 %v2576, %v2576
    %v2609 = vpack.c.bf16 %v2577, %v2577
    %v2610 = vpack.c.bf16 %v2578, %v2578
    %v2611 = vpack.c.bf16 %v2579, %v2579
    %v2612 = vpack.c.bf16 %v2580, %v2580
    %v2613 = vpack.c.bf16 %v2581, %v2581
    %v2614 = vpack.c.bf16 %v2582, %v2582
    %v2615 = vpack.c.bf16 %v2583, %v2583
    %v2616 = vpack.c.bf16 %v2584, %v2584
    %v2617 = vpack.c.bf16 %v2585, %v2585
    %v2618 = vpack.c.bf16 %v2586, %v2586
    %v2619 = vpack.c.bf16 %v2587, %v2587
    %v2620 = vpack.c.bf16 %v2588, %v2588
    %v2621 = vpack.c.bf16 %v2589, %v2589
    %v2622 = vpack.c.bf16 %v2590, %v2590
    %v2623 = vpack.c.bf16 %v2591, %v2591
    %v2624 = vpack.c.bf16 %v2592, %v2592
    %v2625 = vpack.c.bf16 %v2593, %v2593
    %v2626 = vpack.c.bf16 %v2594, %v2594
    %v2627 = vpack.c.bf16 %v2595, %v2595
    %2628 = vst [vmem:[#allocation2 + $0x400] sm:$0xf] %v2596
    %2629 = vst [vmem:[#allocation2 + $0x404] sm:$0xf] %v2597
    %2630 = vst [vmem:[#allocation2 + $0x408] sm:$0xf] %v2598
    %2631 = vst [vmem:[#allocation2 + $0x40c] sm:$0xf] %v2599
    %2632 = vst [vmem:[#allocation2 + $0x410] sm:$0xf] %v2600
    %2633 = vst [vmem:[#allocation2 + $0x414] sm:$0xf] %v2601
    %2634 = vst [vmem:[#allocation2 + $0x418] sm:$0xf] %v2602
    %2635 = vst [vmem:[#allocation2 + $0x41c] sm:$0xf] %v2603
    %2636 = vst [vmem:[#allocation2 + $0x420] sm:$0xf] %v2604
    %2637 = vst [vmem:[#allocation2 + $0x424] sm:$0xf] %v2605
    %2638 = vst [vmem:[#allocation2 + $0x428] sm:$0xf] %v2606
    %2639 = vst [vmem:[#allocation2 + $0x42c] sm:$0xf] %v2607
    %2640 = vst [vmem:[#allocation2 + $0x430] sm:$0xf] %v2608
    %2641 = vst [vmem:[#allocation2 + $0x434] sm:$0xf] %v2609
    %2642 = vst [vmem:[#allocation2 + $0x438] sm:$0xf] %v2610
    %2643 = vst [vmem:[#allocation2 + $0x43c] sm:$0xf] %v2611
    %2644 = vst [vmem:[#allocation2 + $0x440] sm:$0xf] %v2612
    %2645 = vst [vmem:[#allocation2 + $0x444] sm:$0xf] %v2613
    %2646 = vst [vmem:[#allocation2 + $0x448] sm:$0xf] %v2614
    %2647 = vst [vmem:[#allocation2 + $0x44c] sm:$0xf] %v2615
    %2648 = vst [vmem:[#allocation2 + $0x450] sm:$0xf] %v2616
    %2649 = vst [vmem:[#allocation2 + $0x454] sm:$0xf] %v2617
    %2650 = vst [vmem:[#allocation2 + $0x458] sm:$0xf] %v2618
    %2651 = vst [vmem:[#allocation2 + $0x45c] sm:$0xf] %v2619
    %2652 = vst [vmem:[#allocation2 + $0x460] sm:$0xf] %v2620
    %2653 = vst [vmem:[#allocation2 + $0x464] sm:$0xf] %v2621
    %2654 = vst [vmem:[#allocation2 + $0x468] sm:$0xf] %v2622
    %2655 = vst [vmem:[#allocation2 + $0x46c] sm:$0xf] %v2623
    %2656 = vst [vmem:[#allocation2 + $0x470] sm:$0xf] %v2624
    %2657 = vst [vmem:[#allocation2 + $0x474] sm:$0xf] %v2625
    %2658 = vst [vmem:[#allocation2 + $0x478] sm:$0xf] %v2626
    %2659 = vst [vmem:[#allocation2 + $0x47c] sm:$0xf] %v2627
    %v2660 = vld [vmem:[#allocation8] sm:$0xff]
    %v2661 = vld [vmem:[#allocation8 + $0x8] sm:$0xff]
    %v2662 = vld [vmem:[#allocation8 + $0x10] sm:$0xff]
    %v2663 = vld [vmem:[#allocation8 + $0x18] sm:$0xff]
    %v2664 = vld [vmem:[#allocation8 + $0x20] sm:$0xff]
    %v2665 = vld [vmem:[#allocation8 + $0x28] sm:$0xff]
    %v2666 = vld [vmem:[#allocation8 + $0x30] sm:$0xff]
    %v2667 = vld [vmem:[#allocation8 + $0x38] sm:$0xff]
    %v2668 = vld [vmem:[#allocation8 + $0x40] sm:$0xff]
    %v2669 = vld [vmem:[#allocation8 + $0x48] sm:$0xff]
    %v2670 = vld [vmem:[#allocation8 + $0x50] sm:$0xff]
    %v2671 = vld [vmem:[#allocation8 + $0x58] sm:$0xff]
    %v2672 = vld [vmem:[#allocation8 + $0x60] sm:$0xff]
    %v2673 = vld [vmem:[#allocation8 + $0x68] sm:$0xff]
    %v2674 = vld [vmem:[#allocation8 + $0x70] sm:$0xff]
    %v2675 = vld [vmem:[#allocation8 + $0x78] sm:$0xff]
    %v2676 = vld [vmem:[#allocation8 + $0x80] sm:$0xff]
    %v2677 = vld [vmem:[#allocation8 + $0x88] sm:$0xff]
    %v2678 = vld [vmem:[#allocation8 + $0x90] sm:$0xff]
    %v2679 = vld [vmem:[#allocation8 + $0x98] sm:$0xff]
    %v2680 = vld [vmem:[#allocation8 + $0xa0] sm:$0xff]
    %v2681 = vld [vmem:[#allocation8 + $0xa8] sm:$0xff]
    %v2682 = vld [vmem:[#allocation8 + $0xb0] sm:$0xff]
    %v2683 = vld [vmem:[#allocation8 + $0xb8] sm:$0xff]
    %v2684 = vld [vmem:[#allocation8 + $0xc0] sm:$0xff]
    %v2685 = vld [vmem:[#allocation8 + $0xc8] sm:$0xff]
    %v2686 = vld [vmem:[#allocation8 + $0xd0] sm:$0xff]
    %v2687 = vld [vmem:[#allocation8 + $0xd8] sm:$0xff]
    %v2688 = vld [vmem:[#allocation8 + $0xe0] sm:$0xff]
    %v2689 = vld [vmem:[#allocation8 + $0xe8] sm:$0xff]
    %v2690 = vld [vmem:[#allocation8 + $0xf0] sm:$0xff]
    %v2691 = vld [vmem:[#allocation8 + $0xf8] sm:$0xff]
    %v2692 = vld [vmem:[#allocation8 + $0x100] sm:$0xff]
    %v2693 = vld [vmem:[#allocation8 + $0x108] sm:$0xff]
    %v2694 = vld [vmem:[#allocation8 + $0x110] sm:$0xff]
    %v2695 = vld [vmem:[#allocation8 + $0x118] sm:$0xff]
    %v2696 = vld [vmem:[#allocation8 + $0x120] sm:$0xff]
    %v2697 = vld [vmem:[#allocation8 + $0x128] sm:$0xff]
    %v2698 = vld [vmem:[#allocation8 + $0x130] sm:$0xff]
    %v2699 = vld [vmem:[#allocation8 + $0x138] sm:$0xff]
    %v2700 = vld [vmem:[#allocation8 + $0x140] sm:$0xff]
    %v2701 = vld [vmem:[#allocation8 + $0x148] sm:$0xff]
    %v2702 = vld [vmem:[#allocation8 + $0x150] sm:$0xff]
    %v2703 = vld [vmem:[#allocation8 + $0x158] sm:$0xff]
    %v2704 = vld [vmem:[#allocation8 + $0x160] sm:$0xff]
    %v2705 = vld [vmem:[#allocation8 + $0x168] sm:$0xff]
    %v2706 = vld [vmem:[#allocation8 + $0x170] sm:$0xff]
    %v2707 = vld [vmem:[#allocation8 + $0x178] sm:$0xff]
    %v2708 = vld [vmem:[#allocation8 + $0x180] sm:$0xff]
    %v2709 = vld [vmem:[#allocation8 + $0x188] sm:$0xff]
    %v2710 = vld [vmem:[#allocation8 + $0x190] sm:$0xff]
    %v2711 = vld [vmem:[#allocation8 + $0x198] sm:$0xff]
    %v2712 = vld [vmem:[#allocation8 + $0x1a0] sm:$0xff]
    %v2713 = vld [vmem:[#allocation8 + $0x1a8] sm:$0xff]
    %v2714 = vld [vmem:[#allocation8 + $0x1b0] sm:$0xff]
    %v2715 = vld [vmem:[#allocation8 + $0x1b8] sm:$0xff]
    %v2716 = vld [vmem:[#allocation8 + $0x1c0] sm:$0xff]
    %v2717 = vld [vmem:[#allocation8 + $0x1c8] sm:$0xff]
    %v2718 = vld [vmem:[#allocation8 + $0x1d0] sm:$0xff]
    %v2719 = vld [vmem:[#allocation8 + $0x1d8] sm:$0xff]
    %v2720 = vld [vmem:[#allocation8 + $0x1e0] sm:$0xff]
    %v2721 = vld [vmem:[#allocation8 + $0x1e8] sm:$0xff]
    %v2722 = vld [vmem:[#allocation8 + $0x1f0] sm:$0xff]
    %v2723 = vld [vmem:[#allocation8 + $0x1f8] sm:$0xff]
    %v2724 = vld [vmem:[#allocation8 + $0x200] sm:$0xff]
    %v2725 = vld [vmem:[#allocation8 + $0x208] sm:$0xff]
    %v2726 = vld [vmem:[#allocation8 + $0x210] sm:$0xff]
    %v2727 = vld [vmem:[#allocation8 + $0x218] sm:$0xff]
    %v2728 = vld [vmem:[#allocation8 + $0x220] sm:$0xff]
    %v2729 = vld [vmem:[#allocation8 + $0x228] sm:$0xff]
    %v2730 = vld [vmem:[#allocation8 + $0x230] sm:$0xff]
    %v2731 = vld [vmem:[#allocation8 + $0x238] sm:$0xff]
    %v2732 = vld [vmem:[#allocation8 + $0x240] sm:$0xff]
    %v2733 = vld [vmem:[#allocation8 + $0x248] sm:$0xff]
    %v2734 = vld [vmem:[#allocation8 + $0x250] sm:$0xff]
    %v2735 = vld [vmem:[#allocation8 + $0x258] sm:$0xff]
    %v2736 = vld [vmem:[#allocation8 + $0x260] sm:$0xff]
    %v2737 = vld [vmem:[#allocation8 + $0x268] sm:$0xff]
    %v2738 = vld [vmem:[#allocation8 + $0x270] sm:$0xff]
    %v2739 = vld [vmem:[#allocation8 + $0x278] sm:$0xff]
    %v2740 = vld [vmem:[#allocation8 + $0x280] sm:$0xff]
    %v2741 = vld [vmem:[#allocation8 + $0x288] sm:$0xff]
    %v2742 = vld [vmem:[#allocation8 + $0x290] sm:$0xff]
    %v2743 = vld [vmem:[#allocation8 + $0x298] sm:$0xff]
    %v2744 = vld [vmem:[#allocation8 + $0x2a0] sm:$0xff]
    %v2745 = vld [vmem:[#allocation8 + $0x2a8] sm:$0xff]
    %v2746 = vld [vmem:[#allocation8 + $0x2b0] sm:$0xff]
    %v2747 = vld [vmem:[#allocation8 + $0x2b8] sm:$0xff]
    %v2748 = vld [vmem:[#allocation8 + $0x2c0] sm:$0xff]
    %v2749 = vld [vmem:[#allocation8 + $0x2c8] sm:$0xff]
    %v2750 = vld [vmem:[#allocation8 + $0x2d0] sm:$0xff]
    %v2751 = vld [vmem:[#allocation8 + $0x2d8] sm:$0xff]
    %v2752 = vld [vmem:[#allocation8 + $0x2e0] sm:$0xff]
    %v2753 = vld [vmem:[#allocation8 + $0x2e8] sm:$0xff]
    %v2754 = vld [vmem:[#allocation8 + $0x2f0] sm:$0xff]
    %v2755 = vld [vmem:[#allocation8 + $0x2f8] sm:$0xff]
    %v2756 = vld [vmem:[#allocation8 + $0x300] sm:$0xff]
    %v2757 = vld [vmem:[#allocation8 + $0x308] sm:$0xff]
    %v2758 = vld [vmem:[#allocation8 + $0x310] sm:$0xff]
    %v2759 = vld [vmem:[#allocation8 + $0x318] sm:$0xff]
    %v2760 = vld [vmem:[#allocation8 + $0x320] sm:$0xff]
    %v2761 = vld [vmem:[#allocation8 + $0x328] sm:$0xff]
    %v2762 = vld [vmem:[#allocation8 + $0x330] sm:$0xff]
    %v2763 = vld [vmem:[#allocation8 + $0x338] sm:$0xff]
    %v2764 = vld [vmem:[#allocation8 + $0x340] sm:$0xff]
    %v2765 = vld [vmem:[#allocation8 + $0x348] sm:$0xff]
    %v2766 = vld [vmem:[#allocation8 + $0x350] sm:$0xff]
    %v2767 = vld [vmem:[#allocation8 + $0x358] sm:$0xff]
    %v2768 = vld [vmem:[#allocation8 + $0x360] sm:$0xff]
    %v2769 = vld [vmem:[#allocation8 + $0x368] sm:$0xff]
    %v2770 = vld [vmem:[#allocation8 + $0x370] sm:$0xff]
    %v2771 = vld [vmem:[#allocation8 + $0x378] sm:$0xff]
    %v2772 = vld [vmem:[#allocation8 + $0x380] sm:$0xff]
    %v2773 = vld [vmem:[#allocation8 + $0x388] sm:$0xff]
    %v2774 = vld [vmem:[#allocation8 + $0x390] sm:$0xff]
    %v2775 = vld [vmem:[#allocation8 + $0x398] sm:$0xff]
    %v2776 = vld [vmem:[#allocation8 + $0x3a0] sm:$0xff]
    %v2777 = vld [vmem:[#allocation8 + $0x3a8] sm:$0xff]
    %v2778 = vld [vmem:[#allocation8 + $0x3b0] sm:$0xff]
    %v2779 = vld [vmem:[#allocation8 + $0x3b8] sm:$0xff]
    %v2780 = vld [vmem:[#allocation8 + $0x3c0] sm:$0xff]
    %v2781 = vld [vmem:[#allocation8 + $0x3c8] sm:$0xff]
    %v2782 = vld [vmem:[#allocation8 + $0x3d0] sm:$0xff]
    %v2783 = vld [vmem:[#allocation8 + $0x3d8] sm:$0xff]
    %v2784 = vld [vmem:[#allocation8 + $0x3e0] sm:$0xff]
    %v2785 = vld [vmem:[#allocation8 + $0x3e8] sm:$0xff]
    %v2786 = vld [vmem:[#allocation8 + $0x3f0] sm:$0xff]
    %v2787 = vld [vmem:[#allocation8 + $0x3f8] sm:$0xff]
    %v2788 = vld [vmem:[#allocation8 + $0x400] sm:$0xff]
    %v2789 = vld [vmem:[#allocation8 + $0x408] sm:$0xff]
    %v2790 = vld [vmem:[#allocation8 + $0x410] sm:$0xff]
    %v2791 = vld [vmem:[#allocation8 + $0x418] sm:$0xff]
    %v2792 = vld [vmem:[#allocation8 + $0x420] sm:$0xff]
    %v2793 = vld [vmem:[#allocation8 + $0x428] sm:$0xff]
    %v2794 = vld [vmem:[#allocation8 + $0x430] sm:$0xff]
    %v2795 = vld [vmem:[#allocation8 + $0x438] sm:$0xff]
    %v2796 = vld [vmem:[#allocation8 + $0x440] sm:$0xff]
    %v2797 = vld [vmem:[#allocation8 + $0x448] sm:$0xff]
    %v2798 = vld [vmem:[#allocation8 + $0x450] sm:$0xff]
    %v2799 = vld [vmem:[#allocation8 + $0x458] sm:$0xff]
    %v2800 = vld [vmem:[#allocation8 + $0x460] sm:$0xff]
    %v2801 = vld [vmem:[#allocation8 + $0x468] sm:$0xff]
    %v2802 = vld [vmem:[#allocation8 + $0x470] sm:$0xff]
    %v2803 = vld [vmem:[#allocation8 + $0x478] sm:$0xff]
    %v2804 = vld [vmem:[#allocation8 + $0x480] sm:$0xff]
    %v2805 = vld [vmem:[#allocation8 + $0x488] sm:$0xff]
    %v2806 = vld [vmem:[#allocation8 + $0x490] sm:$0xff]
    %v2807 = vld [vmem:[#allocation8 + $0x498] sm:$0xff]
    %v2808 = vld [vmem:[#allocation8 + $0x4a0] sm:$0xff]
    %v2809 = vld [vmem:[#allocation8 + $0x4a8] sm:$0xff]
    %v2810 = vld [vmem:[#allocation8 + $0x4b0] sm:$0xff]
    %v2811 = vld [vmem:[#allocation8 + $0x4b8] sm:$0xff]
    %v2812 = vld [vmem:[#allocation8 + $0x4c0] sm:$0xff]
    %v2813 = vld [vmem:[#allocation8 + $0x4c8] sm:$0xff]
    %v2814 = vld [vmem:[#allocation8 + $0x4d0] sm:$0xff]
    %v2815 = vld [vmem:[#allocation8 + $0x4d8] sm:$0xff]
    %v2816 = vld [vmem:[#allocation8 + $0x4e0] sm:$0xff]
    %v2817 = vld [vmem:[#allocation8 + $0x4e8] sm:$0xff]
    %v2818 = vld [vmem:[#allocation8 + $0x4f0] sm:$0xff]
    %v2819 = vld [vmem:[#allocation8 + $0x4f8] sm:$0xff]
    %v2820 = vld [vmem:[#allocation8 + $0x500] sm:$0xff]
    %v2821 = vld [vmem:[#allocation8 + $0x508] sm:$0xff]
    %v2822 = vld [vmem:[#allocation8 + $0x510] sm:$0xff]
    %v2823 = vld [vmem:[#allocation8 + $0x518] sm:$0xff]
    %v2824 = vld [vmem:[#allocation8 + $0x520] sm:$0xff]
    %v2825 = vld [vmem:[#allocation8 + $0x528] sm:$0xff]
    %v2826 = vld [vmem:[#allocation8 + $0x530] sm:$0xff]
    %v2827 = vld [vmem:[#allocation8 + $0x538] sm:$0xff]
    %v2828 = vld [vmem:[#allocation8 + $0x540] sm:$0xff]
    %v2829 = vld [vmem:[#allocation8 + $0x548] sm:$0xff]
    %v2830 = vld [vmem:[#allocation8 + $0x550] sm:$0xff]
    %v2831 = vld [vmem:[#allocation8 + $0x558] sm:$0xff]
    %v2832 = vld [vmem:[#allocation8 + $0x560] sm:$0xff]
    %v2833 = vld [vmem:[#allocation8 + $0x568] sm:$0xff]
    %v2834 = vld [vmem:[#allocation8 + $0x570] sm:$0xff]
    %v2835 = vld [vmem:[#allocation8 + $0x578] sm:$0xff]
    %v2836 = vld [vmem:[#allocation8 + $0x580] sm:$0xff]
    %v2837 = vld [vmem:[#allocation8 + $0x588] sm:$0xff]
    %v2838 = vld [vmem:[#allocation8 + $0x590] sm:$0xff]
    %v2839 = vld [vmem:[#allocation8 + $0x598] sm:$0xff]
    %v2840 = vld [vmem:[#allocation8 + $0x5a0] sm:$0xff]
    %v2841 = vld [vmem:[#allocation8 + $0x5a8] sm:$0xff]
    %v2842 = vld [vmem:[#allocation8 + $0x5b0] sm:$0xff]
    %v2843 = vld [vmem:[#allocation8 + $0x5b8] sm:$0xff]
    %v2844 = vld [vmem:[#allocation8 + $0x5c0] sm:$0xff]
    %v2845 = vld [vmem:[#allocation8 + $0x5c8] sm:$0xff]
    %v2846 = vld [vmem:[#allocation8 + $0x5d0] sm:$0xff]
    %v2847 = vld [vmem:[#allocation8 + $0x5d8] sm:$0xff]
    %v2848 = vld [vmem:[#allocation8 + $0x5e0] sm:$0xff]
    %v2849 = vld [vmem:[#allocation8 + $0x5e8] sm:$0xff]
    %v2850 = vld [vmem:[#allocation8 + $0x5f0] sm:$0xff]
    %v2851 = vld [vmem:[#allocation8 + $0x5f8] sm:$0xff]
    %v2852 = vld [vmem:[#allocation8 + $0x600] sm:$0xff]
    %v2853 = vld [vmem:[#allocation8 + $0x608] sm:$0xff]
    %v2854 = vld [vmem:[#allocation8 + $0x610] sm:$0xff]
    %v2855 = vld [vmem:[#allocation8 + $0x618] sm:$0xff]
    %v2856 = vld [vmem:[#allocation8 + $0x620] sm:$0xff]
    %v2857 = vld [vmem:[#allocation8 + $0x628] sm:$0xff]
    %v2858 = vld [vmem:[#allocation8 + $0x630] sm:$0xff]
    %v2859 = vld [vmem:[#allocation8 + $0x638] sm:$0xff]
    %v2860 = vld [vmem:[#allocation8 + $0x640] sm:$0xff]
    %v2861 = vld [vmem:[#allocation8 + $0x648] sm:$0xff]
    %v2862 = vld [vmem:[#allocation8 + $0x650] sm:$0xff]
    %v2863 = vld [vmem:[#allocation8 + $0x658] sm:$0xff]
    %v2864 = vld [vmem:[#allocation8 + $0x660] sm:$0xff]
    %v2865 = vld [vmem:[#allocation8 + $0x668] sm:$0xff]
    %v2866 = vld [vmem:[#allocation8 + $0x670] sm:$0xff]
    %v2867 = vld [vmem:[#allocation8 + $0x678] sm:$0xff]
    %v2868 = vld [vmem:[#allocation8 + $0x680] sm:$0xff]
    %v2869 = vld [vmem:[#allocation8 + $0x688] sm:$0xff]
    %v2870 = vld [vmem:[#allocation8 + $0x690] sm:$0xff]
    %v2871 = vld [vmem:[#allocation8 + $0x698] sm:$0xff]
    %v2872 = vld [vmem:[#allocation8 + $0x6a0] sm:$0xff]
    %v2873 = vld [vmem:[#allocation8 + $0x6a8] sm:$0xff]
    %v2874 = vld [vmem:[#allocation8 + $0x6b0] sm:$0xff]
    %v2875 = vld [vmem:[#allocation8 + $0x6b8] sm:$0xff]
    %v2876 = vld [vmem:[#allocation8 + $0x6c0] sm:$0xff]
    %v2877 = vld [vmem:[#allocation8 + $0x6c8] sm:$0xff]
    %v2878 = vld [vmem:[#allocation8 + $0x6d0] sm:$0xff]
    %v2879 = vld [vmem:[#allocation8 + $0x6d8] sm:$0xff]
    %v2880 = vld [vmem:[#allocation8 + $0x6e0] sm:$0xff]
    %v2881 = vld [vmem:[#allocation8 + $0x6e8] sm:$0xff]
    %v2882 = vld [vmem:[#allocation8 + $0x6f0] sm:$0xff]
    %v2883 = vld [vmem:[#allocation8 + $0x6f8] sm:$0xff]
    %v2884 = vld [vmem:[#allocation8 + $0x700] sm:$0xff]
    %v2885 = vld [vmem:[#allocation8 + $0x708] sm:$0xff]
    %v2886 = vld [vmem:[#allocation8 + $0x710] sm:$0xff]
    %v2887 = vld [vmem:[#allocation8 + $0x718] sm:$0xff]
    %v2888 = vld [vmem:[#allocation8 + $0x720] sm:$0xff]
    %v2889 = vld [vmem:[#allocation8 + $0x728] sm:$0xff]
    %v2890 = vld [vmem:[#allocation8 + $0x730] sm:$0xff]
    %v2891 = vld [vmem:[#allocation8 + $0x738] sm:$0xff]
    %v2892 = vld [vmem:[#allocation8 + $0x740] sm:$0xff]
    %v2893 = vld [vmem:[#allocation8 + $0x748] sm:$0xff]
    %v2894 = vld [vmem:[#allocation8 + $0x750] sm:$0xff]
    %v2895 = vld [vmem:[#allocation8 + $0x758] sm:$0xff]
    %v2896 = vld [vmem:[#allocation8 + $0x760] sm:$0xff]
    %v2897 = vld [vmem:[#allocation8 + $0x768] sm:$0xff]
    %v2898 = vld [vmem:[#allocation8 + $0x770] sm:$0xff]
    %v2899 = vld [vmem:[#allocation8 + $0x778] sm:$0xff]
    %v2900 = vld [vmem:[#allocation8 + $0x780] sm:$0xff]
    %v2901 = vld [vmem:[#allocation8 + $0x788] sm:$0xff]
    %v2902 = vld [vmem:[#allocation8 + $0x790] sm:$0xff]
    %v2903 = vld [vmem:[#allocation8 + $0x798] sm:$0xff]
    %v2904 = vld [vmem:[#allocation8 + $0x7a0] sm:$0xff]
    %v2905 = vld [vmem:[#allocation8 + $0x7a8] sm:$0xff]
    %v2906 = vld [vmem:[#allocation8 + $0x7b0] sm:$0xff]
    %v2907 = vld [vmem:[#allocation8 + $0x7b8] sm:$0xff]
    %v2908 = vld [vmem:[#allocation8 + $0x7c0] sm:$0xff]
    %v2909 = vld [vmem:[#allocation8 + $0x7c8] sm:$0xff]
    %v2910 = vld [vmem:[#allocation8 + $0x7d0] sm:$0xff]
    %v2911 = vld [vmem:[#allocation8 + $0x7d8] sm:$0xff]
    %v2912 = vld [vmem:[#allocation8 + $0x7e0] sm:$0xff]
    %v2913 = vld [vmem:[#allocation8 + $0x7e8] sm:$0xff]
    %v2914 = vld [vmem:[#allocation8 + $0x7f0] sm:$0xff]
    %v2915 = vld [vmem:[#allocation8 + $0x7f8] sm:$0xff]
    %v2916 = vld [vmem:[#allocation8 + $0x800] sm:$0xff]
    %v2917 = vld [vmem:[#allocation8 + $0x808] sm:$0xff]
    %v2918 = vld [vmem:[#allocation8 + $0x810] sm:$0xff]
    %v2919 = vld [vmem:[#allocation8 + $0x818] sm:$0xff]
    %v2920 = vld [vmem:[#allocation8 + $0x820] sm:$0xff]
    %v2921 = vld [vmem:[#allocation8 + $0x828] sm:$0xff]
    %v2922 = vld [vmem:[#allocation8 + $0x830] sm:$0xff]
    %v2923 = vld [vmem:[#allocation8 + $0x838] sm:$0xff]
    %v2924 = vld [vmem:[#allocation8 + $0x840] sm:$0xff]
    %v2925 = vld [vmem:[#allocation8 + $0x848] sm:$0xff]
    %v2926 = vld [vmem:[#allocation8 + $0x850] sm:$0xff]
    %v2927 = vld [vmem:[#allocation8 + $0x858] sm:$0xff]
    %v2928 = vld [vmem:[#allocation8 + $0x860] sm:$0xff]
    %v2929 = vld [vmem:[#allocation8 + $0x868] sm:$0xff]
    %v2930 = vld [vmem:[#allocation8 + $0x870] sm:$0xff]
    %v2931 = vld [vmem:[#allocation8 + $0x878] sm:$0xff]
    %v2932 = vld [vmem:[#allocation8 + $0x880] sm:$0xff]
    %v2933 = vld [vmem:[#allocation8 + $0x888] sm:$0xff]
    %v2934 = vld [vmem:[#allocation8 + $0x890] sm:$0xff]
    %v2935 = vld [vmem:[#allocation8 + $0x898] sm:$0xff]
    %v2936 = vld [vmem:[#allocation8 + $0x8a0] sm:$0xff]
    %v2937 = vld [vmem:[#allocation8 + $0x8a8] sm:$0xff]
    %v2938 = vld [vmem:[#allocation8 + $0x8b0] sm:$0xff]
    %v2939 = vld [vmem:[#allocation8 + $0x8b8] sm:$0xff]
    %v2940 = vld [vmem:[#allocation8 + $0x8c0] sm:$0xff]
    %v2941 = vld [vmem:[#allocation8 + $0x8c8] sm:$0xff]
    %v2942 = vld [vmem:[#allocation8 + $0x8d0] sm:$0xff]
    %v2943 = vld [vmem:[#allocation8 + $0x8d8] sm:$0xff]
    %v2944 = vld [vmem:[#allocation8 + $0x8e0] sm:$0xff]
    %v2945 = vld [vmem:[#allocation8 + $0x8e8] sm:$0xff]
    %v2946 = vld [vmem:[#allocation8 + $0x8f0] sm:$0xff]
    %v2947 = vld [vmem:[#allocation8 + $0x8f8] sm:$0xff]
    %v2948 = vld [vmem:[#allocation8 + $0x900] sm:$0xff]
    %v2949 = vld [vmem:[#allocation8 + $0x908] sm:$0xff]
    %v2950 = vld [vmem:[#allocation8 + $0x910] sm:$0xff]
    %v2951 = vld [vmem:[#allocation8 + $0x918] sm:$0xff]
    %v2952 = vld [vmem:[#allocation8 + $0x920] sm:$0xff]
    %v2953 = vld [vmem:[#allocation8 + $0x928] sm:$0xff]
    %v2954 = vld [vmem:[#allocation8 + $0x930] sm:$0xff]
    %v2955 = vld [vmem:[#allocation8 + $0x938] sm:$0xff]
    %v2956 = vld [vmem:[#allocation8 + $0x940] sm:$0xff]
    %v2957 = vld [vmem:[#allocation8 + $0x948] sm:$0xff]
    %v2958 = vld [vmem:[#allocation8 + $0x950] sm:$0xff]
    %v2959 = vld [vmem:[#allocation8 + $0x958] sm:$0xff]
    %v2960 = vld [vmem:[#allocation8 + $0x960] sm:$0xff]
    %v2961 = vld [vmem:[#allocation8 + $0x968] sm:$0xff]
    %v2962 = vld [vmem:[#allocation8 + $0x970] sm:$0xff]
    %v2963 = vld [vmem:[#allocation8 + $0x978] sm:$0xff]
    %v2964 = vld [vmem:[#allocation8 + $0x980] sm:$0xff]
    %v2965 = vld [vmem:[#allocation8 + $0x988] sm:$0xff]
    %v2966 = vld [vmem:[#allocation8 + $0x990] sm:$0xff]
    %v2967 = vld [vmem:[#allocation8 + $0x998] sm:$0xff]
    %v2968 = vld [vmem:[#allocation8 + $0x9a0] sm:$0xff]
    %v2969 = vld [vmem:[#allocation8 + $0x9a8] sm:$0xff]
    %v2970 = vld [vmem:[#allocation8 + $0x9b0] sm:$0xff]
    %v2971 = vld [vmem:[#allocation8 + $0x9b8] sm:$0xff]
    %v2972 = vld [vmem:[#allocation8 + $0x9c0] sm:$0xff]
    %v2973 = vld [vmem:[#allocation8 + $0x9c8] sm:$0xff]
    %v2974 = vld [vmem:[#allocation8 + $0x9d0] sm:$0xff]
    %v2975 = vld [vmem:[#allocation8 + $0x9d8] sm:$0xff]
    %v2976 = vld [vmem:[#allocation8 + $0x9e0] sm:$0xff]
    %v2977 = vld [vmem:[#allocation8 + $0x9e8] sm:$0xff]
    %v2978 = vld [vmem:[#allocation8 + $0x9f0] sm:$0xff]
    %v2979 = vld [vmem:[#allocation8 + $0x9f8] sm:$0xff]
    %v2980 = vld [vmem:[#allocation8 + $0xa00] sm:$0xff]
    %v2981 = vld [vmem:[#allocation8 + $0xa08] sm:$0xff]
    %v2982 = vld [vmem:[#allocation8 + $0xa10] sm:$0xff]
    %v2983 = vld [vmem:[#allocation8 + $0xa18] sm:$0xff]
    %v2984 = vld [vmem:[#allocation8 + $0xa20] sm:$0xff]
    %v2985 = vld [vmem:[#allocation8 + $0xa28] sm:$0xff]
    %v2986 = vld [vmem:[#allocation8 + $0xa30] sm:$0xff]
    %v2987 = vld [vmem:[#allocation8 + $0xa38] sm:$0xff]
    %v2988 = vld [vmem:[#allocation8 + $0xa40] sm:$0xff]
    %v2989 = vld [vmem:[#allocation8 + $0xa48] sm:$0xff]
    %v2990 = vld [vmem:[#allocation8 + $0xa50] sm:$0xff]
    %v2991 = vld [vmem:[#allocation8 + $0xa58] sm:$0xff]
    %v2992 = vld [vmem:[#allocation8 + $0xa60] sm:$0xff]
    %v2993 = vld [vmem:[#allocation8 + $0xa68] sm:$0xff]
    %v2994 = vld [vmem:[#allocation8 + $0xa70] sm:$0xff]
    %v2995 = vld [vmem:[#allocation8 + $0xa78] sm:$0xff]
    %v2996 = vld [vmem:[#allocation8 + $0xa80] sm:$0xff]
    %v2997 = vld [vmem:[#allocation8 + $0xa88] sm:$0xff]
    %v2998 = vld [vmem:[#allocation8 + $0xa90] sm:$0xff]
    %v2999 = vld [vmem:[#allocation8 + $0xa98] sm:$0xff]
    %v3000 = vld [vmem:[#allocation8 + $0xaa0] sm:$0xff]
    %v3001 = vld [vmem:[#allocation8 + $0xaa8] sm:$0xff]
    %v3002 = vld [vmem:[#allocation8 + $0xab0] sm:$0xff]
    %v3003 = vld [vmem:[#allocation8 + $0xab8] sm:$0xff]
    %v3004 = vld [vmem:[#allocation8 + $0xac0] sm:$0xff]
    %v3005 = vld [vmem:[#allocation8 + $0xac8] sm:$0xff]
    %v3006 = vld [vmem:[#allocation8 + $0xad0] sm:$0xff]
    %v3007 = vld [vmem:[#allocation8 + $0xad8] sm:$0xff]
    %v3008 = vld [vmem:[#allocation8 + $0xae0] sm:$0xff]
    %v3009 = vld [vmem:[#allocation8 + $0xae8] sm:$0xff]
    %v3010 = vld [vmem:[#allocation8 + $0xaf0] sm:$0xff]
    %v3011 = vld [vmem:[#allocation8 + $0xaf8] sm:$0xff]
    %v3012 = vld [vmem:[#allocation8 + $0xb00] sm:$0xff]
    %v3013 = vld [vmem:[#allocation8 + $0xb08] sm:$0xff]
    %v3014 = vld [vmem:[#allocation8 + $0xb10] sm:$0xff]
    %v3015 = vld [vmem:[#allocation8 + $0xb18] sm:$0xff]
    %v3016 = vld [vmem:[#allocation8 + $0xb20] sm:$0xff]
    %v3017 = vld [vmem:[#allocation8 + $0xb28] sm:$0xff]
    %v3018 = vld [vmem:[#allocation8 + $0xb30] sm:$0xff]
    %v3019 = vld [vmem:[#allocation8 + $0xb38] sm:$0xff]
    %v3020 = vld [vmem:[#allocation8 + $0xb40] sm:$0xff]
    %v3021 = vld [vmem:[#allocation8 + $0xb48] sm:$0xff]
    %v3022 = vld [vmem:[#allocation8 + $0xb50] sm:$0xff]
    %v3023 = vld [vmem:[#allocation8 + $0xb58] sm:$0xff]
    %v3024 = vld [vmem:[#allocation8 + $0xb60] sm:$0xff]
    %v3025 = vld [vmem:[#allocation8 + $0xb68] sm:$0xff]
    %v3026 = vld [vmem:[#allocation8 + $0xb70] sm:$0xff]
    %v3027 = vld [vmem:[#allocation8 + $0xb78] sm:$0xff]
    %v3028 = vld [vmem:[#allocation8 + $0xb80] sm:$0xff]
    %v3029 = vld [vmem:[#allocation8 + $0xb88] sm:$0xff]
    %v3030 = vld [vmem:[#allocation8 + $0xb90] sm:$0xff]
    %v3031 = vld [vmem:[#allocation8 + $0xb98] sm:$0xff]
    %v3032 = vld [vmem:[#allocation8 + $0xba0] sm:$0xff]
    %v3033 = vld [vmem:[#allocation8 + $0xba8] sm:$0xff]
    %v3034 = vld [vmem:[#allocation8 + $0xbb0] sm:$0xff]
    %v3035 = vld [vmem:[#allocation8 + $0xbb8] sm:$0xff]
    %v3036 = vld [vmem:[#allocation8 + $0xbc0] sm:$0xff]
    %v3037 = vld [vmem:[#allocation8 + $0xbc8] sm:$0xff]
    %v3038 = vld [vmem:[#allocation8 + $0xbd0] sm:$0xff]
    %v3039 = vld [vmem:[#allocation8 + $0xbd8] sm:$0xff]
    %v3040 = vld [vmem:[#allocation8 + $0xbe0] sm:$0xff]
    %v3041 = vld [vmem:[#allocation8 + $0xbe8] sm:$0xff]
    %v3042 = vld [vmem:[#allocation8 + $0xbf0] sm:$0xff]
    %v3043 = vld [vmem:[#allocation8 + $0xbf8] sm:$0xff]
    %v3044 = vld [vmem:[#allocation8 + $0xc00] sm:$0xff]
    %v3045 = vld [vmem:[#allocation8 + $0xc08] sm:$0xff]
    %v3046 = vld [vmem:[#allocation8 + $0xc10] sm:$0xff]
    %v3047 = vld [vmem:[#allocation8 + $0xc18] sm:$0xff]
    %v3048 = vld [vmem:[#allocation8 + $0xc20] sm:$0xff]
    %v3049 = vld [vmem:[#allocation8 + $0xc28] sm:$0xff]
    %v3050 = vld [vmem:[#allocation8 + $0xc30] sm:$0xff]
    %v3051 = vld [vmem:[#allocation8 + $0xc38] sm:$0xff]
    %v3052 = vld [vmem:[#allocation8 + $0xc40] sm:$0xff]
    %v3053 = vld [vmem:[#allocation8 + $0xc48] sm:$0xff]
    %v3054 = vld [vmem:[#allocation8 + $0xc50] sm:$0xff]
    %v3055 = vld [vmem:[#allocation8 + $0xc58] sm:$0xff]
    %v3056 = vld [vmem:[#allocation8 + $0xc60] sm:$0xff]
    %v3057 = vld [vmem:[#allocation8 + $0xc68] sm:$0xff]
    %v3058 = vld [vmem:[#allocation8 + $0xc70] sm:$0xff]
    %v3059 = vld [vmem:[#allocation8 + $0xc78] sm:$0xff]
    %v3060 = vld [vmem:[#allocation8 + $0xc80] sm:$0xff]
    %v3061 = vld [vmem:[#allocation8 + $0xc88] sm:$0xff]
    %v3062 = vld [vmem:[#allocation8 + $0xc90] sm:$0xff]
    %v3063 = vld [vmem:[#allocation8 + $0xc98] sm:$0xff]
    %v3064 = vld [vmem:[#allocation8 + $0xca0] sm:$0xff]
    %v3065 = vld [vmem:[#allocation8 + $0xca8] sm:$0xff]
    %v3066 = vld [vmem:[#allocation8 + $0xcb0] sm:$0xff]
    %v3067 = vld [vmem:[#allocation8 + $0xcb8] sm:$0xff]
    %v3068 = vld [vmem:[#allocation8 + $0xcc0] sm:$0xff]
    %v3069 = vld [vmem:[#allocation8 + $0xcc8] sm:$0xff]
    %v3070 = vld [vmem:[#allocation8 + $0xcd0] sm:$0xff]
    %v3071 = vld [vmem:[#allocation8 + $0xcd8] sm:$0xff]
    %v3072 = vld [vmem:[#allocation8 + $0xce0] sm:$0xff]
    %v3073 = vld [vmem:[#allocation8 + $0xce8] sm:$0xff]
    %v3074 = vld [vmem:[#allocation8 + $0xcf0] sm:$0xff]
    %v3075 = vld [vmem:[#allocation8 + $0xcf8] sm:$0xff]
    %v3076 = vld [vmem:[#allocation8 + $0xd00] sm:$0xff]
    %v3077 = vld [vmem:[#allocation8 + $0xd08] sm:$0xff]
    %v3078 = vld [vmem:[#allocation8 + $0xd10] sm:$0xff]
    %v3079 = vld [vmem:[#allocation8 + $0xd18] sm:$0xff]
    %v3080 = vld [vmem:[#allocation8 + $0xd20] sm:$0xff]
    %v3081 = vld [vmem:[#allocation8 + $0xd28] sm:$0xff]
    %v3082 = vld [vmem:[#allocation8 + $0xd30] sm:$0xff]
    %v3083 = vld [vmem:[#allocation8 + $0xd38] sm:$0xff]
    %v3084 = vld [vmem:[#allocation8 + $0xd40] sm:$0xff]
    %v3085 = vld [vmem:[#allocation8 + $0xd48] sm:$0xff]
    %v3086 = vld [vmem:[#allocation8 + $0xd50] sm:$0xff]
    %v3087 = vld [vmem:[#allocation8 + $0xd58] sm:$0xff]
    %v3088 = vld [vmem:[#allocation8 + $0xd60] sm:$0xff]
    %v3089 = vld [vmem:[#allocation8 + $0xd68] sm:$0xff]
    %v3090 = vld [vmem:[#allocation8 + $0xd70] sm:$0xff]
    %v3091 = vld [vmem:[#allocation8 + $0xd78] sm:$0xff]
    %v3092 = vld [vmem:[#allocation8 + $0xd80] sm:$0xff]
    %v3093 = vld [vmem:[#allocation8 + $0xd88] sm:$0xff]
    %v3094 = vld [vmem:[#allocation8 + $0xd90] sm:$0xff]
    %v3095 = vld [vmem:[#allocation8 + $0xd98] sm:$0xff]
    %v3096 = vld [vmem:[#allocation8 + $0xda0] sm:$0xff]
    %v3097 = vld [vmem:[#allocation8 + $0xda8] sm:$0xff]
    %v3098 = vld [vmem:[#allocation8 + $0xdb0] sm:$0xff]
    %v3099 = vld [vmem:[#allocation8 + $0xdb8] sm:$0xff]
    %v3100 = vld [vmem:[#allocation8 + $0xdc0] sm:$0xff]
    %v3101 = vld [vmem:[#allocation8 + $0xdc8] sm:$0xff]
    %v3102 = vld [vmem:[#allocation8 + $0xdd0] sm:$0xff]
    %v3103 = vld [vmem:[#allocation8 + $0xdd8] sm:$0xff]
    %v3104 = vld [vmem:[#allocation8 + $0xde0] sm:$0xff]
    %v3105 = vld [vmem:[#allocation8 + $0xde8] sm:$0xff]
    %v3106 = vld [vmem:[#allocation8 + $0xdf0] sm:$0xff]
    %v3107 = vld [vmem:[#allocation8 + $0xdf8] sm:$0xff]
    %v3108 = vld [vmem:[#allocation8 + $0xe00] sm:$0xff]
    %v3109 = vld [vmem:[#allocation8 + $0xe08] sm:$0xff]
    %v3110 = vld [vmem:[#allocation8 + $0xe10] sm:$0xff]
    %v3111 = vld [vmem:[#allocation8 + $0xe18] sm:$0xff]
    %v3112 = vld [vmem:[#allocation8 + $0xe20] sm:$0xff]
    %v3113 = vld [vmem:[#allocation8 + $0xe28] sm:$0xff]
    %v3114 = vld [vmem:[#allocation8 + $0xe30] sm:$0xff]
    %v3115 = vld [vmem:[#allocation8 + $0xe38] sm:$0xff]
    %v3116 = vld [vmem:[#allocation8 + $0xe40] sm:$0xff]
    %v3117 = vld [vmem:[#allocation8 + $0xe48] sm:$0xff]
    %v3118 = vld [vmem:[#allocation8 + $0xe50] sm:$0xff]
    %v3119 = vld [vmem:[#allocation8 + $0xe58] sm:$0xff]
    %v3120 = vld [vmem:[#allocation8 + $0xe60] sm:$0xff]
    %v3121 = vld [vmem:[#allocation8 + $0xe68] sm:$0xff]
    %v3122 = vld [vmem:[#allocation8 + $0xe70] sm:$0xff]
    %v3123 = vld [vmem:[#allocation8 + $0xe78] sm:$0xff]
    %v3124 = vld [vmem:[#allocation8 + $0xe80] sm:$0xff]
    %v3125 = vld [vmem:[#allocation8 + $0xe88] sm:$0xff]
    %v3126 = vld [vmem:[#allocation8 + $0xe90] sm:$0xff]
    %v3127 = vld [vmem:[#allocation8 + $0xe98] sm:$0xff]
    %v3128 = vld [vmem:[#allocation8 + $0xea0] sm:$0xff]
    %v3129 = vld [vmem:[#allocation8 + $0xea8] sm:$0xff]
    %v3130 = vld [vmem:[#allocation8 + $0xeb0] sm:$0xff]
    %v3131 = vld [vmem:[#allocation8 + $0xeb8] sm:$0xff]
    %v3132 = vld [vmem:[#allocation8 + $0xec0] sm:$0xff]
    %v3133 = vld [vmem:[#allocation8 + $0xec8] sm:$0xff]
    %v3134 = vld [vmem:[#allocation8 + $0xed0] sm:$0xff]
    %v3135 = vld [vmem:[#allocation8 + $0xed8] sm:$0xff]
    %v3136 = vld [vmem:[#allocation8 + $0xee0] sm:$0xff]
    %v3137 = vld [vmem:[#allocation8 + $0xee8] sm:$0xff]
    %v3138 = vld [vmem:[#allocation8 + $0xef0] sm:$0xff]
    %v3139 = vld [vmem:[#allocation8 + $0xef8] sm:$0xff]
    %v3140 = vld [vmem:[#allocation8 + $0xf00] sm:$0xff]
    %v3141 = vld [vmem:[#allocation8 + $0xf08] sm:$0xff]
    %v3142 = vld [vmem:[#allocation8 + $0xf10] sm:$0xff]
    %v3143 = vld [vmem:[#allocation8 + $0xf18] sm:$0xff]
    %v3144 = vld [vmem:[#allocation8 + $0xf20] sm:$0xff]
    %v3145 = vld [vmem:[#allocation8 + $0xf28] sm:$0xff]
    %v3146 = vld [vmem:[#allocation8 + $0xf30] sm:$0xff]
    %v3147 = vld [vmem:[#allocation8 + $0xf38] sm:$0xff]
    %v3148 = vld [vmem:[#allocation8 + $0xf40] sm:$0xff]
    %v3149 = vld [vmem:[#allocation8 + $0xf48] sm:$0xff]
    %v3150 = vld [vmem:[#allocation8 + $0xf50] sm:$0xff]
    %v3151 = vld [vmem:[#allocation8 + $0xf58] sm:$0xff]
    %v3152 = vld [vmem:[#allocation8 + $0xf60] sm:$0xff]
    %v3153 = vld [vmem:[#allocation8 + $0xf68] sm:$0xff]
    %v3154 = vld [vmem:[#allocation8 + $0xf70] sm:$0xff]
    %v3155 = vld [vmem:[#allocation8 + $0xf78] sm:$0xff]
    %v3156 = vld [vmem:[#allocation8 + $0xf80] sm:$0xff]
    %v3157 = vld [vmem:[#allocation8 + $0xf88] sm:$0xff]
    %v3158 = vld [vmem:[#allocation8 + $0xf90] sm:$0xff]
    %v3159 = vld [vmem:[#allocation8 + $0xf98] sm:$0xff]
    %v3160 = vld [vmem:[#allocation8 + $0xfa0] sm:$0xff]
    %v3161 = vld [vmem:[#allocation8 + $0xfa8] sm:$0xff]
    %v3162 = vld [vmem:[#allocation8 + $0xfb0] sm:$0xff]
    %v3163 = vld [vmem:[#allocation8 + $0xfb8] sm:$0xff]
    %v3164 = vld [vmem:[#allocation8 + $0xfc0] sm:$0xff]
    %v3165 = vld [vmem:[#allocation8 + $0xfc8] sm:$0xff]
    %v3166 = vld [vmem:[#allocation8 + $0xfd0] sm:$0xff]
    %v3167 = vld [vmem:[#allocation8 + $0xfd8] sm:$0xff]
    %v3168 = vld [vmem:[#allocation8 + $0xfe0] sm:$0xff]
    %v3169 = vld [vmem:[#allocation8 + $0xfe8] sm:$0xff]
    %v3170 = vld [vmem:[#allocation8 + $0xff0] sm:$0xff]
    %v3171 = vld [vmem:[#allocation8 + $0xff8] sm:$0xff]
    %v3172 = vld [vmem:[#allocation8 + $0x1000] sm:$0xff]
    %v3173 = vld [vmem:[#allocation8 + $0x1008] sm:$0xff]
    %v3174 = vld [vmem:[#allocation8 + $0x1010] sm:$0xff]
    %v3175 = vld [vmem:[#allocation8 + $0x1018] sm:$0xff]
    %v3176 = vld [vmem:[#allocation8 + $0x1020] sm:$0xff]
    %v3177 = vld [vmem:[#allocation8 + $0x1028] sm:$0xff]
    %v3178 = vld [vmem:[#allocation8 + $0x1030] sm:$0xff]
    %v3179 = vld [vmem:[#allocation8 + $0x1038] sm:$0xff]
    %v3180 = vld [vmem:[#allocation8 + $0x1040] sm:$0xff]
    %v3181 = vld [vmem:[#allocation8 + $0x1048] sm:$0xff]
    %v3182 = vld [vmem:[#allocation8 + $0x1050] sm:$0xff]
    %v3183 = vld [vmem:[#allocation8 + $0x1058] sm:$0xff]
    %v3184 = vld [vmem:[#allocation8 + $0x1060] sm:$0xff]
    %v3185 = vld [vmem:[#allocation8 + $0x1068] sm:$0xff]
    %v3186 = vld [vmem:[#allocation8 + $0x1070] sm:$0xff]
    %v3187 = vld [vmem:[#allocation8 + $0x1078] sm:$0xff]
    %v3188 = vld [vmem:[#allocation8 + $0x1080] sm:$0xff]
    %v3189 = vld [vmem:[#allocation8 + $0x1088] sm:$0xff]
    %v3190 = vld [vmem:[#allocation8 + $0x1090] sm:$0xff]
    %v3191 = vld [vmem:[#allocation8 + $0x1098] sm:$0xff]
    %v3192 = vld [vmem:[#allocation8 + $0x10a0] sm:$0xff]
    %v3193 = vld [vmem:[#allocation8 + $0x10a8] sm:$0xff]
    %v3194 = vld [vmem:[#allocation8 + $0x10b0] sm:$0xff]
    %v3195 = vld [vmem:[#allocation8 + $0x10b8] sm:$0xff]
    %v3196 = vld [vmem:[#allocation8 + $0x10c0] sm:$0xff]
    %v3197 = vld [vmem:[#allocation8 + $0x10c8] sm:$0xff]
    %v3198 = vld [vmem:[#allocation8 + $0x10d0] sm:$0xff]
    %v3199 = vld [vmem:[#allocation8 + $0x10d8] sm:$0xff]
    %v3200 = vld [vmem:[#allocation8 + $0x10e0] sm:$0xff]
    %v3201 = vld [vmem:[#allocation8 + $0x10e8] sm:$0xff]
    %v3202 = vld [vmem:[#allocation8 + $0x10f0] sm:$0xff]
    %v3203 = vld [vmem:[#allocation8 + $0x10f8] sm:$0xff]
    %v3204 = vld [vmem:[#allocation8 + $0x1100] sm:$0xff]
    %v3205 = vld [vmem:[#allocation8 + $0x1108] sm:$0xff]
    %v3206 = vld [vmem:[#allocation8 + $0x1110] sm:$0xff]
    %v3207 = vld [vmem:[#allocation8 + $0x1118] sm:$0xff]
    %v3208 = vld [vmem:[#allocation8 + $0x1120] sm:$0xff]
    %v3209 = vld [vmem:[#allocation8 + $0x1128] sm:$0xff]
    %v3210 = vld [vmem:[#allocation8 + $0x1130] sm:$0xff]
    %v3211 = vld [vmem:[#allocation8 + $0x1138] sm:$0xff]
    %v3212 = vld [vmem:[#allocation8 + $0x1140] sm:$0xff]
    %v3213 = vld [vmem:[#allocation8 + $0x1148] sm:$0xff]
    %v3214 = vld [vmem:[#allocation8 + $0x1150] sm:$0xff]
    %v3215 = vld [vmem:[#allocation8 + $0x1158] sm:$0xff]
    %v3216 = vld [vmem:[#allocation8 + $0x1160] sm:$0xff]
    %v3217 = vld [vmem:[#allocation8 + $0x1168] sm:$0xff]
    %v3218 = vld [vmem:[#allocation8 + $0x1170] sm:$0xff]
    %v3219 = vld [vmem:[#allocation8 + $0x1178] sm:$0xff]
    %v3220 = vld [vmem:[#allocation8 + $0x1180] sm:$0xff]
    %v3221 = vld [vmem:[#allocation8 + $0x1188] sm:$0xff]
    %v3222 = vld [vmem:[#allocation8 + $0x1190] sm:$0xff]
    %v3223 = vld [vmem:[#allocation8 + $0x1198] sm:$0xff]
    %v3224 = vld [vmem:[#allocation8 + $0x11a0] sm:$0xff]
    %v3225 = vld [vmem:[#allocation8 + $0x11a8] sm:$0xff]
    %v3226 = vld [vmem:[#allocation8 + $0x11b0] sm:$0xff]
    %v3227 = vld [vmem:[#allocation8 + $0x11b8] sm:$0xff]
    %v3228 = vld [vmem:[#allocation8 + $0x11c0] sm:$0xff]
    %v3229 = vld [vmem:[#allocation8 + $0x11c8] sm:$0xff]
    %v3230 = vld [vmem:[#allocation8 + $0x11d0] sm:$0xff]
    %v3231 = vld [vmem:[#allocation8 + $0x11d8] sm:$0xff]
    %v3232 = vld [vmem:[#allocation8 + $0x11e0] sm:$0xff]
    %v3233 = vld [vmem:[#allocation8 + $0x11e8] sm:$0xff]
    %v3234 = vld [vmem:[#allocation8 + $0x11f0] sm:$0xff]
    %v3235 = vld [vmem:[#allocation8 + $0x11f8] sm:$0xff]
    %v3236 = vld [vmem:[#allocation2] sm:$0xf]
    %v3237 = vld [vmem:[#allocation2 + $0x4] sm:$0xf]
    %v3238 = vld [vmem:[#allocation2 + $0x8] sm:$0xf]
    %v3239 = vld [vmem:[#allocation2 + $0xc] sm:$0xf]
    %v3240 = vld [vmem:[#allocation2 + $0x10] sm:$0xf]
    %v3241 = vld [vmem:[#allocation2 + $0x14] sm:$0xf]
    %v3242 = vld [vmem:[#allocation2 + $0x18] sm:$0xf]
    %v3243 = vld [vmem:[#allocation2 + $0x1c] sm:$0xf]
    %v3244 = vld [vmem:[#allocation2 + $0x20] sm:$0xf]
    %v3245 = vld [vmem:[#allocation2 + $0x24] sm:$0xf]
    %v3246 = vld [vmem:[#allocation2 + $0x28] sm:$0xf]
    %v3247 = vld [vmem:[#allocation2 + $0x2c] sm:$0xf]
    %v3248 = vld [vmem:[#allocation2 + $0x30] sm:$0xf]
    %v3249 = vld [vmem:[#allocation2 + $0x34] sm:$0xf]
    %v3250 = vld [vmem:[#allocation2 + $0x38] sm:$0xf]
    %v3251 = vld [vmem:[#allocation2 + $0x3c] sm:$0xf]
    %v3252 = vld [vmem:[#allocation2 + $0x40] sm:$0xf]
    %v3253 = vld [vmem:[#allocation2 + $0x44] sm:$0xf]
    %v3254 = vld [vmem:[#allocation2 + $0x48] sm:$0xf]
    %v3255 = vld [vmem:[#allocation2 + $0x4c] sm:$0xf]
    %v3256 = vld [vmem:[#allocation2 + $0x50] sm:$0xf]
    %v3257 = vld [vmem:[#allocation2 + $0x54] sm:$0xf]
    %v3258 = vld [vmem:[#allocation2 + $0x58] sm:$0xf]
    %v3259 = vld [vmem:[#allocation2 + $0x5c] sm:$0xf]
    %v3260 = vld [vmem:[#allocation2 + $0x60] sm:$0xf]
    %v3261 = vld [vmem:[#allocation2 + $0x64] sm:$0xf]
    %v3262 = vld [vmem:[#allocation2 + $0x68] sm:$0xf]
    %v3263 = vld [vmem:[#allocation2 + $0x6c] sm:$0xf]
    %v3264 = vld [vmem:[#allocation2 + $0x70] sm:$0xf]
    %v3265 = vld [vmem:[#allocation2 + $0x74] sm:$0xf]
    %v3266 = vld [vmem:[#allocation2 + $0x78] sm:$0xf]
    %v3267 = vld [vmem:[#allocation2 + $0x7c] sm:$0xf]
    %v3268 = vld [vmem:[#allocation2 + $0x80] sm:$0xf]
    %v3269 = vld [vmem:[#allocation2 + $0x84] sm:$0xf]
    %v3270 = vld [vmem:[#allocation2 + $0x88] sm:$0xf]
    %v3271 = vld [vmem:[#allocation2 + $0x8c] sm:$0xf]
    %v3272 = vld [vmem:[#allocation2 + $0x90] sm:$0xf]
    %v3273 = vld [vmem:[#allocation2 + $0x94] sm:$0xf]
    %v3274 = vld [vmem:[#allocation2 + $0x98] sm:$0xf]
    %v3275 = vld [vmem:[#allocation2 + $0x9c] sm:$0xf]
    %v3276 = vld [vmem:[#allocation2 + $0xa0] sm:$0xf]
    %v3277 = vld [vmem:[#allocation2 + $0xa4] sm:$0xf]
    %v3278 = vld [vmem:[#allocation2 + $0xa8] sm:$0xf]
    %v3279 = vld [vmem:[#allocation2 + $0xac] sm:$0xf]
    %v3280 = vld [vmem:[#allocation2 + $0xb0] sm:$0xf]
    %v3281 = vld [vmem:[#allocation2 + $0xb4] sm:$0xf]
    %v3282 = vld [vmem:[#allocation2 + $0xb8] sm:$0xf]
    %v3283 = vld [vmem:[#allocation2 + $0xbc] sm:$0xf]
    %v3284 = vld [vmem:[#allocation2 + $0xc0] sm:$0xf]
    %v3285 = vld [vmem:[#allocation2 + $0xc4] sm:$0xf]
    %v3286 = vld [vmem:[#allocation2 + $0xc8] sm:$0xf]
    %v3287 = vld [vmem:[#allocation2 + $0xcc] sm:$0xf]
    %v3288 = vld [vmem:[#allocation2 + $0xd0] sm:$0xf]
    %v3289 = vld [vmem:[#allocation2 + $0xd4] sm:$0xf]
    %v3290 = vld [vmem:[#allocation2 + $0xd8] sm:$0xf]
    %v3291 = vld [vmem:[#allocation2 + $0xdc] sm:$0xf]
    %v3292 = vld [vmem:[#allocation2 + $0xe0] sm:$0xf]
    %v3293 = vld [vmem:[#allocation2 + $0xe4] sm:$0xf]
    %v3294 = vld [vmem:[#allocation2 + $0xe8] sm:$0xf]
    %v3295 = vld [vmem:[#allocation2 + $0xec] sm:$0xf]
    %v3296 = vld [vmem:[#allocation2 + $0xf0] sm:$0xf]
    %v3297 = vld [vmem:[#allocation2 + $0xf4] sm:$0xf]
    %v3298 = vld [vmem:[#allocation2 + $0xf8] sm:$0xf]
    %v3299 = vld [vmem:[#allocation2 + $0xfc] sm:$0xf]
    %v3300 = vld [vmem:[#allocation2 + $0x100] sm:$0xf]
    %v3301 = vld [vmem:[#allocation2 + $0x104] sm:$0xf]
    %v3302 = vld [vmem:[#allocation2 + $0x108] sm:$0xf]
    %v3303 = vld [vmem:[#allocation2 + $0x10c] sm:$0xf]
    %v3304 = vld [vmem:[#allocation2 + $0x110] sm:$0xf]
    %v3305 = vld [vmem:[#allocation2 + $0x114] sm:$0xf]
    %v3306 = vld [vmem:[#allocation2 + $0x118] sm:$0xf]
    %v3307 = vld [vmem:[#allocation2 + $0x11c] sm:$0xf]
    %v3308 = vld [vmem:[#allocation2 + $0x120] sm:$0xf]
    %v3309 = vld [vmem:[#allocation2 + $0x124] sm:$0xf]
    %v3310 = vld [vmem:[#allocation2 + $0x128] sm:$0xf]
    %v3311 = vld [vmem:[#allocation2 + $0x12c] sm:$0xf]
    %v3312 = vld [vmem:[#allocation2 + $0x130] sm:$0xf]
    %v3313 = vld [vmem:[#allocation2 + $0x134] sm:$0xf]
    %v3314 = vld [vmem:[#allocation2 + $0x138] sm:$0xf]
    %v3315 = vld [vmem:[#allocation2 + $0x13c] sm:$0xf]
    %v3316 = vld [vmem:[#allocation2 + $0x140] sm:$0xf]
    %v3317 = vld [vmem:[#allocation2 + $0x144] sm:$0xf]
    %v3318 = vld [vmem:[#allocation2 + $0x148] sm:$0xf]
    %v3319 = vld [vmem:[#allocation2 + $0x14c] sm:$0xf]
    %v3320 = vld [vmem:[#allocation2 + $0x150] sm:$0xf]
    %v3321 = vld [vmem:[#allocation2 + $0x154] sm:$0xf]
    %v3322 = vld [vmem:[#allocation2 + $0x158] sm:$0xf]
    %v3323 = vld [vmem:[#allocation2 + $0x15c] sm:$0xf]
    %v3324 = vld [vmem:[#allocation2 + $0x160] sm:$0xf]
    %v3325 = vld [vmem:[#allocation2 + $0x164] sm:$0xf]
    %v3326 = vld [vmem:[#allocation2 + $0x168] sm:$0xf]
    %v3327 = vld [vmem:[#allocation2 + $0x16c] sm:$0xf]
    %v3328 = vld [vmem:[#allocation2 + $0x170] sm:$0xf]
    %v3329 = vld [vmem:[#allocation2 + $0x174] sm:$0xf]
    %v3330 = vld [vmem:[#allocation2 + $0x178] sm:$0xf]
    %v3331 = vld [vmem:[#allocation2 + $0x17c] sm:$0xf]
    %v3332 = vld [vmem:[#allocation2 + $0x180] sm:$0xf]
    %v3333 = vld [vmem:[#allocation2 + $0x184] sm:$0xf]
    %v3334 = vld [vmem:[#allocation2 + $0x188] sm:$0xf]
    %v3335 = vld [vmem:[#allocation2 + $0x18c] sm:$0xf]
    %v3336 = vld [vmem:[#allocation2 + $0x190] sm:$0xf]
    %v3337 = vld [vmem:[#allocation2 + $0x194] sm:$0xf]
    %v3338 = vld [vmem:[#allocation2 + $0x198] sm:$0xf]
    %v3339 = vld [vmem:[#allocation2 + $0x19c] sm:$0xf]
    %v3340 = vld [vmem:[#allocation2 + $0x1a0] sm:$0xf]
    %v3341 = vld [vmem:[#allocation2 + $0x1a4] sm:$0xf]
    %v3342 = vld [vmem:[#allocation2 + $0x1a8] sm:$0xf]
    %v3343 = vld [vmem:[#allocation2 + $0x1ac] sm:$0xf]
    %v3344 = vld [vmem:[#allocation2 + $0x1b0] sm:$0xf]
    %v3345 = vld [vmem:[#allocation2 + $0x1b4] sm:$0xf]
    %v3346 = vld [vmem:[#allocation2 + $0x1b8] sm:$0xf]
    %v3347 = vld [vmem:[#allocation2 + $0x1bc] sm:$0xf]
    %v3348 = vld [vmem:[#allocation2 + $0x1c0] sm:$0xf]
    %v3349 = vld [vmem:[#allocation2 + $0x1c4] sm:$0xf]
    %v3350 = vld [vmem:[#allocation2 + $0x1c8] sm:$0xf]
    %v3351 = vld [vmem:[#allocation2 + $0x1cc] sm:$0xf]
    %v3352 = vld [vmem:[#allocation2 + $0x1d0] sm:$0xf]
    %v3353 = vld [vmem:[#allocation2 + $0x1d4] sm:$0xf]
    %v3354 = vld [vmem:[#allocation2 + $0x1d8] sm:$0xf]
    %v3355 = vld [vmem:[#allocation2 + $0x1dc] sm:$0xf]
    %v3356 = vld [vmem:[#allocation2 + $0x1e0] sm:$0xf]
    %v3357 = vld [vmem:[#allocation2 + $0x1e4] sm:$0xf]
    %v3358 = vld [vmem:[#allocation2 + $0x1e8] sm:$0xf]
    %v3359 = vld [vmem:[#allocation2 + $0x1ec] sm:$0xf]
    %v3360 = vld [vmem:[#allocation2 + $0x1f0] sm:$0xf]
    %v3361 = vld [vmem:[#allocation2 + $0x1f4] sm:$0xf]
    %v3362 = vld [vmem:[#allocation2 + $0x1f8] sm:$0xf]
    %v3363 = vld [vmem:[#allocation2 + $0x1fc] sm:$0xf]
    %v3364 = vld [vmem:[#allocation2 + $0x200] sm:$0xf]
    %v3365 = vld [vmem:[#allocation2 + $0x204] sm:$0xf]
    %v3366 = vld [vmem:[#allocation2 + $0x208] sm:$0xf]
    %v3367 = vld [vmem:[#allocation2 + $0x20c] sm:$0xf]
    %v3368 = vld [vmem:[#allocation2 + $0x210] sm:$0xf]
    %v3369 = vld [vmem:[#allocation2 + $0x214] sm:$0xf]
    %v3370 = vld [vmem:[#allocation2 + $0x218] sm:$0xf]
    %v3371 = vld [vmem:[#allocation2 + $0x21c] sm:$0xf]
    %v3372 = vld [vmem:[#allocation2 + $0x220] sm:$0xf]
    %v3373 = vld [vmem:[#allocation2 + $0x224] sm:$0xf]
    %v3374 = vld [vmem:[#allocation2 + $0x228] sm:$0xf]
    %v3375 = vld [vmem:[#allocation2 + $0x22c] sm:$0xf]
    %v3376 = vld [vmem:[#allocation2 + $0x230] sm:$0xf]
    %v3377 = vld [vmem:[#allocation2 + $0x234] sm:$0xf]
    %v3378 = vld [vmem:[#allocation2 + $0x238] sm:$0xf]
    %v3379 = vld [vmem:[#allocation2 + $0x23c] sm:$0xf]
    %v3380 = vld [vmem:[#allocation2 + $0x240] sm:$0xf]
    %v3381 = vld [vmem:[#allocation2 + $0x244] sm:$0xf]
    %v3382 = vld [vmem:[#allocation2 + $0x248] sm:$0xf]
    %v3383 = vld [vmem:[#allocation2 + $0x24c] sm:$0xf]
    %v3384 = vld [vmem:[#allocation2 + $0x250] sm:$0xf]
    %v3385 = vld [vmem:[#allocation2 + $0x254] sm:$0xf]
    %v3386 = vld [vmem:[#allocation2 + $0x258] sm:$0xf]
    %v3387 = vld [vmem:[#allocation2 + $0x25c] sm:$0xf]
    %v3388 = vld [vmem:[#allocation2 + $0x260] sm:$0xf]
    %v3389 = vld [vmem:[#allocation2 + $0x264] sm:$0xf]
    %v3390 = vld [vmem:[#allocation2 + $0x268] sm:$0xf]
    %v3391 = vld [vmem:[#allocation2 + $0x26c] sm:$0xf]
    %v3392 = vld [vmem:[#allocation2 + $0x270] sm:$0xf]
    %v3393 = vld [vmem:[#allocation2 + $0x274] sm:$0xf]
    %v3394 = vld [vmem:[#allocation2 + $0x278] sm:$0xf]
    %v3395 = vld [vmem:[#allocation2 + $0x27c] sm:$0xf]
    %v3396 = vld [vmem:[#allocation2 + $0x280] sm:$0xf]
    %v3397 = vld [vmem:[#allocation2 + $0x284] sm:$0xf]
    %v3398 = vld [vmem:[#allocation2 + $0x288] sm:$0xf]
    %v3399 = vld [vmem:[#allocation2 + $0x28c] sm:$0xf]
    %v3400 = vld [vmem:[#allocation2 + $0x290] sm:$0xf]
    %v3401 = vld [vmem:[#allocation2 + $0x294] sm:$0xf]
    %v3402 = vld [vmem:[#allocation2 + $0x298] sm:$0xf]
    %v3403 = vld [vmem:[#allocation2 + $0x29c] sm:$0xf]
    %v3404 = vld [vmem:[#allocation2 + $0x2a0] sm:$0xf]
    %v3405 = vld [vmem:[#allocation2 + $0x2a4] sm:$0xf]
    %v3406 = vld [vmem:[#allocation2 + $0x2a8] sm:$0xf]
    %v3407 = vld [vmem:[#allocation2 + $0x2ac] sm:$0xf]
    %v3408 = vld [vmem:[#allocation2 + $0x2b0] sm:$0xf]
    %v3409 = vld [vmem:[#allocation2 + $0x2b4] sm:$0xf]
    %v3410 = vld [vmem:[#allocation2 + $0x2b8] sm:$0xf]
    %v3411 = vld [vmem:[#allocation2 + $0x2bc] sm:$0xf]
    %v3412 = vld [vmem:[#allocation2 + $0x2c0] sm:$0xf]
    %v3413 = vld [vmem:[#allocation2 + $0x2c4] sm:$0xf]
    %v3414 = vld [vmem:[#allocation2 + $0x2c8] sm:$0xf]
    %v3415 = vld [vmem:[#allocation2 + $0x2cc] sm:$0xf]
    %v3416 = vld [vmem:[#allocation2 + $0x2d0] sm:$0xf]
    %v3417 = vld [vmem:[#allocation2 + $0x2d4] sm:$0xf]
    %v3418 = vld [vmem:[#allocation2 + $0x2d8] sm:$0xf]
    %v3419 = vld [vmem:[#allocation2 + $0x2dc] sm:$0xf]
    %v3420 = vld [vmem:[#allocation2 + $0x2e0] sm:$0xf]
    %v3421 = vld [vmem:[#allocation2 + $0x2e4] sm:$0xf]
    %v3422 = vld [vmem:[#allocation2 + $0x2e8] sm:$0xf]
    %v3423 = vld [vmem:[#allocation2 + $0x2ec] sm:$0xf]
    %v3424 = vld [vmem:[#allocation2 + $0x2f0] sm:$0xf]
    %v3425 = vld [vmem:[#allocation2 + $0x2f4] sm:$0xf]
    %v3426 = vld [vmem:[#allocation2 + $0x2f8] sm:$0xf]
    %v3427 = vld [vmem:[#allocation2 + $0x2fc] sm:$0xf]
    %v3428 = vld [vmem:[#allocation2 + $0x300] sm:$0xf]
    %v3429 = vld [vmem:[#allocation2 + $0x304] sm:$0xf]
    %v3430 = vld [vmem:[#allocation2 + $0x308] sm:$0xf]
    %v3431 = vld [vmem:[#allocation2 + $0x30c] sm:$0xf]
    %v3432 = vld [vmem:[#allocation2 + $0x310] sm:$0xf]
    %v3433 = vld [vmem:[#allocation2 + $0x314] sm:$0xf]
    %v3434 = vld [vmem:[#allocation2 + $0x318] sm:$0xf]
    %v3435 = vld [vmem:[#allocation2 + $0x31c] sm:$0xf]
    %v3436 = vld [vmem:[#allocation2 + $0x320] sm:$0xf]
    %v3437 = vld [vmem:[#allocation2 + $0x324] sm:$0xf]
    %v3438 = vld [vmem:[#allocation2 + $0x328] sm:$0xf]
    %v3439 = vld [vmem:[#allocation2 + $0x32c] sm:$0xf]
    %v3440 = vld [vmem:[#allocation2 + $0x330] sm:$0xf]
    %v3441 = vld [vmem:[#allocation2 + $0x334] sm:$0xf]
    %v3442 = vld [vmem:[#allocation2 + $0x338] sm:$0xf]
    %v3443 = vld [vmem:[#allocation2 + $0x33c] sm:$0xf]
    %v3444 = vld [vmem:[#allocation2 + $0x340] sm:$0xf]
    %v3445 = vld [vmem:[#allocation2 + $0x344] sm:$0xf]
    %v3446 = vld [vmem:[#allocation2 + $0x348] sm:$0xf]
    %v3447 = vld [vmem:[#allocation2 + $0x34c] sm:$0xf]
    %v3448 = vld [vmem:[#allocation2 + $0x350] sm:$0xf]
    %v3449 = vld [vmem:[#allocation2 + $0x354] sm:$0xf]
    %v3450 = vld [vmem:[#allocation2 + $0x358] sm:$0xf]
    %v3451 = vld [vmem:[#allocation2 + $0x35c] sm:$0xf]
    %v3452 = vld [vmem:[#allocation2 + $0x360] sm:$0xf]
    %v3453 = vld [vmem:[#allocation2 + $0x364] sm:$0xf]
    %v3454 = vld [vmem:[#allocation2 + $0x368] sm:$0xf]
    %v3455 = vld [vmem:[#allocation2 + $0x36c] sm:$0xf]
    %v3456 = vld [vmem:[#allocation2 + $0x370] sm:$0xf]
    %v3457 = vld [vmem:[#allocation2 + $0x374] sm:$0xf]
    %v3458 = vld [vmem:[#allocation2 + $0x378] sm:$0xf]
    %v3459 = vld [vmem:[#allocation2 + $0x37c] sm:$0xf]
    %v3460 = vld [vmem:[#allocation2 + $0x380] sm:$0xf]
    %v3461 = vld [vmem:[#allocation2 + $0x384] sm:$0xf]
    %v3462 = vld [vmem:[#allocation2 + $0x388] sm:$0xf]
    %v3463 = vld [vmem:[#allocation2 + $0x38c] sm:$0xf]
    %v3464 = vld [vmem:[#allocation2 + $0x390] sm:$0xf]
    %v3465 = vld [vmem:[#allocation2 + $0x394] sm:$0xf]
    %v3466 = vld [vmem:[#allocation2 + $0x398] sm:$0xf]
    %v3467 = vld [vmem:[#allocation2 + $0x39c] sm:$0xf]
    %v3468 = vld [vmem:[#allocation2 + $0x3a0] sm:$0xf]
    %v3469 = vld [vmem:[#allocation2 + $0x3a4] sm:$0xf]
    %v3470 = vld [vmem:[#allocation2 + $0x3a8] sm:$0xf]
    %v3471 = vld [vmem:[#allocation2 + $0x3ac] sm:$0xf]
    %v3472 = vld [vmem:[#allocation2 + $0x3b0] sm:$0xf]
    %v3473 = vld [vmem:[#allocation2 + $0x3b4] sm:$0xf]
    %v3474 = vld [vmem:[#allocation2 + $0x3b8] sm:$0xf]
    %v3475 = vld [vmem:[#allocation2 + $0x3bc] sm:$0xf]
    %v3476 = vld [vmem:[#allocation2 + $0x3c0] sm:$0xf]
    %v3477 = vld [vmem:[#allocation2 + $0x3c4] sm:$0xf]
    %v3478 = vld [vmem:[#allocation2 + $0x3c8] sm:$0xf]
    %v3479 = vld [vmem:[#allocation2 + $0x3cc] sm:$0xf]
    %v3480 = vld [vmem:[#allocation2 + $0x3d0] sm:$0xf]
    %v3481 = vld [vmem:[#allocation2 + $0x3d4] sm:$0xf]
    %v3482 = vld [vmem:[#allocation2 + $0x3d8] sm:$0xf]
    %v3483 = vld [vmem:[#allocation2 + $0x3dc] sm:$0xf]
    %v3484 = vld [vmem:[#allocation2 + $0x3e0] sm:$0xf]
    %v3485 = vld [vmem:[#allocation2 + $0x3e4] sm:$0xf]
    %v3486 = vld [vmem:[#allocation2 + $0x3e8] sm:$0xf]
    %v3487 = vld [vmem:[#allocation2 + $0x3ec] sm:$0xf]
    %v3488 = vld [vmem:[#allocation2 + $0x3f0] sm:$0xf]
    %v3489 = vld [vmem:[#allocation2 + $0x3f4] sm:$0xf]
    %v3490 = vld [vmem:[#allocation2 + $0x3f8] sm:$0xf]
    %v3491 = vld [vmem:[#allocation2 + $0x3fc] sm:$0xf]
    %v3492 = vld [vmem:[#allocation2 + $0x400] sm:$0xf]
    %v3493 = vld [vmem:[#allocation2 + $0x404] sm:$0xf]
    %v3494 = vld [vmem:[#allocation2 + $0x408] sm:$0xf]
    %v3495 = vld [vmem:[#allocation2 + $0x40c] sm:$0xf]
    %v3496 = vld [vmem:[#allocation2 + $0x410] sm:$0xf]
    %v3497 = vld [vmem:[#allocation2 + $0x414] sm:$0xf]
    %v3498 = vld [vmem:[#allocation2 + $0x418] sm:$0xf]
    %v3499 = vld [vmem:[#allocation2 + $0x41c] sm:$0xf]
    %v3500 = vld [vmem:[#allocation2 + $0x420] sm:$0xf]
    %v3501 = vld [vmem:[#allocation2 + $0x424] sm:$0xf]
    %v3502 = vld [vmem:[#allocation2 + $0x428] sm:$0xf]
    %v3503 = vld [vmem:[#allocation2 + $0x42c] sm:$0xf]
    %v3504 = vld [vmem:[#allocation2 + $0x430] sm:$0xf]
    %v3505 = vld [vmem:[#allocation2 + $0x434] sm:$0xf]
    %v3506 = vld [vmem:[#allocation2 + $0x438] sm:$0xf]
    %v3507 = vld [vmem:[#allocation2 + $0x43c] sm:$0xf]
    %v3508 = vld [vmem:[#allocation2 + $0x440] sm:$0xf]
    %v3509 = vld [vmem:[#allocation2 + $0x444] sm:$0xf]
    %v3510 = vld [vmem:[#allocation2 + $0x448] sm:$0xf]
    %v3511 = vld [vmem:[#allocation2 + $0x44c] sm:$0xf]
    %v3512 = vld [vmem:[#allocation2 + $0x450] sm:$0xf]
    %v3513 = vld [vmem:[#allocation2 + $0x454] sm:$0xf]
    %v3514 = vld [vmem:[#allocation2 + $0x458] sm:$0xf]
    %v3515 = vld [vmem:[#allocation2 + $0x45c] sm:$0xf]
    %v3516 = vld [vmem:[#allocation2 + $0x460] sm:$0xf]
    %v3517 = vld [vmem:[#allocation2 + $0x464] sm:$0xf]
    %v3518 = vld [vmem:[#allocation2 + $0x468] sm:$0xf]
    %v3519 = vld [vmem:[#allocation2 + $0x46c] sm:$0xf]
    %v3520 = vld [vmem:[#allocation2 + $0x470] sm:$0xf]
    %v3521 = vld [vmem:[#allocation2 + $0x474] sm:$0xf]
    %v3522 = vld [vmem:[#allocation2 + $0x478] sm:$0xf]
    %v3523 = vld [vmem:[#allocation2 + $0x47c] sm:$0xf]
    %v3524 = vld [vmem:[%s6] sm:$0xff]
    %v3525 = vld [vmem:[%s6 + $0x8] sm:$0xff]
    %v3526 = vld [vmem:[%s6 + $0x10] sm:$0xff]
    %v3527 = vld [vmem:[%s6 + $0x18] sm:$0xff]
    %v3528 = vld [vmem:[%s6 + $0x20] sm:$0xff]
    %v3529 = vld [vmem:[%s6 + $0x28] sm:$0xff]
    %v3530 = vld [vmem:[%s6 + $0x30] sm:$0xff]
    %v3531 = vld [vmem:[%s6 + $0x38] sm:$0xff]
    %v3532 = vld [vmem:[%s6 + $0x40] sm:$0xff]
    %v3533 = vld [vmem:[%s6 + $0x48] sm:$0xff]
    %v3534 = vld [vmem:[%s6 + $0x50] sm:$0xff]
    %v3535 = vld [vmem:[%s6 + $0x58] sm:$0xff]
    %v3536 = vld [vmem:[%s6 + $0x60] sm:$0xff]
    %v3537 = vld [vmem:[%s6 + $0x68] sm:$0xff]
    %v3538 = vld [vmem:[%s6 + $0x70] sm:$0xff]
    %v3539 = vld [vmem:[%s6 + $0x78] sm:$0xff]
    %v3540 = vld [vmem:[%s6 + $0x80] sm:$0xff]
    %v3541 = vld [vmem:[%s6 + $0x88] sm:$0xff]
    %v3542 = vld [vmem:[%s6 + $0x90] sm:$0xff]
    %v3543 = vld [vmem:[%s6 + $0x98] sm:$0xff]
    %v3544 = vld [vmem:[%s6 + $0xa0] sm:$0xff]
    %v3545 = vld [vmem:[%s6 + $0xa8] sm:$0xff]
    %v3546 = vld [vmem:[%s6 + $0xb0] sm:$0xff]
    %v3547 = vld [vmem:[%s6 + $0xb8] sm:$0xff]
    %v3548 = vld [vmem:[%s6 + $0xc0] sm:$0xff]
    %v3549 = vld [vmem:[%s6 + $0xc8] sm:$0xff]
    %v3550 = vld [vmem:[%s6 + $0xd0] sm:$0xff]
    %v3551 = vld [vmem:[%s6 + $0xd8] sm:$0xff]
    %v3552 = vld [vmem:[%s6 + $0xe0] sm:$0xff]
    %v3553 = vld [vmem:[%s6 + $0xe8] sm:$0xff]
    %v3554 = vld [vmem:[%s6 + $0xf0] sm:$0xff]
    %v3555 = vld [vmem:[%s6 + $0xf8] sm:$0xff]
    %v3556 = vld [vmem:[%s6 + $0x100] sm:$0xff]
    %v3557 = vld [vmem:[%s6 + $0x108] sm:$0xff]
    %v3558 = vld [vmem:[%s6 + $0x110] sm:$0xff]
    %v3559 = vld [vmem:[%s6 + $0x118] sm:$0xff]
    %v3560 = vld [vmem:[%s6 + $0x120] sm:$0xff]
    %v3561 = vld [vmem:[%s6 + $0x128] sm:$0xff]
    %v3562 = vld [vmem:[%s6 + $0x130] sm:$0xff]
    %v3563 = vld [vmem:[%s6 + $0x138] sm:$0xff]
    %v3564 = vld [vmem:[%s6 + $0x140] sm:$0xff]
    %v3565 = vld [vmem:[%s6 + $0x148] sm:$0xff]
    %v3566 = vld [vmem:[%s6 + $0x150] sm:$0xff]
    %v3567 = vld [vmem:[%s6 + $0x158] sm:$0xff]
    %v3568 = vld [vmem:[%s6 + $0x160] sm:$0xff]
    %v3569 = vld [vmem:[%s6 + $0x168] sm:$0xff]
    %v3570 = vld [vmem:[%s6 + $0x170] sm:$0xff]
    %v3571 = vld [vmem:[%s6 + $0x178] sm:$0xff]
    %v3572 = vld [vmem:[%s6 + $0x180] sm:$0xff]
    %v3573 = vld [vmem:[%s6 + $0x188] sm:$0xff]
    %v3574 = vld [vmem:[%s6 + $0x190] sm:$0xff]
    %v3575 = vld [vmem:[%s6 + $0x198] sm:$0xff]
    %v3576 = vld [vmem:[%s6 + $0x1a0] sm:$0xff]
    %v3577 = vld [vmem:[%s6 + $0x1a8] sm:$0xff]
    %v3578 = vld [vmem:[%s6 + $0x1b0] sm:$0xff]
    %v3579 = vld [vmem:[%s6 + $0x1b8] sm:$0xff]
    %v3580 = vld [vmem:[%s6 + $0x1c0] sm:$0xff]
    %v3581 = vld [vmem:[%s6 + $0x1c8] sm:$0xff]
    %v3582 = vld [vmem:[%s6 + $0x1d0] sm:$0xff]
    %v3583 = vld [vmem:[%s6 + $0x1d8] sm:$0xff]
    %v3584 = vld [vmem:[%s6 + $0x1e0] sm:$0xff]
    %v3585 = vld [vmem:[%s6 + $0x1e8] sm:$0xff]
    %v3586 = vld [vmem:[%s6 + $0x1f0] sm:$0xff]
    %v3587 = vld [vmem:[%s6 + $0x1f8] sm:$0xff]
    %3589 = vset.pattern.permute.xlu0 0
    %3590 = vperm.xlu0 %3589, %v3524
    %v3591 = vpop.permute.xlu0 %3590
    %3594 = vset.pattern.permute.xlu0 0
    %3595 = vperm.xlu0 %3594, %v3525
    %v3596 = vpop.permute.xlu0 %3595
    %3599 = vset.pattern.permute.xlu0 0
    %3600 = vperm.xlu0 %3599, %v3526
    %v3601 = vpop.permute.xlu0 %3600
    %3604 = vset.pattern.permute.xlu0 0
    %3605 = vperm.xlu0 %3604, %v3527
    %v3606 = vpop.permute.xlu0 %3605
    %3609 = vset.pattern.permute.xlu0 0
    %3610 = vperm.xlu0 %3609, %v3528
    %v3611 = vpop.permute.xlu0 %3610
    %3614 = vset.pattern.permute.xlu0 0
    %3615 = vperm.xlu0 %3614, %v3529
    %v3616 = vpop.permute.xlu0 %3615
    %3619 = vset.pattern.permute.xlu0 0
    %3620 = vperm.xlu0 %3619, %v3530
    %v3621 = vpop.permute.xlu0 %3620
    %3624 = vset.pattern.permute.xlu0 0
    %3625 = vperm.xlu0 %3624, %v3531
    %v3626 = vpop.permute.xlu0 %3625
    %3629 = vset.pattern.permute.xlu0 0
    %3630 = vperm.xlu0 %3629, %v3532
    %v3631 = vpop.permute.xlu0 %3630
    %3634 = vset.pattern.permute.xlu0 0
    %3635 = vperm.xlu0 %3634, %v3533
    %v3636 = vpop.permute.xlu0 %3635
    %3639 = vset.pattern.permute.xlu0 0
    %3640 = vperm.xlu0 %3639, %v3534
    %v3641 = vpop.permute.xlu0 %3640
    %3644 = vset.pattern.permute.xlu0 0
    %3645 = vperm.xlu0 %3644, %v3535
    %v3646 = vpop.permute.xlu0 %3645
    %3649 = vset.pattern.permute.xlu0 0
    %3650 = vperm.xlu0 %3649, %v3536
    %v3651 = vpop.permute.xlu0 %3650
    %3654 = vset.pattern.permute.xlu0 0
    %3655 = vperm.xlu0 %3654, %v3537
    %v3656 = vpop.permute.xlu0 %3655
    %3659 = vset.pattern.permute.xlu0 0
    %3660 = vperm.xlu0 %3659, %v3538
    %v3661 = vpop.permute.xlu0 %3660
    %3664 = vset.pattern.permute.xlu0 0
    %3665 = vperm.xlu0 %3664, %v3539
    %v3666 = vpop.permute.xlu0 %3665
    %3669 = vset.pattern.permute.xlu0 0
    %3670 = vperm.xlu0 %3669, %v3540
    %v3671 = vpop.permute.xlu0 %3670
    %3674 = vset.pattern.permute.xlu0 0
    %3675 = vperm.xlu0 %3674, %v3541
    %v3676 = vpop.permute.xlu0 %3675
    %3679 = vset.pattern.permute.xlu0 0
    %3680 = vperm.xlu0 %3679, %v3542
    %v3681 = vpop.permute.xlu0 %3680
    %3684 = vset.pattern.permute.xlu0 0
    %3685 = vperm.xlu0 %3684, %v3543
    %v3686 = vpop.permute.xlu0 %3685
    %3689 = vset.pattern.permute.xlu0 0
    %3690 = vperm.xlu0 %3689, %v3544
    %v3691 = vpop.permute.xlu0 %3690
    %3694 = vset.pattern.permute.xlu0 0
    %3695 = vperm.xlu0 %3694, %v3545
    %v3696 = vpop.permute.xlu0 %3695
    %3699 = vset.pattern.permute.xlu0 0
    %3700 = vperm.xlu0 %3699, %v3546
    %v3701 = vpop.permute.xlu0 %3700
    %3704 = vset.pattern.permute.xlu0 0
    %3705 = vperm.xlu0 %3704, %v3547
    %v3706 = vpop.permute.xlu0 %3705
    %3709 = vset.pattern.permute.xlu0 0
    %3710 = vperm.xlu0 %3709, %v3548
    %v3711 = vpop.permute.xlu0 %3710
    %3714 = vset.pattern.permute.xlu0 0
    %3715 = vperm.xlu0 %3714, %v3549
    %v3716 = vpop.permute.xlu0 %3715
    %3719 = vset.pattern.permute.xlu0 0
    %3720 = vperm.xlu0 %3719, %v3550
    %v3721 = vpop.permute.xlu0 %3720
    %3724 = vset.pattern.permute.xlu0 0
    %3725 = vperm.xlu0 %3724, %v3551
    %v3726 = vpop.permute.xlu0 %3725
    %3729 = vset.pattern.permute.xlu0 0
    %3730 = vperm.xlu0 %3729, %v3552
    %v3731 = vpop.permute.xlu0 %3730
    %3734 = vset.pattern.permute.xlu0 0
    %3735 = vperm.xlu0 %3734, %v3553
    %v3736 = vpop.permute.xlu0 %3735
    %3739 = vset.pattern.permute.xlu0 0
    %3740 = vperm.xlu0 %3739, %v3554
    %v3741 = vpop.permute.xlu0 %3740
    %3744 = vset.pattern.permute.xlu0 0
    %3745 = vperm.xlu0 %3744, %v3555
    %v3746 = vpop.permute.xlu0 %3745
    %3749 = vset.pattern.permute.xlu0 0
    %3750 = vperm.xlu0 %3749, %v3556
    %v3751 = vpop.permute.xlu0 %3750
    %3754 = vset.pattern.permute.xlu0 0
    %3755 = vperm.xlu0 %3754, %v3557
    %v3756 = vpop.permute.xlu0 %3755
    %3759 = vset.pattern.permute.xlu0 0
    %3760 = vperm.xlu0 %3759, %v3558
    %v3761 = vpop.permute.xlu0 %3760
    %3764 = vset.pattern.permute.xlu0 0
    %3765 = vperm.xlu0 %3764, %v3559
    %v3766 = vpop.permute.xlu0 %3765
    %3769 = vset.pattern.permute.xlu0 0
    %3770 = vperm.xlu0 %3769, %v3560
    %v3771 = vpop.permute.xlu0 %3770
    %3774 = vset.pattern.permute.xlu0 0
    %3775 = vperm.xlu0 %3774, %v3561
    %v3776 = vpop.permute.xlu0 %3775
    %3779 = vset.pattern.permute.xlu0 0
    %3780 = vperm.xlu0 %3779, %v3562
    %v3781 = vpop.permute.xlu0 %3780
    %3784 = vset.pattern.permute.xlu0 0
    %3785 = vperm.xlu0 %3784, %v3563
    %v3786 = vpop.permute.xlu0 %3785
    %3789 = vset.pattern.permute.xlu0 0
    %3790 = vperm.xlu0 %3789, %v3564
    %v3791 = vpop.permute.xlu0 %3790
    %3794 = vset.pattern.permute.xlu0 0
    %3795 = vperm.xlu0 %3794, %v3565
    %v3796 = vpop.permute.xlu0 %3795
    %3799 = vset.pattern.permute.xlu0 0
    %3800 = vperm.xlu0 %3799, %v3566
    %v3801 = vpop.permute.xlu0 %3800
    %3804 = vset.pattern.permute.xlu0 0
    %3805 = vperm.xlu0 %3804, %v3567
    %v3806 = vpop.permute.xlu0 %3805
    %3809 = vset.pattern.permute.xlu0 0
    %3810 = vperm.xlu0 %3809, %v3568
    %v3811 = vpop.permute.xlu0 %3810
    %3814 = vset.pattern.permute.xlu0 0
    %3815 = vperm.xlu0 %3814, %v3569
    %v3816 = vpop.permute.xlu0 %3815
    %3819 = vset.pattern.permute.xlu0 0
    %3820 = vperm.xlu0 %3819, %v3570
    %v3821 = vpop.permute.xlu0 %3820
    %3824 = vset.pattern.permute.xlu0 0
    %3825 = vperm.xlu0 %3824, %v3571
    %v3826 = vpop.permute.xlu0 %3825
    %3829 = vset.pattern.permute.xlu0 0
    %3830 = vperm.xlu0 %3829, %v3572
    %v3831 = vpop.permute.xlu0 %3830
    %3834 = vset.pattern.permute.xlu0 0
    %3835 = vperm.xlu0 %3834, %v3573
    %v3836 = vpop.permute.xlu0 %3835
    %3839 = vset.pattern.permute.xlu0 0
    %3840 = vperm.xlu0 %3839, %v3574
    %v3841 = vpop.permute.xlu0 %3840
    %3844 = vset.pattern.permute.xlu0 0
    %3845 = vperm.xlu0 %3844, %v3575
    %v3846 = vpop.permute.xlu0 %3845
    %3849 = vset.pattern.permute.xlu0 0
    %3850 = vperm.xlu0 %3849, %v3576
    %v3851 = vpop.permute.xlu0 %3850
    %3854 = vset.pattern.permute.xlu0 0
    %3855 = vperm.xlu0 %3854, %v3577
    %v3856 = vpop.permute.xlu0 %3855
    %3859 = vset.pattern.permute.xlu0 0
    %3860 = vperm.xlu0 %3859, %v3578
    %v3861 = vpop.permute.xlu0 %3860
    %3864 = vset.pattern.permute.xlu0 0
    %3865 = vperm.xlu0 %3864, %v3579
    %v3866 = vpop.permute.xlu0 %3865
    %3869 = vset.pattern.permute.xlu0 0
    %3870 = vperm.xlu0 %3869, %v3580
    %v3871 = vpop.permute.xlu0 %3870
    %3874 = vset.pattern.permute.xlu0 0
    %3875 = vperm.xlu0 %3874, %v3581
    %v3876 = vpop.permute.xlu0 %3875
    %3879 = vset.pattern.permute.xlu0 0
    %3880 = vperm.xlu0 %3879, %v3582
    %v3881 = vpop.permute.xlu0 %3880
    %3884 = vset.pattern.permute.xlu0 0
    %3885 = vperm.xlu0 %3884, %v3583
    %v3886 = vpop.permute.xlu0 %3885
    %3889 = vset.pattern.permute.xlu0 0
    %3890 = vperm.xlu0 %3889, %v3584
    %v3891 = vpop.permute.xlu0 %3890
    %3894 = vset.pattern.permute.xlu0 0
    %3895 = vperm.xlu0 %3894, %v3585
    %v3896 = vpop.permute.xlu0 %3895
    %3899 = vset.pattern.permute.xlu0 0
    %3900 = vperm.xlu0 %3899, %v3586
    %v3901 = vpop.permute.xlu0 %3900
    %3904 = vset.pattern.permute.xlu0 0
    %3905 = vperm.xlu0 %3904, %v3587
    %v3906 = vpop.permute.xlu0 %3905
    %v4484 = vunpack.c.l.b16 %v2660
    %v4485 = vunpack.c.h.b16 %v2660
    %v4486 = vunpack.c.l.b16 %v2661
    %v4487 = vunpack.c.h.b16 %v2661
    %v4488 = vunpack.c.l.b16 %v2662
    %v4489 = vunpack.c.h.b16 %v2662
    %v4490 = vunpack.c.l.b16 %v2663
    %v4491 = vunpack.c.h.b16 %v2663
    %v4492 = vunpack.c.l.b16 %v2664
    %v4493 = vunpack.c.h.b16 %v2664
    %v4494 = vunpack.c.l.b16 %v2665
    %v4495 = vunpack.c.h.b16 %v2665
    %v4496 = vunpack.c.l.b16 %v2666
    %v4497 = vunpack.c.h.b16 %v2666
    %v4498 = vunpack.c.l.b16 %v2667
    %v4499 = vunpack.c.h.b16 %v2667
    %v4500 = vunpack.c.l.b16 %v2668
    %v4501 = vunpack.c.h.b16 %v2668
    %v4502 = vunpack.c.l.b16 %v2669
    %v4503 = vunpack.c.h.b16 %v2669
    %v4504 = vunpack.c.l.b16 %v2670
    %v4505 = vunpack.c.h.b16 %v2670
    %v4506 = vunpack.c.l.b16 %v2671
    %v4507 = vunpack.c.h.b16 %v2671
    %v4508 = vunpack.c.l.b16 %v2672
    %v4509 = vunpack.c.h.b16 %v2672
    %v4510 = vunpack.c.l.b16 %v2673
    %v4511 = vunpack.c.h.b16 %v2673
    %v4512 = vunpack.c.l.b16 %v2674
    %v4513 = vunpack.c.h.b16 %v2674
    %v4514 = vunpack.c.l.b16 %v2675
    %v4515 = vunpack.c.h.b16 %v2675
    %v4516 = vunpack.c.l.b16 %v2676
    %v4517 = vunpack.c.h.b16 %v2676
    %v4518 = vunpack.c.l.b16 %v2677
    %v4519 = vunpack.c.h.b16 %v2677
    %v4520 = vunpack.c.l.b16 %v2678
    %v4521 = vunpack.c.h.b16 %v2678
    %v4522 = vunpack.c.l.b16 %v2679
    %v4523 = vunpack.c.h.b16 %v2679
    %v4524 = vunpack.c.l.b16 %v2680
    %v4525 = vunpack.c.h.b16 %v2680
    %v4526 = vunpack.c.l.b16 %v2681
    %v4527 = vunpack.c.h.b16 %v2681
    %v4528 = vunpack.c.l.b16 %v2682
    %v4529 = vunpack.c.h.b16 %v2682
    %v4530 = vunpack.c.l.b16 %v2683
    %v4531 = vunpack.c.h.b16 %v2683
    %v4532 = vunpack.c.l.b16 %v2684
    %v4533 = vunpack.c.h.b16 %v2684
    %v4534 = vunpack.c.l.b16 %v2685
    %v4535 = vunpack.c.h.b16 %v2685
    %v4536 = vunpack.c.l.b16 %v2686
    %v4537 = vunpack.c.h.b16 %v2686
    %v4538 = vunpack.c.l.b16 %v2687
    %v4539 = vunpack.c.h.b16 %v2687
    %v4540 = vunpack.c.l.b16 %v2688
    %v4541 = vunpack.c.h.b16 %v2688
    %v4542 = vunpack.c.l.b16 %v2689
    %v4543 = vunpack.c.h.b16 %v2689
    %v4544 = vunpack.c.l.b16 %v2690
    %v4545 = vunpack.c.h.b16 %v2690
    %v4546 = vunpack.c.l.b16 %v2691
    %v4547 = vunpack.c.h.b16 %v2691
    %v4548 = vunpack.c.l.b16 %v2692
    %v4549 = vunpack.c.h.b16 %v2692
    %v4550 = vunpack.c.l.b16 %v2693
    %v4551 = vunpack.c.h.b16 %v2693
    %v4552 = vunpack.c.l.b16 %v2694
    %v4553 = vunpack.c.h.b16 %v2694
    %v4554 = vunpack.c.l.b16 %v2695
    %v4555 = vunpack.c.h.b16 %v2695
    %v4556 = vunpack.c.l.b16 %v2696
    %v4557 = vunpack.c.h.b16 %v2696
    %v4558 = vunpack.c.l.b16 %v2697
    %v4559 = vunpack.c.h.b16 %v2697
    %v4560 = vunpack.c.l.b16 %v2698
    %v4561 = vunpack.c.h.b16 %v2698
    %v4562 = vunpack.c.l.b16 %v2699
    %v4563 = vunpack.c.h.b16 %v2699
    %v4564 = vunpack.c.l.b16 %v2700
    %v4565 = vunpack.c.h.b16 %v2700
    %v4566 = vunpack.c.l.b16 %v2701
    %v4567 = vunpack.c.h.b16 %v2701
    %v4568 = vunpack.c.l.b16 %v2702
    %v4569 = vunpack.c.h.b16 %v2702
    %v4570 = vunpack.c.l.b16 %v2703
    %v4571 = vunpack.c.h.b16 %v2703
    %v4572 = vunpack.c.l.b16 %v2704
    %v4573 = vunpack.c.h.b16 %v2704
    %v4574 = vunpack.c.l.b16 %v2705
    %v4575 = vunpack.c.h.b16 %v2705
    %v4576 = vunpack.c.l.b16 %v2706
    %v4577 = vunpack.c.h.b16 %v2706
    %v4578 = vunpack.c.l.b16 %v2707
    %v4579 = vunpack.c.h.b16 %v2707
    %v4580 = vunpack.c.l.b16 %v2708
    %v4581 = vunpack.c.h.b16 %v2708
    %v4582 = vunpack.c.l.b16 %v2709
    %v4583 = vunpack.c.h.b16 %v2709
    %v4584 = vunpack.c.l.b16 %v2710
    %v4585 = vunpack.c.h.b16 %v2710
    %v4586 = vunpack.c.l.b16 %v2711
    %v4587 = vunpack.c.h.b16 %v2711
    %v4588 = vunpack.c.l.b16 %v2712
    %v4589 = vunpack.c.h.b16 %v2712
    %v4590 = vunpack.c.l.b16 %v2713
    %v4591 = vunpack.c.h.b16 %v2713
    %v4592 = vunpack.c.l.b16 %v2714
    %v4593 = vunpack.c.h.b16 %v2714
    %v4594 = vunpack.c.l.b16 %v2715
    %v4595 = vunpack.c.h.b16 %v2715
    %v4596 = vunpack.c.l.b16 %v2716
    %v4597 = vunpack.c.h.b16 %v2716
    %v4598 = vunpack.c.l.b16 %v2717
    %v4599 = vunpack.c.h.b16 %v2717
    %v4600 = vunpack.c.l.b16 %v2718
    %v4601 = vunpack.c.h.b16 %v2718
    %v4602 = vunpack.c.l.b16 %v2719
    %v4603 = vunpack.c.h.b16 %v2719
    %v4604 = vunpack.c.l.b16 %v2720
    %v4605 = vunpack.c.h.b16 %v2720
    %v4606 = vunpack.c.l.b16 %v2721
    %v4607 = vunpack.c.h.b16 %v2721
    %v4608 = vunpack.c.l.b16 %v2722
    %v4609 = vunpack.c.h.b16 %v2722
    %v4610 = vunpack.c.l.b16 %v2723
    %v4611 = vunpack.c.h.b16 %v2723
    %v4612 = vunpack.c.l.b16 %v2724
    %v4613 = vunpack.c.h.b16 %v2724
    %v4614 = vunpack.c.l.b16 %v2725
    %v4615 = vunpack.c.h.b16 %v2725
    %v4616 = vunpack.c.l.b16 %v2726
    %v4617 = vunpack.c.h.b16 %v2726
    %v4618 = vunpack.c.l.b16 %v2727
    %v4619 = vunpack.c.h.b16 %v2727
    %v4620 = vunpack.c.l.b16 %v2728
    %v4621 = vunpack.c.h.b16 %v2728
    %v4622 = vunpack.c.l.b16 %v2729
    %v4623 = vunpack.c.h.b16 %v2729
    %v4624 = vunpack.c.l.b16 %v2730
    %v4625 = vunpack.c.h.b16 %v2730
    %v4626 = vunpack.c.l.b16 %v2731
    %v4627 = vunpack.c.h.b16 %v2731
    %v4628 = vunpack.c.l.b16 %v2732
    %v4629 = vunpack.c.h.b16 %v2732
    %v4630 = vunpack.c.l.b16 %v2733
    %v4631 = vunpack.c.h.b16 %v2733
    %v4632 = vunpack.c.l.b16 %v2734
    %v4633 = vunpack.c.h.b16 %v2734
    %v4634 = vunpack.c.l.b16 %v2735
    %v4635 = vunpack.c.h.b16 %v2735
    %v4636 = vunpack.c.l.b16 %v2736
    %v4637 = vunpack.c.h.b16 %v2736
    %v4638 = vunpack.c.l.b16 %v2737
    %v4639 = vunpack.c.h.b16 %v2737
    %v4640 = vunpack.c.l.b16 %v2738
    %v4641 = vunpack.c.h.b16 %v2738
    %v4642 = vunpack.c.l.b16 %v2739
    %v4643 = vunpack.c.h.b16 %v2739
    %v4644 = vunpack.c.l.b16 %v2740
    %v4645 = vunpack.c.h.b16 %v2740
    %v4646 = vunpack.c.l.b16 %v2741
    %v4647 = vunpack.c.h.b16 %v2741
    %v4648 = vunpack.c.l.b16 %v2742
    %v4649 = vunpack.c.h.b16 %v2742
    %v4650 = vunpack.c.l.b16 %v2743
    %v4651 = vunpack.c.h.b16 %v2743
    %v4652 = vunpack.c.l.b16 %v2744
    %v4653 = vunpack.c.h.b16 %v2744
    %v4654 = vunpack.c.l.b16 %v2745
    %v4655 = vunpack.c.h.b16 %v2745
    %v4656 = vunpack.c.l.b16 %v2746
    %v4657 = vunpack.c.h.b16 %v2746
    %v4658 = vunpack.c.l.b16 %v2747
    %v4659 = vunpack.c.h.b16 %v2747
    %v4660 = vunpack.c.l.b16 %v2748
    %v4661 = vunpack.c.h.b16 %v2748
    %v4662 = vunpack.c.l.b16 %v2749
    %v4663 = vunpack.c.h.b16 %v2749
    %v4664 = vunpack.c.l.b16 %v2750
    %v4665 = vunpack.c.h.b16 %v2750
    %v4666 = vunpack.c.l.b16 %v2751
    %v4667 = vunpack.c.h.b16 %v2751
    %v4668 = vunpack.c.l.b16 %v2752
    %v4669 = vunpack.c.h.b16 %v2752
    %v4670 = vunpack.c.l.b16 %v2753
    %v4671 = vunpack.c.h.b16 %v2753
    %v4672 = vunpack.c.l.b16 %v2754
    %v4673 = vunpack.c.h.b16 %v2754
    %v4674 = vunpack.c.l.b16 %v2755
    %v4675 = vunpack.c.h.b16 %v2755
    %v4676 = vunpack.c.l.b16 %v2756
    %v4677 = vunpack.c.h.b16 %v2756
    %v4678 = vunpack.c.l.b16 %v2757
    %v4679 = vunpack.c.h.b16 %v2757
    %v4680 = vunpack.c.l.b16 %v2758
    %v4681 = vunpack.c.h.b16 %v2758
    %v4682 = vunpack.c.l.b16 %v2759
    %v4683 = vunpack.c.h.b16 %v2759
    %v4684 = vunpack.c.l.b16 %v2760
    %v4685 = vunpack.c.h.b16 %v2760
    %v4686 = vunpack.c.l.b16 %v2761
    %v4687 = vunpack.c.h.b16 %v2761
    %v4688 = vunpack.c.l.b16 %v2762
    %v4689 = vunpack.c.h.b16 %v2762
    %v4690 = vunpack.c.l.b16 %v2763
    %v4691 = vunpack.c.h.b16 %v2763
    %v4692 = vunpack.c.l.b16 %v2764
    %v4693 = vunpack.c.h.b16 %v2764
    %v4694 = vunpack.c.l.b16 %v2765
    %v4695 = vunpack.c.h.b16 %v2765
    %v4696 = vunpack.c.l.b16 %v2766
    %v4697 = vunpack.c.h.b16 %v2766
    %v4698 = vunpack.c.l.b16 %v2767
    %v4699 = vunpack.c.h.b16 %v2767
    %v4700 = vunpack.c.l.b16 %v2768
    %v4701 = vunpack.c.h.b16 %v2768
    %v4702 = vunpack.c.l.b16 %v2769
    %v4703 = vunpack.c.h.b16 %v2769
    %v4704 = vunpack.c.l.b16 %v2770
    %v4705 = vunpack.c.h.b16 %v2770
    %v4706 = vunpack.c.l.b16 %v2771
    %v4707 = vunpack.c.h.b16 %v2771
    %v4708 = vunpack.c.l.b16 %v2772
    %v4709 = vunpack.c.h.b16 %v2772
    %v4710 = vunpack.c.l.b16 %v2773
    %v4711 = vunpack.c.h.b16 %v2773
    %v4712 = vunpack.c.l.b16 %v2774
    %v4713 = vunpack.c.h.b16 %v2774
    %v4714 = vunpack.c.l.b16 %v2775
    %v4715 = vunpack.c.h.b16 %v2775
    %v4716 = vunpack.c.l.b16 %v2776
    %v4717 = vunpack.c.h.b16 %v2776
    %v4718 = vunpack.c.l.b16 %v2777
    %v4719 = vunpack.c.h.b16 %v2777
    %v4720 = vunpack.c.l.b16 %v2778
    %v4721 = vunpack.c.h.b16 %v2778
    %v4722 = vunpack.c.l.b16 %v2779
    %v4723 = vunpack.c.h.b16 %v2779
    %v4724 = vunpack.c.l.b16 %v2780
    %v4725 = vunpack.c.h.b16 %v2780
    %v4726 = vunpack.c.l.b16 %v2781
    %v4727 = vunpack.c.h.b16 %v2781
    %v4728 = vunpack.c.l.b16 %v2782
    %v4729 = vunpack.c.h.b16 %v2782
    %v4730 = vunpack.c.l.b16 %v2783
    %v4731 = vunpack.c.h.b16 %v2783
    %v4732 = vunpack.c.l.b16 %v2784
    %v4733 = vunpack.c.h.b16 %v2784
    %v4734 = vunpack.c.l.b16 %v2785
    %v4735 = vunpack.c.h.b16 %v2785
    %v4736 = vunpack.c.l.b16 %v2786
    %v4737 = vunpack.c.h.b16 %v2786
    %v4738 = vunpack.c.l.b16 %v2787
    %v4739 = vunpack.c.h.b16 %v2787
    %v4740 = vunpack.c.l.b16 %v2788
    %v4741 = vunpack.c.h.b16 %v2788
    %v4742 = vunpack.c.l.b16 %v2789
    %v4743 = vunpack.c.h.b16 %v2789
    %v4744 = vunpack.c.l.b16 %v2790
    %v4745 = vunpack.c.h.b16 %v2790
    %v4746 = vunpack.c.l.b16 %v2791
    %v4747 = vunpack.c.h.b16 %v2791
    %v4748 = vunpack.c.l.b16 %v2792
    %v4749 = vunpack.c.h.b16 %v2792
    %v4750 = vunpack.c.l.b16 %v2793
    %v4751 = vunpack.c.h.b16 %v2793
    %v4752 = vunpack.c.l.b16 %v2794
    %v4753 = vunpack.c.h.b16 %v2794
    %v4754 = vunpack.c.l.b16 %v2795
    %v4755 = vunpack.c.h.b16 %v2795
    %v4756 = vunpack.c.l.b16 %v2796
    %v4757 = vunpack.c.h.b16 %v2796
    %v4758 = vunpack.c.l.b16 %v2797
    %v4759 = vunpack.c.h.b16 %v2797
    %v4760 = vunpack.c.l.b16 %v2798
    %v4761 = vunpack.c.h.b16 %v2798
    %v4762 = vunpack.c.l.b16 %v2799
    %v4763 = vunpack.c.h.b16 %v2799
    %v4764 = vunpack.c.l.b16 %v2800
    %v4765 = vunpack.c.h.b16 %v2800
    %v4766 = vunpack.c.l.b16 %v2801
    %v4767 = vunpack.c.h.b16 %v2801
    %v4768 = vunpack.c.l.b16 %v2802
    %v4769 = vunpack.c.h.b16 %v2802
    %v4770 = vunpack.c.l.b16 %v2803
    %v4771 = vunpack.c.h.b16 %v2803
    %v4772 = vunpack.c.l.b16 %v2804
    %v4773 = vunpack.c.h.b16 %v2804
    %v4774 = vunpack.c.l.b16 %v2805
    %v4775 = vunpack.c.h.b16 %v2805
    %v4776 = vunpack.c.l.b16 %v2806
    %v4777 = vunpack.c.h.b16 %v2806
    %v4778 = vunpack.c.l.b16 %v2807
    %v4779 = vunpack.c.h.b16 %v2807
    %v4780 = vunpack.c.l.b16 %v2808
    %v4781 = vunpack.c.h.b16 %v2808
    %v4782 = vunpack.c.l.b16 %v2809
    %v4783 = vunpack.c.h.b16 %v2809
    %v4784 = vunpack.c.l.b16 %v2810
    %v4785 = vunpack.c.h.b16 %v2810
    %v4786 = vunpack.c.l.b16 %v2811
    %v4787 = vunpack.c.h.b16 %v2811
    %v4788 = vunpack.c.l.b16 %v2812
    %v4789 = vunpack.c.h.b16 %v2812
    %v4790 = vunpack.c.l.b16 %v2813
    %v4791 = vunpack.c.h.b16 %v2813
    %v4792 = vunpack.c.l.b16 %v2814
    %v4793 = vunpack.c.h.b16 %v2814
    %v4794 = vunpack.c.l.b16 %v2815
    %v4795 = vunpack.c.h.b16 %v2815
    %v4796 = vunpack.c.l.b16 %v2816
    %v4797 = vunpack.c.h.b16 %v2816
    %v4798 = vunpack.c.l.b16 %v2817
    %v4799 = vunpack.c.h.b16 %v2817
    %v4800 = vunpack.c.l.b16 %v2818
    %v4801 = vunpack.c.h.b16 %v2818
    %v4802 = vunpack.c.l.b16 %v2819
    %v4803 = vunpack.c.h.b16 %v2819
    %v4804 = vunpack.c.l.b16 %v2820
    %v4805 = vunpack.c.h.b16 %v2820
    %v4806 = vunpack.c.l.b16 %v2821
    %v4807 = vunpack.c.h.b16 %v2821
    %v4808 = vunpack.c.l.b16 %v2822
    %v4809 = vunpack.c.h.b16 %v2822
    %v4810 = vunpack.c.l.b16 %v2823
    %v4811 = vunpack.c.h.b16 %v2823
    %v4812 = vunpack.c.l.b16 %v2824
    %v4813 = vunpack.c.h.b16 %v2824
    %v4814 = vunpack.c.l.b16 %v2825
    %v4815 = vunpack.c.h.b16 %v2825
    %v4816 = vunpack.c.l.b16 %v2826
    %v4817 = vunpack.c.h.b16 %v2826
    %v4818 = vunpack.c.l.b16 %v2827
    %v4819 = vunpack.c.h.b16 %v2827
    %v4820 = vunpack.c.l.b16 %v2828
    %v4821 = vunpack.c.h.b16 %v2828
    %v4822 = vunpack.c.l.b16 %v2829
    %v4823 = vunpack.c.h.b16 %v2829
    %v4824 = vunpack.c.l.b16 %v2830
    %v4825 = vunpack.c.h.b16 %v2830
    %v4826 = vunpack.c.l.b16 %v2831
    %v4827 = vunpack.c.h.b16 %v2831
    %v4828 = vunpack.c.l.b16 %v2832
    %v4829 = vunpack.c.h.b16 %v2832
    %v4830 = vunpack.c.l.b16 %v2833
    %v4831 = vunpack.c.h.b16 %v2833
    %v4832 = vunpack.c.l.b16 %v2834
    %v4833 = vunpack.c.h.b16 %v2834
    %v4834 = vunpack.c.l.b16 %v2835
    %v4835 = vunpack.c.h.b16 %v2835
    %v4836 = vunpack.c.l.b16 %v2836
    %v4837 = vunpack.c.h.b16 %v2836
    %v4838 = vunpack.c.l.b16 %v2837
    %v4839 = vunpack.c.h.b16 %v2837
    %v4840 = vunpack.c.l.b16 %v2838
    %v4841 = vunpack.c.h.b16 %v2838
    %v4842 = vunpack.c.l.b16 %v2839
    %v4843 = vunpack.c.h.b16 %v2839
    %v4844 = vunpack.c.l.b16 %v2840
    %v4845 = vunpack.c.h.b16 %v2840
    %v4846 = vunpack.c.l.b16 %v2841
    %v4847 = vunpack.c.h.b16 %v2841
    %v4848 = vunpack.c.l.b16 %v2842
    %v4849 = vunpack.c.h.b16 %v2842
    %v4850 = vunpack.c.l.b16 %v2843
    %v4851 = vunpack.c.h.b16 %v2843
    %v4852 = vunpack.c.l.b16 %v2844
    %v4853 = vunpack.c.h.b16 %v2844
    %v4854 = vunpack.c.l.b16 %v2845
    %v4855 = vunpack.c.h.b16 %v2845
    %v4856 = vunpack.c.l.b16 %v2846
    %v4857 = vunpack.c.h.b16 %v2846
    %v4858 = vunpack.c.l.b16 %v2847
    %v4859 = vunpack.c.h.b16 %v2847
    %v4860 = vunpack.c.l.b16 %v2848
    %v4861 = vunpack.c.h.b16 %v2848
    %v4862 = vunpack.c.l.b16 %v2849
    %v4863 = vunpack.c.h.b16 %v2849
    %v4864 = vunpack.c.l.b16 %v2850
    %v4865 = vunpack.c.h.b16 %v2850
    %v4866 = vunpack.c.l.b16 %v2851
    %v4867 = vunpack.c.h.b16 %v2851
    %v4868 = vunpack.c.l.b16 %v2852
    %v4869 = vunpack.c.h.b16 %v2852
    %v4870 = vunpack.c.l.b16 %v2853
    %v4871 = vunpack.c.h.b16 %v2853
    %v4872 = vunpack.c.l.b16 %v2854
    %v4873 = vunpack.c.h.b16 %v2854
    %v4874 = vunpack.c.l.b16 %v2855
    %v4875 = vunpack.c.h.b16 %v2855
    %v4876 = vunpack.c.l.b16 %v2856
    %v4877 = vunpack.c.h.b16 %v2856
    %v4878 = vunpack.c.l.b16 %v2857
    %v4879 = vunpack.c.h.b16 %v2857
    %v4880 = vunpack.c.l.b16 %v2858
    %v4881 = vunpack.c.h.b16 %v2858
    %v4882 = vunpack.c.l.b16 %v2859
    %v4883 = vunpack.c.h.b16 %v2859
    %v4884 = vunpack.c.l.b16 %v2860
    %v4885 = vunpack.c.h.b16 %v2860
    %v4886 = vunpack.c.l.b16 %v2861
    %v4887 = vunpack.c.h.b16 %v2861
    %v4888 = vunpack.c.l.b16 %v2862
    %v4889 = vunpack.c.h.b16 %v2862
    %v4890 = vunpack.c.l.b16 %v2863
    %v4891 = vunpack.c.h.b16 %v2863
    %v4892 = vunpack.c.l.b16 %v2864
    %v4893 = vunpack.c.h.b16 %v2864
    %v4894 = vunpack.c.l.b16 %v2865
    %v4895 = vunpack.c.h.b16 %v2865
    %v4896 = vunpack.c.l.b16 %v2866
    %v4897 = vunpack.c.h.b16 %v2866
    %v4898 = vunpack.c.l.b16 %v2867
    %v4899 = vunpack.c.h.b16 %v2867
    %v4900 = vunpack.c.l.b16 %v2868
    %v4901 = vunpack.c.h.b16 %v2868
    %v4902 = vunpack.c.l.b16 %v2869
    %v4903 = vunpack.c.h.b16 %v2869
    %v4904 = vunpack.c.l.b16 %v2870
    %v4905 = vunpack.c.h.b16 %v2870
    %v4906 = vunpack.c.l.b16 %v2871
    %v4907 = vunpack.c.h.b16 %v2871
    %v4908 = vunpack.c.l.b16 %v2872
    %v4909 = vunpack.c.h.b16 %v2872
    %v4910 = vunpack.c.l.b16 %v2873
    %v4911 = vunpack.c.h.b16 %v2873
    %v4912 = vunpack.c.l.b16 %v2874
    %v4913 = vunpack.c.h.b16 %v2874
    %v4914 = vunpack.c.l.b16 %v2875
    %v4915 = vunpack.c.h.b16 %v2875
    %v4916 = vunpack.c.l.b16 %v2876
    %v4917 = vunpack.c.h.b16 %v2876
    %v4918 = vunpack.c.l.b16 %v2877
    %v4919 = vunpack.c.h.b16 %v2877
    %v4920 = vunpack.c.l.b16 %v2878
    %v4921 = vunpack.c.h.b16 %v2878
    %v4922 = vunpack.c.l.b16 %v2879
    %v4923 = vunpack.c.h.b16 %v2879
    %v4924 = vunpack.c.l.b16 %v2880
    %v4925 = vunpack.c.h.b16 %v2880
    %v4926 = vunpack.c.l.b16 %v2881
    %v4927 = vunpack.c.h.b16 %v2881
    %v4928 = vunpack.c.l.b16 %v2882
    %v4929 = vunpack.c.h.b16 %v2882
    %v4930 = vunpack.c.l.b16 %v2883
    %v4931 = vunpack.c.h.b16 %v2883
    %v4932 = vunpack.c.l.b16 %v2884
    %v4933 = vunpack.c.h.b16 %v2884
    %v4934 = vunpack.c.l.b16 %v2885
    %v4935 = vunpack.c.h.b16 %v2885
    %v4936 = vunpack.c.l.b16 %v2886
    %v4937 = vunpack.c.h.b16 %v2886
    %v4938 = vunpack.c.l.b16 %v2887
    %v4939 = vunpack.c.h.b16 %v2887
    %v4940 = vunpack.c.l.b16 %v2888
    %v4941 = vunpack.c.h.b16 %v2888
    %v4942 = vunpack.c.l.b16 %v2889
    %v4943 = vunpack.c.h.b16 %v2889
    %v4944 = vunpack.c.l.b16 %v2890
    %v4945 = vunpack.c.h.b16 %v2890
    %v4946 = vunpack.c.l.b16 %v2891
    %v4947 = vunpack.c.h.b16 %v2891
    %v4948 = vunpack.c.l.b16 %v2892
    %v4949 = vunpack.c.h.b16 %v2892
    %v4950 = vunpack.c.l.b16 %v2893
    %v4951 = vunpack.c.h.b16 %v2893
    %v4952 = vunpack.c.l.b16 %v2894
    %v4953 = vunpack.c.h.b16 %v2894
    %v4954 = vunpack.c.l.b16 %v2895
    %v4955 = vunpack.c.h.b16 %v2895
    %v4956 = vunpack.c.l.b16 %v2896
    %v4957 = vunpack.c.h.b16 %v2896
    %v4958 = vunpack.c.l.b16 %v2897
    %v4959 = vunpack.c.h.b16 %v2897
    %v4960 = vunpack.c.l.b16 %v2898
    %v4961 = vunpack.c.h.b16 %v2898
    %v4962 = vunpack.c.l.b16 %v2899
    %v4963 = vunpack.c.h.b16 %v2899
    %v4964 = vunpack.c.l.b16 %v2900
    %v4965 = vunpack.c.h.b16 %v2900
    %v4966 = vunpack.c.l.b16 %v2901
    %v4967 = vunpack.c.h.b16 %v2901
    %v4968 = vunpack.c.l.b16 %v2902
    %v4969 = vunpack.c.h.b16 %v2902
    %v4970 = vunpack.c.l.b16 %v2903
    %v4971 = vunpack.c.h.b16 %v2903
    %v4972 = vunpack.c.l.b16 %v2904
    %v4973 = vunpack.c.h.b16 %v2904
    %v4974 = vunpack.c.l.b16 %v2905
    %v4975 = vunpack.c.h.b16 %v2905
    %v4976 = vunpack.c.l.b16 %v2906
    %v4977 = vunpack.c.h.b16 %v2906
    %v4978 = vunpack.c.l.b16 %v2907
    %v4979 = vunpack.c.h.b16 %v2907
    %v4980 = vunpack.c.l.b16 %v2908
    %v4981 = vunpack.c.h.b16 %v2908
    %v4982 = vunpack.c.l.b16 %v2909
    %v4983 = vunpack.c.h.b16 %v2909
    %v4984 = vunpack.c.l.b16 %v2910
    %v4985 = vunpack.c.h.b16 %v2910
    %v4986 = vunpack.c.l.b16 %v2911
    %v4987 = vunpack.c.h.b16 %v2911
    %v4988 = vunpack.c.l.b16 %v2912
    %v4989 = vunpack.c.h.b16 %v2912
    %v4990 = vunpack.c.l.b16 %v2913
    %v4991 = vunpack.c.h.b16 %v2913
    %v4992 = vunpack.c.l.b16 %v2914
    %v4993 = vunpack.c.h.b16 %v2914
    %v4994 = vunpack.c.l.b16 %v2915
    %v4995 = vunpack.c.h.b16 %v2915
    %v4996 = vunpack.c.l.b16 %v2916
    %v4997 = vunpack.c.h.b16 %v2916
    %v4998 = vunpack.c.l.b16 %v2917
    %v4999 = vunpack.c.h.b16 %v2917
    %v5000 = vunpack.c.l.b16 %v2918
    %v5001 = vunpack.c.h.b16 %v2918
    %v5002 = vunpack.c.l.b16 %v2919
    %v5003 = vunpack.c.h.b16 %v2919
    %v5004 = vunpack.c.l.b16 %v2920
    %v5005 = vunpack.c.h.b16 %v2920
    %v5006 = vunpack.c.l.b16 %v2921
    %v5007 = vunpack.c.h.b16 %v2921
    %v5008 = vunpack.c.l.b16 %v2922
    %v5009 = vunpack.c.h.b16 %v2922
    %v5010 = vunpack.c.l.b16 %v2923
    %v5011 = vunpack.c.h.b16 %v2923
    %v5012 = vunpack.c.l.b16 %v2924
    %v5013 = vunpack.c.h.b16 %v2924
    %v5014 = vunpack.c.l.b16 %v2925
    %v5015 = vunpack.c.h.b16 %v2925
    %v5016 = vunpack.c.l.b16 %v2926
    %v5017 = vunpack.c.h.b16 %v2926
    %v5018 = vunpack.c.l.b16 %v2927
    %v5019 = vunpack.c.h.b16 %v2927
    %v5020 = vunpack.c.l.b16 %v2928
    %v5021 = vunpack.c.h.b16 %v2928
    %v5022 = vunpack.c.l.b16 %v2929
    %v5023 = vunpack.c.h.b16 %v2929
    %v5024 = vunpack.c.l.b16 %v2930
    %v5025 = vunpack.c.h.b16 %v2930
    %v5026 = vunpack.c.l.b16 %v2931
    %v5027 = vunpack.c.h.b16 %v2931
    %v5028 = vunpack.c.l.b16 %v2932
    %v5029 = vunpack.c.h.b16 %v2932
    %v5030 = vunpack.c.l.b16 %v2933
    %v5031 = vunpack.c.h.b16 %v2933
    %v5032 = vunpack.c.l.b16 %v2934
    %v5033 = vunpack.c.h.b16 %v2934
    %v5034 = vunpack.c.l.b16 %v2935
    %v5035 = vunpack.c.h.b16 %v2935
    %v5036 = vunpack.c.l.b16 %v2936
    %v5037 = vunpack.c.h.b16 %v2936
    %v5038 = vunpack.c.l.b16 %v2937
    %v5039 = vunpack.c.h.b16 %v2937
    %v5040 = vunpack.c.l.b16 %v2938
    %v5041 = vunpack.c.h.b16 %v2938
    %v5042 = vunpack.c.l.b16 %v2939
    %v5043 = vunpack.c.h.b16 %v2939
    %v5044 = vunpack.c.l.b16 %v2940
    %v5045 = vunpack.c.h.b16 %v2940
    %v5046 = vunpack.c.l.b16 %v2941
    %v5047 = vunpack.c.h.b16 %v2941
    %v5048 = vunpack.c.l.b16 %v2942
    %v5049 = vunpack.c.h.b16 %v2942
    %v5050 = vunpack.c.l.b16 %v2943
    %v5051 = vunpack.c.h.b16 %v2943
    %v5052 = vunpack.c.l.b16 %v2944
    %v5053 = vunpack.c.h.b16 %v2944
    %v5054 = vunpack.c.l.b16 %v2945
    %v5055 = vunpack.c.h.b16 %v2945
    %v5056 = vunpack.c.l.b16 %v2946
    %v5057 = vunpack.c.h.b16 %v2946
    %v5058 = vunpack.c.l.b16 %v2947
    %v5059 = vunpack.c.h.b16 %v2947
    %v5060 = vunpack.c.l.b16 %v2948
    %v5061 = vunpack.c.h.b16 %v2948
    %v5062 = vunpack.c.l.b16 %v2949
    %v5063 = vunpack.c.h.b16 %v2949
    %v5064 = vunpack.c.l.b16 %v2950
    %v5065 = vunpack.c.h.b16 %v2950
    %v5066 = vunpack.c.l.b16 %v2951
    %v5067 = vunpack.c.h.b16 %v2951
    %v5068 = vunpack.c.l.b16 %v2952
    %v5069 = vunpack.c.h.b16 %v2952
    %v5070 = vunpack.c.l.b16 %v2953
    %v5071 = vunpack.c.h.b16 %v2953
    %v5072 = vunpack.c.l.b16 %v2954
    %v5073 = vunpack.c.h.b16 %v2954
    %v5074 = vunpack.c.l.b16 %v2955
    %v5075 = vunpack.c.h.b16 %v2955
    %v5076 = vunpack.c.l.b16 %v2956
    %v5077 = vunpack.c.h.b16 %v2956
    %v5078 = vunpack.c.l.b16 %v2957
    %v5079 = vunpack.c.h.b16 %v2957
    %v5080 = vunpack.c.l.b16 %v2958
    %v5081 = vunpack.c.h.b16 %v2958
    %v5082 = vunpack.c.l.b16 %v2959
    %v5083 = vunpack.c.h.b16 %v2959
    %v5084 = vunpack.c.l.b16 %v2960
    %v5085 = vunpack.c.h.b16 %v2960
    %v5086 = vunpack.c.l.b16 %v2961
    %v5087 = vunpack.c.h.b16 %v2961
    %v5088 = vunpack.c.l.b16 %v2962
    %v5089 = vunpack.c.h.b16 %v2962
    %v5090 = vunpack.c.l.b16 %v2963
    %v5091 = vunpack.c.h.b16 %v2963
    %v5092 = vunpack.c.l.b16 %v2964
    %v5093 = vunpack.c.h.b16 %v2964
    %v5094 = vunpack.c.l.b16 %v2965
    %v5095 = vunpack.c.h.b16 %v2965
    %v5096 = vunpack.c.l.b16 %v2966
    %v5097 = vunpack.c.h.b16 %v2966
    %v5098 = vunpack.c.l.b16 %v2967
    %v5099 = vunpack.c.h.b16 %v2967
    %v5100 = vunpack.c.l.b16 %v2968
    %v5101 = vunpack.c.h.b16 %v2968
    %v5102 = vunpack.c.l.b16 %v2969
    %v5103 = vunpack.c.h.b16 %v2969
    %v5104 = vunpack.c.l.b16 %v2970
    %v5105 = vunpack.c.h.b16 %v2970
    %v5106 = vunpack.c.l.b16 %v2971
    %v5107 = vunpack.c.h.b16 %v2971
    %v5108 = vunpack.c.l.b16 %v2972
    %v5109 = vunpack.c.h.b16 %v2972
    %v5110 = vunpack.c.l.b16 %v2973
    %v5111 = vunpack.c.h.b16 %v2973
    %v5112 = vunpack.c.l.b16 %v2974
    %v5113 = vunpack.c.h.b16 %v2974
    %v5114 = vunpack.c.l.b16 %v2975
    %v5115 = vunpack.c.h.b16 %v2975
    %v5116 = vunpack.c.l.b16 %v2976
    %v5117 = vunpack.c.h.b16 %v2976
    %v5118 = vunpack.c.l.b16 %v2977
    %v5119 = vunpack.c.h.b16 %v2977
    %v5120 = vunpack.c.l.b16 %v2978
    %v5121 = vunpack.c.h.b16 %v2978
    %v5122 = vunpack.c.l.b16 %v2979
    %v5123 = vunpack.c.h.b16 %v2979
    %v5124 = vunpack.c.l.b16 %v2980
    %v5125 = vunpack.c.h.b16 %v2980
    %v5126 = vunpack.c.l.b16 %v2981
    %v5127 = vunpack.c.h.b16 %v2981
    %v5128 = vunpack.c.l.b16 %v2982
    %v5129 = vunpack.c.h.b16 %v2982
    %v5130 = vunpack.c.l.b16 %v2983
    %v5131 = vunpack.c.h.b16 %v2983
    %v5132 = vunpack.c.l.b16 %v2984
    %v5133 = vunpack.c.h.b16 %v2984
    %v5134 = vunpack.c.l.b16 %v2985
    %v5135 = vunpack.c.h.b16 %v2985
    %v5136 = vunpack.c.l.b16 %v2986
    %v5137 = vunpack.c.h.b16 %v2986
    %v5138 = vunpack.c.l.b16 %v2987
    %v5139 = vunpack.c.h.b16 %v2987
    %v5140 = vunpack.c.l.b16 %v2988
    %v5141 = vunpack.c.h.b16 %v2988
    %v5142 = vunpack.c.l.b16 %v2989
    %v5143 = vunpack.c.h.b16 %v2989
    %v5144 = vunpack.c.l.b16 %v2990
    %v5145 = vunpack.c.h.b16 %v2990
    %v5146 = vunpack.c.l.b16 %v2991
    %v5147 = vunpack.c.h.b16 %v2991
    %v5148 = vunpack.c.l.b16 %v2992
    %v5149 = vunpack.c.h.b16 %v2992
    %v5150 = vunpack.c.l.b16 %v2993
    %v5151 = vunpack.c.h.b16 %v2993
    %v5152 = vunpack.c.l.b16 %v2994
    %v5153 = vunpack.c.h.b16 %v2994
    %v5154 = vunpack.c.l.b16 %v2995
    %v5155 = vunpack.c.h.b16 %v2995
    %v5156 = vunpack.c.l.b16 %v2996
    %v5157 = vunpack.c.h.b16 %v2996
    %v5158 = vunpack.c.l.b16 %v2997
    %v5159 = vunpack.c.h.b16 %v2997
    %v5160 = vunpack.c.l.b16 %v2998
    %v5161 = vunpack.c.h.b16 %v2998
    %v5162 = vunpack.c.l.b16 %v2999
    %v5163 = vunpack.c.h.b16 %v2999
    %v5164 = vunpack.c.l.b16 %v3000
    %v5165 = vunpack.c.h.b16 %v3000
    %v5166 = vunpack.c.l.b16 %v3001
    %v5167 = vunpack.c.h.b16 %v3001
    %v5168 = vunpack.c.l.b16 %v3002
    %v5169 = vunpack.c.h.b16 %v3002
    %v5170 = vunpack.c.l.b16 %v3003
    %v5171 = vunpack.c.h.b16 %v3003
    %v5172 = vunpack.c.l.b16 %v3004
    %v5173 = vunpack.c.h.b16 %v3004
    %v5174 = vunpack.c.l.b16 %v3005
    %v5175 = vunpack.c.h.b16 %v3005
    %v5176 = vunpack.c.l.b16 %v3006
    %v5177 = vunpack.c.h.b16 %v3006
    %v5178 = vunpack.c.l.b16 %v3007
    %v5179 = vunpack.c.h.b16 %v3007
    %v5180 = vunpack.c.l.b16 %v3008
    %v5181 = vunpack.c.h.b16 %v3008
    %v5182 = vunpack.c.l.b16 %v3009
    %v5183 = vunpack.c.h.b16 %v3009
    %v5184 = vunpack.c.l.b16 %v3010
    %v5185 = vunpack.c.h.b16 %v3010
    %v5186 = vunpack.c.l.b16 %v3011
    %v5187 = vunpack.c.h.b16 %v3011
    %v5188 = vunpack.c.l.b16 %v3012
    %v5189 = vunpack.c.h.b16 %v3012
    %v5190 = vunpack.c.l.b16 %v3013
    %v5191 = vunpack.c.h.b16 %v3013
    %v5192 = vunpack.c.l.b16 %v3014
    %v5193 = vunpack.c.h.b16 %v3014
    %v5194 = vunpack.c.l.b16 %v3015
    %v5195 = vunpack.c.h.b16 %v3015
    %v5196 = vunpack.c.l.b16 %v3016
    %v5197 = vunpack.c.h.b16 %v3016
    %v5198 = vunpack.c.l.b16 %v3017
    %v5199 = vunpack.c.h.b16 %v3017
    %v5200 = vunpack.c.l.b16 %v3018
    %v5201 = vunpack.c.h.b16 %v3018
    %v5202 = vunpack.c.l.b16 %v3019
    %v5203 = vunpack.c.h.b16 %v3019
    %v5204 = vunpack.c.l.b16 %v3020
    %v5205 = vunpack.c.h.b16 %v3020
    %v5206 = vunpack.c.l.b16 %v3021
    %v5207 = vunpack.c.h.b16 %v3021
    %v5208 = vunpack.c.l.b16 %v3022
    %v5209 = vunpack.c.h.b16 %v3022
    %v5210 = vunpack.c.l.b16 %v3023
    %v5211 = vunpack.c.h.b16 %v3023
    %v5212 = vunpack.c.l.b16 %v3024
    %v5213 = vunpack.c.h.b16 %v3024
    %v5214 = vunpack.c.l.b16 %v3025
    %v5215 = vunpack.c.h.b16 %v3025
    %v5216 = vunpack.c.l.b16 %v3026
    %v5217 = vunpack.c.h.b16 %v3026
    %v5218 = vunpack.c.l.b16 %v3027
    %v5219 = vunpack.c.h.b16 %v3027
    %v5220 = vunpack.c.l.b16 %v3028
    %v5221 = vunpack.c.h.b16 %v3028
    %v5222 = vunpack.c.l.b16 %v3029
    %v5223 = vunpack.c.h.b16 %v3029
    %v5224 = vunpack.c.l.b16 %v3030
    %v5225 = vunpack.c.h.b16 %v3030
    %v5226 = vunpack.c.l.b16 %v3031
    %v5227 = vunpack.c.h.b16 %v3031
    %v5228 = vunpack.c.l.b16 %v3032
    %v5229 = vunpack.c.h.b16 %v3032
    %v5230 = vunpack.c.l.b16 %v3033
    %v5231 = vunpack.c.h.b16 %v3033
    %v5232 = vunpack.c.l.b16 %v3034
    %v5233 = vunpack.c.h.b16 %v3034
    %v5234 = vunpack.c.l.b16 %v3035
    %v5235 = vunpack.c.h.b16 %v3035
    %v5236 = vunpack.c.l.b16 %v3036
    %v5237 = vunpack.c.h.b16 %v3036
    %v5238 = vunpack.c.l.b16 %v3037
    %v5239 = vunpack.c.h.b16 %v3037
    %v5240 = vunpack.c.l.b16 %v3038
    %v5241 = vunpack.c.h.b16 %v3038
    %v5242 = vunpack.c.l.b16 %v3039
    %v5243 = vunpack.c.h.b16 %v3039
    %v5244 = vunpack.c.l.b16 %v3040
    %v5245 = vunpack.c.h.b16 %v3040
    %v5246 = vunpack.c.l.b16 %v3041
    %v5247 = vunpack.c.h.b16 %v3041
    %v5248 = vunpack.c.l.b16 %v3042
    %v5249 = vunpack.c.h.b16 %v3042
    %v5250 = vunpack.c.l.b16 %v3043
    %v5251 = vunpack.c.h.b16 %v3043
    %v5252 = vunpack.c.l.b16 %v3044
    %v5253 = vunpack.c.h.b16 %v3044
    %v5254 = vunpack.c.l.b16 %v3045
    %v5255 = vunpack.c.h.b16 %v3045
    %v5256 = vunpack.c.l.b16 %v3046
    %v5257 = vunpack.c.h.b16 %v3046
    %v5258 = vunpack.c.l.b16 %v3047
    %v5259 = vunpack.c.h.b16 %v3047
    %v5260 = vunpack.c.l.b16 %v3048
    %v5261 = vunpack.c.h.b16 %v3048
    %v5262 = vunpack.c.l.b16 %v3049
    %v5263 = vunpack.c.h.b16 %v3049
    %v5264 = vunpack.c.l.b16 %v3050
    %v5265 = vunpack.c.h.b16 %v3050
    %v5266 = vunpack.c.l.b16 %v3051
    %v5267 = vunpack.c.h.b16 %v3051
    %v5268 = vunpack.c.l.b16 %v3052
    %v5269 = vunpack.c.h.b16 %v3052
    %v5270 = vunpack.c.l.b16 %v3053
    %v5271 = vunpack.c.h.b16 %v3053
    %v5272 = vunpack.c.l.b16 %v3054
    %v5273 = vunpack.c.h.b16 %v3054
    %v5274 = vunpack.c.l.b16 %v3055
    %v5275 = vunpack.c.h.b16 %v3055
    %v5276 = vunpack.c.l.b16 %v3056
    %v5277 = vunpack.c.h.b16 %v3056
    %v5278 = vunpack.c.l.b16 %v3057
    %v5279 = vunpack.c.h.b16 %v3057
    %v5280 = vunpack.c.l.b16 %v3058
    %v5281 = vunpack.c.h.b16 %v3058
    %v5282 = vunpack.c.l.b16 %v3059
    %v5283 = vunpack.c.h.b16 %v3059
    %v5284 = vunpack.c.l.b16 %v3060
    %v5285 = vunpack.c.h.b16 %v3060
    %v5286 = vunpack.c.l.b16 %v3061
    %v5287 = vunpack.c.h.b16 %v3061
    %v5288 = vunpack.c.l.b16 %v3062
    %v5289 = vunpack.c.h.b16 %v3062
    %v5290 = vunpack.c.l.b16 %v3063
    %v5291 = vunpack.c.h.b16 %v3063
    %v5292 = vunpack.c.l.b16 %v3064
    %v5293 = vunpack.c.h.b16 %v3064
    %v5294 = vunpack.c.l.b16 %v3065
    %v5295 = vunpack.c.h.b16 %v3065
    %v5296 = vunpack.c.l.b16 %v3066
    %v5297 = vunpack.c.h.b16 %v3066
    %v5298 = vunpack.c.l.b16 %v3067
    %v5299 = vunpack.c.h.b16 %v3067
    %v5300 = vunpack.c.l.b16 %v3068
    %v5301 = vunpack.c.h.b16 %v3068
    %v5302 = vunpack.c.l.b16 %v3069
    %v5303 = vunpack.c.h.b16 %v3069
    %v5304 = vunpack.c.l.b16 %v3070
    %v5305 = vunpack.c.h.b16 %v3070
    %v5306 = vunpack.c.l.b16 %v3071
    %v5307 = vunpack.c.h.b16 %v3071
    %v5308 = vunpack.c.l.b16 %v3072
    %v5309 = vunpack.c.h.b16 %v3072
    %v5310 = vunpack.c.l.b16 %v3073
    %v5311 = vunpack.c.h.b16 %v3073
    %v5312 = vunpack.c.l.b16 %v3074
    %v5313 = vunpack.c.h.b16 %v3074
    %v5314 = vunpack.c.l.b16 %v3075
    %v5315 = vunpack.c.h.b16 %v3075
    %v5316 = vunpack.c.l.b16 %v3076
    %v5317 = vunpack.c.h.b16 %v3076
    %v5318 = vunpack.c.l.b16 %v3077
    %v5319 = vunpack.c.h.b16 %v3077
    %v5320 = vunpack.c.l.b16 %v3078
    %v5321 = vunpack.c.h.b16 %v3078
    %v5322 = vunpack.c.l.b16 %v3079
    %v5323 = vunpack.c.h.b16 %v3079
    %v5324 = vunpack.c.l.b16 %v3080
    %v5325 = vunpack.c.h.b16 %v3080
    %v5326 = vunpack.c.l.b16 %v3081
    %v5327 = vunpack.c.h.b16 %v3081
    %v5328 = vunpack.c.l.b16 %v3082
    %v5329 = vunpack.c.h.b16 %v3082
    %v5330 = vunpack.c.l.b16 %v3083
    %v5331 = vunpack.c.h.b16 %v3083
    %v5332 = vunpack.c.l.b16 %v3084
    %v5333 = vunpack.c.h.b16 %v3084
    %v5334 = vunpack.c.l.b16 %v3085
    %v5335 = vunpack.c.h.b16 %v3085
    %v5336 = vunpack.c.l.b16 %v3086
    %v5337 = vunpack.c.h.b16 %v3086
    %v5338 = vunpack.c.l.b16 %v3087
    %v5339 = vunpack.c.h.b16 %v3087
    %v5340 = vunpack.c.l.b16 %v3088
    %v5341 = vunpack.c.h.b16 %v3088
    %v5342 = vunpack.c.l.b16 %v3089
    %v5343 = vunpack.c.h.b16 %v3089
    %v5344 = vunpack.c.l.b16 %v3090
    %v5345 = vunpack.c.h.b16 %v3090
    %v5346 = vunpack.c.l.b16 %v3091
    %v5347 = vunpack.c.h.b16 %v3091
    %v5348 = vunpack.c.l.b16 %v3092
    %v5349 = vunpack.c.h.b16 %v3092
    %v5350 = vunpack.c.l.b16 %v3093
    %v5351 = vunpack.c.h.b16 %v3093
    %v5352 = vunpack.c.l.b16 %v3094
    %v5353 = vunpack.c.h.b16 %v3094
    %v5354 = vunpack.c.l.b16 %v3095
    %v5355 = vunpack.c.h.b16 %v3095
    %v5356 = vunpack.c.l.b16 %v3096
    %v5357 = vunpack.c.h.b16 %v3096
    %v5358 = vunpack.c.l.b16 %v3097
    %v5359 = vunpack.c.h.b16 %v3097
    %v5360 = vunpack.c.l.b16 %v3098
    %v5361 = vunpack.c.h.b16 %v3098
    %v5362 = vunpack.c.l.b16 %v3099
    %v5363 = vunpack.c.h.b16 %v3099
    %v5364 = vunpack.c.l.b16 %v3100
    %v5365 = vunpack.c.h.b16 %v3100
    %v5366 = vunpack.c.l.b16 %v3101
    %v5367 = vunpack.c.h.b16 %v3101
    %v5368 = vunpack.c.l.b16 %v3102
    %v5369 = vunpack.c.h.b16 %v3102
    %v5370 = vunpack.c.l.b16 %v3103
    %v5371 = vunpack.c.h.b16 %v3103
    %v5372 = vunpack.c.l.b16 %v3104
    %v5373 = vunpack.c.h.b16 %v3104
    %v5374 = vunpack.c.l.b16 %v3105
    %v5375 = vunpack.c.h.b16 %v3105
    %v5376 = vunpack.c.l.b16 %v3106
    %v5377 = vunpack.c.h.b16 %v3106
    %v5378 = vunpack.c.l.b16 %v3107
    %v5379 = vunpack.c.h.b16 %v3107
    %v5380 = vunpack.c.l.b16 %v3108
    %v5381 = vunpack.c.h.b16 %v3108
    %v5382 = vunpack.c.l.b16 %v3109
    %v5383 = vunpack.c.h.b16 %v3109
    %v5384 = vunpack.c.l.b16 %v3110
    %v5385 = vunpack.c.h.b16 %v3110
    %v5386 = vunpack.c.l.b16 %v3111
    %v5387 = vunpack.c.h.b16 %v3111
    %v5388 = vunpack.c.l.b16 %v3112
    %v5389 = vunpack.c.h.b16 %v3112
    %v5390 = vunpack.c.l.b16 %v3113
    %v5391 = vunpack.c.h.b16 %v3113
    %v5392 = vunpack.c.l.b16 %v3114
    %v5393 = vunpack.c.h.b16 %v3114
    %v5394 = vunpack.c.l.b16 %v3115
    %v5395 = vunpack.c.h.b16 %v3115
    %v5396 = vunpack.c.l.b16 %v3116
    %v5397 = vunpack.c.h.b16 %v3116
    %v5398 = vunpack.c.l.b16 %v3117
    %v5399 = vunpack.c.h.b16 %v3117
    %v5400 = vunpack.c.l.b16 %v3118
    %v5401 = vunpack.c.h.b16 %v3118
    %v5402 = vunpack.c.l.b16 %v3119
    %v5403 = vunpack.c.h.b16 %v3119
    %v5404 = vunpack.c.l.b16 %v3120
    %v5405 = vunpack.c.h.b16 %v3120
    %v5406 = vunpack.c.l.b16 %v3121
    %v5407 = vunpack.c.h.b16 %v3121
    %v5408 = vunpack.c.l.b16 %v3122
    %v5409 = vunpack.c.h.b16 %v3122
    %v5410 = vunpack.c.l.b16 %v3123
    %v5411 = vunpack.c.h.b16 %v3123
    %v5412 = vunpack.c.l.b16 %v3124
    %v5413 = vunpack.c.h.b16 %v3124
    %v5414 = vunpack.c.l.b16 %v3125
    %v5415 = vunpack.c.h.b16 %v3125
    %v5416 = vunpack.c.l.b16 %v3126
    %v5417 = vunpack.c.h.b16 %v3126
    %v5418 = vunpack.c.l.b16 %v3127
    %v5419 = vunpack.c.h.b16 %v3127
    %v5420 = vunpack.c.l.b16 %v3128
    %v5421 = vunpack.c.h.b16 %v3128
    %v5422 = vunpack.c.l.b16 %v3129
    %v5423 = vunpack.c.h.b16 %v3129
    %v5424 = vunpack.c.l.b16 %v3130
    %v5425 = vunpack.c.h.b16 %v3130
    %v5426 = vunpack.c.l.b16 %v3131
    %v5427 = vunpack.c.h.b16 %v3131
    %v5428 = vunpack.c.l.b16 %v3132
    %v5429 = vunpack.c.h.b16 %v3132
    %v5430 = vunpack.c.l.b16 %v3133
    %v5431 = vunpack.c.h.b16 %v3133
    %v5432 = vunpack.c.l.b16 %v3134
    %v5433 = vunpack.c.h.b16 %v3134
    %v5434 = vunpack.c.l.b16 %v3135
    %v5435 = vunpack.c.h.b16 %v3135
    %v5436 = vunpack.c.l.b16 %v3136
    %v5437 = vunpack.c.h.b16 %v3136
    %v5438 = vunpack.c.l.b16 %v3137
    %v5439 = vunpack.c.h.b16 %v3137
    %v5440 = vunpack.c.l.b16 %v3138
    %v5441 = vunpack.c.h.b16 %v3138
    %v5442 = vunpack.c.l.b16 %v3139
    %v5443 = vunpack.c.h.b16 %v3139
    %v5444 = vunpack.c.l.b16 %v3140
    %v5445 = vunpack.c.h.b16 %v3140
    %v5446 = vunpack.c.l.b16 %v3141
    %v5447 = vunpack.c.h.b16 %v3141
    %v5448 = vunpack.c.l.b16 %v3142
    %v5449 = vunpack.c.h.b16 %v3142
    %v5450 = vunpack.c.l.b16 %v3143
    %v5451 = vunpack.c.h.b16 %v3143
    %v5452 = vunpack.c.l.b16 %v3144
    %v5453 = vunpack.c.h.b16 %v3144
    %v5454 = vunpack.c.l.b16 %v3145
    %v5455 = vunpack.c.h.b16 %v3145
    %v5456 = vunpack.c.l.b16 %v3146
    %v5457 = vunpack.c.h.b16 %v3146
    %v5458 = vunpack.c.l.b16 %v3147
    %v5459 = vunpack.c.h.b16 %v3147
    %v5460 = vunpack.c.l.b16 %v3148
    %v5461 = vunpack.c.h.b16 %v3148
    %v5462 = vunpack.c.l.b16 %v3149
    %v5463 = vunpack.c.h.b16 %v3149
    %v5464 = vunpack.c.l.b16 %v3150
    %v5465 = vunpack.c.h.b16 %v3150
    %v5466 = vunpack.c.l.b16 %v3151
    %v5467 = vunpack.c.h.b16 %v3151
    %v5468 = vunpack.c.l.b16 %v3152
    %v5469 = vunpack.c.h.b16 %v3152
    %v5470 = vunpack.c.l.b16 %v3153
    %v5471 = vunpack.c.h.b16 %v3153
    %v5472 = vunpack.c.l.b16 %v3154
    %v5473 = vunpack.c.h.b16 %v3154
    %v5474 = vunpack.c.l.b16 %v3155
    %v5475 = vunpack.c.h.b16 %v3155
    %v5476 = vunpack.c.l.b16 %v3156
    %v5477 = vunpack.c.h.b16 %v3156
    %v5478 = vunpack.c.l.b16 %v3157
    %v5479 = vunpack.c.h.b16 %v3157
    %v5480 = vunpack.c.l.b16 %v3158
    %v5481 = vunpack.c.h.b16 %v3158
    %v5482 = vunpack.c.l.b16 %v3159
    %v5483 = vunpack.c.h.b16 %v3159
    %v5484 = vunpack.c.l.b16 %v3160
    %v5485 = vunpack.c.h.b16 %v3160
    %v5486 = vunpack.c.l.b16 %v3161
    %v5487 = vunpack.c.h.b16 %v3161
    %v5488 = vunpack.c.l.b16 %v3162
    %v5489 = vunpack.c.h.b16 %v3162
    %v5490 = vunpack.c.l.b16 %v3163
    %v5491 = vunpack.c.h.b16 %v3163
    %v5492 = vunpack.c.l.b16 %v3164
    %v5493 = vunpack.c.h.b16 %v3164
    %v5494 = vunpack.c.l.b16 %v3165
    %v5495 = vunpack.c.h.b16 %v3165
    %v5496 = vunpack.c.l.b16 %v3166
    %v5497 = vunpack.c.h.b16 %v3166
    %v5498 = vunpack.c.l.b16 %v3167
    %v5499 = vunpack.c.h.b16 %v3167
    %v5500 = vunpack.c.l.b16 %v3168
    %v5501 = vunpack.c.h.b16 %v3168
    %v5502 = vunpack.c.l.b16 %v3169
    %v5503 = vunpack.c.h.b16 %v3169
    %v5504 = vunpack.c.l.b16 %v3170
    %v5505 = vunpack.c.h.b16 %v3170
    %v5506 = vunpack.c.l.b16 %v3171
    %v5507 = vunpack.c.h.b16 %v3171
    %v5508 = vunpack.c.l.b16 %v3172
    %v5509 = vunpack.c.h.b16 %v3172
    %v5510 = vunpack.c.l.b16 %v3173
    %v5511 = vunpack.c.h.b16 %v3173
    %v5512 = vunpack.c.l.b16 %v3174
    %v5513 = vunpack.c.h.b16 %v3174
    %v5514 = vunpack.c.l.b16 %v3175
    %v5515 = vunpack.c.h.b16 %v3175
    %v5516 = vunpack.c.l.b16 %v3176
    %v5517 = vunpack.c.h.b16 %v3176
    %v5518 = vunpack.c.l.b16 %v3177
    %v5519 = vunpack.c.h.b16 %v3177
    %v5520 = vunpack.c.l.b16 %v3178
    %v5521 = vunpack.c.h.b16 %v3178
    %v5522 = vunpack.c.l.b16 %v3179
    %v5523 = vunpack.c.h.b16 %v3179
    %v5524 = vunpack.c.l.b16 %v3180
    %v5525 = vunpack.c.h.b16 %v3180
    %v5526 = vunpack.c.l.b16 %v3181
    %v5527 = vunpack.c.h.b16 %v3181
    %v5528 = vunpack.c.l.b16 %v3182
    %v5529 = vunpack.c.h.b16 %v3182
    %v5530 = vunpack.c.l.b16 %v3183
    %v5531 = vunpack.c.h.b16 %v3183
    %v5532 = vunpack.c.l.b16 %v3184
    %v5533 = vunpack.c.h.b16 %v3184
    %v5534 = vunpack.c.l.b16 %v3185
    %v5535 = vunpack.c.h.b16 %v3185
    %v5536 = vunpack.c.l.b16 %v3186
    %v5537 = vunpack.c.h.b16 %v3186
    %v5538 = vunpack.c.l.b16 %v3187
    %v5539 = vunpack.c.h.b16 %v3187
    %v5540 = vunpack.c.l.b16 %v3188
    %v5541 = vunpack.c.h.b16 %v3188
    %v5542 = vunpack.c.l.b16 %v3189
    %v5543 = vunpack.c.h.b16 %v3189
    %v5544 = vunpack.c.l.b16 %v3190
    %v5545 = vunpack.c.h.b16 %v3190
    %v5546 = vunpack.c.l.b16 %v3191
    %v5547 = vunpack.c.h.b16 %v3191
    %v5548 = vunpack.c.l.b16 %v3192
    %v5549 = vunpack.c.h.b16 %v3192
    %v5550 = vunpack.c.l.b16 %v3193
    %v5551 = vunpack.c.h.b16 %v3193
    %v5552 = vunpack.c.l.b16 %v3194
    %v5553 = vunpack.c.h.b16 %v3194
    %v5554 = vunpack.c.l.b16 %v3195
    %v5555 = vunpack.c.h.b16 %v3195
    %v5556 = vunpack.c.l.b16 %v3196
    %v5557 = vunpack.c.h.b16 %v3196
    %v5558 = vunpack.c.l.b16 %v3197
    %v5559 = vunpack.c.h.b16 %v3197
    %v5560 = vunpack.c.l.b16 %v3198
    %v5561 = vunpack.c.h.b16 %v3198
    %v5562 = vunpack.c.l.b16 %v3199
    %v5563 = vunpack.c.h.b16 %v3199
    %v5564 = vunpack.c.l.b16 %v3200
    %v5565 = vunpack.c.h.b16 %v3200
    %v5566 = vunpack.c.l.b16 %v3201
    %v5567 = vunpack.c.h.b16 %v3201
    %v5568 = vunpack.c.l.b16 %v3202
    %v5569 = vunpack.c.h.b16 %v3202
    %v5570 = vunpack.c.l.b16 %v3203
    %v5571 = vunpack.c.h.b16 %v3203
    %v5572 = vunpack.c.l.b16 %v3204
    %v5573 = vunpack.c.h.b16 %v3204
    %v5574 = vunpack.c.l.b16 %v3205
    %v5575 = vunpack.c.h.b16 %v3205
    %v5576 = vunpack.c.l.b16 %v3206
    %v5577 = vunpack.c.h.b16 %v3206
    %v5578 = vunpack.c.l.b16 %v3207
    %v5579 = vunpack.c.h.b16 %v3207
    %v5580 = vunpack.c.l.b16 %v3208
    %v5581 = vunpack.c.h.b16 %v3208
    %v5582 = vunpack.c.l.b16 %v3209
    %v5583 = vunpack.c.h.b16 %v3209
    %v5584 = vunpack.c.l.b16 %v3210
    %v5585 = vunpack.c.h.b16 %v3210
    %v5586 = vunpack.c.l.b16 %v3211
    %v5587 = vunpack.c.h.b16 %v3211
    %v5588 = vunpack.c.l.b16 %v3212
    %v5589 = vunpack.c.h.b16 %v3212
    %v5590 = vunpack.c.l.b16 %v3213
    %v5591 = vunpack.c.h.b16 %v3213
    %v5592 = vunpack.c.l.b16 %v3214
    %v5593 = vunpack.c.h.b16 %v3214
    %v5594 = vunpack.c.l.b16 %v3215
    %v5595 = vunpack.c.h.b16 %v3215
    %v5596 = vunpack.c.l.b16 %v3216
    %v5597 = vunpack.c.h.b16 %v3216
    %v5598 = vunpack.c.l.b16 %v3217
    %v5599 = vunpack.c.h.b16 %v3217
    %v5600 = vunpack.c.l.b16 %v3218
    %v5601 = vunpack.c.h.b16 %v3218
    %v5602 = vunpack.c.l.b16 %v3219
    %v5603 = vunpack.c.h.b16 %v3219
    %v5604 = vunpack.c.l.b16 %v3220
    %v5605 = vunpack.c.h.b16 %v3220
    %v5606 = vunpack.c.l.b16 %v3221
    %v5607 = vunpack.c.h.b16 %v3221
    %v5608 = vunpack.c.l.b16 %v3222
    %v5609 = vunpack.c.h.b16 %v3222
    %v5610 = vunpack.c.l.b16 %v3223
    %v5611 = vunpack.c.h.b16 %v3223
    %v5612 = vunpack.c.l.b16 %v3224
    %v5613 = vunpack.c.h.b16 %v3224
    %v5614 = vunpack.c.l.b16 %v3225
    %v5615 = vunpack.c.h.b16 %v3225
    %v5616 = vunpack.c.l.b16 %v3226
    %v5617 = vunpack.c.h.b16 %v3226
    %v5618 = vunpack.c.l.b16 %v3227
    %v5619 = vunpack.c.h.b16 %v3227
    %v5620 = vunpack.c.l.b16 %v3228
    %v5621 = vunpack.c.h.b16 %v3228
    %v5622 = vunpack.c.l.b16 %v3229
    %v5623 = vunpack.c.h.b16 %v3229
    %v5624 = vunpack.c.l.b16 %v3230
    %v5625 = vunpack.c.h.b16 %v3230
    %v5626 = vunpack.c.l.b16 %v3231
    %v5627 = vunpack.c.h.b16 %v3231
    %v5628 = vunpack.c.l.b16 %v3232
    %v5629 = vunpack.c.h.b16 %v3232
    %v5630 = vunpack.c.l.b16 %v3233
    %v5631 = vunpack.c.h.b16 %v3233
    %v5632 = vunpack.c.l.b16 %v3234
    %v5633 = vunpack.c.h.b16 %v3234
    %v5634 = vunpack.c.l.b16 %v3235
    %v5635 = vunpack.c.h.b16 %v3235
    %v5636 = vpack.c.b16 %v4502, %v4484
    %v5637 = vpack.c.b16 %v4503, %v4485
    %v5638 = vpack.c.b16 %v4504, %v4486
    %v5639 = vpack.c.b16 %v4505, %v4487
    %v5640 = vpack.c.b16 %v4506, %v4488
    %v5641 = vpack.c.b16 %v4507, %v4489
    %v5642 = vpack.c.b16 %v4508, %v4490
    %v5643 = vpack.c.b16 %v4509, %v4491
    %v5644 = vpack.c.b16 %v4510, %v4492
    %v5645 = vpack.c.b16 %v4511, %v4493
    %v5646 = vpack.c.b16 %v4512, %v4494
    %v5647 = vpack.c.b16 %v4513, %v4495
    %v5648 = vpack.c.b16 %v4514, %v4496
    %v5649 = vpack.c.b16 %v4515, %v4497
    %v5650 = vpack.c.b16 %v4516, %v4498
    %v5651 = vpack.c.b16 %v4517, %v4499
    %v5652 = vpack.c.b16 %v4518, %v4500
    %v5653 = vpack.c.b16 %v4519, %v4501
    %v5654 = vpack.c.b16 %v4538, %v4520
    %v5655 = vpack.c.b16 %v4539, %v4521
    %v5656 = vpack.c.b16 %v4540, %v4522
    %v5657 = vpack.c.b16 %v4541, %v4523
    %v5658 = vpack.c.b16 %v4542, %v4524
    %v5659 = vpack.c.b16 %v4543, %v4525
    %v5660 = vpack.c.b16 %v4544, %v4526
    %v5661 = vpack.c.b16 %v4545, %v4527
    %v5662 = vpack.c.b16 %v4546, %v4528
    %v5663 = vpack.c.b16 %v4547, %v4529
    %v5664 = vpack.c.b16 %v4548, %v4530
    %v5665 = vpack.c.b16 %v4549, %v4531
    %v5666 = vpack.c.b16 %v4550, %v4532
    %v5667 = vpack.c.b16 %v4551, %v4533
    %v5668 = vpack.c.b16 %v4552, %v4534
    %v5669 = vpack.c.b16 %v4553, %v4535
    %v5670 = vpack.c.b16 %v4554, %v4536
    %v5671 = vpack.c.b16 %v4555, %v4537
    %v5672 = vpack.c.b16 %v4574, %v4556
    %v5673 = vpack.c.b16 %v4575, %v4557
    %v5674 = vpack.c.b16 %v4576, %v4558
    %v5675 = vpack.c.b16 %v4577, %v4559
    %v5676 = vpack.c.b16 %v4578, %v4560
    %v5677 = vpack.c.b16 %v4579, %v4561
    %v5678 = vpack.c.b16 %v4580, %v4562
    %v5679 = vpack.c.b16 %v4581, %v4563
    %v5680 = vpack.c.b16 %v4582, %v4564
    %v5681 = vpack.c.b16 %v4583, %v4565
    %v5682 = vpack.c.b16 %v4584, %v4566
    %v5683 = vpack.c.b16 %v4585, %v4567
    %v5684 = vpack.c.b16 %v4586, %v4568
    %v5685 = vpack.c.b16 %v4587, %v4569
    %v5686 = vpack.c.b16 %v4588, %v4570
    %v5687 = vpack.c.b16 %v4589, %v4571
    %v5688 = vpack.c.b16 %v4590, %v4572
    %v5689 = vpack.c.b16 %v4591, %v4573
    %v5690 = vpack.c.b16 %v4610, %v4592
    %v5691 = vpack.c.b16 %v4611, %v4593
    %v5692 = vpack.c.b16 %v4612, %v4594
    %v5693 = vpack.c.b16 %v4613, %v4595
    %v5694 = vpack.c.b16 %v4614, %v4596
    %v5695 = vpack.c.b16 %v4615, %v4597
    %v5696 = vpack.c.b16 %v4616, %v4598
    %v5697 = vpack.c.b16 %v4617, %v4599
    %v5698 = vpack.c.b16 %v4618, %v4600
    %v5699 = vpack.c.b16 %v4619, %v4601
    %v5700 = vpack.c.b16 %v4620, %v4602
    %v5701 = vpack.c.b16 %v4621, %v4603
    %v5702 = vpack.c.b16 %v4622, %v4604
    %v5703 = vpack.c.b16 %v4623, %v4605
    %v5704 = vpack.c.b16 %v4624, %v4606
    %v5705 = vpack.c.b16 %v4625, %v4607
    %v5706 = vpack.c.b16 %v4626, %v4608
    %v5707 = vpack.c.b16 %v4627, %v4609
    %v5708 = vpack.c.b16 %v4646, %v4628
    %v5709 = vpack.c.b16 %v4647, %v4629
    %v5710 = vpack.c.b16 %v4648, %v4630
    %v5711 = vpack.c.b16 %v4649, %v4631
    %v5712 = vpack.c.b16 %v4650, %v4632
    %v5713 = vpack.c.b16 %v4651, %v4633
    %v5714 = vpack.c.b16 %v4652, %v4634
    %v5715 = vpack.c.b16 %v4653, %v4635
    %v5716 = vpack.c.b16 %v4654, %v4636
    %v5717 = vpack.c.b16 %v4655, %v4637
    %v5718 = vpack.c.b16 %v4656, %v4638
    %v5719 = vpack.c.b16 %v4657, %v4639
    %v5720 = vpack.c.b16 %v4658, %v4640
    %v5721 = vpack.c.b16 %v4659, %v4641
    %v5722 = vpack.c.b16 %v4660, %v4642
    %v5723 = vpack.c.b16 %v4661, %v4643
    %v5724 = vpack.c.b16 %v4662, %v4644
    %v5725 = vpack.c.b16 %v4663, %v4645
    %v5726 = vpack.c.b16 %v4682, %v4664
    %v5727 = vpack.c.b16 %v4683, %v4665
    %v5728 = vpack.c.b16 %v4684, %v4666
    %v5729 = vpack.c.b16 %v4685, %v4667
    %v5730 = vpack.c.b16 %v4686, %v4668
    %v5731 = vpack.c.b16 %v4687, %v4669
    %v5732 = vpack.c.b16 %v4688, %v4670
    %v5733 = vpack.c.b16 %v4689, %v4671
    %v5734 = vpack.c.b16 %v4690, %v4672
    %v5735 = vpack.c.b16 %v4691, %v4673
    %v5736 = vpack.c.b16 %v4692, %v4674
    %v5737 = vpack.c.b16 %v4693, %v4675
    %v5738 = vpack.c.b16 %v4694, %v4676
    %v5739 = vpack.c.b16 %v4695, %v4677
    %v5740 = vpack.c.b16 %v4696, %v4678
    %v5741 = vpack.c.b16 %v4697, %v4679
    %v5742 = vpack.c.b16 %v4698, %v4680
    %v5743 = vpack.c.b16 %v4699, %v4681
    %v5744 = vpack.c.b16 %v4718, %v4700
    %v5745 = vpack.c.b16 %v4719, %v4701
    %v5746 = vpack.c.b16 %v4720, %v4702
    %v5747 = vpack.c.b16 %v4721, %v4703
    %v5748 = vpack.c.b16 %v4722, %v4704
    %v5749 = vpack.c.b16 %v4723, %v4705
    %v5750 = vpack.c.b16 %v4724, %v4706
    %v5751 = vpack.c.b16 %v4725, %v4707
    %v5752 = vpack.c.b16 %v4726, %v4708
    %v5753 = vpack.c.b16 %v4727, %v4709
    %v5754 = vpack.c.b16 %v4728, %v4710
    %v5755 = vpack.c.b16 %v4729, %v4711
    %v5756 = vpack.c.b16 %v4730, %v4712
    %v5757 = vpack.c.b16 %v4731, %v4713
    %v5758 = vpack.c.b16 %v4732, %v4714
    %v5759 = vpack.c.b16 %v4733, %v4715
    %v5760 = vpack.c.b16 %v4734, %v4716
    %v5761 = vpack.c.b16 %v4735, %v4717
    %v5762 = vpack.c.b16 %v4754, %v4736
    %v5763 = vpack.c.b16 %v4755, %v4737
    %v5764 = vpack.c.b16 %v4756, %v4738
    %v5765 = vpack.c.b16 %v4757, %v4739
    %v5766 = vpack.c.b16 %v4758, %v4740
    %v5767 = vpack.c.b16 %v4759, %v4741
    %v5768 = vpack.c.b16 %v4760, %v4742
    %v5769 = vpack.c.b16 %v4761, %v4743
    %v5770 = vpack.c.b16 %v4762, %v4744
    %v5771 = vpack.c.b16 %v4763, %v4745
    %v5772 = vpack.c.b16 %v4764, %v4746
    %v5773 = vpack.c.b16 %v4765, %v4747
    %v5774 = vpack.c.b16 %v4766, %v4748
    %v5775 = vpack.c.b16 %v4767, %v4749
    %v5776 = vpack.c.b16 %v4768, %v4750
    %v5777 = vpack.c.b16 %v4769, %v4751
    %v5778 = vpack.c.b16 %v4770, %v4752
    %v5779 = vpack.c.b16 %v4771, %v4753
    %v5780 = vpack.c.b16 %v4790, %v4772
    %v5781 = vpack.c.b16 %v4791, %v4773
    %v5782 = vpack.c.b16 %v4792, %v4774
    %v5783 = vpack.c.b16 %v4793, %v4775
    %v5784 = vpack.c.b16 %v4794, %v4776
    %v5785 = vpack.c.b16 %v4795, %v4777
    %v5786 = vpack.c.b16 %v4796, %v4778
    %v5787 = vpack.c.b16 %v4797, %v4779
    %v5788 = vpack.c.b16 %v4798, %v4780
    %v5789 = vpack.c.b16 %v4799, %v4781
    %v5790 = vpack.c.b16 %v4800, %v4782
    %v5791 = vpack.c.b16 %v4801, %v4783
    %v5792 = vpack.c.b16 %v4802, %v4784
    %v5793 = vpack.c.b16 %v4803, %v4785
    %v5794 = vpack.c.b16 %v4804, %v4786
    %v5795 = vpack.c.b16 %v4805, %v4787
    %v5796 = vpack.c.b16 %v4806, %v4788
    %v5797 = vpack.c.b16 %v4807, %v4789
    %v5798 = vpack.c.b16 %v4826, %v4808
    %v5799 = vpack.c.b16 %v4827, %v4809
    %v5800 = vpack.c.b16 %v4828, %v4810
    %v5801 = vpack.c.b16 %v4829, %v4811
    %v5802 = vpack.c.b16 %v4830, %v4812
    %v5803 = vpack.c.b16 %v4831, %v4813
    %v5804 = vpack.c.b16 %v4832, %v4814
    %v5805 = vpack.c.b16 %v4833, %v4815
    %v5806 = vpack.c.b16 %v4834, %v4816
    %v5807 = vpack.c.b16 %v4835, %v4817
    %v5808 = vpack.c.b16 %v4836, %v4818
    %v5809 = vpack.c.b16 %v4837, %v4819
    %v5810 = vpack.c.b16 %v4838, %v4820
    %v5811 = vpack.c.b16 %v4839, %v4821
    %v5812 = vpack.c.b16 %v4840, %v4822
    %v5813 = vpack.c.b16 %v4841, %v4823
    %v5814 = vpack.c.b16 %v4842, %v4824
    %v5815 = vpack.c.b16 %v4843, %v4825
    %v5816 = vpack.c.b16 %v4862, %v4844
    %v5817 = vpack.c.b16 %v4863, %v4845
    %v5818 = vpack.c.b16 %v4864, %v4846
    %v5819 = vpack.c.b16 %v4865, %v4847
    %v5820 = vpack.c.b16 %v4866, %v4848
    %v5821 = vpack.c.b16 %v4867, %v4849
    %v5822 = vpack.c.b16 %v4868, %v4850
    %v5823 = vpack.c.b16 %v4869, %v4851
    %v5824 = vpack.c.b16 %v4870, %v4852
    %v5825 = vpack.c.b16 %v4871, %v4853
    %v5826 = vpack.c.b16 %v4872, %v4854
    %v5827 = vpack.c.b16 %v4873, %v4855
    %v5828 = vpack.c.b16 %v4874, %v4856
    %v5829 = vpack.c.b16 %v4875, %v4857
    %v5830 = vpack.c.b16 %v4876, %v4858
    %v5831 = vpack.c.b16 %v4877, %v4859
    %v5832 = vpack.c.b16 %v4878, %v4860
    %v5833 = vpack.c.b16 %v4879, %v4861
    %v5834 = vpack.c.b16 %v4898, %v4880
    %v5835 = vpack.c.b16 %v4899, %v4881
    %v5836 = vpack.c.b16 %v4900, %v4882
    %v5837 = vpack.c.b16 %v4901, %v4883
    %v5838 = vpack.c.b16 %v4902, %v4884
    %v5839 = vpack.c.b16 %v4903, %v4885
    %v5840 = vpack.c.b16 %v4904, %v4886
    %v5841 = vpack.c.b16 %v4905, %v4887
    %v5842 = vpack.c.b16 %v4906, %v4888
    %v5843 = vpack.c.b16 %v4907, %v4889
    %v5844 = vpack.c.b16 %v4908, %v4890
    %v5845 = vpack.c.b16 %v4909, %v4891
    %v5846 = vpack.c.b16 %v4910, %v4892
    %v5847 = vpack.c.b16 %v4911, %v4893
    %v5848 = vpack.c.b16 %v4912, %v4894
    %v5849 = vpack.c.b16 %v4913, %v4895
    %v5850 = vpack.c.b16 %v4914, %v4896
    %v5851 = vpack.c.b16 %v4915, %v4897
    %v5852 = vpack.c.b16 %v4934, %v4916
    %v5853 = vpack.c.b16 %v4935, %v4917
    %v5854 = vpack.c.b16 %v4936, %v4918
    %v5855 = vpack.c.b16 %v4937, %v4919
    %v5856 = vpack.c.b16 %v4938, %v4920
    %v5857 = vpack.c.b16 %v4939, %v4921
    %v5858 = vpack.c.b16 %v4940, %v4922
    %v5859 = vpack.c.b16 %v4941, %v4923
    %v5860 = vpack.c.b16 %v4942, %v4924
    %v5861 = vpack.c.b16 %v4943, %v4925
    %v5862 = vpack.c.b16 %v4944, %v4926
    %v5863 = vpack.c.b16 %v4945, %v4927
    %v5864 = vpack.c.b16 %v4946, %v4928
    %v5865 = vpack.c.b16 %v4947, %v4929
    %v5866 = vpack.c.b16 %v4948, %v4930
    %v5867 = vpack.c.b16 %v4949, %v4931
    %v5868 = vpack.c.b16 %v4950, %v4932
    %v5869 = vpack.c.b16 %v4951, %v4933
    %v5870 = vpack.c.b16 %v4970, %v4952
    %v5871 = vpack.c.b16 %v4971, %v4953
    %v5872 = vpack.c.b16 %v4972, %v4954
    %v5873 = vpack.c.b16 %v4973, %v4955
    %v5874 = vpack.c.b16 %v4974, %v4956
    %v5875 = vpack.c.b16 %v4975, %v4957
    %v5876 = vpack.c.b16 %v4976, %v4958
    %v5877 = vpack.c.b16 %v4977, %v4959
    %v5878 = vpack.c.b16 %v4978, %v4960
    %v5879 = vpack.c.b16 %v4979, %v4961
    %v5880 = vpack.c.b16 %v4980, %v4962
    %v5881 = vpack.c.b16 %v4981, %v4963
    %v5882 = vpack.c.b16 %v4982, %v4964
    %v5883 = vpack.c.b16 %v4983, %v4965
    %v5884 = vpack.c.b16 %v4984, %v4966
    %v5885 = vpack.c.b16 %v4985, %v4967
    %v5886 = vpack.c.b16 %v4986, %v4968
    %v5887 = vpack.c.b16 %v4987, %v4969
    %v5888 = vpack.c.b16 %v5006, %v4988
    %v5889 = vpack.c.b16 %v5007, %v4989
    %v5890 = vpack.c.b16 %v5008, %v4990
    %v5891 = vpack.c.b16 %v5009, %v4991
    %v5892 = vpack.c.b16 %v5010, %v4992
    %v5893 = vpack.c.b16 %v5011, %v4993
    %v5894 = vpack.c.b16 %v5012, %v4994
    %v5895 = vpack.c.b16 %v5013, %v4995
    %v5896 = vpack.c.b16 %v5014, %v4996
    %v5897 = vpack.c.b16 %v5015, %v4997
    %v5898 = vpack.c.b16 %v5016, %v4998
    %v5899 = vpack.c.b16 %v5017, %v4999
    %v5900 = vpack.c.b16 %v5018, %v5000
    %v5901 = vpack.c.b16 %v5019, %v5001
    %v5902 = vpack.c.b16 %v5020, %v5002
    %v5903 = vpack.c.b16 %v5021, %v5003
    %v5904 = vpack.c.b16 %v5022, %v5004
    %v5905 = vpack.c.b16 %v5023, %v5005
    %v5906 = vpack.c.b16 %v5042, %v5024
    %v5907 = vpack.c.b16 %v5043, %v5025
    %v5908 = vpack.c.b16 %v5044, %v5026
    %v5909 = vpack.c.b16 %v5045, %v5027
    %v5910 = vpack.c.b16 %v5046, %v5028
    %v5911 = vpack.c.b16 %v5047, %v5029
    %v5912 = vpack.c.b16 %v5048, %v5030
    %v5913 = vpack.c.b16 %v5049, %v5031
    %v5914 = vpack.c.b16 %v5050, %v5032
    %v5915 = vpack.c.b16 %v5051, %v5033
    %v5916 = vpack.c.b16 %v5052, %v5034
    %v5917 = vpack.c.b16 %v5053, %v5035
    %v5918 = vpack.c.b16 %v5054, %v5036
    %v5919 = vpack.c.b16 %v5055, %v5037
    %v5920 = vpack.c.b16 %v5056, %v5038
    %v5921 = vpack.c.b16 %v5057, %v5039
    %v5922 = vpack.c.b16 %v5058, %v5040
    %v5923 = vpack.c.b16 %v5059, %v5041
    %v5924 = vpack.c.b16 %v5078, %v5060
    %v5925 = vpack.c.b16 %v5079, %v5061
    %v5926 = vpack.c.b16 %v5080, %v5062
    %v5927 = vpack.c.b16 %v5081, %v5063
    %v5928 = vpack.c.b16 %v5082, %v5064
    %v5929 = vpack.c.b16 %v5083, %v5065
    %v5930 = vpack.c.b16 %v5084, %v5066
    %v5931 = vpack.c.b16 %v5085, %v5067
    %v5932 = vpack.c.b16 %v5086, %v5068
    %v5933 = vpack.c.b16 %v5087, %v5069
    %v5934 = vpack.c.b16 %v5088, %v5070
    %v5935 = vpack.c.b16 %v5089, %v5071
    %v5936 = vpack.c.b16 %v5090, %v5072
    %v5937 = vpack.c.b16 %v5091, %v5073
    %v5938 = vpack.c.b16 %v5092, %v5074
    %v5939 = vpack.c.b16 %v5093, %v5075
    %v5940 = vpack.c.b16 %v5094, %v5076
    %v5941 = vpack.c.b16 %v5095, %v5077
    %v5942 = vpack.c.b16 %v5114, %v5096
    %v5943 = vpack.c.b16 %v5115, %v5097
    %v5944 = vpack.c.b16 %v5116, %v5098
    %v5945 = vpack.c.b16 %v5117, %v5099
    %v5946 = vpack.c.b16 %v5118, %v5100
    %v5947 = vpack.c.b16 %v5119, %v5101
    %v5948 = vpack.c.b16 %v5120, %v5102
    %v5949 = vpack.c.b16 %v5121, %v5103
    %v5950 = vpack.c.b16 %v5122, %v5104
    %v5951 = vpack.c.b16 %v5123, %v5105
    %v5952 = vpack.c.b16 %v5124, %v5106
    %v5953 = vpack.c.b16 %v5125, %v5107
    %v5954 = vpack.c.b16 %v5126, %v5108
    %v5955 = vpack.c.b16 %v5127, %v5109
    %v5956 = vpack.c.b16 %v5128, %v5110
    %v5957 = vpack.c.b16 %v5129, %v5111
    %v5958 = vpack.c.b16 %v5130, %v5112
    %v5959 = vpack.c.b16 %v5131, %v5113
    %v5960 = vpack.c.b16 %v5150, %v5132
    %v5961 = vpack.c.b16 %v5151, %v5133
    %v5962 = vpack.c.b16 %v5152, %v5134
    %v5963 = vpack.c.b16 %v5153, %v5135
    %v5964 = vpack.c.b16 %v5154, %v5136
    %v5965 = vpack.c.b16 %v5155, %v5137
    %v5966 = vpack.c.b16 %v5156, %v5138
    %v5967 = vpack.c.b16 %v5157, %v5139
    %v5968 = vpack.c.b16 %v5158, %v5140
    %v5969 = vpack.c.b16 %v5159, %v5141
    %v5970 = vpack.c.b16 %v5160, %v5142
    %v5971 = vpack.c.b16 %v5161, %v5143
    %v5972 = vpack.c.b16 %v5162, %v5144
    %v5973 = vpack.c.b16 %v5163, %v5145
    %v5974 = vpack.c.b16 %v5164, %v5146
    %v5975 = vpack.c.b16 %v5165, %v5147
    %v5976 = vpack.c.b16 %v5166, %v5148
    %v5977 = vpack.c.b16 %v5167, %v5149
    %v5978 = vpack.c.b16 %v5186, %v5168
    %v5979 = vpack.c.b16 %v5187, %v5169
    %v5980 = vpack.c.b16 %v5188, %v5170
    %v5981 = vpack.c.b16 %v5189, %v5171
    %v5982 = vpack.c.b16 %v5190, %v5172
    %v5983 = vpack.c.b16 %v5191, %v5173
    %v5984 = vpack.c.b16 %v5192, %v5174
    %v5985 = vpack.c.b16 %v5193, %v5175
    %v5986 = vpack.c.b16 %v5194, %v5176
    %v5987 = vpack.c.b16 %v5195, %v5177
    %v5988 = vpack.c.b16 %v5196, %v5178
    %v5989 = vpack.c.b16 %v5197, %v5179
    %v5990 = vpack.c.b16 %v5198, %v5180
    %v5991 = vpack.c.b16 %v5199, %v5181
    %v5992 = vpack.c.b16 %v5200, %v5182
    %v5993 = vpack.c.b16 %v5201, %v5183
    %v5994 = vpack.c.b16 %v5202, %v5184
    %v5995 = vpack.c.b16 %v5203, %v5185
    %v5996 = vpack.c.b16 %v5222, %v5204
    %v5997 = vpack.c.b16 %v5223, %v5205
    %v5998 = vpack.c.b16 %v5224, %v5206
    %v5999 = vpack.c.b16 %v5225, %v5207
    %v6000 = vpack.c.b16 %v5226, %v5208
    %v6001 = vpack.c.b16 %v5227, %v5209
    %v6002 = vpack.c.b16 %v5228, %v5210
    %v6003 = vpack.c.b16 %v5229, %v5211
    %v6004 = vpack.c.b16 %v5230, %v5212
    %v6005 = vpack.c.b16 %v5231, %v5213
    %v6006 = vpack.c.b16 %v5232, %v5214
    %v6007 = vpack.c.b16 %v5233, %v5215
    %v6008 = vpack.c.b16 %v5234, %v5216
    %v6009 = vpack.c.b16 %v5235, %v5217
    %v6010 = vpack.c.b16 %v5236, %v5218
    %v6011 = vpack.c.b16 %v5237, %v5219
    %v6012 = vpack.c.b16 %v5238, %v5220
    %v6013 = vpack.c.b16 %v5239, %v5221
    %v6014 = vpack.c.b16 %v5258, %v5240
    %v6015 = vpack.c.b16 %v5259, %v5241
    %v6016 = vpack.c.b16 %v5260, %v5242
    %v6017 = vpack.c.b16 %v5261, %v5243
    %v6018 = vpack.c.b16 %v5262, %v5244
    %v6019 = vpack.c.b16 %v5263, %v5245
    %v6020 = vpack.c.b16 %v5264, %v5246
    %v6021 = vpack.c.b16 %v5265, %v5247
    %v6022 = vpack.c.b16 %v5266, %v5248
    %v6023 = vpack.c.b16 %v5267, %v5249
    %v6024 = vpack.c.b16 %v5268, %v5250
    %v6025 = vpack.c.b16 %v5269, %v5251
    %v6026 = vpack.c.b16 %v5270, %v5252
    %v6027 = vpack.c.b16 %v5271, %v5253
    %v6028 = vpack.c.b16 %v5272, %v5254
    %v6029 = vpack.c.b16 %v5273, %v5255
    %v6030 = vpack.c.b16 %v5274, %v5256
    %v6031 = vpack.c.b16 %v5275, %v5257
    %v6032 = vpack.c.b16 %v5294, %v5276
    %v6033 = vpack.c.b16 %v5295, %v5277
    %v6034 = vpack.c.b16 %v5296, %v5278
    %v6035 = vpack.c.b16 %v5297, %v5279
    %v6036 = vpack.c.b16 %v5298, %v5280
    %v6037 = vpack.c.b16 %v5299, %v5281
    %v6038 = vpack.c.b16 %v5300, %v5282
    %v6039 = vpack.c.b16 %v5301, %v5283
    %v6040 = vpack.c.b16 %v5302, %v5284
    %v6041 = vpack.c.b16 %v5303, %v5285
    %v6042 = vpack.c.b16 %v5304, %v5286
    %v6043 = vpack.c.b16 %v5305, %v5287
    %v6044 = vpack.c.b16 %v5306, %v5288
    %v6045 = vpack.c.b16 %v5307, %v5289
    %v6046 = vpack.c.b16 %v5308, %v5290
    %v6047 = vpack.c.b16 %v5309, %v5291
    %v6048 = vpack.c.b16 %v5310, %v5292
    %v6049 = vpack.c.b16 %v5311, %v5293
    %v6050 = vpack.c.b16 %v5330, %v5312
    %v6051 = vpack.c.b16 %v5331, %v5313
    %v6052 = vpack.c.b16 %v5332, %v5314
    %v6053 = vpack.c.b16 %v5333, %v5315
    %v6054 = vpack.c.b16 %v5334, %v5316
    %v6055 = vpack.c.b16 %v5335, %v5317
    %v6056 = vpack.c.b16 %v5336, %v5318
    %v6057 = vpack.c.b16 %v5337, %v5319
    %v6058 = vpack.c.b16 %v5338, %v5320
    %v6059 = vpack.c.b16 %v5339, %v5321
    %v6060 = vpack.c.b16 %v5340, %v5322
    %v6061 = vpack.c.b16 %v5341, %v5323
    %v6062 = vpack.c.b16 %v5342, %v5324
    %v6063 = vpack.c.b16 %v5343, %v5325
    %v6064 = vpack.c.b16 %v5344, %v5326
    %v6065 = vpack.c.b16 %v5345, %v5327
    %v6066 = vpack.c.b16 %v5346, %v5328
    %v6067 = vpack.c.b16 %v5347, %v5329
    %v6068 = vpack.c.b16 %v5366, %v5348
    %v6069 = vpack.c.b16 %v5367, %v5349
    %v6070 = vpack.c.b16 %v5368, %v5350
    %v6071 = vpack.c.b16 %v5369, %v5351
    %v6072 = vpack.c.b16 %v5370, %v5352
    %v6073 = vpack.c.b16 %v5371, %v5353
    %v6074 = vpack.c.b16 %v5372, %v5354
    %v6075 = vpack.c.b16 %v5373, %v5355
    %v6076 = vpack.c.b16 %v5374, %v5356
    %v6077 = vpack.c.b16 %v5375, %v5357
    %v6078 = vpack.c.b16 %v5376, %v5358
    %v6079 = vpack.c.b16 %v5377, %v5359
    %v6080 = vpack.c.b16 %v5378, %v5360
    %v6081 = vpack.c.b16 %v5379, %v5361
    %v6082 = vpack.c.b16 %v5380, %v5362
    %v6083 = vpack.c.b16 %v5381, %v5363
    %v6084 = vpack.c.b16 %v5382, %v5364
    %v6085 = vpack.c.b16 %v5383, %v5365
    %v6086 = vpack.c.b16 %v5402, %v5384
    %v6087 = vpack.c.b16 %v5403, %v5385
    %v6088 = vpack.c.b16 %v5404, %v5386
    %v6089 = vpack.c.b16 %v5405, %v5387
    %v6090 = vpack.c.b16 %v5406, %v5388
    %v6091 = vpack.c.b16 %v5407, %v5389
    %v6092 = vpack.c.b16 %v5408, %v5390
    %v6093 = vpack.c.b16 %v5409, %v5391
    %v6094 = vpack.c.b16 %v5410, %v5392
    %v6095 = vpack.c.b16 %v5411, %v5393
    %v6096 = vpack.c.b16 %v5412, %v5394
    %v6097 = vpack.c.b16 %v5413, %v5395
    %v6098 = vpack.c.b16 %v5414, %v5396
    %v6099 = vpack.c.b16 %v5415, %v5397
    %v6100 = vpack.c.b16 %v5416, %v5398
    %v6101 = vpack.c.b16 %v5417, %v5399
    %v6102 = vpack.c.b16 %v5418, %v5400
    %v6103 = vpack.c.b16 %v5419, %v5401
    %v6104 = vpack.c.b16 %v5438, %v5420
    %v6105 = vpack.c.b16 %v5439, %v5421
    %v6106 = vpack.c.b16 %v5440, %v5422
    %v6107 = vpack.c.b16 %v5441, %v5423
    %v6108 = vpack.c.b16 %v5442, %v5424
    %v6109 = vpack.c.b16 %v5443, %v5425
    %v6110 = vpack.c.b16 %v5444, %v5426
    %v6111 = vpack.c.b16 %v5445, %v5427
    %v6112 = vpack.c.b16 %v5446, %v5428
    %v6113 = vpack.c.b16 %v5447, %v5429
    %v6114 = vpack.c.b16 %v5448, %v5430
    %v6115 = vpack.c.b16 %v5449, %v5431
    %v6116 = vpack.c.b16 %v5450, %v5432
    %v6117 = vpack.c.b16 %v5451, %v5433
    %v6118 = vpack.c.b16 %v5452, %v5434
    %v6119 = vpack.c.b16 %v5453, %v5435
    %v6120 = vpack.c.b16 %v5454, %v5436
    %v6121 = vpack.c.b16 %v5455, %v5437
    %v6122 = vpack.c.b16 %v5474, %v5456
    %v6123 = vpack.c.b16 %v5475, %v5457
    %v6124 = vpack.c.b16 %v5476, %v5458
    %v6125 = vpack.c.b16 %v5477, %v5459
    %v6126 = vpack.c.b16 %v5478, %v5460
    %v6127 = vpack.c.b16 %v5479, %v5461
    %v6128 = vpack.c.b16 %v5480, %v5462
    %v6129 = vpack.c.b16 %v5481, %v5463
    %v6130 = vpack.c.b16 %v5482, %v5464
    %v6131 = vpack.c.b16 %v5483, %v5465
    %v6132 = vpack.c.b16 %v5484, %v5466
    %v6133 = vpack.c.b16 %v5485, %v5467
    %v6134 = vpack.c.b16 %v5486, %v5468
    %v6135 = vpack.c.b16 %v5487, %v5469
    %v6136 = vpack.c.b16 %v5488, %v5470
    %v6137 = vpack.c.b16 %v5489, %v5471
    %v6138 = vpack.c.b16 %v5490, %v5472
    %v6139 = vpack.c.b16 %v5491, %v5473
    %v6140 = vpack.c.b16 %v5510, %v5492
    %v6141 = vpack.c.b16 %v5511, %v5493
    %v6142 = vpack.c.b16 %v5512, %v5494
    %v6143 = vpack.c.b16 %v5513, %v5495
    %v6144 = vpack.c.b16 %v5514, %v5496
    %v6145 = vpack.c.b16 %v5515, %v5497
    %v6146 = vpack.c.b16 %v5516, %v5498
    %v6147 = vpack.c.b16 %v5517, %v5499
    %v6148 = vpack.c.b16 %v5518, %v5500
    %v6149 = vpack.c.b16 %v5519, %v5501
    %v6150 = vpack.c.b16 %v5520, %v5502
    %v6151 = vpack.c.b16 %v5521, %v5503
    %v6152 = vpack.c.b16 %v5522, %v5504
    %v6153 = vpack.c.b16 %v5523, %v5505
    %v6154 = vpack.c.b16 %v5524, %v5506
    %v6155 = vpack.c.b16 %v5525, %v5507
    %v6156 = vpack.c.b16 %v5526, %v5508
    %v6157 = vpack.c.b16 %v5527, %v5509
    %v6158 = vpack.c.b16 %v5546, %v5528
    %v6159 = vpack.c.b16 %v5547, %v5529
    %v6160 = vpack.c.b16 %v5548, %v5530
    %v6161 = vpack.c.b16 %v5549, %v5531
    %v6162 = vpack.c.b16 %v5550, %v5532
    %v6163 = vpack.c.b16 %v5551, %v5533
    %v6164 = vpack.c.b16 %v5552, %v5534
    %v6165 = vpack.c.b16 %v5553, %v5535
    %v6166 = vpack.c.b16 %v5554, %v5536
    %v6167 = vpack.c.b16 %v5555, %v5537
    %v6168 = vpack.c.b16 %v5556, %v5538
    %v6169 = vpack.c.b16 %v5557, %v5539
    %v6170 = vpack.c.b16 %v5558, %v5540
    %v6171 = vpack.c.b16 %v5559, %v5541
    %v6172 = vpack.c.b16 %v5560, %v5542
    %v6173 = vpack.c.b16 %v5561, %v5543
    %v6174 = vpack.c.b16 %v5562, %v5544
    %v6175 = vpack.c.b16 %v5563, %v5545
    %v6176 = vpack.c.b16 %v5582, %v5564
    %v6177 = vpack.c.b16 %v5583, %v5565
    %v6178 = vpack.c.b16 %v5584, %v5566
    %v6179 = vpack.c.b16 %v5585, %v5567
    %v6180 = vpack.c.b16 %v5586, %v5568
    %v6181 = vpack.c.b16 %v5587, %v5569
    %v6182 = vpack.c.b16 %v5588, %v5570
    %v6183 = vpack.c.b16 %v5589, %v5571
    %v6184 = vpack.c.b16 %v5590, %v5572
    %v6185 = vpack.c.b16 %v5591, %v5573
    %v6186 = vpack.c.b16 %v5592, %v5574
    %v6187 = vpack.c.b16 %v5593, %v5575
    %v6188 = vpack.c.b16 %v5594, %v5576
    %v6189 = vpack.c.b16 %v5595, %v5577
    %v6190 = vpack.c.b16 %v5596, %v5578
    %v6191 = vpack.c.b16 %v5597, %v5579
    %v6192 = vpack.c.b16 %v5598, %v5580
    %v6193 = vpack.c.b16 %v5599, %v5581
    %v6194 = vpack.c.b16 %v5618, %v5600
    %v6195 = vpack.c.b16 %v5619, %v5601
    %v6196 = vpack.c.b16 %v5620, %v5602
    %v6197 = vpack.c.b16 %v5621, %v5603
    %v6198 = vpack.c.b16 %v5622, %v5604
    %v6199 = vpack.c.b16 %v5623, %v5605
    %v6200 = vpack.c.b16 %v5624, %v5606
    %v6201 = vpack.c.b16 %v5625, %v5607
    %v6202 = vpack.c.b16 %v5626, %v5608
    %v6203 = vpack.c.b16 %v5627, %v5609
    %v6204 = vpack.c.b16 %v5628, %v5610
    %v6205 = vpack.c.b16 %v5629, %v5611
    %v6206 = vpack.c.b16 %v5630, %v5612
    %v6207 = vpack.c.b16 %v5631, %v5613
    %v6208 = vpack.c.b16 %v5632, %v5614
    %v6209 = vpack.c.b16 %v5633, %v5615
    %v6210 = vpack.c.b16 %v5634, %v5616
    %v6211 = vpack.c.b16 %v5635, %v5617
    %v7076 = vunpack.c.l.b16 %v3236
    %v7077 = vunpack.c.l.b16 %v3237
    %v7078 = vunpack.c.l.b16 %v3238
    %v7079 = vunpack.c.l.b16 %v3239
    %v7080 = vunpack.c.l.b16 %v3240
    %v7081 = vunpack.c.l.b16 %v3241
    %v7082 = vunpack.c.l.b16 %v3242
    %v7083 = vunpack.c.l.b16 %v3243
    %v7084 = vunpack.c.l.b16 %v3244
    %v7085 = vunpack.c.l.b16 %v3245
    %v7086 = vunpack.c.l.b16 %v3246
    %v7087 = vunpack.c.l.b16 %v3247
    %v7088 = vunpack.c.l.b16 %v3248
    %v7089 = vunpack.c.l.b16 %v3249
    %v7090 = vunpack.c.l.b16 %v3250
    %v7091 = vunpack.c.l.b16 %v3251
    %v7092 = vunpack.c.l.b16 %v3252
    %v7093 = vunpack.c.l.b16 %v3253
    %v7094 = vunpack.c.l.b16 %v3254
    %v7095 = vunpack.c.l.b16 %v3255
    %v7096 = vunpack.c.l.b16 %v3256
    %v7097 = vunpack.c.l.b16 %v3257
    %v7098 = vunpack.c.l.b16 %v3258
    %v7099 = vunpack.c.l.b16 %v3259
    %v7100 = vunpack.c.l.b16 %v3260
    %v7101 = vunpack.c.l.b16 %v3261
    %v7102 = vunpack.c.l.b16 %v3262
    %v7103 = vunpack.c.l.b16 %v3263
    %v7104 = vunpack.c.l.b16 %v3264
    %v7105 = vunpack.c.l.b16 %v3265
    %v7106 = vunpack.c.l.b16 %v3266
    %v7107 = vunpack.c.l.b16 %v3267
    %v7108 = vunpack.c.l.b16 %v3268
    %v7109 = vunpack.c.l.b16 %v3269
    %v7110 = vunpack.c.l.b16 %v3270
    %v7111 = vunpack.c.l.b16 %v3271
    %v7112 = vunpack.c.l.b16 %v3272
    %v7113 = vunpack.c.l.b16 %v3273
    %v7114 = vunpack.c.l.b16 %v3274
    %v7115 = vunpack.c.l.b16 %v3275
    %v7116 = vunpack.c.l.b16 %v3276
    %v7117 = vunpack.c.l.b16 %v3277
    %v7118 = vunpack.c.l.b16 %v3278
    %v7119 = vunpack.c.l.b16 %v3279
    %v7120 = vunpack.c.l.b16 %v3280
    %v7121 = vunpack.c.l.b16 %v3281
    %v7122 = vunpack.c.l.b16 %v3282
    %v7123 = vunpack.c.l.b16 %v3283
    %v7124 = vunpack.c.l.b16 %v3284
    %v7125 = vunpack.c.l.b16 %v3285
    %v7126 = vunpack.c.l.b16 %v3286
    %v7127 = vunpack.c.l.b16 %v3287
    %v7128 = vunpack.c.l.b16 %v3288
    %v7129 = vunpack.c.l.b16 %v3289
    %v7130 = vunpack.c.l.b16 %v3290
    %v7131 = vunpack.c.l.b16 %v3291
    %v7132 = vunpack.c.l.b16 %v3292
    %v7133 = vunpack.c.l.b16 %v3293
    %v7134 = vunpack.c.l.b16 %v3294
    %v7135 = vunpack.c.l.b16 %v3295
    %v7136 = vunpack.c.l.b16 %v3296
    %v7137 = vunpack.c.l.b16 %v3297
    %v7138 = vunpack.c.l.b16 %v3298
    %v7139 = vunpack.c.l.b16 %v3299
    %v7140 = vunpack.c.l.b16 %v3300
    %v7141 = vunpack.c.l.b16 %v3301
    %v7142 = vunpack.c.l.b16 %v3302
    %v7143 = vunpack.c.l.b16 %v3303
    %v7144 = vunpack.c.l.b16 %v3304
    %v7145 = vunpack.c.l.b16 %v3305
    %v7146 = vunpack.c.l.b16 %v3306
    %v7147 = vunpack.c.l.b16 %v3307
    %v7148 = vunpack.c.l.b16 %v3308
    %v7149 = vunpack.c.l.b16 %v3309
    %v7150 = vunpack.c.l.b16 %v3310
    %v7151 = vunpack.c.l.b16 %v3311
    %v7152 = vunpack.c.l.b16 %v3312
    %v7153 = vunpack.c.l.b16 %v3313
    %v7154 = vunpack.c.l.b16 %v3314
    %v7155 = vunpack.c.l.b16 %v3315
    %v7156 = vunpack.c.l.b16 %v3316
    %v7157 = vunpack.c.l.b16 %v3317
    %v7158 = vunpack.c.l.b16 %v3318
    %v7159 = vunpack.c.l.b16 %v3319
    %v7160 = vunpack.c.l.b16 %v3320
    %v7161 = vunpack.c.l.b16 %v3321
    %v7162 = vunpack.c.l.b16 %v3322
    %v7163 = vunpack.c.l.b16 %v3323
    %v7164 = vunpack.c.l.b16 %v3324
    %v7165 = vunpack.c.l.b16 %v3325
    %v7166 = vunpack.c.l.b16 %v3326
    %v7167 = vunpack.c.l.b16 %v3327
    %v7168 = vunpack.c.l.b16 %v3328
    %v7169 = vunpack.c.l.b16 %v3329
    %v7170 = vunpack.c.l.b16 %v3330
    %v7171 = vunpack.c.l.b16 %v3331
    %v7172 = vunpack.c.l.b16 %v3332
    %v7173 = vunpack.c.l.b16 %v3333
    %v7174 = vunpack.c.l.b16 %v3334
    %v7175 = vunpack.c.l.b16 %v3335
    %v7176 = vunpack.c.l.b16 %v3336
    %v7177 = vunpack.c.l.b16 %v3337
    %v7178 = vunpack.c.l.b16 %v3338
    %v7179 = vunpack.c.l.b16 %v3339
    %v7180 = vunpack.c.l.b16 %v3340
    %v7181 = vunpack.c.l.b16 %v3341
    %v7182 = vunpack.c.l.b16 %v3342
    %v7183 = vunpack.c.l.b16 %v3343
    %v7184 = vunpack.c.l.b16 %v3344
    %v7185 = vunpack.c.l.b16 %v3345
    %v7186 = vunpack.c.l.b16 %v3346
    %v7187 = vunpack.c.l.b16 %v3347
    %v7188 = vunpack.c.l.b16 %v3348
    %v7189 = vunpack.c.l.b16 %v3349
    %v7190 = vunpack.c.l.b16 %v3350
    %v7191 = vunpack.c.l.b16 %v3351
    %v7192 = vunpack.c.l.b16 %v3352
    %v7193 = vunpack.c.l.b16 %v3353
    %v7194 = vunpack.c.l.b16 %v3354
    %v7195 = vunpack.c.l.b16 %v3355
    %v7196 = vunpack.c.l.b16 %v3356
    %v7197 = vunpack.c.l.b16 %v3357
    %v7198 = vunpack.c.l.b16 %v3358
    %v7199 = vunpack.c.l.b16 %v3359
    %v7200 = vunpack.c.l.b16 %v3360
    %v7201 = vunpack.c.l.b16 %v3361
    %v7202 = vunpack.c.l.b16 %v3362
    %v7203 = vunpack.c.l.b16 %v3363
    %v7204 = vunpack.c.l.b16 %v3364
    %v7205 = vunpack.c.l.b16 %v3365
    %v7206 = vunpack.c.l.b16 %v3366
    %v7207 = vunpack.c.l.b16 %v3367
    %v7208 = vunpack.c.l.b16 %v3368
    %v7209 = vunpack.c.l.b16 %v3369
    %v7210 = vunpack.c.l.b16 %v3370
    %v7211 = vunpack.c.l.b16 %v3371
    %v7212 = vunpack.c.l.b16 %v3372
    %v7213 = vunpack.c.l.b16 %v3373
    %v7214 = vunpack.c.l.b16 %v3374
    %v7215 = vunpack.c.l.b16 %v3375
    %v7216 = vunpack.c.l.b16 %v3376
    %v7217 = vunpack.c.l.b16 %v3377
    %v7218 = vunpack.c.l.b16 %v3378
    %v7219 = vunpack.c.l.b16 %v3379
    %v7220 = vunpack.c.l.b16 %v3380
    %v7221 = vunpack.c.l.b16 %v3381
    %v7222 = vunpack.c.l.b16 %v3382
    %v7223 = vunpack.c.l.b16 %v3383
    %v7224 = vunpack.c.l.b16 %v3384
    %v7225 = vunpack.c.l.b16 %v3385
    %v7226 = vunpack.c.l.b16 %v3386
    %v7227 = vunpack.c.l.b16 %v3387
    %v7228 = vunpack.c.l.b16 %v3388
    %v7229 = vunpack.c.l.b16 %v3389
    %v7230 = vunpack.c.l.b16 %v3390
    %v7231 = vunpack.c.l.b16 %v3391
    %v7232 = vunpack.c.l.b16 %v3392
    %v7233 = vunpack.c.l.b16 %v3393
    %v7234 = vunpack.c.l.b16 %v3394
    %v7235 = vunpack.c.l.b16 %v3395
    %v7236 = vunpack.c.l.b16 %v3396
    %v7237 = vunpack.c.l.b16 %v3397
    %v7238 = vunpack.c.l.b16 %v3398
    %v7239 = vunpack.c.l.b16 %v3399
    %v7240 = vunpack.c.l.b16 %v3400
    %v7241 = vunpack.c.l.b16 %v3401
    %v7242 = vunpack.c.l.b16 %v3402
    %v7243 = vunpack.c.l.b16 %v3403
    %v7244 = vunpack.c.l.b16 %v3404
    %v7245 = vunpack.c.l.b16 %v3405
    %v7246 = vunpack.c.l.b16 %v3406
    %v7247 = vunpack.c.l.b16 %v3407
    %v7248 = vunpack.c.l.b16 %v3408
    %v7249 = vunpack.c.l.b16 %v3409
    %v7250 = vunpack.c.l.b16 %v3410
    %v7251 = vunpack.c.l.b16 %v3411
    %v7252 = vunpack.c.l.b16 %v3412
    %v7253 = vunpack.c.l.b16 %v3413
    %v7254 = vunpack.c.l.b16 %v3414
    %v7255 = vunpack.c.l.b16 %v3415
    %v7256 = vunpack.c.l.b16 %v3416
    %v7257 = vunpack.c.l.b16 %v3417
    %v7258 = vunpack.c.l.b16 %v3418
    %v7259 = vunpack.c.l.b16 %v3419
    %v7260 = vunpack.c.l.b16 %v3420
    %v7261 = vunpack.c.l.b16 %v3421
    %v7262 = vunpack.c.l.b16 %v3422
    %v7263 = vunpack.c.l.b16 %v3423
    %v7264 = vunpack.c.l.b16 %v3424
    %v7265 = vunpack.c.l.b16 %v3425
    %v7266 = vunpack.c.l.b16 %v3426
    %v7267 = vunpack.c.l.b16 %v3427
    %v7268 = vunpack.c.l.b16 %v3428
    %v7269 = vunpack.c.l.b16 %v3429
    %v7270 = vunpack.c.l.b16 %v3430
    %v7271 = vunpack.c.l.b16 %v3431
    %v7272 = vunpack.c.l.b16 %v3432
    %v7273 = vunpack.c.l.b16 %v3433
    %v7274 = vunpack.c.l.b16 %v3434
    %v7275 = vunpack.c.l.b16 %v3435
    %v7276 = vunpack.c.l.b16 %v3436
    %v7277 = vunpack.c.l.b16 %v3437
    %v7278 = vunpack.c.l.b16 %v3438
    %v7279 = vunpack.c.l.b16 %v3439
    %v7280 = vunpack.c.l.b16 %v3440
    %v7281 = vunpack.c.l.b16 %v3441
    %v7282 = vunpack.c.l.b16 %v3442
    %v7283 = vunpack.c.l.b16 %v3443
    %v7284 = vunpack.c.l.b16 %v3444
    %v7285 = vunpack.c.l.b16 %v3445
    %v7286 = vunpack.c.l.b16 %v3446
    %v7287 = vunpack.c.l.b16 %v3447
    %v7288 = vunpack.c.l.b16 %v3448
    %v7289 = vunpack.c.l.b16 %v3449
    %v7290 = vunpack.c.l.b16 %v3450
    %v7291 = vunpack.c.l.b16 %v3451
    %v7292 = vunpack.c.l.b16 %v3452
    %v7293 = vunpack.c.l.b16 %v3453
    %v7294 = vunpack.c.l.b16 %v3454
    %v7295 = vunpack.c.l.b16 %v3455
    %v7296 = vunpack.c.l.b16 %v3456
    %v7297 = vunpack.c.l.b16 %v3457
    %v7298 = vunpack.c.l.b16 %v3458
    %v7299 = vunpack.c.l.b16 %v3459
    %v7300 = vunpack.c.l.b16 %v3460
    %v7301 = vunpack.c.l.b16 %v3461
    %v7302 = vunpack.c.l.b16 %v3462
    %v7303 = vunpack.c.l.b16 %v3463
    %v7304 = vunpack.c.l.b16 %v3464
    %v7305 = vunpack.c.l.b16 %v3465
    %v7306 = vunpack.c.l.b16 %v3466
    %v7307 = vunpack.c.l.b16 %v3467
    %v7308 = vunpack.c.l.b16 %v3468
    %v7309 = vunpack.c.l.b16 %v3469
    %v7310 = vunpack.c.l.b16 %v3470
    %v7311 = vunpack.c.l.b16 %v3471
    %v7312 = vunpack.c.l.b16 %v3472
    %v7313 = vunpack.c.l.b16 %v3473
    %v7314 = vunpack.c.l.b16 %v3474
    %v7315 = vunpack.c.l.b16 %v3475
    %v7316 = vunpack.c.l.b16 %v3476
    %v7317 = vunpack.c.l.b16 %v3477
    %v7318 = vunpack.c.l.b16 %v3478
    %v7319 = vunpack.c.l.b16 %v3479
    %v7320 = vunpack.c.l.b16 %v3480
    %v7321 = vunpack.c.l.b16 %v3481
    %v7322 = vunpack.c.l.b16 %v3482
    %v7323 = vunpack.c.l.b16 %v3483
    %v7324 = vunpack.c.l.b16 %v3484
    %v7325 = vunpack.c.l.b16 %v3485
    %v7326 = vunpack.c.l.b16 %v3486
    %v7327 = vunpack.c.l.b16 %v3487
    %v7328 = vunpack.c.l.b16 %v3488
    %v7329 = vunpack.c.l.b16 %v3489
    %v7330 = vunpack.c.l.b16 %v3490
    %v7331 = vunpack.c.l.b16 %v3491
    %v7332 = vunpack.c.l.b16 %v3492
    %v7333 = vunpack.c.l.b16 %v3493
    %v7334 = vunpack.c.l.b16 %v3494
    %v7335 = vunpack.c.l.b16 %v3495
    %v7336 = vunpack.c.l.b16 %v3496
    %v7337 = vunpack.c.l.b16 %v3497
    %v7338 = vunpack.c.l.b16 %v3498
    %v7339 = vunpack.c.l.b16 %v3499
    %v7340 = vunpack.c.l.b16 %v3500
    %v7341 = vunpack.c.l.b16 %v3501
    %v7342 = vunpack.c.l.b16 %v3502
    %v7343 = vunpack.c.l.b16 %v3503
    %v7344 = vunpack.c.l.b16 %v3504
    %v7345 = vunpack.c.l.b16 %v3505
    %v7346 = vunpack.c.l.b16 %v3506
    %v7347 = vunpack.c.l.b16 %v3507
    %v7348 = vunpack.c.l.b16 %v3508
    %v7349 = vunpack.c.l.b16 %v3509
    %v7350 = vunpack.c.l.b16 %v3510
    %v7351 = vunpack.c.l.b16 %v3511
    %v7352 = vunpack.c.l.b16 %v3512
    %v7353 = vunpack.c.l.b16 %v3513
    %v7354 = vunpack.c.l.b16 %v3514
    %v7355 = vunpack.c.l.b16 %v3515
    %v7356 = vunpack.c.l.b16 %v3516
    %v7357 = vunpack.c.l.b16 %v3517
    %v7358 = vunpack.c.l.b16 %v3518
    %v7359 = vunpack.c.l.b16 %v3519
    %v7360 = vunpack.c.l.b16 %v3520
    %v7361 = vunpack.c.l.b16 %v3521
    %v7362 = vunpack.c.l.b16 %v3522
    %v7363 = vunpack.c.l.b16 %v3523
    %v7364 = vpack.c.b16 %v7077, %v7076
    %v7365 = vpack.c.b16 %v7079, %v7078
    %v7366 = vpack.c.b16 %v7081, %v7080
    %v7367 = vpack.c.b16 %v7083, %v7082
    %v7368 = vpack.c.b16 %v7085, %v7084
    %v7369 = vpack.c.b16 %v7087, %v7086
    %v7370 = vpack.c.b16 %v7089, %v7088
    %v7371 = vpack.c.b16 %v7091, %v7090
    %v7372 = vpack.c.b16 %v7093, %v7092
    %v7373 = vpack.c.b16 %v7095, %v7094
    %v7374 = vpack.c.b16 %v7097, %v7096
    %v7375 = vpack.c.b16 %v7099, %v7098
    %v7376 = vpack.c.b16 %v7101, %v7100
    %v7377 = vpack.c.b16 %v7103, %v7102
    %v7378 = vpack.c.b16 %v7105, %v7104
    %v7379 = vpack.c.b16 %v7107, %v7106
    %v7380 = vpack.c.b16 %v7109, %v7108
    %v7381 = vpack.c.b16 %v7111, %v7110
    %v7382 = vpack.c.b16 %v7113, %v7112
    %v7383 = vpack.c.b16 %v7115, %v7114
    %v7384 = vpack.c.b16 %v7117, %v7116
    %v7385 = vpack.c.b16 %v7119, %v7118
    %v7386 = vpack.c.b16 %v7121, %v7120
    %v7387 = vpack.c.b16 %v7123, %v7122
    %v7388 = vpack.c.b16 %v7125, %v7124
    %v7389 = vpack.c.b16 %v7127, %v7126
    %v7390 = vpack.c.b16 %v7129, %v7128
    %v7391 = vpack.c.b16 %v7131, %v7130
    %v7392 = vpack.c.b16 %v7133, %v7132
    %v7393 = vpack.c.b16 %v7135, %v7134
    %v7394 = vpack.c.b16 %v7137, %v7136
    %v7395 = vpack.c.b16 %v7139, %v7138
    %v7396 = vpack.c.b16 %v7141, %v7140
    %v7397 = vpack.c.b16 %v7143, %v7142
    %v7398 = vpack.c.b16 %v7145, %v7144
    %v7399 = vpack.c.b16 %v7147, %v7146
    %v7400 = vpack.c.b16 %v7149, %v7148
    %v7401 = vpack.c.b16 %v7151, %v7150
    %v7402 = vpack.c.b16 %v7153, %v7152
    %v7403 = vpack.c.b16 %v7155, %v7154
    %v7404 = vpack.c.b16 %v7157, %v7156
    %v7405 = vpack.c.b16 %v7159, %v7158
    %v7406 = vpack.c.b16 %v7161, %v7160
    %v7407 = vpack.c.b16 %v7163, %v7162
    %v7408 = vpack.c.b16 %v7165, %v7164
    %v7409 = vpack.c.b16 %v7167, %v7166
    %v7410 = vpack.c.b16 %v7169, %v7168
    %v7411 = vpack.c.b16 %v7171, %v7170
    %v7412 = vpack.c.b16 %v7173, %v7172
    %v7413 = vpack.c.b16 %v7175, %v7174
    %v7414 = vpack.c.b16 %v7177, %v7176
    %v7415 = vpack.c.b16 %v7179, %v7178
    %v7416 = vpack.c.b16 %v7181, %v7180
    %v7417 = vpack.c.b16 %v7183, %v7182
    %v7418 = vpack.c.b16 %v7185, %v7184
    %v7419 = vpack.c.b16 %v7187, %v7186
    %v7420 = vpack.c.b16 %v7189, %v7188
    %v7421 = vpack.c.b16 %v7191, %v7190
    %v7422 = vpack.c.b16 %v7193, %v7192
    %v7423 = vpack.c.b16 %v7195, %v7194
    %v7424 = vpack.c.b16 %v7197, %v7196
    %v7425 = vpack.c.b16 %v7199, %v7198
    %v7426 = vpack.c.b16 %v7201, %v7200
    %v7427 = vpack.c.b16 %v7203, %v7202
    %v7428 = vpack.c.b16 %v7205, %v7204
    %v7429 = vpack.c.b16 %v7207, %v7206
    %v7430 = vpack.c.b16 %v7209, %v7208
    %v7431 = vpack.c.b16 %v7211, %v7210
    %v7432 = vpack.c.b16 %v7213, %v7212
    %v7433 = vpack.c.b16 %v7215, %v7214
    %v7434 = vpack.c.b16 %v7217, %v7216
    %v7435 = vpack.c.b16 %v7219, %v7218
    %v7436 = vpack.c.b16 %v7221, %v7220
    %v7437 = vpack.c.b16 %v7223, %v7222
    %v7438 = vpack.c.b16 %v7225, %v7224
    %v7439 = vpack.c.b16 %v7227, %v7226
    %v7440 = vpack.c.b16 %v7229, %v7228
    %v7441 = vpack.c.b16 %v7231, %v7230
    %v7442 = vpack.c.b16 %v7233, %v7232
    %v7443 = vpack.c.b16 %v7235, %v7234
    %v7444 = vpack.c.b16 %v7237, %v7236
    %v7445 = vpack.c.b16 %v7239, %v7238
    %v7446 = vpack.c.b16 %v7241, %v7240
    %v7447 = vpack.c.b16 %v7243, %v7242
    %v7448 = vpack.c.b16 %v7245, %v7244
    %v7449 = vpack.c.b16 %v7247, %v7246
    %v7450 = vpack.c.b16 %v7249, %v7248
    %v7451 = vpack.c.b16 %v7251, %v7250
    %v7452 = vpack.c.b16 %v7253, %v7252
    %v7453 = vpack.c.b16 %v7255, %v7254
    %v7454 = vpack.c.b16 %v7257, %v7256
    %v7455 = vpack.c.b16 %v7259, %v7258
    %v7456 = vpack.c.b16 %v7261, %v7260
    %v7457 = vpack.c.b16 %v7263, %v7262
    %v7458 = vpack.c.b16 %v7265, %v7264
    %v7459 = vpack.c.b16 %v7267, %v7266
    %v7460 = vpack.c.b16 %v7269, %v7268
    %v7461 = vpack.c.b16 %v7271, %v7270
    %v7462 = vpack.c.b16 %v7273, %v7272
    %v7463 = vpack.c.b16 %v7275, %v7274
    %v7464 = vpack.c.b16 %v7277, %v7276
    %v7465 = vpack.c.b16 %v7279, %v7278
    %v7466 = vpack.c.b16 %v7281, %v7280
    %v7467 = vpack.c.b16 %v7283, %v7282
    %v7468 = vpack.c.b16 %v7285, %v7284
    %v7469 = vpack.c.b16 %v7287, %v7286
    %v7470 = vpack.c.b16 %v7289, %v7288
    %v7471 = vpack.c.b16 %v7291, %v7290
    %v7472 = vpack.c.b16 %v7293, %v7292
    %v7473 = vpack.c.b16 %v7295, %v7294
    %v7474 = vpack.c.b16 %v7297, %v7296
    %v7475 = vpack.c.b16 %v7299, %v7298
    %v7476 = vpack.c.b16 %v7301, %v7300
    %v7477 = vpack.c.b16 %v7303, %v7302
    %v7478 = vpack.c.b16 %v7305, %v7304
    %v7479 = vpack.c.b16 %v7307, %v7306
    %v7480 = vpack.c.b16 %v7309, %v7308
    %v7481 = vpack.c.b16 %v7311, %v7310
    %v7482 = vpack.c.b16 %v7313, %v7312
    %v7483 = vpack.c.b16 %v7315, %v7314
    %v7484 = vpack.c.b16 %v7317, %v7316
    %v7485 = vpack.c.b16 %v7319, %v7318
    %v7486 = vpack.c.b16 %v7321, %v7320
    %v7487 = vpack.c.b16 %v7323, %v7322
    %v7488 = vpack.c.b16 %v7325, %v7324
    %v7489 = vpack.c.b16 %v7327, %v7326
    %v7490 = vpack.c.b16 %v7329, %v7328
    %v7491 = vpack.c.b16 %v7331, %v7330
    %v7492 = vpack.c.b16 %v7333, %v7332
    %v7493 = vpack.c.b16 %v7335, %v7334
    %v7494 = vpack.c.b16 %v7337, %v7336
    %v7495 = vpack.c.b16 %v7339, %v7338
    %v7496 = vpack.c.b16 %v7341, %v7340
    %v7497 = vpack.c.b16 %v7343, %v7342
    %v7498 = vpack.c.b16 %v7345, %v7344
    %v7499 = vpack.c.b16 %v7347, %v7346
    %v7500 = vpack.c.b16 %v7349, %v7348
    %v7501 = vpack.c.b16 %v7351, %v7350
    %v7502 = vpack.c.b16 %v7353, %v7352
    %v7503 = vpack.c.b16 %v7355, %v7354
    %v7504 = vpack.c.b16 %v7357, %v7356
    %v7505 = vpack.c.b16 %v7359, %v7358
    %v7506 = vpack.c.b16 %v7361, %v7360
    %v7507 = vpack.c.b16 %v7363, %v7362
    %7652 = vmatpush.bf16.msra.mxu0 %v7371
    %7653 = vmatpush.bf16.msra.mxu0 %v7370
    %7654 = vmatpush.bf16.msra.mxu0 %v7369
    %7655 = vmatpush.bf16.msra.mxu0 %v7368
    %7656 = vmatpush.bf16.msra.mxu0 %v7367
    %7657 = vmatpush.bf16.msra.mxu0 %v7366
    %7658 = vmatpush.bf16.msra.mxu0 %v7365
    %7659 = vmatpush.bf16.msra.mxu0 %v7364
    %7660 = vmatmul.bf16.gmra.mxu0 %v5636
    %v7661 = vpop.f32.mrf.mxu0
    %v7662 = vadd.f32 %v3591, %v7661
    %v7663 = vpop.f32.mrf.mxu0
    %v7664 = vadd.f32 %v3596, %v7663
    %7665 = vmatmul.bf16.gmra.mxu0 %v5654
    %v7666 = vpop.f32.mrf.mxu0
    %v7667 = vadd.f32 %v3601, %v7666
    %v7668 = vpop.f32.mrf.mxu0
    %v7669 = vadd.f32 %v3606, %v7668
    %7670 = vmatmul.bf16.gmra.mxu0 %v5672
    %v7671 = vpop.f32.mrf.mxu0
    %v7672 = vadd.f32 %v3611, %v7671
    %v7673 = vpop.f32.mrf.mxu0
    %v7674 = vadd.f32 %v3616, %v7673
    %7675 = vmatmul.bf16.gmra.mxu0 %v5690
    %v7676 = vpop.f32.mrf.mxu0
    %v7677 = vadd.f32 %v3621, %v7676
    %v7678 = vpop.f32.mrf.mxu0
    %v7679 = vadd.f32 %v3626, %v7678
    %7680 = vmatmul.bf16.gmra.mxu0 %v5708
    %v7681 = vpop.f32.mrf.mxu0
    %v7682 = vadd.f32 %v3631, %v7681
    %v7683 = vpop.f32.mrf.mxu0
    %v7684 = vadd.f32 %v3636, %v7683
    %7685 = vmatmul.bf16.gmra.mxu0 %v5726
    %v7686 = vpop.f32.mrf.mxu0
    %v7687 = vadd.f32 %v3641, %v7686
    %v7688 = vpop.f32.mrf.mxu0
    %v7689 = vadd.f32 %v3646, %v7688
    %7690 = vmatmul.bf16.gmra.mxu0 %v5744
    %v7691 = vpop.f32.mrf.mxu0
    %v7692 = vadd.f32 %v3651, %v7691
    %v7693 = vpop.f32.mrf.mxu0
    %v7694 = vadd.f32 %v3656, %v7693
    %7695 = vmatmul.bf16.gmra.mxu0 %v5762
    %v7696 = vpop.f32.mrf.mxu0
    %v7697 = vadd.f32 %v3661, %v7696
    %v7698 = vpop.f32.mrf.mxu0
    %v7699 = vadd.f32 %v3666, %v7698
    %7700 = vmatmul.bf16.gmra.mxu0 %v5780
    %v7701 = vpop.f32.mrf.mxu0
    %v7702 = vadd.f32 %v3671, %v7701
    %v7703 = vpop.f32.mrf.mxu0
    %v7704 = vadd.f32 %v3676, %v7703
    %7705 = vmatmul.bf16.gmra.mxu0 %v5798
    %v7706 = vpop.f32.mrf.mxu0
    %v7707 = vadd.f32 %v3681, %v7706
    %v7708 = vpop.f32.mrf.mxu0
    %v7709 = vadd.f32 %v3686, %v7708
    %7710 = vmatmul.bf16.gmra.mxu0 %v5816
    %v7711 = vpop.f32.mrf.mxu0
    %v7712 = vadd.f32 %v3691, %v7711
    %v7713 = vpop.f32.mrf.mxu0
    %v7714 = vadd.f32 %v3696, %v7713
    %7715 = vmatmul.bf16.gmra.mxu0 %v5834
    %v7716 = vpop.f32.mrf.mxu0
    %v7717 = vadd.f32 %v3701, %v7716
    %v7718 = vpop.f32.mrf.mxu0
    %v7719 = vadd.f32 %v3706, %v7718
    %7720 = vmatmul.bf16.gmra.mxu0 %v5852
    %v7721 = vpop.f32.mrf.mxu0
    %v7722 = vadd.f32 %v3711, %v7721
    %v7723 = vpop.f32.mrf.mxu0
    %v7724 = vadd.f32 %v3716, %v7723
    %7725 = vmatmul.bf16.gmra.mxu0 %v5870
    %v7726 = vpop.f32.mrf.mxu0
    %v7727 = vadd.f32 %v3721, %v7726
    %v7728 = vpop.f32.mrf.mxu0
    %v7729 = vadd.f32 %v3726, %v7728
    %7730 = vmatmul.bf16.gmra.mxu0 %v5888
    %v7731 = vpop.f32.mrf.mxu0
    %v7732 = vadd.f32 %v3731, %v7731
    %v7733 = vpop.f32.mrf.mxu0
    %v7734 = vadd.f32 %v3736, %v7733
    %7735 = vmatmul.bf16.gmra.mxu0 %v5906
    %v7736 = vpop.f32.mrf.mxu0
    %v7737 = vadd.f32 %v3741, %v7736
    %v7738 = vpop.f32.mrf.mxu0
    %v7739 = vadd.f32 %v3746, %v7738
    %7740 = vmatmul.bf16.gmra.mxu0 %v5924
    %v7741 = vpop.f32.mrf.mxu0
    %v7742 = vadd.f32 %v3751, %v7741
    %v7743 = vpop.f32.mrf.mxu0
    %v7744 = vadd.f32 %v3756, %v7743
    %7745 = vmatmul.bf16.gmra.mxu0 %v5942
    %v7746 = vpop.f32.mrf.mxu0
    %v7747 = vadd.f32 %v3761, %v7746
    %v7748 = vpop.f32.mrf.mxu0
    %v7749 = vadd.f32 %v3766, %v7748
    %7750 = vmatmul.bf16.gmra.mxu0 %v5960
    %v7751 = vpop.f32.mrf.mxu0
    %v7752 = vadd.f32 %v3771, %v7751
    %v7753 = vpop.f32.mrf.mxu0
    %v7754 = vadd.f32 %v3776, %v7753
    %7755 = vmatmul.bf16.gmra.mxu0 %v5978
    %v7756 = vpop.f32.mrf.mxu0
    %v7757 = vadd.f32 %v3781, %v7756
    %v7758 = vpop.f32.mrf.mxu0
    %v7759 = vadd.f32 %v3786, %v7758
    %7760 = vmatmul.bf16.gmra.mxu0 %v5996
    %v7761 = vpop.f32.mrf.mxu0
    %v7762 = vadd.f32 %v3791, %v7761
    %v7763 = vpop.f32.mrf.mxu0
    %v7764 = vadd.f32 %v3796, %v7763
    %7765 = vmatmul.bf16.gmra.mxu0 %v6014
    %v7766 = vpop.f32.mrf.mxu0
    %v7767 = vadd.f32 %v3801, %v7766
    %v7768 = vpop.f32.mrf.mxu0
    %v7769 = vadd.f32 %v3806, %v7768
    %7770 = vmatmul.bf16.gmra.mxu0 %v6032
    %v7771 = vpop.f32.mrf.mxu0
    %v7772 = vadd.f32 %v3811, %v7771
    %v7773 = vpop.f32.mrf.mxu0
    %v7774 = vadd.f32 %v3816, %v7773
    %7775 = vmatmul.bf16.gmra.mxu0 %v6050
    %v7776 = vpop.f32.mrf.mxu0
    %v7777 = vadd.f32 %v3821, %v7776
    %v7778 = vpop.f32.mrf.mxu0
    %v7779 = vadd.f32 %v3826, %v7778
    %7780 = vmatmul.bf16.gmra.mxu0 %v6068
    %v7781 = vpop.f32.mrf.mxu0
    %v7782 = vadd.f32 %v3831, %v7781
    %v7783 = vpop.f32.mrf.mxu0
    %v7784 = vadd.f32 %v3836, %v7783
    %7785 = vmatmul.bf16.gmra.mxu0 %v6086
    %v7786 = vpop.f32.mrf.mxu0
    %v7787 = vadd.f32 %v3841, %v7786
    %v7788 = vpop.f32.mrf.mxu0
    %v7789 = vadd.f32 %v3846, %v7788
    %7790 = vmatmul.bf16.gmra.mxu0 %v6104
    %v7791 = vpop.f32.mrf.mxu0
    %v7792 = vadd.f32 %v3851, %v7791
    %v7793 = vpop.f32.mrf.mxu0
    %v7794 = vadd.f32 %v3856, %v7793
    %7795 = vmatmul.bf16.gmra.mxu0 %v6122
    %v7796 = vpop.f32.mrf.mxu0
    %v7797 = vadd.f32 %v3861, %v7796
    %v7798 = vpop.f32.mrf.mxu0
    %v7799 = vadd.f32 %v3866, %v7798
    %7800 = vmatmul.bf16.gmra.mxu0 %v6140
    %v7801 = vpop.f32.mrf.mxu0
    %v7802 = vadd.f32 %v3871, %v7801
    %v7803 = vpop.f32.mrf.mxu0
    %v7804 = vadd.f32 %v3876, %v7803
    %7805 = vmatmul.bf16.gmra.mxu0 %v6158
    %v7806 = vpop.f32.mrf.mxu0
    %v7807 = vadd.f32 %v3881, %v7806
    %v7808 = vpop.f32.mrf.mxu0
    %v7809 = vadd.f32 %v3886, %v7808
    %7810 = vmatmul.bf16.gmra.mxu0 %v6176
    %v7811 = vpop.f32.mrf.mxu0
    %v7812 = vadd.f32 %v3891, %v7811
    %v7813 = vpop.f32.mrf.mxu0
    %v7814 = vadd.f32 %v3896, %v7813
    %7815 = vmatmul.bf16.gmra.mxu0 %v6194
    %v7816 = vpop.f32.mrf.mxu0
    %v7817 = vadd.f32 %v3901, %v7816
    %v7818 = vpop.f32.mrf.mxu0
    %v7819 = vadd.f32 %v3906, %v7818
    %7820 = vdwg.mxu0
    %7821 = vmatpush.bf16.msra.mxu0 %v7379
    %7822 = vmatpush.bf16.msra.mxu0 %v7378
    %7823 = vmatpush.bf16.msra.mxu0 %v7377
    %7824 = vmatpush.bf16.msra.mxu0 %v7376
    %7825 = vmatpush.bf16.msra.mxu0 %v7375
    %7826 = vmatpush.bf16.msra.mxu0 %v7374
    %7827 = vmatpush.bf16.msra.mxu0 %v7373
    %7828 = vmatpush.bf16.msra.mxu0 %v7372
    %7829 = vmatmul.bf16.gmra.mxu0 %v5637
    %v7830 = vpop.f32.mrf.mxu0
    %v7831 = vadd.f32 %v7662, %v7830
    %v7832 = vpop.f32.mrf.mxu0
    %v7833 = vadd.f32 %v7664, %v7832
    %7834 = vmatmul.bf16.gmra.mxu0 %v5655
    %v7835 = vpop.f32.mrf.mxu0
    %v7836 = vadd.f32 %v7667, %v7835
    %v7837 = vpop.f32.mrf.mxu0
    %v7838 = vadd.f32 %v7669, %v7837
    %7839 = vmatmul.bf16.gmra.mxu0 %v5673
    %v7840 = vpop.f32.mrf.mxu0
    %v7841 = vadd.f32 %v7672, %v7840
    %v7842 = vpop.f32.mrf.mxu0
    %v7843 = vadd.f32 %v7674, %v7842
    %7844 = vmatmul.bf16.gmra.mxu0 %v5691
    %v7845 = vpop.f32.mrf.mxu0
    %v7846 = vadd.f32 %v7677, %v7845
    %v7847 = vpop.f32.mrf.mxu0
    %v7848 = vadd.f32 %v7679, %v7847
    %7849 = vmatmul.bf16.gmra.mxu0 %v5709
    %v7850 = vpop.f32.mrf.mxu0
    %v7851 = vadd.f32 %v7682, %v7850
    %v7852 = vpop.f32.mrf.mxu0
    %v7853 = vadd.f32 %v7684, %v7852
    %7854 = vmatmul.bf16.gmra.mxu0 %v5727
    %v7855 = vpop.f32.mrf.mxu0
    %v7856 = vadd.f32 %v7687, %v7855
    %v7857 = vpop.f32.mrf.mxu0
    %v7858 = vadd.f32 %v7689, %v7857
    %7859 = vmatmul.bf16.gmra.mxu0 %v5745
    %v7860 = vpop.f32.mrf.mxu0
    %v7861 = vadd.f32 %v7692, %v7860
    %v7862 = vpop.f32.mrf.mxu0
    %v7863 = vadd.f32 %v7694, %v7862
    %7864 = vmatmul.bf16.gmra.mxu0 %v5763
    %v7865 = vpop.f32.mrf.mxu0
    %v7866 = vadd.f32 %v7697, %v7865
    %v7867 = vpop.f32.mrf.mxu0
    %v7868 = vadd.f32 %v7699, %v7867
    %7869 = vmatmul.bf16.gmra.mxu0 %v5781
    %v7870 = vpop.f32.mrf.mxu0
    %v7871 = vadd.f32 %v7702, %v7870
    %v7872 = vpop.f32.mrf.mxu0
    %v7873 = vadd.f32 %v7704, %v7872
    %7874 = vmatmul.bf16.gmra.mxu0 %v5799
    %v7875 = vpop.f32.mrf.mxu0
    %v7876 = vadd.f32 %v7707, %v7875
    %v7877 = vpop.f32.mrf.mxu0
    %v7878 = vadd.f32 %v7709, %v7877
    %7879 = vmatmul.bf16.gmra.mxu0 %v5817
    %v7880 = vpop.f32.mrf.mxu0
    %v7881 = vadd.f32 %v7712, %v7880
    %v7882 = vpop.f32.mrf.mxu0
    %v7883 = vadd.f32 %v7714, %v7882
    %7884 = vmatmul.bf16.gmra.mxu0 %v5835
    %v7885 = vpop.f32.mrf.mxu0
    %v7886 = vadd.f32 %v7717, %v7885
    %v7887 = vpop.f32.mrf.mxu0
    %v7888 = vadd.f32 %v7719, %v7887
    %7889 = vmatmul.bf16.gmra.mxu0 %v5853
    %v7890 = vpop.f32.mrf.mxu0
    %v7891 = vadd.f32 %v7722, %v7890
    %v7892 = vpop.f32.mrf.mxu0
    %v7893 = vadd.f32 %v7724, %v7892
    %7894 = vmatmul.bf16.gmra.mxu0 %v5871
    %v7895 = vpop.f32.mrf.mxu0
    %v7896 = vadd.f32 %v7727, %v7895
    %v7897 = vpop.f32.mrf.mxu0
    %v7898 = vadd.f32 %v7729, %v7897
    %7899 = vmatmul.bf16.gmra.mxu0 %v5889
    %v7900 = vpop.f32.mrf.mxu0
    %v7901 = vadd.f32 %v7732, %v7900
    %v7902 = vpop.f32.mrf.mxu0
    %v7903 = vadd.f32 %v7734, %v7902
    %7904 = vmatmul.bf16.gmra.mxu0 %v5907
    %v7905 = vpop.f32.mrf.mxu0
    %v7906 = vadd.f32 %v7737, %v7905
    %v7907 = vpop.f32.mrf.mxu0
    %v7908 = vadd.f32 %v7739, %v7907
    %7909 = vmatmul.bf16.gmra.mxu0 %v5925
    %v7910 = vpop.f32.mrf.mxu0
    %v7911 = vadd.f32 %v7742, %v7910
    %v7912 = vpop.f32.mrf.mxu0
    %v7913 = vadd.f32 %v7744, %v7912
    %7914 = vmatmul.bf16.gmra.mxu0 %v5943
    %v7915 = vpop.f32.mrf.mxu0
    %v7916 = vadd.f32 %v7747, %v7915
    %v7917 = vpop.f32.mrf.mxu0
    %v7918 = vadd.f32 %v7749, %v7917
    %7919 = vmatmul.bf16.gmra.mxu0 %v5961
    %v7920 = vpop.f32.mrf.mxu0
    %v7921 = vadd.f32 %v7752, %v7920
    %v7922 = vpop.f32.mrf.mxu0
    %v7923 = vadd.f32 %v7754, %v7922
    %7924 = vmatmul.bf16.gmra.mxu0 %v5979
    %v7925 = vpop.f32.mrf.mxu0
    %v7926 = vadd.f32 %v7757, %v7925
    %v7927 = vpop.f32.mrf.mxu0
    %v7928 = vadd.f32 %v7759, %v7927
    %7929 = vmatmul.bf16.gmra.mxu0 %v5997
    %v7930 = vpop.f32.mrf.mxu0
    %v7931 = vadd.f32 %v7762, %v7930
    %v7932 = vpop.f32.mrf.mxu0
    %v7933 = vadd.f32 %v7764, %v7932
    %7934 = vmatmul.bf16.gmra.mxu0 %v6015
    %v7935 = vpop.f32.mrf.mxu0
    %v7936 = vadd.f32 %v7767, %v7935
    %v7937 = vpop.f32.mrf.mxu0
    %v7938 = vadd.f32 %v7769, %v7937
    %7939 = vmatmul.bf16.gmra.mxu0 %v6033
    %v7940 = vpop.f32.mrf.mxu0
    %v7941 = vadd.f32 %v7772, %v7940
    %v7942 = vpop.f32.mrf.mxu0
    %v7943 = vadd.f32 %v7774, %v7942
    %7944 = vmatmul.bf16.gmra.mxu0 %v6051
    %v7945 = vpop.f32.mrf.mxu0
    %v7946 = vadd.f32 %v7777, %v7945
    %v7947 = vpop.f32.mrf.mxu0
    %v7948 = vadd.f32 %v7779, %v7947
    %7949 = vmatmul.bf16.gmra.mxu0 %v6069
    %v7950 = vpop.f32.mrf.mxu0
    %v7951 = vadd.f32 %v7782, %v7950
    %v7952 = vpop.f32.mrf.mxu0
    %v7953 = vadd.f32 %v7784, %v7952
    %7954 = vmatmul.bf16.gmra.mxu0 %v6087
    %v7955 = vpop.f32.mrf.mxu0
    %v7956 = vadd.f32 %v7787, %v7955
    %v7957 = vpop.f32.mrf.mxu0
    %v7958 = vadd.f32 %v7789, %v7957
    %7959 = vmatmul.bf16.gmra.mxu0 %v6105
    %v7960 = vpop.f32.mrf.mxu0
    %v7961 = vadd.f32 %v7792, %v7960
    %v7962 = vpop.f32.mrf.mxu0
    %v7963 = vadd.f32 %v7794, %v7962
    %7964 = vmatmul.bf16.gmra.mxu0 %v6123
    %v7965 = vpop.f32.mrf.mxu0
    %v7966 = vadd.f32 %v7797, %v7965
    %v7967 = vpop.f32.mrf.mxu0
    %v7968 = vadd.f32 %v7799, %v7967
    %7969 = vmatmul.bf16.gmra.mxu0 %v6141
    %v7970 = vpop.f32.mrf.mxu0
    %v7971 = vadd.f32 %v7802, %v7970
    %v7972 = vpop.f32.mrf.mxu0
    %v7973 = vadd.f32 %v7804, %v7972
    %7974 = vmatmul.bf16.gmra.mxu0 %v6159
    %v7975 = vpop.f32.mrf.mxu0
    %v7976 = vadd.f32 %v7807, %v7975
    %v7977 = vpop.f32.mrf.mxu0
    %v7978 = vadd.f32 %v7809, %v7977
    %7979 = vmatmul.bf16.gmra.mxu0 %v6177
    %v7980 = vpop.f32.mrf.mxu0
    %v7981 = vadd.f32 %v7812, %v7980
    %v7982 = vpop.f32.mrf.mxu0
    %v7983 = vadd.f32 %v7814, %v7982
    %7984 = vmatmul.bf16.gmra.mxu0 %v6195
    %v7985 = vpop.f32.mrf.mxu0
    %v7986 = vadd.f32 %v7817, %v7985
    %v7987 = vpop.f32.mrf.mxu0
    %v7988 = vadd.f32 %v7819, %v7987
    %7989 = vdwg.mxu0
    %7990 = vmatpush.bf16.msra.mxu0 %v7387
    %7991 = vmatpush.bf16.msra.mxu0 %v7386
    %7992 = vmatpush.bf16.msra.mxu0 %v7385
    %7993 = vmatpush.bf16.msra.mxu0 %v7384
    %7994 = vmatpush.bf16.msra.mxu0 %v7383
    %7995 = vmatpush.bf16.msra.mxu0 %v7382
    %7996 = vmatpush.bf16.msra.mxu0 %v7381
    %7997 = vmatpush.bf16.msra.mxu0 %v7380
    %7998 = vmatmul.bf16.gmra.mxu0 %v5638
    %v7999 = vpop.f32.mrf.mxu0
    %v8000 = vadd.f32 %v7831, %v7999
    %v8001 = vpop.f32.mrf.mxu0
    %v8002 = vadd.f32 %v7833, %v8001
    %8003 = vmatmul.bf16.gmra.mxu0 %v5656
    %v8004 = vpop.f32.mrf.mxu0
    %v8005 = vadd.f32 %v7836, %v8004
    %v8006 = vpop.f32.mrf.mxu0
    %v8007 = vadd.f32 %v7838, %v8006
    %8008 = vmatmul.bf16.gmra.mxu0 %v5674
    %v8009 = vpop.f32.mrf.mxu0
    %v8010 = vadd.f32 %v7841, %v8009
    %v8011 = vpop.f32.mrf.mxu0
    %v8012 = vadd.f32 %v7843, %v8011
    %8013 = vmatmul.bf16.gmra.mxu0 %v5692
    %v8014 = vpop.f32.mrf.mxu0
    %v8015 = vadd.f32 %v7846, %v8014
    %v8016 = vpop.f32.mrf.mxu0
    %v8017 = vadd.f32 %v7848, %v8016
    %8018 = vmatmul.bf16.gmra.mxu0 %v5710
    %v8019 = vpop.f32.mrf.mxu0
    %v8020 = vadd.f32 %v7851, %v8019
    %v8021 = vpop.f32.mrf.mxu0
    %v8022 = vadd.f32 %v7853, %v8021
    %8023 = vmatmul.bf16.gmra.mxu0 %v5728
    %v8024 = vpop.f32.mrf.mxu0
    %v8025 = vadd.f32 %v7856, %v8024
    %v8026 = vpop.f32.mrf.mxu0
    %v8027 = vadd.f32 %v7858, %v8026
    %8028 = vmatmul.bf16.gmra.mxu0 %v5746
    %v8029 = vpop.f32.mrf.mxu0
    %v8030 = vadd.f32 %v7861, %v8029
    %v8031 = vpop.f32.mrf.mxu0
    %v8032 = vadd.f32 %v7863, %v8031
    %8033 = vmatmul.bf16.gmra.mxu0 %v5764
    %v8034 = vpop.f32.mrf.mxu0
    %v8035 = vadd.f32 %v7866, %v8034
    %v8036 = vpop.f32.mrf.mxu0
    %v8037 = vadd.f32 %v7868, %v8036
    %8038 = vmatmul.bf16.gmra.mxu0 %v5782
    %v8039 = vpop.f32.mrf.mxu0
    %v8040 = vadd.f32 %v7871, %v8039
    %v8041 = vpop.f32.mrf.mxu0
    %v8042 = vadd.f32 %v7873, %v8041
    %8043 = vmatmul.bf16.gmra.mxu0 %v5800
    %v8044 = vpop.f32.mrf.mxu0
    %v8045 = vadd.f32 %v7876, %v8044
    %v8046 = vpop.f32.mrf.mxu0
    %v8047 = vadd.f32 %v7878, %v8046
    %8048 = vmatmul.bf16.gmra.mxu0 %v5818
    %v8049 = vpop.f32.mrf.mxu0
    %v8050 = vadd.f32 %v7881, %v8049
    %v8051 = vpop.f32.mrf.mxu0
    %v8052 = vadd.f32 %v7883, %v8051
    %8053 = vmatmul.bf16.gmra.mxu0 %v5836
    %v8054 = vpop.f32.mrf.mxu0
    %v8055 = vadd.f32 %v7886, %v8054
    %v8056 = vpop.f32.mrf.mxu0
    %v8057 = vadd.f32 %v7888, %v8056
    %8058 = vmatmul.bf16.gmra.mxu0 %v5854
    %v8059 = vpop.f32.mrf.mxu0
    %v8060 = vadd.f32 %v7891, %v8059
    %v8061 = vpop.f32.mrf.mxu0
    %v8062 = vadd.f32 %v7893, %v8061
    %8063 = vmatmul.bf16.gmra.mxu0 %v5872
    %v8064 = vpop.f32.mrf.mxu0
    %v8065 = vadd.f32 %v7896, %v8064
    %v8066 = vpop.f32.mrf.mxu0
    %v8067 = vadd.f32 %v7898, %v8066
    %8068 = vmatmul.bf16.gmra.mxu0 %v5890
    %v8069 = vpop.f32.mrf.mxu0
    %v8070 = vadd.f32 %v7901, %v8069
    %v8071 = vpop.f32.mrf.mxu0
    %v8072 = vadd.f32 %v7903, %v8071
    %8073 = vmatmul.bf16.gmra.mxu0 %v5908
    %v8074 = vpop.f32.mrf.mxu0
    %v8075 = vadd.f32 %v7906, %v8074
    %v8076 = vpop.f32.mrf.mxu0
    %v8077 = vadd.f32 %v7908, %v8076
    %8078 = vmatmul.bf16.gmra.mxu0 %v5926
    %v8079 = vpop.f32.mrf.mxu0
    %v8080 = vadd.f32 %v7911, %v8079
    %v8081 = vpop.f32.mrf.mxu0
    %v8082 = vadd.f32 %v7913, %v8081
    %8083 = vmatmul.bf16.gmra.mxu0 %v5944
    %v8084 = vpop.f32.mrf.mxu0
    %v8085 = vadd.f32 %v7916, %v8084
    %v8086 = vpop.f32.mrf.mxu0
    %v8087 = vadd.f32 %v7918, %v8086
    %8088 = vmatmul.bf16.gmra.mxu0 %v5962
    %v8089 = vpop.f32.mrf.mxu0
    %v8090 = vadd.f32 %v7921, %v8089
    %v8091 = vpop.f32.mrf.mxu0
    %v8092 = vadd.f32 %v7923, %v8091
    %8093 = vmatmul.bf16.gmra.mxu0 %v5980
    %v8094 = vpop.f32.mrf.mxu0
    %v8095 = vadd.f32 %v7926, %v8094
    %v8096 = vpop.f32.mrf.mxu0
    %v8097 = vadd.f32 %v7928, %v8096
    %8098 = vmatmul.bf16.gmra.mxu0 %v5998
    %v8099 = vpop.f32.mrf.mxu0
    %v8100 = vadd.f32 %v7931, %v8099
    %v8101 = vpop.f32.mrf.mxu0
    %v8102 = vadd.f32 %v7933, %v8101
    %8103 = vmatmul.bf16.gmra.mxu0 %v6016
    %v8104 = vpop.f32.mrf.mxu0
    %v8105 = vadd.f32 %v7936, %v8104
    %v8106 = vpop.f32.mrf.mxu0
    %v8107 = vadd.f32 %v7938, %v8106
    %8108 = vmatmul.bf16.gmra.mxu0 %v6034
    %v8109 = vpop.f32.mrf.mxu0
    %v8110 = vadd.f32 %v7941, %v8109
    %v8111 = vpop.f32.mrf.mxu0
    %v8112 = vadd.f32 %v7943, %v8111
    %8113 = vmatmul.bf16.gmra.mxu0 %v6052
    %v8114 = vpop.f32.mrf.mxu0
    %v8115 = vadd.f32 %v7946, %v8114
    %v8116 = vpop.f32.mrf.mxu0
    %v8117 = vadd.f32 %v7948, %v8116
    %8118 = vmatmul.bf16.gmra.mxu0 %v6070
    %v8119 = vpop.f32.mrf.mxu0
    %v8120 = vadd.f32 %v7951, %v8119
    %v8121 = vpop.f32.mrf.mxu0
    %v8122 = vadd.f32 %v7953, %v8121
    %8123 = vmatmul.bf16.gmra.mxu0 %v6088
    %v8124 = vpop.f32.mrf.mxu0
    %v8125 = vadd.f32 %v7956, %v8124
    %v8126 = vpop.f32.mrf.mxu0
    %v8127 = vadd.f32 %v7958, %v8126
    %8128 = vmatmul.bf16.gmra.mxu0 %v6106
    %v8129 = vpop.f32.mrf.mxu0
    %v8130 = vadd.f32 %v7961, %v8129
    %v8131 = vpop.f32.mrf.mxu0
    %v8132 = vadd.f32 %v7963, %v8131
    %8133 = vmatmul.bf16.gmra.mxu0 %v6124
    %v8134 = vpop.f32.mrf.mxu0
    %v8135 = vadd.f32 %v7966, %v8134
    %v8136 = vpop.f32.mrf.mxu0
    %v8137 = vadd.f32 %v7968, %v8136
    %8138 = vmatmul.bf16.gmra.mxu0 %v6142
    %v8139 = vpop.f32.mrf.mxu0
    %v8140 = vadd.f32 %v7971, %v8139
    %v8141 = vpop.f32.mrf.mxu0
    %v8142 = vadd.f32 %v7973, %v8141
    %8143 = vmatmul.bf16.gmra.mxu0 %v6160
    %v8144 = vpop.f32.mrf.mxu0
    %v8145 = vadd.f32 %v7976, %v8144
    %v8146 = vpop.f32.mrf.mxu0
    %v8147 = vadd.f32 %v7978, %v8146
    %8148 = vmatmul.bf16.gmra.mxu0 %v6178
    %v8149 = vpop.f32.mrf.mxu0
    %v8150 = vadd.f32 %v7981, %v8149
    %v8151 = vpop.f32.mrf.mxu0
    %v8152 = vadd.f32 %v7983, %v8151
    %8153 = vmatmul.bf16.gmra.mxu0 %v6196
    %v8154 = vpop.f32.mrf.mxu0
    %v8155 = vadd.f32 %v7986, %v8154
    %v8156 = vpop.f32.mrf.mxu0
    %v8157 = vadd.f32 %v7988, %v8156
    %8158 = vdwg.mxu0
    %8159 = vmatpush.bf16.msra.mxu0 %v7395
    %8160 = vmatpush.bf16.msra.mxu0 %v7394
    %8161 = vmatpush.bf16.msra.mxu0 %v7393
    %8162 = vmatpush.bf16.msra.mxu0 %v7392
    %8163 = vmatpush.bf16.msra.mxu0 %v7391
    %8164 = vmatpush.bf16.msra.mxu0 %v7390
    %8165 = vmatpush.bf16.msra.mxu0 %v7389
    %8166 = vmatpush.bf16.msra.mxu0 %v7388
    %8167 = vmatmul.bf16.gmra.mxu0 %v5639
    %v8168 = vpop.f32.mrf.mxu0
    %v8169 = vadd.f32 %v8000, %v8168
    %v8170 = vpop.f32.mrf.mxu0
    %v8171 = vadd.f32 %v8002, %v8170
    %8172 = vmatmul.bf16.gmra.mxu0 %v5657
    %v8173 = vpop.f32.mrf.mxu0
    %v8174 = vadd.f32 %v8005, %v8173
    %v8175 = vpop.f32.mrf.mxu0
    %v8176 = vadd.f32 %v8007, %v8175
    %8177 = vmatmul.bf16.gmra.mxu0 %v5675
    %v8178 = vpop.f32.mrf.mxu0
    %v8179 = vadd.f32 %v8010, %v8178
    %v8180 = vpop.f32.mrf.mxu0
    %v8181 = vadd.f32 %v8012, %v8180
    %8182 = vmatmul.bf16.gmra.mxu0 %v5693
    %v8183 = vpop.f32.mrf.mxu0
    %v8184 = vadd.f32 %v8015, %v8183
    %v8185 = vpop.f32.mrf.mxu0
    %v8186 = vadd.f32 %v8017, %v8185
    %8187 = vmatmul.bf16.gmra.mxu0 %v5711
    %v8188 = vpop.f32.mrf.mxu0
    %v8189 = vadd.f32 %v8020, %v8188
    %v8190 = vpop.f32.mrf.mxu0
    %v8191 = vadd.f32 %v8022, %v8190
    %8192 = vmatmul.bf16.gmra.mxu0 %v5729
    %v8193 = vpop.f32.mrf.mxu0
    %v8194 = vadd.f32 %v8025, %v8193
    %v8195 = vpop.f32.mrf.mxu0
    %v8196 = vadd.f32 %v8027, %v8195
    %8197 = vmatmul.bf16.gmra.mxu0 %v5747
    %v8198 = vpop.f32.mrf.mxu0
    %v8199 = vadd.f32 %v8030, %v8198
    %v8200 = vpop.f32.mrf.mxu0
    %v8201 = vadd.f32 %v8032, %v8200
    %8202 = vmatmul.bf16.gmra.mxu0 %v5765
    %v8203 = vpop.f32.mrf.mxu0
    %v8204 = vadd.f32 %v8035, %v8203
    %v8205 = vpop.f32.mrf.mxu0
    %v8206 = vadd.f32 %v8037, %v8205
    %8207 = vmatmul.bf16.gmra.mxu0 %v5783
    %v8208 = vpop.f32.mrf.mxu0
    %v8209 = vadd.f32 %v8040, %v8208
    %v8210 = vpop.f32.mrf.mxu0
    %v8211 = vadd.f32 %v8042, %v8210
    %8212 = vmatmul.bf16.gmra.mxu0 %v5801
    %v8213 = vpop.f32.mrf.mxu0
    %v8214 = vadd.f32 %v8045, %v8213
    %v8215 = vpop.f32.mrf.mxu0
    %v8216 = vadd.f32 %v8047, %v8215
    %8217 = vmatmul.bf16.gmra.mxu0 %v5819
    %v8218 = vpop.f32.mrf.mxu0
    %v8219 = vadd.f32 %v8050, %v8218
    %v8220 = vpop.f32.mrf.mxu0
    %v8221 = vadd.f32 %v8052, %v8220
    %8222 = vmatmul.bf16.gmra.mxu0 %v5837
    %v8223 = vpop.f32.mrf.mxu0
    %v8224 = vadd.f32 %v8055, %v8223
    %v8225 = vpop.f32.mrf.mxu0
    %v8226 = vadd.f32 %v8057, %v8225
    %8227 = vmatmul.bf16.gmra.mxu0 %v5855
    %v8228 = vpop.f32.mrf.mxu0
    %v8229 = vadd.f32 %v8060, %v8228
    %v8230 = vpop.f32.mrf.mxu0
    %v8231 = vadd.f32 %v8062, %v8230
    %8232 = vmatmul.bf16.gmra.mxu0 %v5873
    %v8233 = vpop.f32.mrf.mxu0
    %v8234 = vadd.f32 %v8065, %v8233
    %v8235 = vpop.f32.mrf.mxu0
    %v8236 = vadd.f32 %v8067, %v8235
    %8237 = vmatmul.bf16.gmra.mxu0 %v5891
    %v8238 = vpop.f32.mrf.mxu0
    %v8239 = vadd.f32 %v8070, %v8238
    %v8240 = vpop.f32.mrf.mxu0
    %v8241 = vadd.f32 %v8072, %v8240
    %8242 = vmatmul.bf16.gmra.mxu0 %v5909
    %v8243 = vpop.f32.mrf.mxu0
    %v8244 = vadd.f32 %v8075, %v8243
    %v8245 = vpop.f32.mrf.mxu0
    %v8246 = vadd.f32 %v8077, %v8245
    %8247 = vmatmul.bf16.gmra.mxu0 %v5927
    %v8248 = vpop.f32.mrf.mxu0
    %v8249 = vadd.f32 %v8080, %v8248
    %v8250 = vpop.f32.mrf.mxu0
    %v8251 = vadd.f32 %v8082, %v8250
    %8252 = vmatmul.bf16.gmra.mxu0 %v5945
    %v8253 = vpop.f32.mrf.mxu0
    %v8254 = vadd.f32 %v8085, %v8253
    %v8255 = vpop.f32.mrf.mxu0
    %v8256 = vadd.f32 %v8087, %v8255
    %8257 = vmatmul.bf16.gmra.mxu0 %v5963
    %v8258 = vpop.f32.mrf.mxu0
    %v8259 = vadd.f32 %v8090, %v8258
    %v8260 = vpop.f32.mrf.mxu0
    %v8261 = vadd.f32 %v8092, %v8260
    %8262 = vmatmul.bf16.gmra.mxu0 %v5981
    %v8263 = vpop.f32.mrf.mxu0
    %v8264 = vadd.f32 %v8095, %v8263
    %v8265 = vpop.f32.mrf.mxu0
    %v8266 = vadd.f32 %v8097, %v8265
    %8267 = vmatmul.bf16.gmra.mxu0 %v5999
    %v8268 = vpop.f32.mrf.mxu0
    %v8269 = vadd.f32 %v8100, %v8268
    %v8270 = vpop.f32.mrf.mxu0
    %v8271 = vadd.f32 %v8102, %v8270
    %8272 = vmatmul.bf16.gmra.mxu0 %v6017
    %v8273 = vpop.f32.mrf.mxu0
    %v8274 = vadd.f32 %v8105, %v8273
    %v8275 = vpop.f32.mrf.mxu0
    %v8276 = vadd.f32 %v8107, %v8275
    %8277 = vmatmul.bf16.gmra.mxu0 %v6035
    %v8278 = vpop.f32.mrf.mxu0
    %v8279 = vadd.f32 %v8110, %v8278
    %v8280 = vpop.f32.mrf.mxu0
    %v8281 = vadd.f32 %v8112, %v8280
    %8282 = vmatmul.bf16.gmra.mxu0 %v6053
    %v8283 = vpop.f32.mrf.mxu0
    %v8284 = vadd.f32 %v8115, %v8283
    %v8285 = vpop.f32.mrf.mxu0
    %v8286 = vadd.f32 %v8117, %v8285
    %8287 = vmatmul.bf16.gmra.mxu0 %v6071
    %v8288 = vpop.f32.mrf.mxu0
    %v8289 = vadd.f32 %v8120, %v8288
    %v8290 = vpop.f32.mrf.mxu0
    %v8291 = vadd.f32 %v8122, %v8290
    %8292 = vmatmul.bf16.gmra.mxu0 %v6089
    %v8293 = vpop.f32.mrf.mxu0
    %v8294 = vadd.f32 %v8125, %v8293
    %v8295 = vpop.f32.mrf.mxu0
    %v8296 = vadd.f32 %v8127, %v8295
    %8297 = vmatmul.bf16.gmra.mxu0 %v6107
    %v8298 = vpop.f32.mrf.mxu0
    %v8299 = vadd.f32 %v8130, %v8298
    %v8300 = vpop.f32.mrf.mxu0
    %v8301 = vadd.f32 %v8132, %v8300
    %8302 = vmatmul.bf16.gmra.mxu0 %v6125
    %v8303 = vpop.f32.mrf.mxu0
    %v8304 = vadd.f32 %v8135, %v8303
    %v8305 = vpop.f32.mrf.mxu0
    %v8306 = vadd.f32 %v8137, %v8305
    %8307 = vmatmul.bf16.gmra.mxu0 %v6143
    %v8308 = vpop.f32.mrf.mxu0
    %v8309 = vadd.f32 %v8140, %v8308
    %v8310 = vpop.f32.mrf.mxu0
    %v8311 = vadd.f32 %v8142, %v8310
    %8312 = vmatmul.bf16.gmra.mxu0 %v6161
    %v8313 = vpop.f32.mrf.mxu0
    %v8314 = vadd.f32 %v8145, %v8313
    %v8315 = vpop.f32.mrf.mxu0
    %v8316 = vadd.f32 %v8147, %v8315
    %8317 = vmatmul.bf16.gmra.mxu0 %v6179
    %v8318 = vpop.f32.mrf.mxu0
    %v8319 = vadd.f32 %v8150, %v8318
    %v8320 = vpop.f32.mrf.mxu0
    %v8321 = vadd.f32 %v8152, %v8320
    %8322 = vmatmul.bf16.gmra.mxu0 %v6197
    %v8323 = vpop.f32.mrf.mxu0
    %v8324 = vadd.f32 %v8155, %v8323
    %v8325 = vpop.f32.mrf.mxu0
    %v8326 = vadd.f32 %v8157, %v8325
    %8327 = vdwg.mxu0
    %8328 = vmatpush.bf16.msra.mxu0 %v7403
    %8329 = vmatpush.bf16.msra.mxu0 %v7402
    %8330 = vmatpush.bf16.msra.mxu0 %v7401
    %8331 = vmatpush.bf16.msra.mxu0 %v7400
    %8332 = vmatpush.bf16.msra.mxu0 %v7399
    %8333 = vmatpush.bf16.msra.mxu0 %v7398
    %8334 = vmatpush.bf16.msra.mxu0 %v7397
    %8335 = vmatpush.bf16.msra.mxu0 %v7396
    %8336 = vmatmul.bf16.gmra.mxu0 %v5640
    %v8337 = vpop.f32.mrf.mxu0
    %v8338 = vadd.f32 %v8169, %v8337
    %v8339 = vpop.f32.mrf.mxu0
    %v8340 = vadd.f32 %v8171, %v8339
    %8341 = vmatmul.bf16.gmra.mxu0 %v5658
    %v8342 = vpop.f32.mrf.mxu0
    %v8343 = vadd.f32 %v8174, %v8342
    %v8344 = vpop.f32.mrf.mxu0
    %v8345 = vadd.f32 %v8176, %v8344
    %8346 = vmatmul.bf16.gmra.mxu0 %v5676
    %v8347 = vpop.f32.mrf.mxu0
    %v8348 = vadd.f32 %v8179, %v8347
    %v8349 = vpop.f32.mrf.mxu0
    %v8350 = vadd.f32 %v8181, %v8349
    %8351 = vmatmul.bf16.gmra.mxu0 %v5694
    %v8352 = vpop.f32.mrf.mxu0
    %v8353 = vadd.f32 %v8184, %v8352
    %v8354 = vpop.f32.mrf.mxu0
    %v8355 = vadd.f32 %v8186, %v8354
    %8356 = vmatmul.bf16.gmra.mxu0 %v5712
    %v8357 = vpop.f32.mrf.mxu0
    %v8358 = vadd.f32 %v8189, %v8357
    %v8359 = vpop.f32.mrf.mxu0
    %v8360 = vadd.f32 %v8191, %v8359
    %8361 = vmatmul.bf16.gmra.mxu0 %v5730
    %v8362 = vpop.f32.mrf.mxu0
    %v8363 = vadd.f32 %v8194, %v8362
    %v8364 = vpop.f32.mrf.mxu0
    %v8365 = vadd.f32 %v8196, %v8364
    %8366 = vmatmul.bf16.gmra.mxu0 %v5748
    %v8367 = vpop.f32.mrf.mxu0
    %v8368 = vadd.f32 %v8199, %v8367
    %v8369 = vpop.f32.mrf.mxu0
    %v8370 = vadd.f32 %v8201, %v8369
    %8371 = vmatmul.bf16.gmra.mxu0 %v5766
    %v8372 = vpop.f32.mrf.mxu0
    %v8373 = vadd.f32 %v8204, %v8372
    %v8374 = vpop.f32.mrf.mxu0
    %v8375 = vadd.f32 %v8206, %v8374
    %8376 = vmatmul.bf16.gmra.mxu0 %v5784
    %v8377 = vpop.f32.mrf.mxu0
    %v8378 = vadd.f32 %v8209, %v8377
    %v8379 = vpop.f32.mrf.mxu0
    %v8380 = vadd.f32 %v8211, %v8379
    %8381 = vmatmul.bf16.gmra.mxu0 %v5802
    %v8382 = vpop.f32.mrf.mxu0
    %v8383 = vadd.f32 %v8214, %v8382
    %v8384 = vpop.f32.mrf.mxu0
    %v8385 = vadd.f32 %v8216, %v8384
    %8386 = vmatmul.bf16.gmra.mxu0 %v5820
    %v8387 = vpop.f32.mrf.mxu0
    %v8388 = vadd.f32 %v8219, %v8387
    %v8389 = vpop.f32.mrf.mxu0
    %v8390 = vadd.f32 %v8221, %v8389
    %8391 = vmatmul.bf16.gmra.mxu0 %v5838
    %v8392 = vpop.f32.mrf.mxu0
    %v8393 = vadd.f32 %v8224, %v8392
    %v8394 = vpop.f32.mrf.mxu0
    %v8395 = vadd.f32 %v8226, %v8394
    %8396 = vmatmul.bf16.gmra.mxu0 %v5856
    %v8397 = vpop.f32.mrf.mxu0
    %v8398 = vadd.f32 %v8229, %v8397
    %v8399 = vpop.f32.mrf.mxu0
    %v8400 = vadd.f32 %v8231, %v8399
    %8401 = vmatmul.bf16.gmra.mxu0 %v5874
    %v8402 = vpop.f32.mrf.mxu0
    %v8403 = vadd.f32 %v8234, %v8402
    %v8404 = vpop.f32.mrf.mxu0
    %v8405 = vadd.f32 %v8236, %v8404
    %8406 = vmatmul.bf16.gmra.mxu0 %v5892
    %v8407 = vpop.f32.mrf.mxu0
    %v8408 = vadd.f32 %v8239, %v8407
    %v8409 = vpop.f32.mrf.mxu0
    %v8410 = vadd.f32 %v8241, %v8409
    %8411 = vmatmul.bf16.gmra.mxu0 %v5910
    %v8412 = vpop.f32.mrf.mxu0
    %v8413 = vadd.f32 %v8244, %v8412
    %v8414 = vpop.f32.mrf.mxu0
    %v8415 = vadd.f32 %v8246, %v8414
    %8416 = vmatmul.bf16.gmra.mxu0 %v5928
    %v8417 = vpop.f32.mrf.mxu0
    %v8418 = vadd.f32 %v8249, %v8417
    %v8419 = vpop.f32.mrf.mxu0
    %v8420 = vadd.f32 %v8251, %v8419
    %8421 = vmatmul.bf16.gmra.mxu0 %v5946
    %v8422 = vpop.f32.mrf.mxu0
    %v8423 = vadd.f32 %v8254, %v8422
    %v8424 = vpop.f32.mrf.mxu0
    %v8425 = vadd.f32 %v8256, %v8424
    %8426 = vmatmul.bf16.gmra.mxu0 %v5964
    %v8427 = vpop.f32.mrf.mxu0
    %v8428 = vadd.f32 %v8259, %v8427
    %v8429 = vpop.f32.mrf.mxu0
    %v8430 = vadd.f32 %v8261, %v8429
    %8431 = vmatmul.bf16.gmra.mxu0 %v5982
    %v8432 = vpop.f32.mrf.mxu0
    %v8433 = vadd.f32 %v8264, %v8432
    %v8434 = vpop.f32.mrf.mxu0
    %v8435 = vadd.f32 %v8266, %v8434
    %8436 = vmatmul.bf16.gmra.mxu0 %v6000
    %v8437 = vpop.f32.mrf.mxu0
    %v8438 = vadd.f32 %v8269, %v8437
    %v8439 = vpop.f32.mrf.mxu0
    %v8440 = vadd.f32 %v8271, %v8439
    %8441 = vmatmul.bf16.gmra.mxu0 %v6018
    %v8442 = vpop.f32.mrf.mxu0
    %v8443 = vadd.f32 %v8274, %v8442
    %v8444 = vpop.f32.mrf.mxu0
    %v8445 = vadd.f32 %v8276, %v8444
    %8446 = vmatmul.bf16.gmra.mxu0 %v6036
    %v8447 = vpop.f32.mrf.mxu0
    %v8448 = vadd.f32 %v8279, %v8447
    %v8449 = vpop.f32.mrf.mxu0
    %v8450 = vadd.f32 %v8281, %v8449
    %8451 = vmatmul.bf16.gmra.mxu0 %v6054
    %v8452 = vpop.f32.mrf.mxu0
    %v8453 = vadd.f32 %v8284, %v8452
    %v8454 = vpop.f32.mrf.mxu0
    %v8455 = vadd.f32 %v8286, %v8454
    %8456 = vmatmul.bf16.gmra.mxu0 %v6072
    %v8457 = vpop.f32.mrf.mxu0
    %v8458 = vadd.f32 %v8289, %v8457
    %v8459 = vpop.f32.mrf.mxu0
    %v8460 = vadd.f32 %v8291, %v8459
    %8461 = vmatmul.bf16.gmra.mxu0 %v6090
    %v8462 = vpop.f32.mrf.mxu0
    %v8463 = vadd.f32 %v8294, %v8462
    %v8464 = vpop.f32.mrf.mxu0
    %v8465 = vadd.f32 %v8296, %v8464
    %8466 = vmatmul.bf16.gmra.mxu0 %v6108
    %v8467 = vpop.f32.mrf.mxu0
    %v8468 = vadd.f32 %v8299, %v8467
    %v8469 = vpop.f32.mrf.mxu0
    %v8470 = vadd.f32 %v8301, %v8469
    %8471 = vmatmul.bf16.gmra.mxu0 %v6126
    %v8472 = vpop.f32.mrf.mxu0
    %v8473 = vadd.f32 %v8304, %v8472
    %v8474 = vpop.f32.mrf.mxu0
    %v8475 = vadd.f32 %v8306, %v8474
    %8476 = vmatmul.bf16.gmra.mxu0 %v6144
    %v8477 = vpop.f32.mrf.mxu0
    %v8478 = vadd.f32 %v8309, %v8477
    %v8479 = vpop.f32.mrf.mxu0
    %v8480 = vadd.f32 %v8311, %v8479
    %8481 = vmatmul.bf16.gmra.mxu0 %v6162
    %v8482 = vpop.f32.mrf.mxu0
    %v8483 = vadd.f32 %v8314, %v8482
    %v8484 = vpop.f32.mrf.mxu0
    %v8485 = vadd.f32 %v8316, %v8484
    %8486 = vmatmul.bf16.gmra.mxu0 %v6180
    %v8487 = vpop.f32.mrf.mxu0
    %v8488 = vadd.f32 %v8319, %v8487
    %v8489 = vpop.f32.mrf.mxu0
    %v8490 = vadd.f32 %v8321, %v8489
    %8491 = vmatmul.bf16.gmra.mxu0 %v6198
    %v8492 = vpop.f32.mrf.mxu0
    %v8493 = vadd.f32 %v8324, %v8492
    %v8494 = vpop.f32.mrf.mxu0
    %v8495 = vadd.f32 %v8326, %v8494
    %8496 = vdwg.mxu0
    %8497 = vmatpush.bf16.msra.mxu0 %v7411
    %8498 = vmatpush.bf16.msra.mxu0 %v7410
    %8499 = vmatpush.bf16.msra.mxu0 %v7409
    %8500 = vmatpush.bf16.msra.mxu0 %v7408
    %8501 = vmatpush.bf16.msra.mxu0 %v7407
    %8502 = vmatpush.bf16.msra.mxu0 %v7406
    %8503 = vmatpush.bf16.msra.mxu0 %v7405
    %8504 = vmatpush.bf16.msra.mxu0 %v7404
    %8505 = vmatmul.bf16.gmra.mxu0 %v5641
    %v8506 = vpop.f32.mrf.mxu0
    %v8507 = vadd.f32 %v8338, %v8506
    %v8508 = vpop.f32.mrf.mxu0
    %v8509 = vadd.f32 %v8340, %v8508
    %8510 = vmatmul.bf16.gmra.mxu0 %v5659
    %v8511 = vpop.f32.mrf.mxu0
    %v8512 = vadd.f32 %v8343, %v8511
    %v8513 = vpop.f32.mrf.mxu0
    %v8514 = vadd.f32 %v8345, %v8513
    %8515 = vmatmul.bf16.gmra.mxu0 %v5677
    %v8516 = vpop.f32.mrf.mxu0
    %v8517 = vadd.f32 %v8348, %v8516
    %v8518 = vpop.f32.mrf.mxu0
    %v8519 = vadd.f32 %v8350, %v8518
    %8520 = vmatmul.bf16.gmra.mxu0 %v5695
    %v8521 = vpop.f32.mrf.mxu0
    %v8522 = vadd.f32 %v8353, %v8521
    %v8523 = vpop.f32.mrf.mxu0
    %v8524 = vadd.f32 %v8355, %v8523
    %8525 = vmatmul.bf16.gmra.mxu0 %v5713
    %v8526 = vpop.f32.mrf.mxu0
    %v8527 = vadd.f32 %v8358, %v8526
    %v8528 = vpop.f32.mrf.mxu0
    %v8529 = vadd.f32 %v8360, %v8528
    %8530 = vmatmul.bf16.gmra.mxu0 %v5731
    %v8531 = vpop.f32.mrf.mxu0
    %v8532 = vadd.f32 %v8363, %v8531
    %v8533 = vpop.f32.mrf.mxu0
    %v8534 = vadd.f32 %v8365, %v8533
    %8535 = vmatmul.bf16.gmra.mxu0 %v5749
    %v8536 = vpop.f32.mrf.mxu0
    %v8537 = vadd.f32 %v8368, %v8536
    %v8538 = vpop.f32.mrf.mxu0
    %v8539 = vadd.f32 %v8370, %v8538
    %8540 = vmatmul.bf16.gmra.mxu0 %v5767
    %v8541 = vpop.f32.mrf.mxu0
    %v8542 = vadd.f32 %v8373, %v8541
    %v8543 = vpop.f32.mrf.mxu0
    %v8544 = vadd.f32 %v8375, %v8543
    %8545 = vmatmul.bf16.gmra.mxu0 %v5785
    %v8546 = vpop.f32.mrf.mxu0
    %v8547 = vadd.f32 %v8378, %v8546
    %v8548 = vpop.f32.mrf.mxu0
    %v8549 = vadd.f32 %v8380, %v8548
    %8550 = vmatmul.bf16.gmra.mxu0 %v5803
    %v8551 = vpop.f32.mrf.mxu0
    %v8552 = vadd.f32 %v8383, %v8551
    %v8553 = vpop.f32.mrf.mxu0
    %v8554 = vadd.f32 %v8385, %v8553
    %8555 = vmatmul.bf16.gmra.mxu0 %v5821
    %v8556 = vpop.f32.mrf.mxu0
    %v8557 = vadd.f32 %v8388, %v8556
    %v8558 = vpop.f32.mrf.mxu0
    %v8559 = vadd.f32 %v8390, %v8558
    %8560 = vmatmul.bf16.gmra.mxu0 %v5839
    %v8561 = vpop.f32.mrf.mxu0
    %v8562 = vadd.f32 %v8393, %v8561
    %v8563 = vpop.f32.mrf.mxu0
    %v8564 = vadd.f32 %v8395, %v8563
    %8565 = vmatmul.bf16.gmra.mxu0 %v5857
    %v8566 = vpop.f32.mrf.mxu0
    %v8567 = vadd.f32 %v8398, %v8566
    %v8568 = vpop.f32.mrf.mxu0
    %v8569 = vadd.f32 %v8400, %v8568
    %8570 = vmatmul.bf16.gmra.mxu0 %v5875
    %v8571 = vpop.f32.mrf.mxu0
    %v8572 = vadd.f32 %v8403, %v8571
    %v8573 = vpop.f32.mrf.mxu0
    %v8574 = vadd.f32 %v8405, %v8573
    %8575 = vmatmul.bf16.gmra.mxu0 %v5893
    %v8576 = vpop.f32.mrf.mxu0
    %v8577 = vadd.f32 %v8408, %v8576
    %v8578 = vpop.f32.mrf.mxu0
    %v8579 = vadd.f32 %v8410, %v8578
    %8580 = vmatmul.bf16.gmra.mxu0 %v5911
    %v8581 = vpop.f32.mrf.mxu0
    %v8582 = vadd.f32 %v8413, %v8581
    %v8583 = vpop.f32.mrf.mxu0
    %v8584 = vadd.f32 %v8415, %v8583
    %8585 = vmatmul.bf16.gmra.mxu0 %v5929
    %v8586 = vpop.f32.mrf.mxu0
    %v8587 = vadd.f32 %v8418, %v8586
    %v8588 = vpop.f32.mrf.mxu0
    %v8589 = vadd.f32 %v8420, %v8588
    %8590 = vmatmul.bf16.gmra.mxu0 %v5947
    %v8591 = vpop.f32.mrf.mxu0
    %v8592 = vadd.f32 %v8423, %v8591
    %v8593 = vpop.f32.mrf.mxu0
    %v8594 = vadd.f32 %v8425, %v8593
    %8595 = vmatmul.bf16.gmra.mxu0 %v5965
    %v8596 = vpop.f32.mrf.mxu0
    %v8597 = vadd.f32 %v8428, %v8596
    %v8598 = vpop.f32.mrf.mxu0
    %v8599 = vadd.f32 %v8430, %v8598
    %8600 = vmatmul.bf16.gmra.mxu0 %v5983
    %v8601 = vpop.f32.mrf.mxu0
    %v8602 = vadd.f32 %v8433, %v8601
    %v8603 = vpop.f32.mrf.mxu0
    %v8604 = vadd.f32 %v8435, %v8603
    %8605 = vmatmul.bf16.gmra.mxu0 %v6001
    %v8606 = vpop.f32.mrf.mxu0
    %v8607 = vadd.f32 %v8438, %v8606
    %v8608 = vpop.f32.mrf.mxu0
    %v8609 = vadd.f32 %v8440, %v8608
    %8610 = vmatmul.bf16.gmra.mxu0 %v6019
    %v8611 = vpop.f32.mrf.mxu0
    %v8612 = vadd.f32 %v8443, %v8611
    %v8613 = vpop.f32.mrf.mxu0
    %v8614 = vadd.f32 %v8445, %v8613
    %8615 = vmatmul.bf16.gmra.mxu0 %v6037
    %v8616 = vpop.f32.mrf.mxu0
    %v8617 = vadd.f32 %v8448, %v8616
    %v8618 = vpop.f32.mrf.mxu0
    %v8619 = vadd.f32 %v8450, %v8618
    %8620 = vmatmul.bf16.gmra.mxu0 %v6055
    %v8621 = vpop.f32.mrf.mxu0
    %v8622 = vadd.f32 %v8453, %v8621
    %v8623 = vpop.f32.mrf.mxu0
    %v8624 = vadd.f32 %v8455, %v8623
    %8625 = vmatmul.bf16.gmra.mxu0 %v6073
    %v8626 = vpop.f32.mrf.mxu0
    %v8627 = vadd.f32 %v8458, %v8626
    %v8628 = vpop.f32.mrf.mxu0
    %v8629 = vadd.f32 %v8460, %v8628
    %8630 = vmatmul.bf16.gmra.mxu0 %v6091
    %v8631 = vpop.f32.mrf.mxu0
    %v8632 = vadd.f32 %v8463, %v8631
    %v8633 = vpop.f32.mrf.mxu0
    %v8634 = vadd.f32 %v8465, %v8633
    %8635 = vmatmul.bf16.gmra.mxu0 %v6109
    %v8636 = vpop.f32.mrf.mxu0
    %v8637 = vadd.f32 %v8468, %v8636
    %v8638 = vpop.f32.mrf.mxu0
    %v8639 = vadd.f32 %v8470, %v8638
    %8640 = vmatmul.bf16.gmra.mxu0 %v6127
    %v8641 = vpop.f32.mrf.mxu0
    %v8642 = vadd.f32 %v8473, %v8641
    %v8643 = vpop.f32.mrf.mxu0
    %v8644 = vadd.f32 %v8475, %v8643
    %8645 = vmatmul.bf16.gmra.mxu0 %v6145
    %v8646 = vpop.f32.mrf.mxu0
    %v8647 = vadd.f32 %v8478, %v8646
    %v8648 = vpop.f32.mrf.mxu0
    %v8649 = vadd.f32 %v8480, %v8648
    %8650 = vmatmul.bf16.gmra.mxu0 %v6163
    %v8651 = vpop.f32.mrf.mxu0
    %v8652 = vadd.f32 %v8483, %v8651
    %v8653 = vpop.f32.mrf.mxu0
    %v8654 = vadd.f32 %v8485, %v8653
    %8655 = vmatmul.bf16.gmra.mxu0 %v6181
    %v8656 = vpop.f32.mrf.mxu0
    %v8657 = vadd.f32 %v8488, %v8656
    %v8658 = vpop.f32.mrf.mxu0
    %v8659 = vadd.f32 %v8490, %v8658
    %8660 = vmatmul.bf16.gmra.mxu0 %v6199
    %v8661 = vpop.f32.mrf.mxu0
    %v8662 = vadd.f32 %v8493, %v8661
    %v8663 = vpop.f32.mrf.mxu0
    %v8664 = vadd.f32 %v8495, %v8663
    %8665 = vdwg.mxu0
    %8666 = vmatpush.bf16.msra.mxu0 %v7419
    %8667 = vmatpush.bf16.msra.mxu0 %v7418
    %8668 = vmatpush.bf16.msra.mxu0 %v7417
    %8669 = vmatpush.bf16.msra.mxu0 %v7416
    %8670 = vmatpush.bf16.msra.mxu0 %v7415
    %8671 = vmatpush.bf16.msra.mxu0 %v7414
    %8672 = vmatpush.bf16.msra.mxu0 %v7413
    %8673 = vmatpush.bf16.msra.mxu0 %v7412
    %8674 = vmatmul.bf16.gmra.mxu0 %v5642
    %v8675 = vpop.f32.mrf.mxu0
    %v8676 = vadd.f32 %v8507, %v8675
    %v8677 = vpop.f32.mrf.mxu0
    %v8678 = vadd.f32 %v8509, %v8677
    %8679 = vmatmul.bf16.gmra.mxu0 %v5660
    %v8680 = vpop.f32.mrf.mxu0
    %v8681 = vadd.f32 %v8512, %v8680
    %v8682 = vpop.f32.mrf.mxu0
    %v8683 = vadd.f32 %v8514, %v8682
    %8684 = vmatmul.bf16.gmra.mxu0 %v5678
    %v8685 = vpop.f32.mrf.mxu0
    %v8686 = vadd.f32 %v8517, %v8685
    %v8687 = vpop.f32.mrf.mxu0
    %v8688 = vadd.f32 %v8519, %v8687
    %8689 = vmatmul.bf16.gmra.mxu0 %v5696
    %v8690 = vpop.f32.mrf.mxu0
    %v8691 = vadd.f32 %v8522, %v8690
    %v8692 = vpop.f32.mrf.mxu0
    %v8693 = vadd.f32 %v8524, %v8692
    %8694 = vmatmul.bf16.gmra.mxu0 %v5714
    %v8695 = vpop.f32.mrf.mxu0
    %v8696 = vadd.f32 %v8527, %v8695
    %v8697 = vpop.f32.mrf.mxu0
    %v8698 = vadd.f32 %v8529, %v8697
    %8699 = vmatmul.bf16.gmra.mxu0 %v5732
    %v8700 = vpop.f32.mrf.mxu0
    %v8701 = vadd.f32 %v8532, %v8700
    %v8702 = vpop.f32.mrf.mxu0
    %v8703 = vadd.f32 %v8534, %v8702
    %8704 = vmatmul.bf16.gmra.mxu0 %v5750
    %v8705 = vpop.f32.mrf.mxu0
    %v8706 = vadd.f32 %v8537, %v8705
    %v8707 = vpop.f32.mrf.mxu0
    %v8708 = vadd.f32 %v8539, %v8707
    %8709 = vmatmul.bf16.gmra.mxu0 %v5768
    %v8710 = vpop.f32.mrf.mxu0
    %v8711 = vadd.f32 %v8542, %v8710
    %v8712 = vpop.f32.mrf.mxu0
    %v8713 = vadd.f32 %v8544, %v8712
    %8714 = vmatmul.bf16.gmra.mxu0 %v5786
    %v8715 = vpop.f32.mrf.mxu0
    %v8716 = vadd.f32 %v8547, %v8715
    %v8717 = vpop.f32.mrf.mxu0
    %v8718 = vadd.f32 %v8549, %v8717
    %8719 = vmatmul.bf16.gmra.mxu0 %v5804
    %v8720 = vpop.f32.mrf.mxu0
    %v8721 = vadd.f32 %v8552, %v8720
    %v8722 = vpop.f32.mrf.mxu0
    %v8723 = vadd.f32 %v8554, %v8722
    %8724 = vmatmul.bf16.gmra.mxu0 %v5822
    %v8725 = vpop.f32.mrf.mxu0
    %v8726 = vadd.f32 %v8557, %v8725
    %v8727 = vpop.f32.mrf.mxu0
    %v8728 = vadd.f32 %v8559, %v8727
    %8729 = vmatmul.bf16.gmra.mxu0 %v5840
    %v8730 = vpop.f32.mrf.mxu0
    %v8731 = vadd.f32 %v8562, %v8730
    %v8732 = vpop.f32.mrf.mxu0
    %v8733 = vadd.f32 %v8564, %v8732
    %8734 = vmatmul.bf16.gmra.mxu0 %v5858
    %v8735 = vpop.f32.mrf.mxu0
    %v8736 = vadd.f32 %v8567, %v8735
    %v8737 = vpop.f32.mrf.mxu0
    %v8738 = vadd.f32 %v8569, %v8737
    %8739 = vmatmul.bf16.gmra.mxu0 %v5876
    %v8740 = vpop.f32.mrf.mxu0
    %v8741 = vadd.f32 %v8572, %v8740
    %v8742 = vpop.f32.mrf.mxu0
    %v8743 = vadd.f32 %v8574, %v8742
    %8744 = vmatmul.bf16.gmra.mxu0 %v5894
    %v8745 = vpop.f32.mrf.mxu0
    %v8746 = vadd.f32 %v8577, %v8745
    %v8747 = vpop.f32.mrf.mxu0
    %v8748 = vadd.f32 %v8579, %v8747
    %8749 = vmatmul.bf16.gmra.mxu0 %v5912
    %v8750 = vpop.f32.mrf.mxu0
    %v8751 = vadd.f32 %v8582, %v8750
    %v8752 = vpop.f32.mrf.mxu0
    %v8753 = vadd.f32 %v8584, %v8752
    %8754 = vmatmul.bf16.gmra.mxu0 %v5930
    %v8755 = vpop.f32.mrf.mxu0
    %v8756 = vadd.f32 %v8587, %v8755
    %v8757 = vpop.f32.mrf.mxu0
    %v8758 = vadd.f32 %v8589, %v8757
    %8759 = vmatmul.bf16.gmra.mxu0 %v5948
    %v8760 = vpop.f32.mrf.mxu0
    %v8761 = vadd.f32 %v8592, %v8760
    %v8762 = vpop.f32.mrf.mxu0
    %v8763 = vadd.f32 %v8594, %v8762
    %8764 = vmatmul.bf16.gmra.mxu0 %v5966
    %v8765 = vpop.f32.mrf.mxu0
    %v8766 = vadd.f32 %v8597, %v8765
    %v8767 = vpop.f32.mrf.mxu0
    %v8768 = vadd.f32 %v8599, %v8767
    %8769 = vmatmul.bf16.gmra.mxu0 %v5984
    %v8770 = vpop.f32.mrf.mxu0
    %v8771 = vadd.f32 %v8602, %v8770
    %v8772 = vpop.f32.mrf.mxu0
    %v8773 = vadd.f32 %v8604, %v8772
    %8774 = vmatmul.bf16.gmra.mxu0 %v6002
    %v8775 = vpop.f32.mrf.mxu0
    %v8776 = vadd.f32 %v8607, %v8775
    %v8777 = vpop.f32.mrf.mxu0
    %v8778 = vadd.f32 %v8609, %v8777
    %8779 = vmatmul.bf16.gmra.mxu0 %v6020
    %v8780 = vpop.f32.mrf.mxu0
    %v8781 = vadd.f32 %v8612, %v8780
    %v8782 = vpop.f32.mrf.mxu0
    %v8783 = vadd.f32 %v8614, %v8782
    %8784 = vmatmul.bf16.gmra.mxu0 %v6038
    %v8785 = vpop.f32.mrf.mxu0
    %v8786 = vadd.f32 %v8617, %v8785
    %v8787 = vpop.f32.mrf.mxu0
    %v8788 = vadd.f32 %v8619, %v8787
    %8789 = vmatmul.bf16.gmra.mxu0 %v6056
    %v8790 = vpop.f32.mrf.mxu0
    %v8791 = vadd.f32 %v8622, %v8790
    %v8792 = vpop.f32.mrf.mxu0
    %v8793 = vadd.f32 %v8624, %v8792
    %8794 = vmatmul.bf16.gmra.mxu0 %v6074
    %v8795 = vpop.f32.mrf.mxu0
    %v8796 = vadd.f32 %v8627, %v8795
    %v8797 = vpop.f32.mrf.mxu0
    %v8798 = vadd.f32 %v8629, %v8797
    %8799 = vmatmul.bf16.gmra.mxu0 %v6092
    %v8800 = vpop.f32.mrf.mxu0
    %v8801 = vadd.f32 %v8632, %v8800
    %v8802 = vpop.f32.mrf.mxu0
    %v8803 = vadd.f32 %v8634, %v8802
    %8804 = vmatmul.bf16.gmra.mxu0 %v6110
    %v8805 = vpop.f32.mrf.mxu0
    %v8806 = vadd.f32 %v8637, %v8805
    %v8807 = vpop.f32.mrf.mxu0
    %v8808 = vadd.f32 %v8639, %v8807
    %8809 = vmatmul.bf16.gmra.mxu0 %v6128
    %v8810 = vpop.f32.mrf.mxu0
    %v8811 = vadd.f32 %v8642, %v8810
    %v8812 = vpop.f32.mrf.mxu0
    %v8813 = vadd.f32 %v8644, %v8812
    %8814 = vmatmul.bf16.gmra.mxu0 %v6146
    %v8815 = vpop.f32.mrf.mxu0
    %v8816 = vadd.f32 %v8647, %v8815
    %v8817 = vpop.f32.mrf.mxu0
    %v8818 = vadd.f32 %v8649, %v8817
    %8819 = vmatmul.bf16.gmra.mxu0 %v6164
    %v8820 = vpop.f32.mrf.mxu0
    %v8821 = vadd.f32 %v8652, %v8820
    %v8822 = vpop.f32.mrf.mxu0
    %v8823 = vadd.f32 %v8654, %v8822
    %8824 = vmatmul.bf16.gmra.mxu0 %v6182
    %v8825 = vpop.f32.mrf.mxu0
    %v8826 = vadd.f32 %v8657, %v8825
    %v8827 = vpop.f32.mrf.mxu0
    %v8828 = vadd.f32 %v8659, %v8827
    %8829 = vmatmul.bf16.gmra.mxu0 %v6200
    %v8830 = vpop.f32.mrf.mxu0
    %v8831 = vadd.f32 %v8662, %v8830
    %v8832 = vpop.f32.mrf.mxu0
    %v8833 = vadd.f32 %v8664, %v8832
    %8834 = vdwg.mxu0
    %8835 = vmatpush.bf16.msra.mxu0 %v7427
    %8836 = vmatpush.bf16.msra.mxu0 %v7426
    %8837 = vmatpush.bf16.msra.mxu0 %v7425
    %8838 = vmatpush.bf16.msra.mxu0 %v7424
    %8839 = vmatpush.bf16.msra.mxu0 %v7423
    %8840 = vmatpush.bf16.msra.mxu0 %v7422
    %8841 = vmatpush.bf16.msra.mxu0 %v7421
    %8842 = vmatpush.bf16.msra.mxu0 %v7420
    %8843 = vmatmul.bf16.gmra.mxu0 %v5643
    %v8844 = vpop.f32.mrf.mxu0
    %v8845 = vadd.f32 %v8676, %v8844
    %v8846 = vpop.f32.mrf.mxu0
    %v8847 = vadd.f32 %v8678, %v8846
    %8848 = vmatmul.bf16.gmra.mxu0 %v5661
    %v8849 = vpop.f32.mrf.mxu0
    %v8850 = vadd.f32 %v8681, %v8849
    %v8851 = vpop.f32.mrf.mxu0
    %v8852 = vadd.f32 %v8683, %v8851
    %8853 = vmatmul.bf16.gmra.mxu0 %v5679
    %v8854 = vpop.f32.mrf.mxu0
    %v8855 = vadd.f32 %v8686, %v8854
    %v8856 = vpop.f32.mrf.mxu0
    %v8857 = vadd.f32 %v8688, %v8856
    %8858 = vmatmul.bf16.gmra.mxu0 %v5697
    %v8859 = vpop.f32.mrf.mxu0
    %v8860 = vadd.f32 %v8691, %v8859
    %v8861 = vpop.f32.mrf.mxu0
    %v8862 = vadd.f32 %v8693, %v8861
    %8863 = vmatmul.bf16.gmra.mxu0 %v5715
    %v8864 = vpop.f32.mrf.mxu0
    %v8865 = vadd.f32 %v8696, %v8864
    %v8866 = vpop.f32.mrf.mxu0
    %v8867 = vadd.f32 %v8698, %v8866
    %8868 = vmatmul.bf16.gmra.mxu0 %v5733
    %v8869 = vpop.f32.mrf.mxu0
    %v8870 = vadd.f32 %v8701, %v8869
    %v8871 = vpop.f32.mrf.mxu0
    %v8872 = vadd.f32 %v8703, %v8871
    %8873 = vmatmul.bf16.gmra.mxu0 %v5751
    %v8874 = vpop.f32.mrf.mxu0
    %v8875 = vadd.f32 %v8706, %v8874
    %v8876 = vpop.f32.mrf.mxu0
    %v8877 = vadd.f32 %v8708, %v8876
    %8878 = vmatmul.bf16.gmra.mxu0 %v5769
    %v8879 = vpop.f32.mrf.mxu0
    %v8880 = vadd.f32 %v8711, %v8879
    %v8881 = vpop.f32.mrf.mxu0
    %v8882 = vadd.f32 %v8713, %v8881
    %8883 = vmatmul.bf16.gmra.mxu0 %v5787
    %v8884 = vpop.f32.mrf.mxu0
    %v8885 = vadd.f32 %v8716, %v8884
    %v8886 = vpop.f32.mrf.mxu0
    %v8887 = vadd.f32 %v8718, %v8886
    %8888 = vmatmul.bf16.gmra.mxu0 %v5805
    %v8889 = vpop.f32.mrf.mxu0
    %v8890 = vadd.f32 %v8721, %v8889
    %v8891 = vpop.f32.mrf.mxu0
    %v8892 = vadd.f32 %v8723, %v8891
    %8893 = vmatmul.bf16.gmra.mxu0 %v5823
    %v8894 = vpop.f32.mrf.mxu0
    %v8895 = vadd.f32 %v8726, %v8894
    %v8896 = vpop.f32.mrf.mxu0
    %v8897 = vadd.f32 %v8728, %v8896
    %8898 = vmatmul.bf16.gmra.mxu0 %v5841
    %v8899 = vpop.f32.mrf.mxu0
    %v8900 = vadd.f32 %v8731, %v8899
    %v8901 = vpop.f32.mrf.mxu0
    %v8902 = vadd.f32 %v8733, %v8901
    %8903 = vmatmul.bf16.gmra.mxu0 %v5859
    %v8904 = vpop.f32.mrf.mxu0
    %v8905 = vadd.f32 %v8736, %v8904
    %v8906 = vpop.f32.mrf.mxu0
    %v8907 = vadd.f32 %v8738, %v8906
    %8908 = vmatmul.bf16.gmra.mxu0 %v5877
    %v8909 = vpop.f32.mrf.mxu0
    %v8910 = vadd.f32 %v8741, %v8909
    %v8911 = vpop.f32.mrf.mxu0
    %v8912 = vadd.f32 %v8743, %v8911
    %8913 = vmatmul.bf16.gmra.mxu0 %v5895
    %v8914 = vpop.f32.mrf.mxu0
    %v8915 = vadd.f32 %v8746, %v8914
    %v8916 = vpop.f32.mrf.mxu0
    %v8917 = vadd.f32 %v8748, %v8916
    %8918 = vmatmul.bf16.gmra.mxu0 %v5913
    %v8919 = vpop.f32.mrf.mxu0
    %v8920 = vadd.f32 %v8751, %v8919
    %v8921 = vpop.f32.mrf.mxu0
    %v8922 = vadd.f32 %v8753, %v8921
    %8923 = vmatmul.bf16.gmra.mxu0 %v5931
    %v8924 = vpop.f32.mrf.mxu0
    %v8925 = vadd.f32 %v8756, %v8924
    %v8926 = vpop.f32.mrf.mxu0
    %v8927 = vadd.f32 %v8758, %v8926
    %8928 = vmatmul.bf16.gmra.mxu0 %v5949
    %v8929 = vpop.f32.mrf.mxu0
    %v8930 = vadd.f32 %v8761, %v8929
    %v8931 = vpop.f32.mrf.mxu0
    %v8932 = vadd.f32 %v8763, %v8931
    %8933 = vmatmul.bf16.gmra.mxu0 %v5967
    %v8934 = vpop.f32.mrf.mxu0
    %v8935 = vadd.f32 %v8766, %v8934
    %v8936 = vpop.f32.mrf.mxu0
    %v8937 = vadd.f32 %v8768, %v8936
    %8938 = vmatmul.bf16.gmra.mxu0 %v5985
    %v8939 = vpop.f32.mrf.mxu0
    %v8940 = vadd.f32 %v8771, %v8939
    %v8941 = vpop.f32.mrf.mxu0
    %v8942 = vadd.f32 %v8773, %v8941
    %8943 = vmatmul.bf16.gmra.mxu0 %v6003
    %v8944 = vpop.f32.mrf.mxu0
    %v8945 = vadd.f32 %v8776, %v8944
    %v8946 = vpop.f32.mrf.mxu0
    %v8947 = vadd.f32 %v8778, %v8946
    %8948 = vmatmul.bf16.gmra.mxu0 %v6021
    %v8949 = vpop.f32.mrf.mxu0
    %v8950 = vadd.f32 %v8781, %v8949
    %v8951 = vpop.f32.mrf.mxu0
    %v8952 = vadd.f32 %v8783, %v8951
    %8953 = vmatmul.bf16.gmra.mxu0 %v6039
    %v8954 = vpop.f32.mrf.mxu0
    %v8955 = vadd.f32 %v8786, %v8954
    %v8956 = vpop.f32.mrf.mxu0
    %v8957 = vadd.f32 %v8788, %v8956
    %8958 = vmatmul.bf16.gmra.mxu0 %v6057
    %v8959 = vpop.f32.mrf.mxu0
    %v8960 = vadd.f32 %v8791, %v8959
    %v8961 = vpop.f32.mrf.mxu0
    %v8962 = vadd.f32 %v8793, %v8961
    %8963 = vmatmul.bf16.gmra.mxu0 %v6075
    %v8964 = vpop.f32.mrf.mxu0
    %v8965 = vadd.f32 %v8796, %v8964
    %v8966 = vpop.f32.mrf.mxu0
    %v8967 = vadd.f32 %v8798, %v8966
    %8968 = vmatmul.bf16.gmra.mxu0 %v6093
    %v8969 = vpop.f32.mrf.mxu0
    %v8970 = vadd.f32 %v8801, %v8969
    %v8971 = vpop.f32.mrf.mxu0
    %v8972 = vadd.f32 %v8803, %v8971
    %8973 = vmatmul.bf16.gmra.mxu0 %v6111
    %v8974 = vpop.f32.mrf.mxu0
    %v8975 = vadd.f32 %v8806, %v8974
    %v8976 = vpop.f32.mrf.mxu0
    %v8977 = vadd.f32 %v8808, %v8976
    %8978 = vmatmul.bf16.gmra.mxu0 %v6129
    %v8979 = vpop.f32.mrf.mxu0
    %v8980 = vadd.f32 %v8811, %v8979
    %v8981 = vpop.f32.mrf.mxu0
    %v8982 = vadd.f32 %v8813, %v8981
    %8983 = vmatmul.bf16.gmra.mxu0 %v6147
    %v8984 = vpop.f32.mrf.mxu0
    %v8985 = vadd.f32 %v8816, %v8984
    %v8986 = vpop.f32.mrf.mxu0
    %v8987 = vadd.f32 %v8818, %v8986
    %8988 = vmatmul.bf16.gmra.mxu0 %v6165
    %v8989 = vpop.f32.mrf.mxu0
    %v8990 = vadd.f32 %v8821, %v8989
    %v8991 = vpop.f32.mrf.mxu0
    %v8992 = vadd.f32 %v8823, %v8991
    %8993 = vmatmul.bf16.gmra.mxu0 %v6183
    %v8994 = vpop.f32.mrf.mxu0
    %v8995 = vadd.f32 %v8826, %v8994
    %v8996 = vpop.f32.mrf.mxu0
    %v8997 = vadd.f32 %v8828, %v8996
    %8998 = vmatmul.bf16.gmra.mxu0 %v6201
    %v8999 = vpop.f32.mrf.mxu0
    %v9000 = vadd.f32 %v8831, %v8999
    %v9001 = vpop.f32.mrf.mxu0
    %v9002 = vadd.f32 %v8833, %v9001
    %9003 = vdwg.mxu0
    %9004 = vmatpush.bf16.msra.mxu0 %v7435
    %9005 = vmatpush.bf16.msra.mxu0 %v7434
    %9006 = vmatpush.bf16.msra.mxu0 %v7433
    %9007 = vmatpush.bf16.msra.mxu0 %v7432
    %9008 = vmatpush.bf16.msra.mxu0 %v7431
    %9009 = vmatpush.bf16.msra.mxu0 %v7430
    %9010 = vmatpush.bf16.msra.mxu0 %v7429
    %9011 = vmatpush.bf16.msra.mxu0 %v7428
    %9012 = vmatmul.bf16.gmra.mxu0 %v5644
    %v9013 = vpop.f32.mrf.mxu0
    %v9014 = vadd.f32 %v8845, %v9013
    %v9015 = vpop.f32.mrf.mxu0
    %v9016 = vadd.f32 %v8847, %v9015
    %9017 = vmatmul.bf16.gmra.mxu0 %v5662
    %v9018 = vpop.f32.mrf.mxu0
    %v9019 = vadd.f32 %v8850, %v9018
    %v9020 = vpop.f32.mrf.mxu0
    %v9021 = vadd.f32 %v8852, %v9020
    %9022 = vmatmul.bf16.gmra.mxu0 %v5680
    %v9023 = vpop.f32.mrf.mxu0
    %v9024 = vadd.f32 %v8855, %v9023
    %v9025 = vpop.f32.mrf.mxu0
    %v9026 = vadd.f32 %v8857, %v9025
    %9027 = vmatmul.bf16.gmra.mxu0 %v5698
    %v9028 = vpop.f32.mrf.mxu0
    %v9029 = vadd.f32 %v8860, %v9028
    %v9030 = vpop.f32.mrf.mxu0
    %v9031 = vadd.f32 %v8862, %v9030
    %9032 = vmatmul.bf16.gmra.mxu0 %v5716
    %v9033 = vpop.f32.mrf.mxu0
    %v9034 = vadd.f32 %v8865, %v9033
    %v9035 = vpop.f32.mrf.mxu0
    %v9036 = vadd.f32 %v8867, %v9035
    %9037 = vmatmul.bf16.gmra.mxu0 %v5734
    %v9038 = vpop.f32.mrf.mxu0
    %v9039 = vadd.f32 %v8870, %v9038
    %v9040 = vpop.f32.mrf.mxu0
    %v9041 = vadd.f32 %v8872, %v9040
    %9042 = vmatmul.bf16.gmra.mxu0 %v5752
    %v9043 = vpop.f32.mrf.mxu0
    %v9044 = vadd.f32 %v8875, %v9043
    %v9045 = vpop.f32.mrf.mxu0
    %v9046 = vadd.f32 %v8877, %v9045
    %9047 = vmatmul.bf16.gmra.mxu0 %v5770
    %v9048 = vpop.f32.mrf.mxu0
    %v9049 = vadd.f32 %v8880, %v9048
    %v9050 = vpop.f32.mrf.mxu0
    %v9051 = vadd.f32 %v8882, %v9050
    %9052 = vmatmul.bf16.gmra.mxu0 %v5788
    %v9053 = vpop.f32.mrf.mxu0
    %v9054 = vadd.f32 %v8885, %v9053
    %v9055 = vpop.f32.mrf.mxu0
    %v9056 = vadd.f32 %v8887, %v9055
    %9057 = vmatmul.bf16.gmra.mxu0 %v5806
    %v9058 = vpop.f32.mrf.mxu0
    %v9059 = vadd.f32 %v8890, %v9058
    %v9060 = vpop.f32.mrf.mxu0
    %v9061 = vadd.f32 %v8892, %v9060
    %9062 = vmatmul.bf16.gmra.mxu0 %v5824
    %v9063 = vpop.f32.mrf.mxu0
    %v9064 = vadd.f32 %v8895, %v9063
    %v9065 = vpop.f32.mrf.mxu0
    %v9066 = vadd.f32 %v8897, %v9065
    %9067 = vmatmul.bf16.gmra.mxu0 %v5842
    %v9068 = vpop.f32.mrf.mxu0
    %v9069 = vadd.f32 %v8900, %v9068
    %v9070 = vpop.f32.mrf.mxu0
    %v9071 = vadd.f32 %v8902, %v9070
    %9072 = vmatmul.bf16.gmra.mxu0 %v5860
    %v9073 = vpop.f32.mrf.mxu0
    %v9074 = vadd.f32 %v8905, %v9073
    %v9075 = vpop.f32.mrf.mxu0
    %v9076 = vadd.f32 %v8907, %v9075
    %9077 = vmatmul.bf16.gmra.mxu0 %v5878
    %v9078 = vpop.f32.mrf.mxu0
    %v9079 = vadd.f32 %v8910, %v9078
    %v9080 = vpop.f32.mrf.mxu0
    %v9081 = vadd.f32 %v8912, %v9080
    %9082 = vmatmul.bf16.gmra.mxu0 %v5896
    %v9083 = vpop.f32.mrf.mxu0
    %v9084 = vadd.f32 %v8915, %v9083
    %v9085 = vpop.f32.mrf.mxu0
    %v9086 = vadd.f32 %v8917, %v9085
    %9087 = vmatmul.bf16.gmra.mxu0 %v5914
    %v9088 = vpop.f32.mrf.mxu0
    %v9089 = vadd.f32 %v8920, %v9088
    %v9090 = vpop.f32.mrf.mxu0
    %v9091 = vadd.f32 %v8922, %v9090
    %9092 = vmatmul.bf16.gmra.mxu0 %v5932
    %v9093 = vpop.f32.mrf.mxu0
    %v9094 = vadd.f32 %v8925, %v9093
    %v9095 = vpop.f32.mrf.mxu0
    %v9096 = vadd.f32 %v8927, %v9095
    %9097 = vmatmul.bf16.gmra.mxu0 %v5950
    %v9098 = vpop.f32.mrf.mxu0
    %v9099 = vadd.f32 %v8930, %v9098
    %v9100 = vpop.f32.mrf.mxu0
    %v9101 = vadd.f32 %v8932, %v9100
    %9102 = vmatmul.bf16.gmra.mxu0 %v5968
    %v9103 = vpop.f32.mrf.mxu0
    %v9104 = vadd.f32 %v8935, %v9103
    %v9105 = vpop.f32.mrf.mxu0
    %v9106 = vadd.f32 %v8937, %v9105
    %9107 = vmatmul.bf16.gmra.mxu0 %v5986
    %v9108 = vpop.f32.mrf.mxu0
    %v9109 = vadd.f32 %v8940, %v9108
    %v9110 = vpop.f32.mrf.mxu0
    %v9111 = vadd.f32 %v8942, %v9110
    %9112 = vmatmul.bf16.gmra.mxu0 %v6004
    %v9113 = vpop.f32.mrf.mxu0
    %v9114 = vadd.f32 %v8945, %v9113
    %v9115 = vpop.f32.mrf.mxu0
    %v9116 = vadd.f32 %v8947, %v9115
    %9117 = vmatmul.bf16.gmra.mxu0 %v6022
    %v9118 = vpop.f32.mrf.mxu0
    %v9119 = vadd.f32 %v8950, %v9118
    %v9120 = vpop.f32.mrf.mxu0
    %v9121 = vadd.f32 %v8952, %v9120
    %9122 = vmatmul.bf16.gmra.mxu0 %v6040
    %v9123 = vpop.f32.mrf.mxu0
    %v9124 = vadd.f32 %v8955, %v9123
    %v9125 = vpop.f32.mrf.mxu0
    %v9126 = vadd.f32 %v8957, %v9125
    %9127 = vmatmul.bf16.gmra.mxu0 %v6058
    %v9128 = vpop.f32.mrf.mxu0
    %v9129 = vadd.f32 %v8960, %v9128
    %v9130 = vpop.f32.mrf.mxu0
    %v9131 = vadd.f32 %v8962, %v9130
    %9132 = vmatmul.bf16.gmra.mxu0 %v6076
    %v9133 = vpop.f32.mrf.mxu0
    %v9134 = vadd.f32 %v8965, %v9133
    %v9135 = vpop.f32.mrf.mxu0
    %v9136 = vadd.f32 %v8967, %v9135
    %9137 = vmatmul.bf16.gmra.mxu0 %v6094
    %v9138 = vpop.f32.mrf.mxu0
    %v9139 = vadd.f32 %v8970, %v9138
    %v9140 = vpop.f32.mrf.mxu0
    %v9141 = vadd.f32 %v8972, %v9140
    %9142 = vmatmul.bf16.gmra.mxu0 %v6112
    %v9143 = vpop.f32.mrf.mxu0
    %v9144 = vadd.f32 %v8975, %v9143
    %v9145 = vpop.f32.mrf.mxu0
    %v9146 = vadd.f32 %v8977, %v9145
    %9147 = vmatmul.bf16.gmra.mxu0 %v6130
    %v9148 = vpop.f32.mrf.mxu0
    %v9149 = vadd.f32 %v8980, %v9148
    %v9150 = vpop.f32.mrf.mxu0
    %v9151 = vadd.f32 %v8982, %v9150
    %9152 = vmatmul.bf16.gmra.mxu0 %v6148
    %v9153 = vpop.f32.mrf.mxu0
    %v9154 = vadd.f32 %v8985, %v9153
    %v9155 = vpop.f32.mrf.mxu0
    %v9156 = vadd.f32 %v8987, %v9155
    %9157 = vmatmul.bf16.gmra.mxu0 %v6166
    %v9158 = vpop.f32.mrf.mxu0
    %v9159 = vadd.f32 %v8990, %v9158
    %v9160 = vpop.f32.mrf.mxu0
    %v9161 = vadd.f32 %v8992, %v9160
    %9162 = vmatmul.bf16.gmra.mxu0 %v6184
    %v9163 = vpop.f32.mrf.mxu0
    %v9164 = vadd.f32 %v8995, %v9163
    %v9165 = vpop.f32.mrf.mxu0
    %v9166 = vadd.f32 %v8997, %v9165
    %9167 = vmatmul.bf16.gmra.mxu0 %v6202
    %v9168 = vpop.f32.mrf.mxu0
    %v9169 = vadd.f32 %v9000, %v9168
    %v9170 = vpop.f32.mrf.mxu0
    %v9171 = vadd.f32 %v9002, %v9170
    %9172 = vdwg.mxu0
    %9173 = vmatpush.bf16.msra.mxu0 %v7443
    %9174 = vmatpush.bf16.msra.mxu0 %v7442
    %9175 = vmatpush.bf16.msra.mxu0 %v7441
    %9176 = vmatpush.bf16.msra.mxu0 %v7440
    %9177 = vmatpush.bf16.msra.mxu0 %v7439
    %9178 = vmatpush.bf16.msra.mxu0 %v7438
    %9179 = vmatpush.bf16.msra.mxu0 %v7437
    %9180 = vmatpush.bf16.msra.mxu0 %v7436
    %9181 = vmatmul.bf16.gmra.mxu0 %v5645
    %v9182 = vpop.f32.mrf.mxu0
    %v9183 = vadd.f32 %v9014, %v9182
    %v9184 = vpop.f32.mrf.mxu0
    %v9185 = vadd.f32 %v9016, %v9184
    %9186 = vmatmul.bf16.gmra.mxu0 %v5663
    %v9187 = vpop.f32.mrf.mxu0
    %v9188 = vadd.f32 %v9019, %v9187
    %v9189 = vpop.f32.mrf.mxu0
    %v9190 = vadd.f32 %v9021, %v9189
    %9191 = vmatmul.bf16.gmra.mxu0 %v5681
    %v9192 = vpop.f32.mrf.mxu0
    %v9193 = vadd.f32 %v9024, %v9192
    %v9194 = vpop.f32.mrf.mxu0
    %v9195 = vadd.f32 %v9026, %v9194
    %9196 = vmatmul.bf16.gmra.mxu0 %v5699
    %v9197 = vpop.f32.mrf.mxu0
    %v9198 = vadd.f32 %v9029, %v9197
    %v9199 = vpop.f32.mrf.mxu0
    %v9200 = vadd.f32 %v9031, %v9199
    %9201 = vmatmul.bf16.gmra.mxu0 %v5717
    %v9202 = vpop.f32.mrf.mxu0
    %v9203 = vadd.f32 %v9034, %v9202
    %v9204 = vpop.f32.mrf.mxu0
    %v9205 = vadd.f32 %v9036, %v9204
    %9206 = vmatmul.bf16.gmra.mxu0 %v5735
    %v9207 = vpop.f32.mrf.mxu0
    %v9208 = vadd.f32 %v9039, %v9207
    %v9209 = vpop.f32.mrf.mxu0
    %v9210 = vadd.f32 %v9041, %v9209
    %9211 = vmatmul.bf16.gmra.mxu0 %v5753
    %v9212 = vpop.f32.mrf.mxu0
    %v9213 = vadd.f32 %v9044, %v9212
    %v9214 = vpop.f32.mrf.mxu0
    %v9215 = vadd.f32 %v9046, %v9214
    %9216 = vmatmul.bf16.gmra.mxu0 %v5771
    %v9217 = vpop.f32.mrf.mxu0
    %v9218 = vadd.f32 %v9049, %v9217
    %v9219 = vpop.f32.mrf.mxu0
    %v9220 = vadd.f32 %v9051, %v9219
    %9221 = vmatmul.bf16.gmra.mxu0 %v5789
    %v9222 = vpop.f32.mrf.mxu0
    %v9223 = vadd.f32 %v9054, %v9222
    %v9224 = vpop.f32.mrf.mxu0
    %v9225 = vadd.f32 %v9056, %v9224
    %9226 = vmatmul.bf16.gmra.mxu0 %v5807
    %v9227 = vpop.f32.mrf.mxu0
    %v9228 = vadd.f32 %v9059, %v9227
    %v9229 = vpop.f32.mrf.mxu0
    %v9230 = vadd.f32 %v9061, %v9229
    %9231 = vmatmul.bf16.gmra.mxu0 %v5825
    %v9232 = vpop.f32.mrf.mxu0
    %v9233 = vadd.f32 %v9064, %v9232
    %v9234 = vpop.f32.mrf.mxu0
    %v9235 = vadd.f32 %v9066, %v9234
    %9236 = vmatmul.bf16.gmra.mxu0 %v5843
    %v9237 = vpop.f32.mrf.mxu0
    %v9238 = vadd.f32 %v9069, %v9237
    %v9239 = vpop.f32.mrf.mxu0
    %v9240 = vadd.f32 %v9071, %v9239
    %9241 = vmatmul.bf16.gmra.mxu0 %v5861
    %v9242 = vpop.f32.mrf.mxu0
    %v9243 = vadd.f32 %v9074, %v9242
    %v9244 = vpop.f32.mrf.mxu0
    %v9245 = vadd.f32 %v9076, %v9244
    %9246 = vmatmul.bf16.gmra.mxu0 %v5879
    %v9247 = vpop.f32.mrf.mxu0
    %v9248 = vadd.f32 %v9079, %v9247
    %v9249 = vpop.f32.mrf.mxu0
    %v9250 = vadd.f32 %v9081, %v9249
    %9251 = vmatmul.bf16.gmra.mxu0 %v5897
    %v9252 = vpop.f32.mrf.mxu0
    %v9253 = vadd.f32 %v9084, %v9252
    %v9254 = vpop.f32.mrf.mxu0
    %v9255 = vadd.f32 %v9086, %v9254
    %9256 = vmatmul.bf16.gmra.mxu0 %v5915
    %v9257 = vpop.f32.mrf.mxu0
    %v9258 = vadd.f32 %v9089, %v9257
    %v9259 = vpop.f32.mrf.mxu0
    %v9260 = vadd.f32 %v9091, %v9259
    %9261 = vmatmul.bf16.gmra.mxu0 %v5933
    %v9262 = vpop.f32.mrf.mxu0
    %v9263 = vadd.f32 %v9094, %v9262
    %v9264 = vpop.f32.mrf.mxu0
    %v9265 = vadd.f32 %v9096, %v9264
    %9266 = vmatmul.bf16.gmra.mxu0 %v5951
    %v9267 = vpop.f32.mrf.mxu0
    %v9268 = vadd.f32 %v9099, %v9267
    %v9269 = vpop.f32.mrf.mxu0
    %v9270 = vadd.f32 %v9101, %v9269
    %9271 = vmatmul.bf16.gmra.mxu0 %v5969
    %v9272 = vpop.f32.mrf.mxu0
    %v9273 = vadd.f32 %v9104, %v9272
    %v9274 = vpop.f32.mrf.mxu0
    %v9275 = vadd.f32 %v9106, %v9274
    %9276 = vmatmul.bf16.gmra.mxu0 %v5987
    %v9277 = vpop.f32.mrf.mxu0
    %v9278 = vadd.f32 %v9109, %v9277
    %v9279 = vpop.f32.mrf.mxu0
    %v9280 = vadd.f32 %v9111, %v9279
    %9281 = vmatmul.bf16.gmra.mxu0 %v6005
    %v9282 = vpop.f32.mrf.mxu0
    %v9283 = vadd.f32 %v9114, %v9282
    %v9284 = vpop.f32.mrf.mxu0
    %v9285 = vadd.f32 %v9116, %v9284
    %9286 = vmatmul.bf16.gmra.mxu0 %v6023
    %v9287 = vpop.f32.mrf.mxu0
    %v9288 = vadd.f32 %v9119, %v9287
    %v9289 = vpop.f32.mrf.mxu0
    %v9290 = vadd.f32 %v9121, %v9289
    %9291 = vmatmul.bf16.gmra.mxu0 %v6041
    %v9292 = vpop.f32.mrf.mxu0
    %v9293 = vadd.f32 %v9124, %v9292
    %v9294 = vpop.f32.mrf.mxu0
    %v9295 = vadd.f32 %v9126, %v9294
    %9296 = vmatmul.bf16.gmra.mxu0 %v6059
    %v9297 = vpop.f32.mrf.mxu0
    %v9298 = vadd.f32 %v9129, %v9297
    %v9299 = vpop.f32.mrf.mxu0
    %v9300 = vadd.f32 %v9131, %v9299
    %9301 = vmatmul.bf16.gmra.mxu0 %v6077
    %v9302 = vpop.f32.mrf.mxu0
    %v9303 = vadd.f32 %v9134, %v9302
    %v9304 = vpop.f32.mrf.mxu0
    %v9305 = vadd.f32 %v9136, %v9304
    %9306 = vmatmul.bf16.gmra.mxu0 %v6095
    %v9307 = vpop.f32.mrf.mxu0
    %v9308 = vadd.f32 %v9139, %v9307
    %v9309 = vpop.f32.mrf.mxu0
    %v9310 = vadd.f32 %v9141, %v9309
    %9311 = vmatmul.bf16.gmra.mxu0 %v6113
    %v9312 = vpop.f32.mrf.mxu0
    %v9313 = vadd.f32 %v9144, %v9312
    %v9314 = vpop.f32.mrf.mxu0
    %v9315 = vadd.f32 %v9146, %v9314
    %9316 = vmatmul.bf16.gmra.mxu0 %v6131
    %v9317 = vpop.f32.mrf.mxu0
    %v9318 = vadd.f32 %v9149, %v9317
    %v9319 = vpop.f32.mrf.mxu0
    %v9320 = vadd.f32 %v9151, %v9319
    %9321 = vmatmul.bf16.gmra.mxu0 %v6149
    %v9322 = vpop.f32.mrf.mxu0
    %v9323 = vadd.f32 %v9154, %v9322
    %v9324 = vpop.f32.mrf.mxu0
    %v9325 = vadd.f32 %v9156, %v9324
    %9326 = vmatmul.bf16.gmra.mxu0 %v6167
    %v9327 = vpop.f32.mrf.mxu0
    %v9328 = vadd.f32 %v9159, %v9327
    %v9329 = vpop.f32.mrf.mxu0
    %v9330 = vadd.f32 %v9161, %v9329
    %9331 = vmatmul.bf16.gmra.mxu0 %v6185
    %v9332 = vpop.f32.mrf.mxu0
    %v9333 = vadd.f32 %v9164, %v9332
    %v9334 = vpop.f32.mrf.mxu0
    %v9335 = vadd.f32 %v9166, %v9334
    %9336 = vmatmul.bf16.gmra.mxu0 %v6203
    %v9337 = vpop.f32.mrf.mxu0
    %v9338 = vadd.f32 %v9169, %v9337
    %v9339 = vpop.f32.mrf.mxu0
    %v9340 = vadd.f32 %v9171, %v9339
    %9341 = vdwg.mxu0
    %9342 = vmatpush.bf16.msra.mxu0 %v7451
    %9343 = vmatpush.bf16.msra.mxu0 %v7450
    %9344 = vmatpush.bf16.msra.mxu0 %v7449
    %9345 = vmatpush.bf16.msra.mxu0 %v7448
    %9346 = vmatpush.bf16.msra.mxu0 %v7447
    %9347 = vmatpush.bf16.msra.mxu0 %v7446
    %9348 = vmatpush.bf16.msra.mxu0 %v7445
    %9349 = vmatpush.bf16.msra.mxu0 %v7444
    %9350 = vmatmul.bf16.gmra.mxu0 %v5646
    %v9351 = vpop.f32.mrf.mxu0
    %v9352 = vadd.f32 %v9183, %v9351
    %v9353 = vpop.f32.mrf.mxu0
    %v9354 = vadd.f32 %v9185, %v9353
    %9355 = vmatmul.bf16.gmra.mxu0 %v5664
    %v9356 = vpop.f32.mrf.mxu0
    %v9357 = vadd.f32 %v9188, %v9356
    %v9358 = vpop.f32.mrf.mxu0
    %v9359 = vadd.f32 %v9190, %v9358
    %9360 = vmatmul.bf16.gmra.mxu0 %v5682
    %v9361 = vpop.f32.mrf.mxu0
    %v9362 = vadd.f32 %v9193, %v9361
    %v9363 = vpop.f32.mrf.mxu0
    %v9364 = vadd.f32 %v9195, %v9363
    %9365 = vmatmul.bf16.gmra.mxu0 %v5700
    %v9366 = vpop.f32.mrf.mxu0
    %v9367 = vadd.f32 %v9198, %v9366
    %v9368 = vpop.f32.mrf.mxu0
    %v9369 = vadd.f32 %v9200, %v9368
    %9370 = vmatmul.bf16.gmra.mxu0 %v5718
    %v9371 = vpop.f32.mrf.mxu0
    %v9372 = vadd.f32 %v9203, %v9371
    %v9373 = vpop.f32.mrf.mxu0
    %v9374 = vadd.f32 %v9205, %v9373
    %9375 = vmatmul.bf16.gmra.mxu0 %v5736
    %v9376 = vpop.f32.mrf.mxu0
    %v9377 = vadd.f32 %v9208, %v9376
    %v9378 = vpop.f32.mrf.mxu0
    %v9379 = vadd.f32 %v9210, %v9378
    %9380 = vmatmul.bf16.gmra.mxu0 %v5754
    %v9381 = vpop.f32.mrf.mxu0
    %v9382 = vadd.f32 %v9213, %v9381
    %v9383 = vpop.f32.mrf.mxu0
    %v9384 = vadd.f32 %v9215, %v9383
    %9385 = vmatmul.bf16.gmra.mxu0 %v5772
    %v9386 = vpop.f32.mrf.mxu0
    %v9387 = vadd.f32 %v9218, %v9386
    %v9388 = vpop.f32.mrf.mxu0
    %v9389 = vadd.f32 %v9220, %v9388
    %9390 = vmatmul.bf16.gmra.mxu0 %v5790
    %v9391 = vpop.f32.mrf.mxu0
    %v9392 = vadd.f32 %v9223, %v9391
    %v9393 = vpop.f32.mrf.mxu0
    %v9394 = vadd.f32 %v9225, %v9393
    %9395 = vmatmul.bf16.gmra.mxu0 %v5808
    %v9396 = vpop.f32.mrf.mxu0
    %v9397 = vadd.f32 %v9228, %v9396
    %v9398 = vpop.f32.mrf.mxu0
    %v9399 = vadd.f32 %v9230, %v9398
    %9400 = vmatmul.bf16.gmra.mxu0 %v5826
    %v9401 = vpop.f32.mrf.mxu0
    %v9402 = vadd.f32 %v9233, %v9401
    %v9403 = vpop.f32.mrf.mxu0
    %v9404 = vadd.f32 %v9235, %v9403
    %9405 = vmatmul.bf16.gmra.mxu0 %v5844
    %v9406 = vpop.f32.mrf.mxu0
    %v9407 = vadd.f32 %v9238, %v9406
    %v9408 = vpop.f32.mrf.mxu0
    %v9409 = vadd.f32 %v9240, %v9408
    %9410 = vmatmul.bf16.gmra.mxu0 %v5862
    %v9411 = vpop.f32.mrf.mxu0
    %v9412 = vadd.f32 %v9243, %v9411
    %v9413 = vpop.f32.mrf.mxu0
    %v9414 = vadd.f32 %v9245, %v9413
    %9415 = vmatmul.bf16.gmra.mxu0 %v5880
    %v9416 = vpop.f32.mrf.mxu0
    %v9417 = vadd.f32 %v9248, %v9416
    %v9418 = vpop.f32.mrf.mxu0
    %v9419 = vadd.f32 %v9250, %v9418
    %9420 = vmatmul.bf16.gmra.mxu0 %v5898
    %v9421 = vpop.f32.mrf.mxu0
    %v9422 = vadd.f32 %v9253, %v9421
    %v9423 = vpop.f32.mrf.mxu0
    %v9424 = vadd.f32 %v9255, %v9423
    %9425 = vmatmul.bf16.gmra.mxu0 %v5916
    %v9426 = vpop.f32.mrf.mxu0
    %v9427 = vadd.f32 %v9258, %v9426
    %v9428 = vpop.f32.mrf.mxu0
    %v9429 = vadd.f32 %v9260, %v9428
    %9430 = vmatmul.bf16.gmra.mxu0 %v5934
    %v9431 = vpop.f32.mrf.mxu0
    %v9432 = vadd.f32 %v9263, %v9431
    %v9433 = vpop.f32.mrf.mxu0
    %v9434 = vadd.f32 %v9265, %v9433
    %9435 = vmatmul.bf16.gmra.mxu0 %v5952
    %v9436 = vpop.f32.mrf.mxu0
    %v9437 = vadd.f32 %v9268, %v9436
    %v9438 = vpop.f32.mrf.mxu0
    %v9439 = vadd.f32 %v9270, %v9438
    %9440 = vmatmul.bf16.gmra.mxu0 %v5970
    %v9441 = vpop.f32.mrf.mxu0
    %v9442 = vadd.f32 %v9273, %v9441
    %v9443 = vpop.f32.mrf.mxu0
    %v9444 = vadd.f32 %v9275, %v9443
    %9445 = vmatmul.bf16.gmra.mxu0 %v5988
    %v9446 = vpop.f32.mrf.mxu0
    %v9447 = vadd.f32 %v9278, %v9446
    %v9448 = vpop.f32.mrf.mxu0
    %v9449 = vadd.f32 %v9280, %v9448
    %9450 = vmatmul.bf16.gmra.mxu0 %v6006
    %v9451 = vpop.f32.mrf.mxu0
    %v9452 = vadd.f32 %v9283, %v9451
    %v9453 = vpop.f32.mrf.mxu0
    %v9454 = vadd.f32 %v9285, %v9453
    %9455 = vmatmul.bf16.gmra.mxu0 %v6024
    %v9456 = vpop.f32.mrf.mxu0
    %v9457 = vadd.f32 %v9288, %v9456
    %v9458 = vpop.f32.mrf.mxu0
    %v9459 = vadd.f32 %v9290, %v9458
    %9460 = vmatmul.bf16.gmra.mxu0 %v6042
    %v9461 = vpop.f32.mrf.mxu0
    %v9462 = vadd.f32 %v9293, %v9461
    %v9463 = vpop.f32.mrf.mxu0
    %v9464 = vadd.f32 %v9295, %v9463
    %9465 = vmatmul.bf16.gmra.mxu0 %v6060
    %v9466 = vpop.f32.mrf.mxu0
    %v9467 = vadd.f32 %v9298, %v9466
    %v9468 = vpop.f32.mrf.mxu0
    %v9469 = vadd.f32 %v9300, %v9468
    %9470 = vmatmul.bf16.gmra.mxu0 %v6078
    %v9471 = vpop.f32.mrf.mxu0
    %v9472 = vadd.f32 %v9303, %v9471
    %v9473 = vpop.f32.mrf.mxu0
    %v9474 = vadd.f32 %v9305, %v9473
    %9475 = vmatmul.bf16.gmra.mxu0 %v6096
    %v9476 = vpop.f32.mrf.mxu0
    %v9477 = vadd.f32 %v9308, %v9476
    %v9478 = vpop.f32.mrf.mxu0
    %v9479 = vadd.f32 %v9310, %v9478
    %9480 = vmatmul.bf16.gmra.mxu0 %v6114
    %v9481 = vpop.f32.mrf.mxu0
    %v9482 = vadd.f32 %v9313, %v9481
    %v9483 = vpop.f32.mrf.mxu0
    %v9484 = vadd.f32 %v9315, %v9483
    %9485 = vmatmul.bf16.gmra.mxu0 %v6132
    %v9486 = vpop.f32.mrf.mxu0
    %v9487 = vadd.f32 %v9318, %v9486
    %v9488 = vpop.f32.mrf.mxu0
    %v9489 = vadd.f32 %v9320, %v9488
    %9490 = vmatmul.bf16.gmra.mxu0 %v6150
    %v9491 = vpop.f32.mrf.mxu0
    %v9492 = vadd.f32 %v9323, %v9491
    %v9493 = vpop.f32.mrf.mxu0
    %v9494 = vadd.f32 %v9325, %v9493
    %9495 = vmatmul.bf16.gmra.mxu0 %v6168
    %v9496 = vpop.f32.mrf.mxu0
    %v9497 = vadd.f32 %v9328, %v9496
    %v9498 = vpop.f32.mrf.mxu0
    %v9499 = vadd.f32 %v9330, %v9498
    %9500 = vmatmul.bf16.gmra.mxu0 %v6186
    %v9501 = vpop.f32.mrf.mxu0
    %v9502 = vadd.f32 %v9333, %v9501
    %v9503 = vpop.f32.mrf.mxu0
    %v9504 = vadd.f32 %v9335, %v9503
    %9505 = vmatmul.bf16.gmra.mxu0 %v6204
    %v9506 = vpop.f32.mrf.mxu0
    %v9507 = vadd.f32 %v9338, %v9506
    %v9508 = vpop.f32.mrf.mxu0
    %v9509 = vadd.f32 %v9340, %v9508
    %9510 = vdwg.mxu0
    %9511 = vmatpush.bf16.msra.mxu0 %v7459
    %9512 = vmatpush.bf16.msra.mxu0 %v7458
    %9513 = vmatpush.bf16.msra.mxu0 %v7457
    %9514 = vmatpush.bf16.msra.mxu0 %v7456
    %9515 = vmatpush.bf16.msra.mxu0 %v7455
    %9516 = vmatpush.bf16.msra.mxu0 %v7454
    %9517 = vmatpush.bf16.msra.mxu0 %v7453
    %9518 = vmatpush.bf16.msra.mxu0 %v7452
    %9519 = vmatmul.bf16.gmra.mxu0 %v5647
    %v9520 = vpop.f32.mrf.mxu0
    %v9521 = vadd.f32 %v9352, %v9520
    %v9522 = vpop.f32.mrf.mxu0
    %v9523 = vadd.f32 %v9354, %v9522
    %9524 = vmatmul.bf16.gmra.mxu0 %v5665
    %v9525 = vpop.f32.mrf.mxu0
    %v9526 = vadd.f32 %v9357, %v9525
    %v9527 = vpop.f32.mrf.mxu0
    %v9528 = vadd.f32 %v9359, %v9527
    %9529 = vmatmul.bf16.gmra.mxu0 %v5683
    %v9530 = vpop.f32.mrf.mxu0
    %v9531 = vadd.f32 %v9362, %v9530
    %v9532 = vpop.f32.mrf.mxu0
    %v9533 = vadd.f32 %v9364, %v9532
    %9534 = vmatmul.bf16.gmra.mxu0 %v5701
    %v9535 = vpop.f32.mrf.mxu0
    %v9536 = vadd.f32 %v9367, %v9535
    %v9537 = vpop.f32.mrf.mxu0
    %v9538 = vadd.f32 %v9369, %v9537
    %9539 = vmatmul.bf16.gmra.mxu0 %v5719
    %v9540 = vpop.f32.mrf.mxu0
    %v9541 = vadd.f32 %v9372, %v9540
    %v9542 = vpop.f32.mrf.mxu0
    %v9543 = vadd.f32 %v9374, %v9542
    %9544 = vmatmul.bf16.gmra.mxu0 %v5737
    %v9545 = vpop.f32.mrf.mxu0
    %v9546 = vadd.f32 %v9377, %v9545
    %v9547 = vpop.f32.mrf.mxu0
    %v9548 = vadd.f32 %v9379, %v9547
    %9549 = vmatmul.bf16.gmra.mxu0 %v5755
    %v9550 = vpop.f32.mrf.mxu0
    %v9551 = vadd.f32 %v9382, %v9550
    %v9552 = vpop.f32.mrf.mxu0
    %v9553 = vadd.f32 %v9384, %v9552
    %9554 = vmatmul.bf16.gmra.mxu0 %v5773
    %v9555 = vpop.f32.mrf.mxu0
    %v9556 = vadd.f32 %v9387, %v9555
    %v9557 = vpop.f32.mrf.mxu0
    %v9558 = vadd.f32 %v9389, %v9557
    %9559 = vmatmul.bf16.gmra.mxu0 %v5791
    %v9560 = vpop.f32.mrf.mxu0
    %v9561 = vadd.f32 %v9392, %v9560
    %v9562 = vpop.f32.mrf.mxu0
    %v9563 = vadd.f32 %v9394, %v9562
    %9564 = vmatmul.bf16.gmra.mxu0 %v5809
    %v9565 = vpop.f32.mrf.mxu0
    %v9566 = vadd.f32 %v9397, %v9565
    %v9567 = vpop.f32.mrf.mxu0
    %v9568 = vadd.f32 %v9399, %v9567
    %9569 = vmatmul.bf16.gmra.mxu0 %v5827
    %v9570 = vpop.f32.mrf.mxu0
    %v9571 = vadd.f32 %v9402, %v9570
    %v9572 = vpop.f32.mrf.mxu0
    %v9573 = vadd.f32 %v9404, %v9572
    %9574 = vmatmul.bf16.gmra.mxu0 %v5845
    %v9575 = vpop.f32.mrf.mxu0
    %v9576 = vadd.f32 %v9407, %v9575
    %v9577 = vpop.f32.mrf.mxu0
    %v9578 = vadd.f32 %v9409, %v9577
    %9579 = vmatmul.bf16.gmra.mxu0 %v5863
    %v9580 = vpop.f32.mrf.mxu0
    %v9581 = vadd.f32 %v9412, %v9580
    %v9582 = vpop.f32.mrf.mxu0
    %v9583 = vadd.f32 %v9414, %v9582
    %9584 = vmatmul.bf16.gmra.mxu0 %v5881
    %v9585 = vpop.f32.mrf.mxu0
    %v9586 = vadd.f32 %v9417, %v9585
    %v9587 = vpop.f32.mrf.mxu0
    %v9588 = vadd.f32 %v9419, %v9587
    %9589 = vmatmul.bf16.gmra.mxu0 %v5899
    %v9590 = vpop.f32.mrf.mxu0
    %v9591 = vadd.f32 %v9422, %v9590
    %v9592 = vpop.f32.mrf.mxu0
    %v9593 = vadd.f32 %v9424, %v9592
    %9594 = vmatmul.bf16.gmra.mxu0 %v5917
    %v9595 = vpop.f32.mrf.mxu0
    %v9596 = vadd.f32 %v9427, %v9595
    %v9597 = vpop.f32.mrf.mxu0
    %v9598 = vadd.f32 %v9429, %v9597
    %9599 = vmatmul.bf16.gmra.mxu0 %v5935
    %v9600 = vpop.f32.mrf.mxu0
    %v9601 = vadd.f32 %v9432, %v9600
    %v9602 = vpop.f32.mrf.mxu0
    %v9603 = vadd.f32 %v9434, %v9602
    %9604 = vmatmul.bf16.gmra.mxu0 %v5953
    %v9605 = vpop.f32.mrf.mxu0
    %v9606 = vadd.f32 %v9437, %v9605
    %v9607 = vpop.f32.mrf.mxu0
    %v9608 = vadd.f32 %v9439, %v9607
    %9609 = vmatmul.bf16.gmra.mxu0 %v5971
    %v9610 = vpop.f32.mrf.mxu0
    %v9611 = vadd.f32 %v9442, %v9610
    %v9612 = vpop.f32.mrf.mxu0
    %v9613 = vadd.f32 %v9444, %v9612
    %9614 = vmatmul.bf16.gmra.mxu0 %v5989
    %v9615 = vpop.f32.mrf.mxu0
    %v9616 = vadd.f32 %v9447, %v9615
    %v9617 = vpop.f32.mrf.mxu0
    %v9618 = vadd.f32 %v9449, %v9617
    %9619 = vmatmul.bf16.gmra.mxu0 %v6007
    %v9620 = vpop.f32.mrf.mxu0
    %v9621 = vadd.f32 %v9452, %v9620
    %v9622 = vpop.f32.mrf.mxu0
    %v9623 = vadd.f32 %v9454, %v9622
    %9624 = vmatmul.bf16.gmra.mxu0 %v6025
    %v9625 = vpop.f32.mrf.mxu0
    %v9626 = vadd.f32 %v9457, %v9625
    %v9627 = vpop.f32.mrf.mxu0
    %v9628 = vadd.f32 %v9459, %v9627
    %9629 = vmatmul.bf16.gmra.mxu0 %v6043
    %v9630 = vpop.f32.mrf.mxu0
    %v9631 = vadd.f32 %v9462, %v9630
    %v9632 = vpop.f32.mrf.mxu0
    %v9633 = vadd.f32 %v9464, %v9632
    %9634 = vmatmul.bf16.gmra.mxu0 %v6061
    %v9635 = vpop.f32.mrf.mxu0
    %v9636 = vadd.f32 %v9467, %v9635
    %v9637 = vpop.f32.mrf.mxu0
    %v9638 = vadd.f32 %v9469, %v9637
    %9639 = vmatmul.bf16.gmra.mxu0 %v6079
    %v9640 = vpop.f32.mrf.mxu0
    %v9641 = vadd.f32 %v9472, %v9640
    %v9642 = vpop.f32.mrf.mxu0
    %v9643 = vadd.f32 %v9474, %v9642
    %9644 = vmatmul.bf16.gmra.mxu0 %v6097
    %v9645 = vpop.f32.mrf.mxu0
    %v9646 = vadd.f32 %v9477, %v9645
    %v9647 = vpop.f32.mrf.mxu0
    %v9648 = vadd.f32 %v9479, %v9647
    %9649 = vmatmul.bf16.gmra.mxu0 %v6115
    %v9650 = vpop.f32.mrf.mxu0
    %v9651 = vadd.f32 %v9482, %v9650
    %v9652 = vpop.f32.mrf.mxu0
    %v9653 = vadd.f32 %v9484, %v9652
    %9654 = vmatmul.bf16.gmra.mxu0 %v6133
    %v9655 = vpop.f32.mrf.mxu0
    %v9656 = vadd.f32 %v9487, %v9655
    %v9657 = vpop.f32.mrf.mxu0
    %v9658 = vadd.f32 %v9489, %v9657
    %9659 = vmatmul.bf16.gmra.mxu0 %v6151
    %v9660 = vpop.f32.mrf.mxu0
    %v9661 = vadd.f32 %v9492, %v9660
    %v9662 = vpop.f32.mrf.mxu0
    %v9663 = vadd.f32 %v9494, %v9662
    %9664 = vmatmul.bf16.gmra.mxu0 %v6169
    %v9665 = vpop.f32.mrf.mxu0
    %v9666 = vadd.f32 %v9497, %v9665
    %v9667 = vpop.f32.mrf.mxu0
    %v9668 = vadd.f32 %v9499, %v9667
    %9669 = vmatmul.bf16.gmra.mxu0 %v6187
    %v9670 = vpop.f32.mrf.mxu0
    %v9671 = vadd.f32 %v9502, %v9670
    %v9672 = vpop.f32.mrf.mxu0
    %v9673 = vadd.f32 %v9504, %v9672
    %9674 = vmatmul.bf16.gmra.mxu0 %v6205
    %v9675 = vpop.f32.mrf.mxu0
    %v9676 = vadd.f32 %v9507, %v9675
    %v9677 = vpop.f32.mrf.mxu0
    %v9678 = vadd.f32 %v9509, %v9677
    %9679 = vdwg.mxu0
    %9680 = vmatpush.bf16.msra.mxu0 %v7467
    %9681 = vmatpush.bf16.msra.mxu0 %v7466
    %9682 = vmatpush.bf16.msra.mxu0 %v7465
    %9683 = vmatpush.bf16.msra.mxu0 %v7464
    %9684 = vmatpush.bf16.msra.mxu0 %v7463
    %9685 = vmatpush.bf16.msra.mxu0 %v7462
    %9686 = vmatpush.bf16.msra.mxu0 %v7461
    %9687 = vmatpush.bf16.msra.mxu0 %v7460
    %9688 = vmatmul.bf16.gmra.mxu0 %v5648
    %v9689 = vpop.f32.mrf.mxu0
    %v9690 = vadd.f32 %v9521, %v9689
    %v9691 = vpop.f32.mrf.mxu0
    %v9692 = vadd.f32 %v9523, %v9691
    %9693 = vmatmul.bf16.gmra.mxu0 %v5666
    %v9694 = vpop.f32.mrf.mxu0
    %v9695 = vadd.f32 %v9526, %v9694
    %v9696 = vpop.f32.mrf.mxu0
    %v9697 = vadd.f32 %v9528, %v9696
    %9698 = vmatmul.bf16.gmra.mxu0 %v5684
    %v9699 = vpop.f32.mrf.mxu0
    %v9700 = vadd.f32 %v9531, %v9699
    %v9701 = vpop.f32.mrf.mxu0
    %v9702 = vadd.f32 %v9533, %v9701
    %9703 = vmatmul.bf16.gmra.mxu0 %v5702
    %v9704 = vpop.f32.mrf.mxu0
    %v9705 = vadd.f32 %v9536, %v9704
    %v9706 = vpop.f32.mrf.mxu0
    %v9707 = vadd.f32 %v9538, %v9706
    %9708 = vmatmul.bf16.gmra.mxu0 %v5720
    %v9709 = vpop.f32.mrf.mxu0
    %v9710 = vadd.f32 %v9541, %v9709
    %v9711 = vpop.f32.mrf.mxu0
    %v9712 = vadd.f32 %v9543, %v9711
    %9713 = vmatmul.bf16.gmra.mxu0 %v5738
    %v9714 = vpop.f32.mrf.mxu0
    %v9715 = vadd.f32 %v9546, %v9714
    %v9716 = vpop.f32.mrf.mxu0
    %v9717 = vadd.f32 %v9548, %v9716
    %9718 = vmatmul.bf16.gmra.mxu0 %v5756
    %v9719 = vpop.f32.mrf.mxu0
    %v9720 = vadd.f32 %v9551, %v9719
    %v9721 = vpop.f32.mrf.mxu0
    %v9722 = vadd.f32 %v9553, %v9721
    %9723 = vmatmul.bf16.gmra.mxu0 %v5774
    %v9724 = vpop.f32.mrf.mxu0
    %v9725 = vadd.f32 %v9556, %v9724
    %v9726 = vpop.f32.mrf.mxu0
    %v9727 = vadd.f32 %v9558, %v9726
    %9728 = vmatmul.bf16.gmra.mxu0 %v5792
    %v9729 = vpop.f32.mrf.mxu0
    %v9730 = vadd.f32 %v9561, %v9729
    %v9731 = vpop.f32.mrf.mxu0
    %v9732 = vadd.f32 %v9563, %v9731
    %9733 = vmatmul.bf16.gmra.mxu0 %v5810
    %v9734 = vpop.f32.mrf.mxu0
    %v9735 = vadd.f32 %v9566, %v9734
    %v9736 = vpop.f32.mrf.mxu0
    %v9737 = vadd.f32 %v9568, %v9736
    %9738 = vmatmul.bf16.gmra.mxu0 %v5828
    %v9739 = vpop.f32.mrf.mxu0
    %v9740 = vadd.f32 %v9571, %v9739
    %v9741 = vpop.f32.mrf.mxu0
    %v9742 = vadd.f32 %v9573, %v9741
    %9743 = vmatmul.bf16.gmra.mxu0 %v5846
    %v9744 = vpop.f32.mrf.mxu0
    %v9745 = vadd.f32 %v9576, %v9744
    %v9746 = vpop.f32.mrf.mxu0
    %v9747 = vadd.f32 %v9578, %v9746
    %9748 = vmatmul.bf16.gmra.mxu0 %v5864
    %v9749 = vpop.f32.mrf.mxu0
    %v9750 = vadd.f32 %v9581, %v9749
    %v9751 = vpop.f32.mrf.mxu0
    %v9752 = vadd.f32 %v9583, %v9751
    %9753 = vmatmul.bf16.gmra.mxu0 %v5882
    %v9754 = vpop.f32.mrf.mxu0
    %v9755 = vadd.f32 %v9586, %v9754
    %v9756 = vpop.f32.mrf.mxu0
    %v9757 = vadd.f32 %v9588, %v9756
    %9758 = vmatmul.bf16.gmra.mxu0 %v5900
    %v9759 = vpop.f32.mrf.mxu0
    %v9760 = vadd.f32 %v9591, %v9759
    %v9761 = vpop.f32.mrf.mxu0
    %v9762 = vadd.f32 %v9593, %v9761
    %9763 = vmatmul.bf16.gmra.mxu0 %v5918
    %v9764 = vpop.f32.mrf.mxu0
    %v9765 = vadd.f32 %v9596, %v9764
    %v9766 = vpop.f32.mrf.mxu0
    %v9767 = vadd.f32 %v9598, %v9766
    %9768 = vmatmul.bf16.gmra.mxu0 %v5936
    %v9769 = vpop.f32.mrf.mxu0
    %v9770 = vadd.f32 %v9601, %v9769
    %v9771 = vpop.f32.mrf.mxu0
    %v9772 = vadd.f32 %v9603, %v9771
    %9773 = vmatmul.bf16.gmra.mxu0 %v5954
    %v9774 = vpop.f32.mrf.mxu0
    %v9775 = vadd.f32 %v9606, %v9774
    %v9776 = vpop.f32.mrf.mxu0
    %v9777 = vadd.f32 %v9608, %v9776
    %9778 = vmatmul.bf16.gmra.mxu0 %v5972
    %v9779 = vpop.f32.mrf.mxu0
    %v9780 = vadd.f32 %v9611, %v9779
    %v9781 = vpop.f32.mrf.mxu0
    %v9782 = vadd.f32 %v9613, %v9781
    %9783 = vmatmul.bf16.gmra.mxu0 %v5990
    %v9784 = vpop.f32.mrf.mxu0
    %v9785 = vadd.f32 %v9616, %v9784
    %v9786 = vpop.f32.mrf.mxu0
    %v9787 = vadd.f32 %v9618, %v9786
    %9788 = vmatmul.bf16.gmra.mxu0 %v6008
    %v9789 = vpop.f32.mrf.mxu0
    %v9790 = vadd.f32 %v9621, %v9789
    %v9791 = vpop.f32.mrf.mxu0
    %v9792 = vadd.f32 %v9623, %v9791
    %9793 = vmatmul.bf16.gmra.mxu0 %v6026
    %v9794 = vpop.f32.mrf.mxu0
    %v9795 = vadd.f32 %v9626, %v9794
    %v9796 = vpop.f32.mrf.mxu0
    %v9797 = vadd.f32 %v9628, %v9796
    %9798 = vmatmul.bf16.gmra.mxu0 %v6044
    %v9799 = vpop.f32.mrf.mxu0
    %v9800 = vadd.f32 %v9631, %v9799
    %v9801 = vpop.f32.mrf.mxu0
    %v9802 = vadd.f32 %v9633, %v9801
    %9803 = vmatmul.bf16.gmra.mxu0 %v6062
    %v9804 = vpop.f32.mrf.mxu0
    %v9805 = vadd.f32 %v9636, %v9804
    %v9806 = vpop.f32.mrf.mxu0
    %v9807 = vadd.f32 %v9638, %v9806
    %9808 = vmatmul.bf16.gmra.mxu0 %v6080
    %v9809 = vpop.f32.mrf.mxu0
    %v9810 = vadd.f32 %v9641, %v9809
    %v9811 = vpop.f32.mrf.mxu0
    %v9812 = vadd.f32 %v9643, %v9811
    %9813 = vmatmul.bf16.gmra.mxu0 %v6098
    %v9814 = vpop.f32.mrf.mxu0
    %v9815 = vadd.f32 %v9646, %v9814
    %v9816 = vpop.f32.mrf.mxu0
    %v9817 = vadd.f32 %v9648, %v9816
    %9818 = vmatmul.bf16.gmra.mxu0 %v6116
    %v9819 = vpop.f32.mrf.mxu0
    %v9820 = vadd.f32 %v9651, %v9819
    %v9821 = vpop.f32.mrf.mxu0
    %v9822 = vadd.f32 %v9653, %v9821
    %9823 = vmatmul.bf16.gmra.mxu0 %v6134
    %v9824 = vpop.f32.mrf.mxu0
    %v9825 = vadd.f32 %v9656, %v9824
    %v9826 = vpop.f32.mrf.mxu0
    %v9827 = vadd.f32 %v9658, %v9826
    %9828 = vmatmul.bf16.gmra.mxu0 %v6152
    %v9829 = vpop.f32.mrf.mxu0
    %v9830 = vadd.f32 %v9661, %v9829
    %v9831 = vpop.f32.mrf.mxu0
    %v9832 = vadd.f32 %v9663, %v9831
    %9833 = vmatmul.bf16.gmra.mxu0 %v6170
    %v9834 = vpop.f32.mrf.mxu0
    %v9835 = vadd.f32 %v9666, %v9834
    %v9836 = vpop.f32.mrf.mxu0
    %v9837 = vadd.f32 %v9668, %v9836
    %9838 = vmatmul.bf16.gmra.mxu0 %v6188
    %v9839 = vpop.f32.mrf.mxu0
    %v9840 = vadd.f32 %v9671, %v9839
    %v9841 = vpop.f32.mrf.mxu0
    %v9842 = vadd.f32 %v9673, %v9841
    %9843 = vmatmul.bf16.gmra.mxu0 %v6206
    %v9844 = vpop.f32.mrf.mxu0
    %v9845 = vadd.f32 %v9676, %v9844
    %v9846 = vpop.f32.mrf.mxu0
    %v9847 = vadd.f32 %v9678, %v9846
    %9848 = vdwg.mxu0
    %9849 = vmatpush.bf16.msra.mxu0 %v7475
    %9850 = vmatpush.bf16.msra.mxu0 %v7474
    %9851 = vmatpush.bf16.msra.mxu0 %v7473
    %9852 = vmatpush.bf16.msra.mxu0 %v7472
    %9853 = vmatpush.bf16.msra.mxu0 %v7471
    %9854 = vmatpush.bf16.msra.mxu0 %v7470
    %9855 = vmatpush.bf16.msra.mxu0 %v7469
    %9856 = vmatpush.bf16.msra.mxu0 %v7468
    %9857 = vmatmul.bf16.gmra.mxu0 %v5649
    %v9858 = vpop.f32.mrf.mxu0
    %v9859 = vadd.f32 %v9690, %v9858
    %v9860 = vpop.f32.mrf.mxu0
    %v9861 = vadd.f32 %v9692, %v9860
    %9862 = vmatmul.bf16.gmra.mxu0 %v5667
    %v9863 = vpop.f32.mrf.mxu0
    %v9864 = vadd.f32 %v9695, %v9863
    %v9865 = vpop.f32.mrf.mxu0
    %v9866 = vadd.f32 %v9697, %v9865
    %9867 = vmatmul.bf16.gmra.mxu0 %v5685
    %v9868 = vpop.f32.mrf.mxu0
    %v9869 = vadd.f32 %v9700, %v9868
    %v9870 = vpop.f32.mrf.mxu0
    %v9871 = vadd.f32 %v9702, %v9870
    %9872 = vmatmul.bf16.gmra.mxu0 %v5703
    %v9873 = vpop.f32.mrf.mxu0
    %v9874 = vadd.f32 %v9705, %v9873
    %v9875 = vpop.f32.mrf.mxu0
    %v9876 = vadd.f32 %v9707, %v9875
    %9877 = vmatmul.bf16.gmra.mxu0 %v5721
    %v9878 = vpop.f32.mrf.mxu0
    %v9879 = vadd.f32 %v9710, %v9878
    %v9880 = vpop.f32.mrf.mxu0
    %v9881 = vadd.f32 %v9712, %v9880
    %9882 = vmatmul.bf16.gmra.mxu0 %v5739
    %v9883 = vpop.f32.mrf.mxu0
    %v9884 = vadd.f32 %v9715, %v9883
    %v9885 = vpop.f32.mrf.mxu0
    %v9886 = vadd.f32 %v9717, %v9885
    %9887 = vmatmul.bf16.gmra.mxu0 %v5757
    %v9888 = vpop.f32.mrf.mxu0
    %v9889 = vadd.f32 %v9720, %v9888
    %v9890 = vpop.f32.mrf.mxu0
    %v9891 = vadd.f32 %v9722, %v9890
    %9892 = vmatmul.bf16.gmra.mxu0 %v5775
    %v9893 = vpop.f32.mrf.mxu0
    %v9894 = vadd.f32 %v9725, %v9893
    %v9895 = vpop.f32.mrf.mxu0
    %v9896 = vadd.f32 %v9727, %v9895
    %9897 = vmatmul.bf16.gmra.mxu0 %v5793
    %v9898 = vpop.f32.mrf.mxu0
    %v9899 = vadd.f32 %v9730, %v9898
    %v9900 = vpop.f32.mrf.mxu0
    %v9901 = vadd.f32 %v9732, %v9900
    %9902 = vmatmul.bf16.gmra.mxu0 %v5811
    %v9903 = vpop.f32.mrf.mxu0
    %v9904 = vadd.f32 %v9735, %v9903
    %v9905 = vpop.f32.mrf.mxu0
    %v9906 = vadd.f32 %v9737, %v9905
    %9907 = vmatmul.bf16.gmra.mxu0 %v5829
    %v9908 = vpop.f32.mrf.mxu0
    %v9909 = vadd.f32 %v9740, %v9908
    %v9910 = vpop.f32.mrf.mxu0
    %v9911 = vadd.f32 %v9742, %v9910
    %9912 = vmatmul.bf16.gmra.mxu0 %v5847
    %v9913 = vpop.f32.mrf.mxu0
    %v9914 = vadd.f32 %v9745, %v9913
    %v9915 = vpop.f32.mrf.mxu0
    %v9916 = vadd.f32 %v9747, %v9915
    %9917 = vmatmul.bf16.gmra.mxu0 %v5865
    %v9918 = vpop.f32.mrf.mxu0
    %v9919 = vadd.f32 %v9750, %v9918
    %v9920 = vpop.f32.mrf.mxu0
    %v9921 = vadd.f32 %v9752, %v9920
    %9922 = vmatmul.bf16.gmra.mxu0 %v5883
    %v9923 = vpop.f32.mrf.mxu0
    %v9924 = vadd.f32 %v9755, %v9923
    %v9925 = vpop.f32.mrf.mxu0
    %v9926 = vadd.f32 %v9757, %v9925
    %9927 = vmatmul.bf16.gmra.mxu0 %v5901
    %v9928 = vpop.f32.mrf.mxu0
    %v9929 = vadd.f32 %v9760, %v9928
    %v9930 = vpop.f32.mrf.mxu0
    %v9931 = vadd.f32 %v9762, %v9930
    %9932 = vmatmul.bf16.gmra.mxu0 %v5919
    %v9933 = vpop.f32.mrf.mxu0
    %v9934 = vadd.f32 %v9765, %v9933
    %v9935 = vpop.f32.mrf.mxu0
    %v9936 = vadd.f32 %v9767, %v9935
    %9937 = vmatmul.bf16.gmra.mxu0 %v5937
    %v9938 = vpop.f32.mrf.mxu0
    %v9939 = vadd.f32 %v9770, %v9938
    %v9940 = vpop.f32.mrf.mxu0
    %v9941 = vadd.f32 %v9772, %v9940
    %9942 = vmatmul.bf16.gmra.mxu0 %v5955
    %v9943 = vpop.f32.mrf.mxu0
    %v9944 = vadd.f32 %v9775, %v9943
    %v9945 = vpop.f32.mrf.mxu0
    %v9946 = vadd.f32 %v9777, %v9945
    %9947 = vmatmul.bf16.gmra.mxu0 %v5973
    %v9948 = vpop.f32.mrf.mxu0
    %v9949 = vadd.f32 %v9780, %v9948
    %v9950 = vpop.f32.mrf.mxu0
    %v9951 = vadd.f32 %v9782, %v9950
    %9952 = vmatmul.bf16.gmra.mxu0 %v5991
    %v9953 = vpop.f32.mrf.mxu0
    %v9954 = vadd.f32 %v9785, %v9953
    %v9955 = vpop.f32.mrf.mxu0
    %v9956 = vadd.f32 %v9787, %v9955
    %9957 = vmatmul.bf16.gmra.mxu0 %v6009
    %v9958 = vpop.f32.mrf.mxu0
    %v9959 = vadd.f32 %v9790, %v9958
    %v9960 = vpop.f32.mrf.mxu0
    %v9961 = vadd.f32 %v9792, %v9960
    %9962 = vmatmul.bf16.gmra.mxu0 %v6027
    %v9963 = vpop.f32.mrf.mxu0
    %v9964 = vadd.f32 %v9795, %v9963
    %v9965 = vpop.f32.mrf.mxu0
    %v9966 = vadd.f32 %v9797, %v9965
    %9967 = vmatmul.bf16.gmra.mxu0 %v6045
    %v9968 = vpop.f32.mrf.mxu0
    %v9969 = vadd.f32 %v9800, %v9968
    %v9970 = vpop.f32.mrf.mxu0
    %v9971 = vadd.f32 %v9802, %v9970
    %9972 = vmatmul.bf16.gmra.mxu0 %v6063
    %v9973 = vpop.f32.mrf.mxu0
    %v9974 = vadd.f32 %v9805, %v9973
    %v9975 = vpop.f32.mrf.mxu0
    %v9976 = vadd.f32 %v9807, %v9975
    %9977 = vmatmul.bf16.gmra.mxu0 %v6081
    %v9978 = vpop.f32.mrf.mxu0
    %v9979 = vadd.f32 %v9810, %v9978
    %v9980 = vpop.f32.mrf.mxu0
    %v9981 = vadd.f32 %v9812, %v9980
    %9982 = vmatmul.bf16.gmra.mxu0 %v6099
    %v9983 = vpop.f32.mrf.mxu0
    %v9984 = vadd.f32 %v9815, %v9983
    %v9985 = vpop.f32.mrf.mxu0
    %v9986 = vadd.f32 %v9817, %v9985
    %9987 = vmatmul.bf16.gmra.mxu0 %v6117
    %v9988 = vpop.f32.mrf.mxu0
    %v9989 = vadd.f32 %v9820, %v9988
    %v9990 = vpop.f32.mrf.mxu0
    %v9991 = vadd.f32 %v9822, %v9990
    %9992 = vmatmul.bf16.gmra.mxu0 %v6135
    %v9993 = vpop.f32.mrf.mxu0
    %v9994 = vadd.f32 %v9825, %v9993
    %v9995 = vpop.f32.mrf.mxu0
    %v9996 = vadd.f32 %v9827, %v9995
    %9997 = vmatmul.bf16.gmra.mxu0 %v6153
    %v9998 = vpop.f32.mrf.mxu0
    %v9999 = vadd.f32 %v9830, %v9998
    %v10000 = vpop.f32.mrf.mxu0
    %v10001 = vadd.f32 %v9832, %v10000
    %10002 = vmatmul.bf16.gmra.mxu0 %v6171
    %v10003 = vpop.f32.mrf.mxu0
    %v10004 = vadd.f32 %v9835, %v10003
    %v10005 = vpop.f32.mrf.mxu0
    %v10006 = vadd.f32 %v9837, %v10005
    %10007 = vmatmul.bf16.gmra.mxu0 %v6189
    %v10008 = vpop.f32.mrf.mxu0
    %v10009 = vadd.f32 %v9840, %v10008
    %v10010 = vpop.f32.mrf.mxu0
    %v10011 = vadd.f32 %v9842, %v10010
    %10012 = vmatmul.bf16.gmra.mxu0 %v6207
    %v10013 = vpop.f32.mrf.mxu0
    %v10014 = vadd.f32 %v9845, %v10013
    %v10015 = vpop.f32.mrf.mxu0
    %v10016 = vadd.f32 %v9847, %v10015
    %10017 = vdwg.mxu0
    %10018 = vmatpush.bf16.msra.mxu0 %v7483
    %10019 = vmatpush.bf16.msra.mxu0 %v7482
    %10020 = vmatpush.bf16.msra.mxu0 %v7481
    %10021 = vmatpush.bf16.msra.mxu0 %v7480
    %10022 = vmatpush.bf16.msra.mxu0 %v7479
    %10023 = vmatpush.bf16.msra.mxu0 %v7478
    %10024 = vmatpush.bf16.msra.mxu0 %v7477
    %10025 = vmatpush.bf16.msra.mxu0 %v7476
    %10026 = vmatmul.bf16.gmra.mxu0 %v5650
    %v10027 = vpop.f32.mrf.mxu0
    %v10028 = vadd.f32 %v9859, %v10027
    %v10029 = vpop.f32.mrf.mxu0
    %v10030 = vadd.f32 %v9861, %v10029
    %10031 = vmatmul.bf16.gmra.mxu0 %v5668
    %v10032 = vpop.f32.mrf.mxu0
    %v10033 = vadd.f32 %v9864, %v10032
    %v10034 = vpop.f32.mrf.mxu0
    %v10035 = vadd.f32 %v9866, %v10034
    %10036 = vmatmul.bf16.gmra.mxu0 %v5686
    %v10037 = vpop.f32.mrf.mxu0
    %v10038 = vadd.f32 %v9869, %v10037
    %v10039 = vpop.f32.mrf.mxu0
    %v10040 = vadd.f32 %v9871, %v10039
    %10041 = vmatmul.bf16.gmra.mxu0 %v5704
    %v10042 = vpop.f32.mrf.mxu0
    %v10043 = vadd.f32 %v9874, %v10042
    %v10044 = vpop.f32.mrf.mxu0
    %v10045 = vadd.f32 %v9876, %v10044
    %10046 = vmatmul.bf16.gmra.mxu0 %v5722
    %v10047 = vpop.f32.mrf.mxu0
    %v10048 = vadd.f32 %v9879, %v10047
    %v10049 = vpop.f32.mrf.mxu0
    %v10050 = vadd.f32 %v9881, %v10049
    %10051 = vmatmul.bf16.gmra.mxu0 %v5740
    %v10052 = vpop.f32.mrf.mxu0
    %v10053 = vadd.f32 %v9884, %v10052
    %v10054 = vpop.f32.mrf.mxu0
    %v10055 = vadd.f32 %v9886, %v10054
    %10056 = vmatmul.bf16.gmra.mxu0 %v5758
    %v10057 = vpop.f32.mrf.mxu0
    %v10058 = vadd.f32 %v9889, %v10057
    %v10059 = vpop.f32.mrf.mxu0
    %v10060 = vadd.f32 %v9891, %v10059
    %10061 = vmatmul.bf16.gmra.mxu0 %v5776
    %v10062 = vpop.f32.mrf.mxu0
    %v10063 = vadd.f32 %v9894, %v10062
    %v10064 = vpop.f32.mrf.mxu0
    %v10065 = vadd.f32 %v9896, %v10064
    %10066 = vmatmul.bf16.gmra.mxu0 %v5794
    %v10067 = vpop.f32.mrf.mxu0
    %v10068 = vadd.f32 %v9899, %v10067
    %v10069 = vpop.f32.mrf.mxu0
    %v10070 = vadd.f32 %v9901, %v10069
    %10071 = vmatmul.bf16.gmra.mxu0 %v5812
    %v10072 = vpop.f32.mrf.mxu0
    %v10073 = vadd.f32 %v9904, %v10072
    %v10074 = vpop.f32.mrf.mxu0
    %v10075 = vadd.f32 %v9906, %v10074
    %10076 = vmatmul.bf16.gmra.mxu0 %v5830
    %v10077 = vpop.f32.mrf.mxu0
    %v10078 = vadd.f32 %v9909, %v10077
    %v10079 = vpop.f32.mrf.mxu0
    %v10080 = vadd.f32 %v9911, %v10079
    %10081 = vmatmul.bf16.gmra.mxu0 %v5848
    %v10082 = vpop.f32.mrf.mxu0
    %v10083 = vadd.f32 %v9914, %v10082
    %v10084 = vpop.f32.mrf.mxu0
    %v10085 = vadd.f32 %v9916, %v10084
    %10086 = vmatmul.bf16.gmra.mxu0 %v5866
    %v10087 = vpop.f32.mrf.mxu0
    %v10088 = vadd.f32 %v9919, %v10087
    %v10089 = vpop.f32.mrf.mxu0
    %v10090 = vadd.f32 %v9921, %v10089
    %10091 = vmatmul.bf16.gmra.mxu0 %v5884
    %v10092 = vpop.f32.mrf.mxu0
    %v10093 = vadd.f32 %v9924, %v10092
    %v10094 = vpop.f32.mrf.mxu0
    %v10095 = vadd.f32 %v9926, %v10094
    %10096 = vmatmul.bf16.gmra.mxu0 %v5902
    %v10097 = vpop.f32.mrf.mxu0
    %v10098 = vadd.f32 %v9929, %v10097
    %v10099 = vpop.f32.mrf.mxu0
    %v10100 = vadd.f32 %v9931, %v10099
    %10101 = vmatmul.bf16.gmra.mxu0 %v5920
    %v10102 = vpop.f32.mrf.mxu0
    %v10103 = vadd.f32 %v9934, %v10102
    %v10104 = vpop.f32.mrf.mxu0
    %v10105 = vadd.f32 %v9936, %v10104
    %10106 = vmatmul.bf16.gmra.mxu0 %v5938
    %v10107 = vpop.f32.mrf.mxu0
    %v10108 = vadd.f32 %v9939, %v10107
    %v10109 = vpop.f32.mrf.mxu0
    %v10110 = vadd.f32 %v9941, %v10109
    %10111 = vmatmul.bf16.gmra.mxu0 %v5956
    %v10112 = vpop.f32.mrf.mxu0
    %v10113 = vadd.f32 %v9944, %v10112
    %v10114 = vpop.f32.mrf.mxu0
    %v10115 = vadd.f32 %v9946, %v10114
    %10116 = vmatmul.bf16.gmra.mxu0 %v5974
    %v10117 = vpop.f32.mrf.mxu0
    %v10118 = vadd.f32 %v9949, %v10117
    %v10119 = vpop.f32.mrf.mxu0
    %v10120 = vadd.f32 %v9951, %v10119
    %10121 = vmatmul.bf16.gmra.mxu0 %v5992
    %v10122 = vpop.f32.mrf.mxu0
    %v10123 = vadd.f32 %v9954, %v10122
    %v10124 = vpop.f32.mrf.mxu0
    %v10125 = vadd.f32 %v9956, %v10124
    %10126 = vmatmul.bf16.gmra.mxu0 %v6010
    %v10127 = vpop.f32.mrf.mxu0
    %v10128 = vadd.f32 %v9959, %v10127
    %v10129 = vpop.f32.mrf.mxu0
    %v10130 = vadd.f32 %v9961, %v10129
    %10131 = vmatmul.bf16.gmra.mxu0 %v6028
    %v10132 = vpop.f32.mrf.mxu0
    %v10133 = vadd.f32 %v9964, %v10132
    %v10134 = vpop.f32.mrf.mxu0
    %v10135 = vadd.f32 %v9966, %v10134
    %10136 = vmatmul.bf16.gmra.mxu0 %v6046
    %v10137 = vpop.f32.mrf.mxu0
    %v10138 = vadd.f32 %v9969, %v10137
    %v10139 = vpop.f32.mrf.mxu0
    %v10140 = vadd.f32 %v9971, %v10139
    %10141 = vmatmul.bf16.gmra.mxu0 %v6064
    %v10142 = vpop.f32.mrf.mxu0
    %v10143 = vadd.f32 %v9974, %v10142
    %v10144 = vpop.f32.mrf.mxu0
    %v10145 = vadd.f32 %v9976, %v10144
    %10146 = vmatmul.bf16.gmra.mxu0 %v6082
    %v10147 = vpop.f32.mrf.mxu0
    %v10148 = vadd.f32 %v9979, %v10147
    %v10149 = vpop.f32.mrf.mxu0
    %v10150 = vadd.f32 %v9981, %v10149
    %10151 = vmatmul.bf16.gmra.mxu0 %v6100
    %v10152 = vpop.f32.mrf.mxu0
    %v10153 = vadd.f32 %v9984, %v10152
    %v10154 = vpop.f32.mrf.mxu0
    %v10155 = vadd.f32 %v9986, %v10154
    %10156 = vmatmul.bf16.gmra.mxu0 %v6118
    %v10157 = vpop.f32.mrf.mxu0
    %v10158 = vadd.f32 %v9989, %v10157
    %v10159 = vpop.f32.mrf.mxu0
    %v10160 = vadd.f32 %v9991, %v10159
    %10161 = vmatmul.bf16.gmra.mxu0 %v6136
    %v10162 = vpop.f32.mrf.mxu0
    %v10163 = vadd.f32 %v9994, %v10162
    %v10164 = vpop.f32.mrf.mxu0
    %v10165 = vadd.f32 %v9996, %v10164
    %10166 = vmatmul.bf16.gmra.mxu0 %v6154
    %v10167 = vpop.f32.mrf.mxu0
    %v10168 = vadd.f32 %v9999, %v10167
    %v10169 = vpop.f32.mrf.mxu0
    %v10170 = vadd.f32 %v10001, %v10169
    %10171 = vmatmul.bf16.gmra.mxu0 %v6172
    %v10172 = vpop.f32.mrf.mxu0
    %v10173 = vadd.f32 %v10004, %v10172
    %v10174 = vpop.f32.mrf.mxu0
    %v10175 = vadd.f32 %v10006, %v10174
    %10176 = vmatmul.bf16.gmra.mxu0 %v6190
    %v10177 = vpop.f32.mrf.mxu0
    %v10178 = vadd.f32 %v10009, %v10177
    %v10179 = vpop.f32.mrf.mxu0
    %v10180 = vadd.f32 %v10011, %v10179
    %10181 = vmatmul.bf16.gmra.mxu0 %v6208
    %v10182 = vpop.f32.mrf.mxu0
    %v10183 = vadd.f32 %v10014, %v10182
    %v10184 = vpop.f32.mrf.mxu0
    %v10185 = vadd.f32 %v10016, %v10184
    %10186 = vdwg.mxu0
    %10187 = vmatpush.bf16.msra.mxu0 %v7491
    %10188 = vmatpush.bf16.msra.mxu0 %v7490
    %10189 = vmatpush.bf16.msra.mxu0 %v7489
    %10190 = vmatpush.bf16.msra.mxu0 %v7488
    %10191 = vmatpush.bf16.msra.mxu0 %v7487
    %10192 = vmatpush.bf16.msra.mxu0 %v7486
    %10193 = vmatpush.bf16.msra.mxu0 %v7485
    %10194 = vmatpush.bf16.msra.mxu0 %v7484
    %10195 = vmatmul.bf16.gmra.mxu0 %v5651
    %v10196 = vpop.f32.mrf.mxu0
    %v10197 = vadd.f32 %v10028, %v10196
    %v10198 = vpop.f32.mrf.mxu0
    %v10199 = vadd.f32 %v10030, %v10198
    %10200 = vmatmul.bf16.gmra.mxu0 %v5669
    %v10201 = vpop.f32.mrf.mxu0
    %v10202 = vadd.f32 %v10033, %v10201
    %v10203 = vpop.f32.mrf.mxu0
    %v10204 = vadd.f32 %v10035, %v10203
    %10205 = vmatmul.bf16.gmra.mxu0 %v5687
    %v10206 = vpop.f32.mrf.mxu0
    %v10207 = vadd.f32 %v10038, %v10206
    %v10208 = vpop.f32.mrf.mxu0
    %v10209 = vadd.f32 %v10040, %v10208
    %10210 = vmatmul.bf16.gmra.mxu0 %v5705
    %v10211 = vpop.f32.mrf.mxu0
    %v10212 = vadd.f32 %v10043, %v10211
    %v10213 = vpop.f32.mrf.mxu0
    %v10214 = vadd.f32 %v10045, %v10213
    %10215 = vmatmul.bf16.gmra.mxu0 %v5723
    %v10216 = vpop.f32.mrf.mxu0
    %v10217 = vadd.f32 %v10048, %v10216
    %v10218 = vpop.f32.mrf.mxu0
    %v10219 = vadd.f32 %v10050, %v10218
    %10220 = vmatmul.bf16.gmra.mxu0 %v5741
    %v10221 = vpop.f32.mrf.mxu0
    %v10222 = vadd.f32 %v10053, %v10221
    %v10223 = vpop.f32.mrf.mxu0
    %v10224 = vadd.f32 %v10055, %v10223
    %10225 = vmatmul.bf16.gmra.mxu0 %v5759
    %v10226 = vpop.f32.mrf.mxu0
    %v10227 = vadd.f32 %v10058, %v10226
    %v10228 = vpop.f32.mrf.mxu0
    %v10229 = vadd.f32 %v10060, %v10228
    %10230 = vmatmul.bf16.gmra.mxu0 %v5777
    %v10231 = vpop.f32.mrf.mxu0
    %v10232 = vadd.f32 %v10063, %v10231
    %v10233 = vpop.f32.mrf.mxu0
    %v10234 = vadd.f32 %v10065, %v10233
    %10235 = vmatmul.bf16.gmra.mxu0 %v5795
    %v10236 = vpop.f32.mrf.mxu0
    %v10237 = vadd.f32 %v10068, %v10236
    %v10238 = vpop.f32.mrf.mxu0
    %v10239 = vadd.f32 %v10070, %v10238
    %10240 = vmatmul.bf16.gmra.mxu0 %v5813
    %v10241 = vpop.f32.mrf.mxu0
    %v10242 = vadd.f32 %v10073, %v10241
    %v10243 = vpop.f32.mrf.mxu0
    %v10244 = vadd.f32 %v10075, %v10243
    %10245 = vmatmul.bf16.gmra.mxu0 %v5831
    %v10246 = vpop.f32.mrf.mxu0
    %v10247 = vadd.f32 %v10078, %v10246
    %v10248 = vpop.f32.mrf.mxu0
    %v10249 = vadd.f32 %v10080, %v10248
    %10250 = vmatmul.bf16.gmra.mxu0 %v5849
    %v10251 = vpop.f32.mrf.mxu0
    %v10252 = vadd.f32 %v10083, %v10251
    %v10253 = vpop.f32.mrf.mxu0
    %v10254 = vadd.f32 %v10085, %v10253
    %10255 = vmatmul.bf16.gmra.mxu0 %v5867
    %v10256 = vpop.f32.mrf.mxu0
    %v10257 = vadd.f32 %v10088, %v10256
    %v10258 = vpop.f32.mrf.mxu0
    %v10259 = vadd.f32 %v10090, %v10258
    %10260 = vmatmul.bf16.gmra.mxu0 %v5885
    %v10261 = vpop.f32.mrf.mxu0
    %v10262 = vadd.f32 %v10093, %v10261
    %v10263 = vpop.f32.mrf.mxu0
    %v10264 = vadd.f32 %v10095, %v10263
    %10265 = vmatmul.bf16.gmra.mxu0 %v5903
    %v10266 = vpop.f32.mrf.mxu0
    %v10267 = vadd.f32 %v10098, %v10266
    %v10268 = vpop.f32.mrf.mxu0
    %v10269 = vadd.f32 %v10100, %v10268
    %10270 = vmatmul.bf16.gmra.mxu0 %v5921
    %v10271 = vpop.f32.mrf.mxu0
    %v10272 = vadd.f32 %v10103, %v10271
    %v10273 = vpop.f32.mrf.mxu0
    %v10274 = vadd.f32 %v10105, %v10273
    %10275 = vmatmul.bf16.gmra.mxu0 %v5939
    %v10276 = vpop.f32.mrf.mxu0
    %v10277 = vadd.f32 %v10108, %v10276
    %v10278 = vpop.f32.mrf.mxu0
    %v10279 = vadd.f32 %v10110, %v10278
    %10280 = vmatmul.bf16.gmra.mxu0 %v5957
    %v10281 = vpop.f32.mrf.mxu0
    %v10282 = vadd.f32 %v10113, %v10281
    %v10283 = vpop.f32.mrf.mxu0
    %v10284 = vadd.f32 %v10115, %v10283
    %10285 = vmatmul.bf16.gmra.mxu0 %v5975
    %v10286 = vpop.f32.mrf.mxu0
    %v10287 = vadd.f32 %v10118, %v10286
    %v10288 = vpop.f32.mrf.mxu0
    %v10289 = vadd.f32 %v10120, %v10288
    %10290 = vmatmul.bf16.gmra.mxu0 %v5993
    %v10291 = vpop.f32.mrf.mxu0
    %v10292 = vadd.f32 %v10123, %v10291
    %v10293 = vpop.f32.mrf.mxu0
    %v10294 = vadd.f32 %v10125, %v10293
    %10295 = vmatmul.bf16.gmra.mxu0 %v6011
    %v10296 = vpop.f32.mrf.mxu0
    %v10297 = vadd.f32 %v10128, %v10296
    %v10298 = vpop.f32.mrf.mxu0
    %v10299 = vadd.f32 %v10130, %v10298
    %10300 = vmatmul.bf16.gmra.mxu0 %v6029
    %v10301 = vpop.f32.mrf.mxu0
    %v10302 = vadd.f32 %v10133, %v10301
    %v10303 = vpop.f32.mrf.mxu0
    %v10304 = vadd.f32 %v10135, %v10303
    %10305 = vmatmul.bf16.gmra.mxu0 %v6047
    %v10306 = vpop.f32.mrf.mxu0
    %v10307 = vadd.f32 %v10138, %v10306
    %v10308 = vpop.f32.mrf.mxu0
    %v10309 = vadd.f32 %v10140, %v10308
    %10310 = vmatmul.bf16.gmra.mxu0 %v6065
    %v10311 = vpop.f32.mrf.mxu0
    %v10312 = vadd.f32 %v10143, %v10311
    %v10313 = vpop.f32.mrf.mxu0
    %v10314 = vadd.f32 %v10145, %v10313
    %10315 = vmatmul.bf16.gmra.mxu0 %v6083
    %v10316 = vpop.f32.mrf.mxu0
    %v10317 = vadd.f32 %v10148, %v10316
    %v10318 = vpop.f32.mrf.mxu0
    %v10319 = vadd.f32 %v10150, %v10318
    %10320 = vmatmul.bf16.gmra.mxu0 %v6101
    %v10321 = vpop.f32.mrf.mxu0
    %v10322 = vadd.f32 %v10153, %v10321
    %v10323 = vpop.f32.mrf.mxu0
    %v10324 = vadd.f32 %v10155, %v10323
    %10325 = vmatmul.bf16.gmra.mxu0 %v6119
    %v10326 = vpop.f32.mrf.mxu0
    %v10327 = vadd.f32 %v10158, %v10326
    %v10328 = vpop.f32.mrf.mxu0
    %v10329 = vadd.f32 %v10160, %v10328
    %10330 = vmatmul.bf16.gmra.mxu0 %v6137
    %v10331 = vpop.f32.mrf.mxu0
    %v10332 = vadd.f32 %v10163, %v10331
    %v10333 = vpop.f32.mrf.mxu0
    %v10334 = vadd.f32 %v10165, %v10333
    %10335 = vmatmul.bf16.gmra.mxu0 %v6155
    %v10336 = vpop.f32.mrf.mxu0
    %v10337 = vadd.f32 %v10168, %v10336
    %v10338 = vpop.f32.mrf.mxu0
    %v10339 = vadd.f32 %v10170, %v10338
    %10340 = vmatmul.bf16.gmra.mxu0 %v6173
    %v10341 = vpop.f32.mrf.mxu0
    %v10342 = vadd.f32 %v10173, %v10341
    %v10343 = vpop.f32.mrf.mxu0
    %v10344 = vadd.f32 %v10175, %v10343
    %10345 = vmatmul.bf16.gmra.mxu0 %v6191
    %v10346 = vpop.f32.mrf.mxu0
    %v10347 = vadd.f32 %v10178, %v10346
    %v10348 = vpop.f32.mrf.mxu0
    %v10349 = vadd.f32 %v10180, %v10348
    %10350 = vmatmul.bf16.gmra.mxu0 %v6209
    %v10351 = vpop.f32.mrf.mxu0
    %v10352 = vadd.f32 %v10183, %v10351
    %v10353 = vpop.f32.mrf.mxu0
    %v10354 = vadd.f32 %v10185, %v10353
    %10355 = vdwg.mxu0
    %10356 = vmatpush.bf16.msra.mxu0 %v7499
    %10357 = vmatpush.bf16.msra.mxu0 %v7498
    %10358 = vmatpush.bf16.msra.mxu0 %v7497
    %10359 = vmatpush.bf16.msra.mxu0 %v7496
    %10360 = vmatpush.bf16.msra.mxu0 %v7495
    %10361 = vmatpush.bf16.msra.mxu0 %v7494
    %10362 = vmatpush.bf16.msra.mxu0 %v7493
    %10363 = vmatpush.bf16.msra.mxu0 %v7492
    %10364 = vmatmul.bf16.gmra.mxu0 %v5652
    %v10365 = vpop.f32.mrf.mxu0
    %v10366 = vadd.f32 %v10197, %v10365
    %v10367 = vpop.f32.mrf.mxu0
    %v10368 = vadd.f32 %v10199, %v10367
    %10369 = vmatmul.bf16.gmra.mxu0 %v5670
    %v10370 = vpop.f32.mrf.mxu0
    %v10371 = vadd.f32 %v10202, %v10370
    %v10372 = vpop.f32.mrf.mxu0
    %v10373 = vadd.f32 %v10204, %v10372
    %10374 = vmatmul.bf16.gmra.mxu0 %v5688
    %v10375 = vpop.f32.mrf.mxu0
    %v10376 = vadd.f32 %v10207, %v10375
    %v10377 = vpop.f32.mrf.mxu0
    %v10378 = vadd.f32 %v10209, %v10377
    %10379 = vmatmul.bf16.gmra.mxu0 %v5706
    %v10380 = vpop.f32.mrf.mxu0
    %v10381 = vadd.f32 %v10212, %v10380
    %v10382 = vpop.f32.mrf.mxu0
    %v10383 = vadd.f32 %v10214, %v10382
    %10384 = vmatmul.bf16.gmra.mxu0 %v5724
    %v10385 = vpop.f32.mrf.mxu0
    %v10386 = vadd.f32 %v10217, %v10385
    %v10387 = vpop.f32.mrf.mxu0
    %v10388 = vadd.f32 %v10219, %v10387
    %10389 = vmatmul.bf16.gmra.mxu0 %v5742
    %v10390 = vpop.f32.mrf.mxu0
    %v10391 = vadd.f32 %v10222, %v10390
    %v10392 = vpop.f32.mrf.mxu0
    %v10393 = vadd.f32 %v10224, %v10392
    %10394 = vmatmul.bf16.gmra.mxu0 %v5760
    %v10395 = vpop.f32.mrf.mxu0
    %v10396 = vadd.f32 %v10227, %v10395
    %v10397 = vpop.f32.mrf.mxu0
    %v10398 = vadd.f32 %v10229, %v10397
    %10399 = vmatmul.bf16.gmra.mxu0 %v5778
    %v10400 = vpop.f32.mrf.mxu0
    %v10401 = vadd.f32 %v10232, %v10400
    %v10402 = vpop.f32.mrf.mxu0
    %v10403 = vadd.f32 %v10234, %v10402
    %10404 = vmatmul.bf16.gmra.mxu0 %v5796
    %v10405 = vpop.f32.mrf.mxu0
    %v10406 = vadd.f32 %v10237, %v10405
    %v10407 = vpop.f32.mrf.mxu0
    %v10408 = vadd.f32 %v10239, %v10407
    %10409 = vmatmul.bf16.gmra.mxu0 %v5814
    %v10410 = vpop.f32.mrf.mxu0
    %v10411 = vadd.f32 %v10242, %v10410
    %v10412 = vpop.f32.mrf.mxu0
    %v10413 = vadd.f32 %v10244, %v10412
    %10414 = vmatmul.bf16.gmra.mxu0 %v5832
    %v10415 = vpop.f32.mrf.mxu0
    %v10416 = vadd.f32 %v10247, %v10415
    %v10417 = vpop.f32.mrf.mxu0
    %v10418 = vadd.f32 %v10249, %v10417
    %10419 = vmatmul.bf16.gmra.mxu0 %v5850
    %v10420 = vpop.f32.mrf.mxu0
    %v10421 = vadd.f32 %v10252, %v10420
    %v10422 = vpop.f32.mrf.mxu0
    %v10423 = vadd.f32 %v10254, %v10422
    %10424 = vmatmul.bf16.gmra.mxu0 %v5868
    %v10425 = vpop.f32.mrf.mxu0
    %v10426 = vadd.f32 %v10257, %v10425
    %v10427 = vpop.f32.mrf.mxu0
    %v10428 = vadd.f32 %v10259, %v10427
    %10429 = vmatmul.bf16.gmra.mxu0 %v5886
    %v10430 = vpop.f32.mrf.mxu0
    %v10431 = vadd.f32 %v10262, %v10430
    %v10432 = vpop.f32.mrf.mxu0
    %v10433 = vadd.f32 %v10264, %v10432
    %10434 = vmatmul.bf16.gmra.mxu0 %v5904
    %v10435 = vpop.f32.mrf.mxu0
    %v10436 = vadd.f32 %v10267, %v10435
    %v10437 = vpop.f32.mrf.mxu0
    %v10438 = vadd.f32 %v10269, %v10437
    %10439 = vmatmul.bf16.gmra.mxu0 %v5922
    %v10440 = vpop.f32.mrf.mxu0
    %v10441 = vadd.f32 %v10272, %v10440
    %v10442 = vpop.f32.mrf.mxu0
    %v10443 = vadd.f32 %v10274, %v10442
    %10444 = vmatmul.bf16.gmra.mxu0 %v5940
    %v10445 = vpop.f32.mrf.mxu0
    %v10446 = vadd.f32 %v10277, %v10445
    %v10447 = vpop.f32.mrf.mxu0
    %v10448 = vadd.f32 %v10279, %v10447
    %10449 = vmatmul.bf16.gmra.mxu0 %v5958
    %v10450 = vpop.f32.mrf.mxu0
    %v10451 = vadd.f32 %v10282, %v10450
    %v10452 = vpop.f32.mrf.mxu0
    %v10453 = vadd.f32 %v10284, %v10452
    %10454 = vmatmul.bf16.gmra.mxu0 %v5976
    %v10455 = vpop.f32.mrf.mxu0
    %v10456 = vadd.f32 %v10287, %v10455
    %v10457 = vpop.f32.mrf.mxu0
    %v10458 = vadd.f32 %v10289, %v10457
    %10459 = vmatmul.bf16.gmra.mxu0 %v5994
    %v10460 = vpop.f32.mrf.mxu0
    %v10461 = vadd.f32 %v10292, %v10460
    %v10462 = vpop.f32.mrf.mxu0
    %v10463 = vadd.f32 %v10294, %v10462
    %10464 = vmatmul.bf16.gmra.mxu0 %v6012
    %v10465 = vpop.f32.mrf.mxu0
    %v10466 = vadd.f32 %v10297, %v10465
    %v10467 = vpop.f32.mrf.mxu0
    %v10468 = vadd.f32 %v10299, %v10467
    %10469 = vmatmul.bf16.gmra.mxu0 %v6030
    %v10470 = vpop.f32.mrf.mxu0
    %v10471 = vadd.f32 %v10302, %v10470
    %v10472 = vpop.f32.mrf.mxu0
    %v10473 = vadd.f32 %v10304, %v10472
    %10474 = vmatmul.bf16.gmra.mxu0 %v6048
    %v10475 = vpop.f32.mrf.mxu0
    %v10476 = vadd.f32 %v10307, %v10475
    %v10477 = vpop.f32.mrf.mxu0
    %v10478 = vadd.f32 %v10309, %v10477
    %10479 = vmatmul.bf16.gmra.mxu0 %v6066
    %v10480 = vpop.f32.mrf.mxu0
    %v10481 = vadd.f32 %v10312, %v10480
    %v10482 = vpop.f32.mrf.mxu0
    %v10483 = vadd.f32 %v10314, %v10482
    %10484 = vmatmul.bf16.gmra.mxu0 %v6084
    %v10485 = vpop.f32.mrf.mxu0
    %v10486 = vadd.f32 %v10317, %v10485
    %v10487 = vpop.f32.mrf.mxu0
    %v10488 = vadd.f32 %v10319, %v10487
    %10489 = vmatmul.bf16.gmra.mxu0 %v6102
    %v10490 = vpop.f32.mrf.mxu0
    %v10491 = vadd.f32 %v10322, %v10490
    %v10492 = vpop.f32.mrf.mxu0
    %v10493 = vadd.f32 %v10324, %v10492
    %10494 = vmatmul.bf16.gmra.mxu0 %v6120
    %v10495 = vpop.f32.mrf.mxu0
    %v10496 = vadd.f32 %v10327, %v10495
    %v10497 = vpop.f32.mrf.mxu0
    %v10498 = vadd.f32 %v10329, %v10497
    %10499 = vmatmul.bf16.gmra.mxu0 %v6138
    %v10500 = vpop.f32.mrf.mxu0
    %v10501 = vadd.f32 %v10332, %v10500
    %v10502 = vpop.f32.mrf.mxu0
    %v10503 = vadd.f32 %v10334, %v10502
    %10504 = vmatmul.bf16.gmra.mxu0 %v6156
    %v10505 = vpop.f32.mrf.mxu0
    %v10506 = vadd.f32 %v10337, %v10505
    %v10507 = vpop.f32.mrf.mxu0
    %v10508 = vadd.f32 %v10339, %v10507
    %10509 = vmatmul.bf16.gmra.mxu0 %v6174
    %v10510 = vpop.f32.mrf.mxu0
    %v10511 = vadd.f32 %v10342, %v10510
    %v10512 = vpop.f32.mrf.mxu0
    %v10513 = vadd.f32 %v10344, %v10512
    %10514 = vmatmul.bf16.gmra.mxu0 %v6192
    %v10515 = vpop.f32.mrf.mxu0
    %v10516 = vadd.f32 %v10347, %v10515
    %v10517 = vpop.f32.mrf.mxu0
    %v10518 = vadd.f32 %v10349, %v10517
    %10519 = vmatmul.bf16.gmra.mxu0 %v6210
    %v10520 = vpop.f32.mrf.mxu0
    %v10521 = vadd.f32 %v10352, %v10520
    %v10522 = vpop.f32.mrf.mxu0
    %v10523 = vadd.f32 %v10354, %v10522
    %10524 = vdwg.mxu0
    %10525 = vmatpush.bf16.msra.mxu0 %v7507
    %10526 = vmatpush.bf16.msra.mxu0 %v7506
    %10527 = vmatpush.bf16.msra.mxu0 %v7505
    %10528 = vmatpush.bf16.msra.mxu0 %v7504
    %10529 = vmatpush.bf16.msra.mxu0 %v7503
    %10530 = vmatpush.bf16.msra.mxu0 %v7502
    %10531 = vmatpush.bf16.msra.mxu0 %v7501
    %10532 = vmatpush.bf16.msra.mxu0 %v7500
    %10533 = vmatmul.bf16.gmra.mxu0 %v5653
    %v10534 = vpop.f32.mrf.mxu0
    %v10535 = vadd.f32 %v10366, %v10534
    %v10536 = vpop.f32.mrf.mxu0
    %v10537 = vadd.f32 %v10368, %v10536
    %10538 = vmatmul.bf16.gmra.mxu0 %v5671
    %v10539 = vpop.f32.mrf.mxu0
    %v10540 = vadd.f32 %v10371, %v10539
    %v10541 = vpop.f32.mrf.mxu0
    %v10542 = vadd.f32 %v10373, %v10541
    %10543 = vmatmul.bf16.gmra.mxu0 %v5689
    %v10544 = vpop.f32.mrf.mxu0
    %v10545 = vadd.f32 %v10376, %v10544
    %v10546 = vpop.f32.mrf.mxu0
    %v10547 = vadd.f32 %v10378, %v10546
    %10548 = vmatmul.bf16.gmra.mxu0 %v5707
    %v10549 = vpop.f32.mrf.mxu0
    %v10550 = vadd.f32 %v10381, %v10549
    %v10551 = vpop.f32.mrf.mxu0
    %v10552 = vadd.f32 %v10383, %v10551
    %10553 = vmatmul.bf16.gmra.mxu0 %v5725
    %v10554 = vpop.f32.mrf.mxu0
    %v10555 = vadd.f32 %v10386, %v10554
    %v10556 = vpop.f32.mrf.mxu0
    %v10557 = vadd.f32 %v10388, %v10556
    %10558 = vmatmul.bf16.gmra.mxu0 %v5743
    %v10559 = vpop.f32.mrf.mxu0
    %v10560 = vadd.f32 %v10391, %v10559
    %v10561 = vpop.f32.mrf.mxu0
    %v10562 = vadd.f32 %v10393, %v10561
    %10563 = vmatmul.bf16.gmra.mxu0 %v5761
    %v10564 = vpop.f32.mrf.mxu0
    %v10565 = vadd.f32 %v10396, %v10564
    %v10566 = vpop.f32.mrf.mxu0
    %v10567 = vadd.f32 %v10398, %v10566
    %10568 = vmatmul.bf16.gmra.mxu0 %v5779
    %v10569 = vpop.f32.mrf.mxu0
    %v10570 = vadd.f32 %v10401, %v10569
    %v10571 = vpop.f32.mrf.mxu0
    %v10572 = vadd.f32 %v10403, %v10571
    %10573 = vmatmul.bf16.gmra.mxu0 %v5797
    %v10574 = vpop.f32.mrf.mxu0
    %v10575 = vadd.f32 %v10406, %v10574
    %v10576 = vpop.f32.mrf.mxu0
    %v10577 = vadd.f32 %v10408, %v10576
    %10578 = vmatmul.bf16.gmra.mxu0 %v5815
    %v10579 = vpop.f32.mrf.mxu0
    %v10580 = vadd.f32 %v10411, %v10579
    %v10581 = vpop.f32.mrf.mxu0
    %v10582 = vadd.f32 %v10413, %v10581
    %10583 = vmatmul.bf16.gmra.mxu0 %v5833
    %v10584 = vpop.f32.mrf.mxu0
    %v10585 = vadd.f32 %v10416, %v10584
    %v10586 = vpop.f32.mrf.mxu0
    %v10587 = vadd.f32 %v10418, %v10586
    %10588 = vmatmul.bf16.gmra.mxu0 %v5851
    %v10589 = vpop.f32.mrf.mxu0
    %v10590 = vadd.f32 %v10421, %v10589
    %v10591 = vpop.f32.mrf.mxu0
    %v10592 = vadd.f32 %v10423, %v10591
    %10593 = vmatmul.bf16.gmra.mxu0 %v5869
    %v10594 = vpop.f32.mrf.mxu0
    %v10595 = vadd.f32 %v10426, %v10594
    %v10596 = vpop.f32.mrf.mxu0
    %v10597 = vadd.f32 %v10428, %v10596
    %10598 = vmatmul.bf16.gmra.mxu0 %v5887
    %v10599 = vpop.f32.mrf.mxu0
    %v10600 = vadd.f32 %v10431, %v10599
    %v10601 = vpop.f32.mrf.mxu0
    %v10602 = vadd.f32 %v10433, %v10601
    %10603 = vmatmul.bf16.gmra.mxu0 %v5905
    %v10604 = vpop.f32.mrf.mxu0
    %v10605 = vadd.f32 %v10436, %v10604
    %v10606 = vpop.f32.mrf.mxu0
    %v10607 = vadd.f32 %v10438, %v10606
    %10608 = vmatmul.bf16.gmra.mxu0 %v5923
    %v10609 = vpop.f32.mrf.mxu0
    %v10610 = vadd.f32 %v10441, %v10609
    %v10611 = vpop.f32.mrf.mxu0
    %v10612 = vadd.f32 %v10443, %v10611
    %10613 = vmatmul.bf16.gmra.mxu0 %v5941
    %v10614 = vpop.f32.mrf.mxu0
    %v10615 = vadd.f32 %v10446, %v10614
    %v10616 = vpop.f32.mrf.mxu0
    %v10617 = vadd.f32 %v10448, %v10616
    %10618 = vmatmul.bf16.gmra.mxu0 %v5959
    %v10619 = vpop.f32.mrf.mxu0
    %v10620 = vadd.f32 %v10451, %v10619
    %v10621 = vpop.f32.mrf.mxu0
    %v10622 = vadd.f32 %v10453, %v10621
    %10623 = vmatmul.bf16.gmra.mxu0 %v5977
    %v10624 = vpop.f32.mrf.mxu0
    %v10625 = vadd.f32 %v10456, %v10624
    %v10626 = vpop.f32.mrf.mxu0
    %v10627 = vadd.f32 %v10458, %v10626
    %10628 = vmatmul.bf16.gmra.mxu0 %v5995
    %v10629 = vpop.f32.mrf.mxu0
    %v10630 = vadd.f32 %v10461, %v10629
    %v10631 = vpop.f32.mrf.mxu0
    %v10632 = vadd.f32 %v10463, %v10631
    %10633 = vmatmul.bf16.gmra.mxu0 %v6013
    %v10634 = vpop.f32.mrf.mxu0
    %v10635 = vadd.f32 %v10466, %v10634
    %v10636 = vpop.f32.mrf.mxu0
    %v10637 = vadd.f32 %v10468, %v10636
    %10638 = vmatmul.bf16.gmra.mxu0 %v6031
    %v10639 = vpop.f32.mrf.mxu0
    %v10640 = vadd.f32 %v10471, %v10639
    %v10641 = vpop.f32.mrf.mxu0
    %v10642 = vadd.f32 %v10473, %v10641
    %10643 = vmatmul.bf16.gmra.mxu0 %v6049
    %v10644 = vpop.f32.mrf.mxu0
    %v10645 = vadd.f32 %v10476, %v10644
    %v10646 = vpop.f32.mrf.mxu0
    %v10647 = vadd.f32 %v10478, %v10646
    %10648 = vmatmul.bf16.gmra.mxu0 %v6067
    %v10649 = vpop.f32.mrf.mxu0
    %v10650 = vadd.f32 %v10481, %v10649
    %v10651 = vpop.f32.mrf.mxu0
    %v10652 = vadd.f32 %v10483, %v10651
    %10653 = vmatmul.bf16.gmra.mxu0 %v6085
    %v10654 = vpop.f32.mrf.mxu0
    %v10655 = vadd.f32 %v10486, %v10654
    %v10656 = vpop.f32.mrf.mxu0
    %v10657 = vadd.f32 %v10488, %v10656
    %10658 = vmatmul.bf16.gmra.mxu0 %v6103
    %v10659 = vpop.f32.mrf.mxu0
    %v10660 = vadd.f32 %v10491, %v10659
    %v10661 = vpop.f32.mrf.mxu0
    %v10662 = vadd.f32 %v10493, %v10661
    %10663 = vmatmul.bf16.gmra.mxu0 %v6121
    %v10664 = vpop.f32.mrf.mxu0
    %v10665 = vadd.f32 %v10496, %v10664
    %v10666 = vpop.f32.mrf.mxu0
    %v10667 = vadd.f32 %v10498, %v10666
    %10668 = vmatmul.bf16.gmra.mxu0 %v6139
    %v10669 = vpop.f32.mrf.mxu0
    %v10670 = vadd.f32 %v10501, %v10669
    %v10671 = vpop.f32.mrf.mxu0
    %v10672 = vadd.f32 %v10503, %v10671
    %10673 = vmatmul.bf16.gmra.mxu0 %v6157
    %v10674 = vpop.f32.mrf.mxu0
    %v10675 = vadd.f32 %v10506, %v10674
    %v10676 = vpop.f32.mrf.mxu0
    %v10677 = vadd.f32 %v10508, %v10676
    %10678 = vmatmul.bf16.gmra.mxu0 %v6175
    %v10679 = vpop.f32.mrf.mxu0
    %v10680 = vadd.f32 %v10511, %v10679
    %v10681 = vpop.f32.mrf.mxu0
    %v10682 = vadd.f32 %v10513, %v10681
    %10683 = vmatmul.bf16.gmra.mxu0 %v6193
    %v10684 = vpop.f32.mrf.mxu0
    %v10685 = vadd.f32 %v10516, %v10684
    %v10686 = vpop.f32.mrf.mxu0
    %v10687 = vadd.f32 %v10518, %v10686
    %10688 = vmatmul.bf16.gmra.mxu0 %v6211
    %v10689 = vpop.f32.mrf.mxu0
    %v10690 = vadd.f32 %v10521, %v10689
    %v10691 = vpop.f32.mrf.mxu0
    %v10692 = vadd.f32 %v10523, %v10691
    %10693 = vdwg.mxu0
    %v10694 = vmax.f32 %v10535, 0.0
    %v10695 = vmax.f32 %v10537, 0.0
    %v10696 = vmax.f32 %v10540, 0.0
    %v10697 = vmax.f32 %v10542, 0.0
    %v10698 = vmax.f32 %v10545, 0.0
    %v10699 = vmax.f32 %v10547, 0.0
    %v10700 = vmax.f32 %v10550, 0.0
    %v10701 = vmax.f32 %v10552, 0.0
    %v10702 = vmax.f32 %v10555, 0.0
    %v10703 = vmax.f32 %v10557, 0.0
    %v10704 = vmax.f32 %v10560, 0.0
    %v10705 = vmax.f32 %v10562, 0.0
    %v10706 = vmax.f32 %v10565, 0.0
    %v10707 = vmax.f32 %v10567, 0.0
    %v10708 = vmax.f32 %v10570, 0.0
    %v10709 = vmax.f32 %v10572, 0.0
    %v10710 = vmax.f32 %v10575, 0.0
    %v10711 = vmax.f32 %v10577, 0.0
    %v10712 = vmax.f32 %v10580, 0.0
    %v10713 = vmax.f32 %v10582, 0.0
    %v10714 = vmax.f32 %v10585, 0.0
    %v10715 = vmax.f32 %v10587, 0.0
    %v10716 = vmax.f32 %v10590, 0.0
    %v10717 = vmax.f32 %v10592, 0.0
    %v10718 = vmax.f32 %v10595, 0.0
    %v10719 = vmax.f32 %v10597, 0.0
    %v10720 = vmax.f32 %v10600, 0.0
    %v10721 = vmax.f32 %v10602, 0.0
    %v10722 = vmax.f32 %v10605, 0.0
    %v10723 = vmax.f32 %v10607, 0.0
    %v10724 = vmax.f32 %v10610, 0.0
    %v10725 = vmax.f32 %v10612, 0.0
    %v10726 = vmax.f32 %v10615, 0.0
    %v10727 = vmax.f32 %v10617, 0.0
    %v10728 = vmax.f32 %v10620, 0.0
    %v10729 = vmax.f32 %v10622, 0.0
    %v10730 = vmax.f32 %v10625, 0.0
    %v10731 = vmax.f32 %v10627, 0.0
    %v10732 = vmax.f32 %v10630, 0.0
    %v10733 = vmax.f32 %v10632, 0.0
    %v10734 = vmax.f32 %v10635, 0.0
    %v10735 = vmax.f32 %v10637, 0.0
    %v10736 = vmax.f32 %v10640, 0.0
    %v10737 = vmax.f32 %v10642, 0.0
    %v10738 = vmax.f32 %v10645, 0.0
    %v10739 = vmax.f32 %v10647, 0.0
    %v10740 = vmax.f32 %v10650, 0.0
    %v10741 = vmax.f32 %v10652, 0.0
    %v10742 = vmax.f32 %v10655, 0.0
    %v10743 = vmax.f32 %v10657, 0.0
    %v10744 = vmax.f32 %v10660, 0.0
    %v10745 = vmax.f32 %v10662, 0.0
    %v10746 = vmax.f32 %v10665, 0.0
    %v10747 = vmax.f32 %v10667, 0.0
    %v10748 = vmax.f32 %v10670, 0.0
    %v10749 = vmax.f32 %v10672, 0.0
    %v10750 = vmax.f32 %v10675, 0.0
    %v10751 = vmax.f32 %v10677, 0.0
    %v10752 = vmax.f32 %v10680, 0.0
    %v10753 = vmax.f32 %v10682, 0.0
    %v10754 = vmax.f32 %v10685, 0.0
    %v10755 = vmax.f32 %v10687, 0.0
    %v10756 = vmax.f32 %v10690, 0.0
    %v10757 = vmax.f32 %v10692, 0.0
    %v10758 = vadd.f32 %v10694, %v10695
    %v10759 = vadd.f32 %v10758, %v10696
    %v10760 = vadd.f32 %v10759, %v10697
    %v10761 = vadd.f32 %v10760, %v10698
    %v10762 = vadd.f32 %v10761, %v10699
    %v10763 = vadd.f32 %v10762, %v10700
    %v10764 = vadd.f32 %v10763, %v10701
    %v10765 = vadd.f32 %v10764, %v10702
    %v10766 = vadd.f32 %v10765, %v10703
    %v10767 = vadd.f32 %v10766, %v10704
    %v10768 = vadd.f32 %v10767, %v10705
    %v10769 = vadd.f32 %v10768, %v10706
    %v10770 = vadd.f32 %v10769, %v10707
    %v10771 = vadd.f32 %v10770, %v10708
    %v10772 = vadd.f32 %v10771, %v10709
    %v10773 = vadd.f32 %v10772, %v10710
    %v10774 = vadd.f32 %v10773, %v10711
    %v10775 = vadd.f32 %v10774, %v10712
    %v10776 = vadd.f32 %v10775, %v10713
    %v10777 = vadd.f32 %v10776, %v10714
    %v10778 = vadd.f32 %v10777, %v10715
    %v10779 = vadd.f32 %v10778, %v10716
    %v10780 = vadd.f32 %v10779, %v10717
    %v10781 = vadd.f32 %v10780, %v10718
    %v10782 = vadd.f32 %v10781, %v10719
    %v10783 = vadd.f32 %v10782, %v10720
    %v10784 = vadd.f32 %v10783, %v10721
    %v10785 = vadd.f32 %v10784, %v10722
    %v10786 = vadd.f32 %v10785, %v10723
    %v10787 = vadd.f32 %v10786, %v10724
    %v10788 = vadd.f32 %v10787, %v10725
    %v10789 = vadd.f32 %v10788, %v10726
    %v10790 = vadd.f32 %v10789, %v10727
    %v10791 = vadd.f32 %v10790, %v10728
    %v10792 = vadd.f32 %v10791, %v10729
    %v10793 = vadd.f32 %v10792, %v10730
    %v10794 = vadd.f32 %v10793, %v10731
    %v10795 = vadd.f32 %v10794, %v10732
    %v10796 = vadd.f32 %v10795, %v10733
    %v10797 = vadd.f32 %v10796, %v10734
    %v10798 = vadd.f32 %v10797, %v10735
    %v10799 = vadd.f32 %v10798, %v10736
    %v10800 = vadd.f32 %v10799, %v10737
    %v10801 = vadd.f32 %v10800, %v10738
    %v10802 = vadd.f32 %v10801, %v10739
    %v10803 = vadd.f32 %v10802, %v10740
    %v10804 = vadd.f32 %v10803, %v10741
    %v10805 = vadd.f32 %v10804, %v10742
    %v10806 = vadd.f32 %v10805, %v10743
    %v10807 = vadd.f32 %v10806, %v10744
    %v10808 = vadd.f32 %v10807, %v10745
    %v10809 = vadd.f32 %v10808, %v10746
    %v10810 = vadd.f32 %v10809, %v10747
    %v10811 = vadd.f32 %v10810, %v10748
    %v10812 = vadd.f32 %v10811, %v10749
    %v10813 = vadd.f32 %v10812, %v10750
    %v10814 = vadd.f32 %v10813, %v10751
    %v10815 = vadd.f32 %v10814, %v10752
    %v10816 = vadd.f32 %v10815, %v10753
    %v10817 = vadd.f32 %v10816, %v10754
    %v10818 = vadd.f32 %v10817, %v10755
    %v10819 = vadd.f32 %v10818, %v10756
    %v10820 = vadd.f32 %v10819, %v10757
    %v10821 = vrot.slane %v10820, 4
    %v10822 = vadd.f32 %v10820, %v10821
    %v10823 = vrot.slane %v10822, 2
    %v10824 = vadd.f32 %v10822, %v10823
    %v10825 = vrot.slane %v10824, 1
    %v10826 = vadd.f32 %v10824, %v10825
    %v10827 = vunpack.c.l.bf16 %v89
    %v10828 = vunpack.c.l.bf16 %v90
    %v10829 = vunpack.c.l.bf16 %v91
    %v10830 = vunpack.c.l.bf16 %v92
    %v10831 = vunpack.c.l.bf16 %v93
    %v10832 = vunpack.c.l.bf16 %v94
    %v10833 = vunpack.c.l.bf16 %v95
    %v10834 = vunpack.c.l.bf16 %v96
    %v10835 = vunpack.c.l.bf16 %v97
    %v10836 = vunpack.c.l.bf16 %v98
    %v10837 = vunpack.c.l.bf16 %v99
    %v10838 = vunpack.c.l.bf16 %v100
    %v10839 = vunpack.c.l.bf16 %v101
    %v10840 = vunpack.c.l.bf16 %v102
    %v10841 = vunpack.c.l.bf16 %v103
    %v10842 = vunpack.c.l.bf16 %v104
    %v10843 = vunpack.c.l.bf16 %v105
    %v10844 = vunpack.c.l.bf16 %v106
    %v10845 = vunpack.c.l.bf16 %v107
    %v10846 = vunpack.c.l.bf16 %v108
    %v10847 = vunpack.c.l.bf16 %v109
    %v10848 = vunpack.c.l.bf16 %v110
    %v10849 = vunpack.c.l.bf16 %v111
    %v10850 = vunpack.c.l.bf16 %v112
    %v10851 = vunpack.c.l.bf16 %v113
    %v10852 = vunpack.c.l.bf16 %v114
    %v10853 = vunpack.c.l.bf16 %v115
    %v10854 = vunpack.c.l.bf16 %v116
    %v10855 = vunpack.c.l.bf16 %v117
    %v10856 = vunpack.c.l.bf16 %v118
    %v10857 = vunpack.c.l.bf16 %v119
    %v10858 = vunpack.c.l.bf16 %v120
    %v10859 = vunpack.c.l.bf16 %v121
    %v10860 = vunpack.c.l.bf16 %v122
    %v10861 = vunpack.c.l.bf16 %v123
    %v10862 = vunpack.c.l.bf16 %v124
    %v10863 = vunpack.c.l.bf16 %v125
    %v10864 = vunpack.c.l.bf16 %v126
    %v10865 = vunpack.c.l.bf16 %v127
    %v10866 = vunpack.c.l.bf16 %v128
    %v10867 = vunpack.c.l.bf16 %v129
    %v10868 = vunpack.c.l.bf16 %v130
    %v10869 = vunpack.c.l.bf16 %v131
    %v10870 = vunpack.c.l.bf16 %v132
    %v10871 = vunpack.c.l.bf16 %v133
    %v10872 = vunpack.c.l.bf16 %v134
    %v10873 = vunpack.c.l.bf16 %v135
    %v10874 = vunpack.c.l.bf16 %v136
    %v10875 = vunpack.c.l.bf16 %v137
    %v10876 = vunpack.c.l.bf16 %v138
    %v10877 = vunpack.c.l.bf16 %v139
    %v10878 = vunpack.c.l.bf16 %v140
    %v10879 = vunpack.c.l.bf16 %v141
    %v10880 = vunpack.c.l.bf16 %v142
    %v10881 = vunpack.c.l.bf16 %v143
    %v10882 = vunpack.c.l.bf16 %v144
    %v10883 = vunpack.c.l.bf16 %v145
    %v10884 = vunpack.c.l.bf16 %v146
    %v10885 = vunpack.c.l.bf16 %v147
    %v10886 = vunpack.c.l.bf16 %v148
    %v10887 = vunpack.c.l.bf16 %v149
    %v10888 = vunpack.c.l.bf16 %v150
    %v10889 = vunpack.c.l.bf16 %v151
    %v10890 = vunpack.c.l.bf16 %v152
    %v10891 = vmul.f32 %v10827, %v10826
    %v10892 = vmul.f32 %v10828, %v10826
    %v10893 = vmul.f32 %v10829, %v10826
    %v10894 = vmul.f32 %v10830, %v10826
    %v10895 = vmul.f32 %v10831, %v10826
    %v10896 = vmul.f32 %v10832, %v10826
    %v10897 = vmul.f32 %v10833, %v10826
    %v10898 = vmul.f32 %v10834, %v10826
    %v10899 = vmul.f32 %v10835, %v10826
    %v10900 = vmul.f32 %v10836, %v10826
    %v10901 = vmul.f32 %v10837, %v10826
    %v10902 = vmul.f32 %v10838, %v10826
    %v10903 = vmul.f32 %v10839, %v10826
    %v10904 = vmul.f32 %v10840, %v10826
    %v10905 = vmul.f32 %v10841, %v10826
    %v10906 = vmul.f32 %v10842, %v10826
    %v10907 = vmul.f32 %v10843, %v10826
    %v10908 = vmul.f32 %v10844, %v10826
    %v10909 = vmul.f32 %v10845, %v10826
    %v10910 = vmul.f32 %v10846, %v10826
    %v10911 = vmul.f32 %v10847, %v10826
    %v10912 = vmul.f32 %v10848, %v10826
    %v10913 = vmul.f32 %v10849, %v10826
    %v10914 = vmul.f32 %v10850, %v10826
    %v10915 = vmul.f32 %v10851, %v10826
    %v10916 = vmul.f32 %v10852, %v10826
    %v10917 = vmul.f32 %v10853, %v10826
    %v10918 = vmul.f32 %v10854, %v10826
    %v10919 = vmul.f32 %v10855, %v10826
    %v10920 = vmul.f32 %v10856, %v10826
    %v10921 = vmul.f32 %v10857, %v10826
    %v10922 = vmul.f32 %v10858, %v10826
    %v10923 = vmul.f32 %v10859, %v10826
    %v10924 = vmul.f32 %v10860, %v10826
    %v10925 = vmul.f32 %v10861, %v10826
    %v10926 = vmul.f32 %v10862, %v10826
    %v10927 = vmul.f32 %v10863, %v10826
    %v10928 = vmul.f32 %v10864, %v10826
    %v10929 = vmul.f32 %v10865, %v10826
    %v10930 = vmul.f32 %v10866, %v10826
    %v10931 = vmul.f32 %v10867, %v10826
    %v10932 = vmul.f32 %v10868, %v10826
    %v10933 = vmul.f32 %v10869, %v10826
    %v10934 = vmul.f32 %v10870, %v10826
    %v10935 = vmul.f32 %v10871, %v10826
    %v10936 = vmul.f32 %v10872, %v10826
    %v10937 = vmul.f32 %v10873, %v10826
    %v10938 = vmul.f32 %v10874, %v10826
    %v10939 = vmul.f32 %v10875, %v10826
    %v10940 = vmul.f32 %v10876, %v10826
    %v10941 = vmul.f32 %v10877, %v10826
    %v10942 = vmul.f32 %v10878, %v10826
    %v10943 = vmul.f32 %v10879, %v10826
    %v10944 = vmul.f32 %v10880, %v10826
    %v10945 = vmul.f32 %v10881, %v10826
    %v10946 = vmul.f32 %v10882, %v10826
    %v10947 = vmul.f32 %v10883, %v10826
    %v10948 = vmul.f32 %v10884, %v10826
    %v10949 = vmul.f32 %v10885, %v10826
    %v10950 = vmul.f32 %v10886, %v10826
    %v10951 = vmul.f32 %v10887, %v10826
    %v10952 = vmul.f32 %v10888, %v10826
    %v10953 = vmul.f32 %v10889, %v10826
    %v10954 = vmul.f32 %v10890, %v10826
    %v10955 = vld [vmem:[%s2] sm:$0xff]
    %v10956 = vld [vmem:[%s2 + $0x8] sm:$0xff]
    %v10957 = vld [vmem:[%s2 + $0x10] sm:$0xff]
    %v10958 = vld [vmem:[%s2 + $0x18] sm:$0xff]
    %v10959 = vld [vmem:[%s2 + $0x20] sm:$0xff]
    %v10960 = vld [vmem:[%s2 + $0x28] sm:$0xff]
    %v10961 = vld [vmem:[%s2 + $0x30] sm:$0xff]
    %v10962 = vld [vmem:[%s2 + $0x38] sm:$0xff]
    %v10963 = vld [vmem:[%s2 + $0x40] sm:$0xff]
    %v10964 = vld [vmem:[%s2 + $0x48] sm:$0xff]
    %v10965 = vld [vmem:[%s2 + $0x50] sm:$0xff]
    %v10966 = vld [vmem:[%s2 + $0x58] sm:$0xff]
    %v10967 = vld [vmem:[%s2 + $0x60] sm:$0xff]
    %v10968 = vld [vmem:[%s2 + $0x68] sm:$0xff]
    %v10969 = vld [vmem:[%s2 + $0x70] sm:$0xff]
    %v10970 = vld [vmem:[%s2 + $0x78] sm:$0xff]
    %10971 = vmatpush.msra.mxu0 %v10970
    %10972 = vmatpush.msra.mxu0 %v10969
    %10973 = vmatpush.msra.mxu0 %v10968
    %10974 = vmatpush.msra.mxu0 %v10967
    %10975 = vmatpush.msra.mxu0 %v10966
    %10976 = vmatpush.msra.mxu0 %v10965
    %10977 = vmatpush.msra.mxu0 %v10964
    %10978 = vmatpush.msra.mxu0 %v10963
    %10979 = vmatpush.msra.mxu0 %v10962
    %10980 = vmatpush.msra.mxu0 %v10961
    %10981 = vmatpush.msra.mxu0 %v10960
    %10982 = vmatpush.msra.mxu0 %v10959
    %10983 = vmatpush.msra.mxu0 %v10958
    %10984 = vmatpush.msra.mxu0 %v10957
    %10985 = vmatpush.msra.mxu0 %v10956
    %10986 = vmatpush.msra.mxu0 %v10955
    %10987 = vmatmul.f32.gmra.mxu0 %v10891
    %v10988 = vpop.f32.mrf.mxu0
    %v10989 = vadd.f32 0.0, %v10988
    %10990 = vmatmul.f32.gmra.mxu0 %v10892
    %v10991 = vpop.f32.mrf.mxu0
    %v10992 = vadd.f32 0.0, %v10991
    %10993 = vmatmul.f32.gmra.mxu0 %v10893
    %v10994 = vpop.f32.mrf.mxu0
    %v10995 = vadd.f32 0.0, %v10994
    %10996 = vmatmul.f32.gmra.mxu0 %v10894
    %v10997 = vpop.f32.mrf.mxu0
    %v10998 = vadd.f32 0.0, %v10997
    %10999 = vmatmul.f32.gmra.mxu0 %v10895
    %v11000 = vpop.f32.mrf.mxu0
    %v11001 = vadd.f32 0.0, %v11000
    %11002 = vmatmul.f32.gmra.mxu0 %v10896
    %v11003 = vpop.f32.mrf.mxu0
    %v11004 = vadd.f32 0.0, %v11003
    %11005 = vmatmul.f32.gmra.mxu0 %v10897
    %v11006 = vpop.f32.mrf.mxu0
    %v11007 = vadd.f32 0.0, %v11006
    %11008 = vmatmul.f32.gmra.mxu0 %v10898
    %v11009 = vpop.f32.mrf.mxu0
    %v11010 = vadd.f32 0.0, %v11009
    %11011 = vmatmul.f32.gmra.mxu0 %v10899
    %v11012 = vpop.f32.mrf.mxu0
    %v11013 = vadd.f32 0.0, %v11012
    %11014 = vmatmul.f32.gmra.mxu0 %v10900
    %v11015 = vpop.f32.mrf.mxu0
    %v11016 = vadd.f32 0.0, %v11015
    %11017 = vmatmul.f32.gmra.mxu0 %v10901
    %v11018 = vpop.f32.mrf.mxu0
    %v11019 = vadd.f32 0.0, %v11018
    %11020 = vmatmul.f32.gmra.mxu0 %v10902
    %v11021 = vpop.f32.mrf.mxu0
    %v11022 = vadd.f32 0.0, %v11021
    %11023 = vmatmul.f32.gmra.mxu0 %v10903
    %v11024 = vpop.f32.mrf.mxu0
    %v11025 = vadd.f32 0.0, %v11024
    %11026 = vmatmul.f32.gmra.mxu0 %v10904
    %v11027 = vpop.f32.mrf.mxu0
    %v11028 = vadd.f32 0.0, %v11027
    %11029 = vmatmul.f32.gmra.mxu0 %v10905
    %v11030 = vpop.f32.mrf.mxu0
    %v11031 = vadd.f32 0.0, %v11030
    %11032 = vmatmul.f32.gmra.mxu0 %v10906
    %v11033 = vpop.f32.mrf.mxu0
    %v11034 = vadd.f32 0.0, %v11033
    %11035 = vmatmul.f32.gmra.mxu0 %v10907
    %v11036 = vpop.f32.mrf.mxu0
    %v11037 = vadd.f32 0.0, %v11036
    %11038 = vmatmul.f32.gmra.mxu0 %v10908
    %v11039 = vpop.f32.mrf.mxu0
    %v11040 = vadd.f32 0.0, %v11039
    %11041 = vmatmul.f32.gmra.mxu0 %v10909
    %v11042 = vpop.f32.mrf.mxu0
    %v11043 = vadd.f32 0.0, %v11042
    %11044 = vmatmul.f32.gmra.mxu0 %v10910
    %v11045 = vpop.f32.mrf.mxu0
    %v11046 = vadd.f32 0.0, %v11045
    %11047 = vmatmul.f32.gmra.mxu0 %v10911
    %v11048 = vpop.f32.mrf.mxu0
    %v11049 = vadd.f32 0.0, %v11048
    %11050 = vmatmul.f32.gmra.mxu0 %v10912
    %v11051 = vpop.f32.mrf.mxu0
    %v11052 = vadd.f32 0.0, %v11051
    %11053 = vmatmul.f32.gmra.mxu0 %v10913
    %v11054 = vpop.f32.mrf.mxu0
    %v11055 = vadd.f32 0.0, %v11054
    %11056 = vmatmul.f32.gmra.mxu0 %v10914
    %v11057 = vpop.f32.mrf.mxu0
    %v11058 = vadd.f32 0.0, %v11057
    %11059 = vmatmul.f32.gmra.mxu0 %v10915
    %v11060 = vpop.f32.mrf.mxu0
    %v11061 = vadd.f32 0.0, %v11060
    %11062 = vmatmul.f32.gmra.mxu0 %v10916
    %v11063 = vpop.f32.mrf.mxu0
    %v11064 = vadd.f32 0.0, %v11063
    %11065 = vmatmul.f32.gmra.mxu0 %v10917
    %v11066 = vpop.f32.mrf.mxu0
    %v11067 = vadd.f32 0.0, %v11066
    %11068 = vmatmul.f32.gmra.mxu0 %v10918
    %v11069 = vpop.f32.mrf.mxu0
    %v11070 = vadd.f32 0.0, %v11069
    %11071 = vmatmul.f32.gmra.mxu0 %v10919
    %v11072 = vpop.f32.mrf.mxu0
    %v11073 = vadd.f32 0.0, %v11072
    %11074 = vmatmul.f32.gmra.mxu0 %v10920
    %v11075 = vpop.f32.mrf.mxu0
    %v11076 = vadd.f32 0.0, %v11075
    %11077 = vmatmul.f32.gmra.mxu0 %v10921
    %v11078 = vpop.f32.mrf.mxu0
    %v11079 = vadd.f32 0.0, %v11078
    %11080 = vmatmul.f32.gmra.mxu0 %v10922
    %v11081 = vpop.f32.mrf.mxu0
    %v11082 = vadd.f32 0.0, %v11081
    %11083 = vmatmul.f32.gmra.mxu0 %v10923
    %v11084 = vpop.f32.mrf.mxu0
    %v11085 = vadd.f32 0.0, %v11084
    %11086 = vmatmul.f32.gmra.mxu0 %v10924
    %v11087 = vpop.f32.mrf.mxu0
    %v11088 = vadd.f32 0.0, %v11087
    %11089 = vmatmul.f32.gmra.mxu0 %v10925
    %v11090 = vpop.f32.mrf.mxu0
    %v11091 = vadd.f32 0.0, %v11090
    %11092 = vmatmul.f32.gmra.mxu0 %v10926
    %v11093 = vpop.f32.mrf.mxu0
    %v11094 = vadd.f32 0.0, %v11093
    %11095 = vmatmul.f32.gmra.mxu0 %v10927
    %v11096 = vpop.f32.mrf.mxu0
    %v11097 = vadd.f32 0.0, %v11096
    %11098 = vmatmul.f32.gmra.mxu0 %v10928
    %v11099 = vpop.f32.mrf.mxu0
    %v11100 = vadd.f32 0.0, %v11099
    %11101 = vmatmul.f32.gmra.mxu0 %v10929
    %v11102 = vpop.f32.mrf.mxu0
    %v11103 = vadd.f32 0.0, %v11102
    %11104 = vmatmul.f32.gmra.mxu0 %v10930
    %v11105 = vpop.f32.mrf.mxu0
    %v11106 = vadd.f32 0.0, %v11105
    %11107 = vmatmul.f32.gmra.mxu0 %v10931
    %v11108 = vpop.f32.mrf.mxu0
    %v11109 = vadd.f32 0.0, %v11108
    %11110 = vmatmul.f32.gmra.mxu0 %v10932
    %v11111 = vpop.f32.mrf.mxu0
    %v11112 = vadd.f32 0.0, %v11111
    %11113 = vmatmul.f32.gmra.mxu0 %v10933
    %v11114 = vpop.f32.mrf.mxu0
    %v11115 = vadd.f32 0.0, %v11114
    %11116 = vmatmul.f32.gmra.mxu0 %v10934
    %v11117 = vpop.f32.mrf.mxu0
    %v11118 = vadd.f32 0.0, %v11117
    %11119 = vmatmul.f32.gmra.mxu0 %v10935
    %v11120 = vpop.f32.mrf.mxu0
    %v11121 = vadd.f32 0.0, %v11120
    %11122 = vmatmul.f32.gmra.mxu0 %v10936
    %v11123 = vpop.f32.mrf.mxu0
    %v11124 = vadd.f32 0.0, %v11123
    %11125 = vmatmul.f32.gmra.mxu0 %v10937
    %v11126 = vpop.f32.mrf.mxu0
    %v11127 = vadd.f32 0.0, %v11126
    %11128 = vmatmul.f32.gmra.mxu0 %v10938
    %v11129 = vpop.f32.mrf.mxu0
    %v11130 = vadd.f32 0.0, %v11129
    %11131 = vmatmul.f32.gmra.mxu0 %v10939
    %v11132 = vpop.f32.mrf.mxu0
    %v11133 = vadd.f32 0.0, %v11132
    %11134 = vmatmul.f32.gmra.mxu0 %v10940
    %v11135 = vpop.f32.mrf.mxu0
    %v11136 = vadd.f32 0.0, %v11135
    %11137 = vmatmul.f32.gmra.mxu0 %v10941
    %v11138 = vpop.f32.mrf.mxu0
    %v11139 = vadd.f32 0.0, %v11138
    %11140 = vmatmul.f32.gmra.mxu0 %v10942
    %v11141 = vpop.f32.mrf.mxu0
    %v11142 = vadd.f32 0.0, %v11141
    %11143 = vmatmul.f32.gmra.mxu0 %v10943
    %v11144 = vpop.f32.mrf.mxu0
    %v11145 = vadd.f32 0.0, %v11144
    %11146 = vmatmul.f32.gmra.mxu0 %v10944
    %v11147 = vpop.f32.mrf.mxu0
    %v11148 = vadd.f32 0.0, %v11147
    %11149 = vmatmul.f32.gmra.mxu0 %v10945
    %v11150 = vpop.f32.mrf.mxu0
    %v11151 = vadd.f32 0.0, %v11150
    %11152 = vmatmul.f32.gmra.mxu0 %v10946
    %v11153 = vpop.f32.mrf.mxu0
    %v11154 = vadd.f32 0.0, %v11153
    %11155 = vmatmul.f32.gmra.mxu0 %v10947
    %v11156 = vpop.f32.mrf.mxu0
    %v11157 = vadd.f32 0.0, %v11156
    %11158 = vmatmul.f32.gmra.mxu0 %v10948
    %v11159 = vpop.f32.mrf.mxu0
    %v11160 = vadd.f32 0.0, %v11159
    %11161 = vmatmul.f32.gmra.mxu0 %v10949
    %v11162 = vpop.f32.mrf.mxu0
    %v11163 = vadd.f32 0.0, %v11162
    %11164 = vmatmul.f32.gmra.mxu0 %v10950
    %v11165 = vpop.f32.mrf.mxu0
    %v11166 = vadd.f32 0.0, %v11165
    %11167 = vmatmul.f32.gmra.mxu0 %v10951
    %v11168 = vpop.f32.mrf.mxu0
    %v11169 = vadd.f32 0.0, %v11168
    %11170 = vmatmul.f32.gmra.mxu0 %v10952
    %v11171 = vpop.f32.mrf.mxu0
    %v11172 = vadd.f32 0.0, %v11171
    %11173 = vmatmul.f32.gmra.mxu0 %v10953
    %v11174 = vpop.f32.mrf.mxu0
    %v11175 = vadd.f32 0.0, %v11174
    %11176 = vmatmul.f32.gmra.mxu0 %v10954
    %v11177 = vpop.f32.mrf.mxu0
    %v11178 = vadd.f32 0.0, %v11177
    %11179 = vdwg.mxu0
    %vm11180 = vcmask 15360
    %11181 = vst.msk [vmem:[%s7] sm:$0xff] %vm11180, %v10989
    %11182 = vst.msk [vmem:[%s7 + $0x8] sm:$0xff] %vm11180, %v10992
    %11183 = vst.msk [vmem:[%s7 + $0x10] sm:$0xff] %vm11180, %v10995
    %11184 = vst.msk [vmem:[%s7 + $0x18] sm:$0xff] %vm11180, %v10998
    %11185 = vst.msk [vmem:[%s7 + $0x20] sm:$0xff] %vm11180, %v11001
    %11186 = vst.msk [vmem:[%s7 + $0x28] sm:$0xff] %vm11180, %v11004
    %11187 = vst.msk [vmem:[%s7 + $0x30] sm:$0xff] %vm11180, %v11007
    %11188 = vst.msk [vmem:[%s7 + $0x38] sm:$0xff] %vm11180, %v11010
    %11189 = vst.msk [vmem:[%s7 + $0x40] sm:$0xff] %vm11180, %v11013
    %11190 = vst.msk [vmem:[%s7 + $0x48] sm:$0xff] %vm11180, %v11016
    %11191 = vst.msk [vmem:[%s7 + $0x50] sm:$0xff] %vm11180, %v11019
    %11192 = vst.msk [vmem:[%s7 + $0x58] sm:$0xff] %vm11180, %v11022
    %11193 = vst.msk [vmem:[%s7 + $0x60] sm:$0xff] %vm11180, %v11025
    %11194 = vst.msk [vmem:[%s7 + $0x68] sm:$0xff] %vm11180, %v11028
    %11195 = vst.msk [vmem:[%s7 + $0x70] sm:$0xff] %vm11180, %v11031
    %11196 = vst.msk [vmem:[%s7 + $0x78] sm:$0xff] %vm11180, %v11034
    %11197 = vst.msk [vmem:[%s7 + $0x80] sm:$0xff] %vm11180, %v11037
    %11198 = vst.msk [vmem:[%s7 + $0x88] sm:$0xff] %vm11180, %v11040
    %11199 = vst.msk [vmem:[%s7 + $0x90] sm:$0xff] %vm11180, %v11043
    %11200 = vst.msk [vmem:[%s7 + $0x98] sm:$0xff] %vm11180, %v11046
    %11201 = vst.msk [vmem:[%s7 + $0xa0] sm:$0xff] %vm11180, %v11049
    %11202 = vst.msk [vmem:[%s7 + $0xa8] sm:$0xff] %vm11180, %v11052
    %11203 = vst.msk [vmem:[%s7 + $0xb0] sm:$0xff] %vm11180, %v11055
    %11204 = vst.msk [vmem:[%s7 + $0xb8] sm:$0xff] %vm11180, %v11058
    %11205 = vst.msk [vmem:[%s7 + $0xc0] sm:$0xff] %vm11180, %v11061
    %11206 = vst.msk [vmem:[%s7 + $0xc8] sm:$0xff] %vm11180, %v11064
    %11207 = vst.msk [vmem:[%s7 + $0xd0] sm:$0xff] %vm11180, %v11067
    %11208 = vst.msk [vmem:[%s7 + $0xd8] sm:$0xff] %vm11180, %v11070
    %11209 = vst.msk [vmem:[%s7 + $0xe0] sm:$0xff] %vm11180, %v11073
    %11210 = vst.msk [vmem:[%s7 + $0xe8] sm:$0xff] %vm11180, %v11076
    %11211 = vst.msk [vmem:[%s7 + $0xf0] sm:$0xff] %vm11180, %v11079
    %11212 = vst.msk [vmem:[%s7 + $0xf8] sm:$0xff] %vm11180, %v11082
    %11213 = vst.msk [vmem:[%s7 + $0x100] sm:$0xff] %vm11180, %v11085
    %11214 = vst.msk [vmem:[%s7 + $0x108] sm:$0xff] %vm11180, %v11088
    %11215 = vst.msk [vmem:[%s7 + $0x110] sm:$0xff] %vm11180, %v11091
    %11216 = vst.msk [vmem:[%s7 + $0x118] sm:$0xff] %vm11180, %v11094
    %11217 = vst.msk [vmem:[%s7 + $0x120] sm:$0xff] %vm11180, %v11097
    %11218 = vst.msk [vmem:[%s7 + $0x128] sm:$0xff] %vm11180, %v11100
    %11219 = vst.msk [vmem:[%s7 + $0x130] sm:$0xff] %vm11180, %v11103
    %11220 = vst.msk [vmem:[%s7 + $0x138] sm:$0xff] %vm11180, %v11106
    %11221 = vst.msk [vmem:[%s7 + $0x140] sm:$0xff] %vm11180, %v11109
    %11222 = vst.msk [vmem:[%s7 + $0x148] sm:$0xff] %vm11180, %v11112
    %11223 = vst.msk [vmem:[%s7 + $0x150] sm:$0xff] %vm11180, %v11115
    %11224 = vst.msk [vmem:[%s7 + $0x158] sm:$0xff] %vm11180, %v11118
    %11225 = vst.msk [vmem:[%s7 + $0x160] sm:$0xff] %vm11180, %v11121
    %11226 = vst.msk [vmem:[%s7 + $0x168] sm:$0xff] %vm11180, %v11124
    %11227 = vst.msk [vmem:[%s7 + $0x170] sm:$0xff] %vm11180, %v11127
    %11228 = vst.msk [vmem:[%s7 + $0x178] sm:$0xff] %vm11180, %v11130
    %11229 = vst.msk [vmem:[%s7 + $0x180] sm:$0xff] %vm11180, %v11133
    %11230 = vst.msk [vmem:[%s7 + $0x188] sm:$0xff] %vm11180, %v11136
    %11231 = vst.msk [vmem:[%s7 + $0x190] sm:$0xff] %vm11180, %v11139
    %11232 = vst.msk [vmem:[%s7 + $0x198] sm:$0xff] %vm11180, %v11142
    %11233 = vst.msk [vmem:[%s7 + $0x1a0] sm:$0xff] %vm11180, %v11145
    %11234 = vst.msk [vmem:[%s7 + $0x1a8] sm:$0xff] %vm11180, %v11148
    %11235 = vst.msk [vmem:[%s7 + $0x1b0] sm:$0xff] %vm11180, %v11151
    %11236 = vst.msk [vmem:[%s7 + $0x1b8] sm:$0xff] %vm11180, %v11154
    %11237 = vst.msk [vmem:[%s7 + $0x1c0] sm:$0xff] %vm11180, %v11157
    %11238 = vst.msk [vmem:[%s7 + $0x1c8] sm:$0xff] %vm11180, %v11160
    %11239 = vst.msk [vmem:[%s7 + $0x1d0] sm:$0xff] %vm11180, %v11163
    %11240 = vst.msk [vmem:[%s7 + $0x1d8] sm:$0xff] %vm11180, %v11166
    %11241 = vst.msk [vmem:[%s7 + $0x1e0] sm:$0xff] %vm11180, %v11169
    %11242 = vst.msk [vmem:[%s7 + $0x1e8] sm:$0xff] %vm11180, %v11172
    %11243 = vst.msk [vmem:[%s7 + $0x1f0] sm:$0xff] %vm11180, %v11175
    %11244 = vst.msk [vmem:[%s7 + $0x1f8] sm:$0xff] %vm11180, %v11178
    // Predicated region
    $region46: #{tpu_custom_call.1} parent=1 // pred_check
      _
    $region47: #{tpu_custom_call.1} parent=1 // pred_check_branch
      %11246 = sbr.rel (0) target = $region49
    $region48: #{tpu_custom_call.1} parent=1 // pred_region
      _
    $region49: #{tpu_custom_call.1} parent=1 // pred_fallthru
      _
    // Predicated region
    $region50: #{tpu_custom_call.1} parent=1 // pred_check
      _
    $region51: #{tpu_custom_call.1} parent=1 // pred_check_branch
      %11248 = sbr.rel (0) target = $region53
    $region52: #{tpu_custom_call.1} parent=1 // pred_region
      _
    $region53: #{tpu_custom_call.1} parent=1 // pred_fallthru
      _
    %11249 = vsyncpa [#allocation4], 1
    %11250 = vsyncpa [#allocation6], 1
    %11251 = vsyncpa [#allocation9], 1

</llo_original>
